<compile_context>
chip_gen: v7x
topology: tpu7x:2x2x1
jax: 0.10.0
libtpu: 0.0.40
codegen_flags: <defaults>
</compile_context>

<pallas_src>
import functools

import jax
import jax.numpy as jnp
from jax.experimental import pallas as pl
from jax.experimental.pallas import tpu as pltpu


# ----------------------------------------------------------------------------
# Pallas kernel: fused relu(A @ B + bias), whole problem in one invocation.
# ----------------------------------------------------------------------------
def _mm_bias_relu_kernel(a_ref, b_ref, bias_ref, o_ref):
    a = a_ref[...]
    b = b_ref[...]
    if a.dtype != b.dtype:  # conv3: cast activations to bf16 -> bf16 MXU pass
        a = a.astype(b.dtype)
    r = jnp.dot(a, b, preferred_element_type=jnp.float32) + bias_ref[...]
    o_ref[...] = jnp.maximum(r, 0.0).astype(o_ref.dtype)


def matmul_bias_relu(a, b, bias):
    """relu(a @ b + bias).  a:(M,K) f32; b:(K,N) f32|bf16; bias:(1,N) f32.

    Grid-free pallas_call: every operand is resident in VMEM (all three convs
    of this module are far below VMEM capacity on v5e/v6e/v7x), so there is no
    tiling, no accumulator scratch and no pipelining overhead — the MXU sweeps
    the whole contraction in one pass sequence with f32 accumulation.
    """
    M, K = a.shape
    Kb, N = b.shape
    assert K == Kb and bias.shape == (1, N)

    cost = pl.CostEstimate(
        flops=int(2 * M * K * N),
        transcendentals=0,
        bytes_accessed=int(
            a.size * a.dtype.itemsize
            + b.size * b.dtype.itemsize
            + bias.size * bias.dtype.itemsize
            + M * N * 4
        ),
    )
    vmem = pl.BlockSpec(memory_space=pltpu.MemorySpace.VMEM)
    return pl.pallas_call(
        _mm_bias_relu_kernel,
        out_shape=jax.ShapeDtypeStruct((M, N), jnp.float32),
        in_specs=[vmem, vmem, vmem],
        out_specs=vmem,
        cost_estimate=cost,
    )(a, b, bias)


# ----------------------------------------------------------------------------
# im2col glue (plain JAX) — turns a conv into the GEMM above.
# ----------------------------------------------------------------------------
def _im2col(x_nhwc, kh, kw, stride, padding):
    n, h, w, c = x_nhwc.shape
    xp = jnp.pad(x_nhwc, ((0, 0), (padding, padding), (padding, padding), (0, 0)))
    hp, wp = h + 2 * padding, w + 2 * padding
    ho = (hp - kh) // stride + 1
    wo = (wp - kw) // stride + 1
    cols = []
    for i in range(kh):
        for j in range(kw):
            cols.append(
                xp[:, i : i + stride * (ho - 1) + 1 : stride,
                      j : j + stride * (wo - 1) + 1 : stride, :]
            )
    # (N, Ho, Wo, kh*kw, C) -> feature index = (i*kw + j)*C + c
    p = jnp.stack(cols, axis=3).reshape(n, ho, wo, kh * kw * c)
    return p, ho, wo


def conv2d_relu(x_nhwc, prep, *, stride, padding):
    kh, kw, cin, cout = prep["kh"], prep["kw"], prep["cin"], prep["cout"]
    n, h, w, c = x_nhwc.shape
    assert c == cin
    ho = (h + 2 * padding - kh) // stride + 1
    wo = (w + 2 * padding - kw) // stride + 1

    if kh == h and kw == w and padding == 0 and stride == 1:
        # conv3 fast path: kernel covers the whole input (output 1x1), so the
        # im2col patch is the NHWC tensor flattened in (i*kw+j)*cin+c order —
        # exactly the weight layout.  Pure reshape, no slices/stack.
        a = x_nhwc.reshape(n, kh * kw * cin)
    else:
        patches, ho, wo = _im2col(x_nhwc, kh, kw, stride, padding)
        a = patches.reshape(n * ho * wo, kh * kw * cin)

    y = matmul_bias_relu(a, prep["b"], prep["bias"])
    return y.reshape(n, ho, wo, cout)


# ----------------------------------------------------------------------------
# One-time weight relayout (hoisted out of the forward path).  No padding at
# all: every conv runs as a full-extent, single-invocation GEMM.
# ----------------------------------------------------------------------------
def _prepare_conv(w_oihw, bias, *, weight_dtype=jnp.float32):
    cout, cin, kh, kw = w_oihw.shape
    K, N = kh * kw * cin, cout
    # feature ordering (kh, kw, cin) flattened, cout last — matches _im2col
    b = jnp.transpose(w_oihw, (2, 3, 1, 0)).reshape(K, N).astype(weight_dtype)
    bias2d = bias.astype(jnp.float32).reshape(1, N)
    return dict(b=b, bias=bias2d, kh=kh, kw=kw, cin=cin, cout=cout)


def prepare_params(params, *, conv3_weight_dtype=jnp.bfloat16):
    """Pre-transpose (and bf16-cast conv3) weights once, outside the forward."""
    return dict(
        c1=_prepare_conv(params["w1"], params["b1"]),               # f32, 2 KB
        c2=_prepare_conv(params["w2"], params["b2"]),               # f32, 0.3 MB
        c3=_prepare_conv(params["w3"], params["b3"],
                         weight_dtype=conv3_weight_dtype),          # bf16, 5.3 MB
    )


# ----------------------------------------------------------------------------
# ConvLayer forward (batchnorm=False), NCHW in / NCHW out.
# ----------------------------------------------------------------------------
def conv_layer_forward(x_nchw, prepped):
    x = jnp.transpose(x_nchw, (0, 2, 3, 1))  # NCHW -> NHWC
    x = conv2d_relu(x, prepped["c1"], stride=2, padding=1)
    x = conv2d_relu(x, prepped["c2"], stride=2, padding=1)
    x = conv2d_relu(x, prepped["c3"], stride=1, padding=0)
    return jnp.transpose(x, (0, 3, 1, 2))    # NHWC -> NCHW


def init_params(key, in_channels=1, out_channels=256):
    """Mirror PyTorch Conv2d default init (uniform +/- 1/sqrt(fan_in))."""
    def conv_init(k, cout, cin, kh, kw):
        k1, k2 = jax.random.split(k)
        bound = 1.0 / jnp.sqrt(cin * kh * kw)
        w = jax.random.uniform(k1, (cout, cin, kh, kw), jnp.float32, -bound, bound)
        b = jax.random.uniform(k2, (cout,), jnp.float32, -bound, bound)
        return w, b

    k1, k2, k3 = jax.random.split(key, 3)
    w1, b1 = conv_init(k1, 64, in_channels, 3, 3)
    w2, b2 = conv_init(k2, 128, 64, 3, 3)
    w3, b3 = conv_init(k3, out_channels, 128, 9, 9)
    return dict(w1=w1, b1=b1, w2=w2, b2=b2, w3=w3, b3=b3)


# ----------------------------------------------------------------------------
# Reference (pure XLA, full f32) for a sanity check.
# ----------------------------------------------------------------------------
def _ref_forward(x_nchw, params):
    def conv(x, w, b, stride, padding):
        y = jax.lax.conv_general_dilated(
            x, w, window_strides=(stride, stride),
            padding=[(padding, padding), (padding, padding)],
            dimension_numbers=("NCHW", "OIHW", "NCHW"),
        )
        return jnp.maximum(y + b[None, :, None, None], 0.0)

    x = conv(x_nchw, params["w1"], params["b1"], 2, 1)
    x = conv(x, params["w2"], params["b2"], 2, 1)
    x = conv(x, params["w3"], params["b3"], 1, 0)
    return x


if __name__ == "__main__":
    key = jax.random.PRNGKey(0)
    kx, kp = jax.random.split(key)

    # 36x36 -> 18x18 -> 9x9 -> 1x1
    x = jax.random.normal(kx, (2, 1, 36, 36), jnp.float32)
    params = init_params(kp, in_channels=1, out_channels=256)
    prepped = prepare_params(params)  # one-time relayout / bf16 cast

    fwd = jax.jit(functools.partial(conv_layer_forward, prepped=prepped))
    out = jax.block_until_ready(fwd(x))
    assert out.shape == (2, 256, 1, 1), out.shape

    ref = _ref_forward(x, params)
    # conv3 weights are streamed/multiplied as bf16 (f32 accumulation) ->
    # loosened tolerance (same precision config as the previously verified run).
    assert jnp.allclose(out, ref, rtol=2e-2, atol=2e-2), float(
        jnp.max(jnp.abs(out - ref))
    )

    print("KERNEL_OK")
</pallas_src>

<mosaic_0001>
module attributes {stable_mosaic.version = 11 : i64} {
  func.func @_mm_bias_relu_kernel(%arg0: memref<648x9xf32, #tpu.memory_space<vmem>>, %arg1: memref<9x64xf32, #tpu.memory_space<vmem>>, %arg2: memref<1x64xf32, #tpu.memory_space<vmem>>, %arg3: memref<648x64xf32, #tpu.memory_space<vmem>>) attributes {dimension_semantics = [], scalar_prefetch = 0 : i64, scratch_operands = 0 : i64, tpu.core_type = #tpu.core_type<tc>} {
    %c0 = arith.constant 0 : index
    %c0_0 = arith.constant 0 : index
    %0 = vector.load %arg0[%c0, %c0_0] : memref<648x9xf32, #tpu.memory_space<vmem>>, vector<648x9xf32>
    %c0_1 = arith.constant 0 : index
    %c0_2 = arith.constant 0 : index
    %1 = vector.load %arg1[%c0_1, %c0_2] : memref<9x64xf32, #tpu.memory_space<vmem>>, vector<9x64xf32>
    %cst = arith.constant dense<0.000000e+00> : vector<648x64xf32>
    %2 = tpu.matmul %0, %1, %cst {dimension_numbers = #tpu.dot_dimension_numbers<[1], [0], [0], [1], [0, 0, 1, 1], [], []>} : vector<648x9xf32>, vector<9x64xf32>, vector<648x64xf32> -> vector<648x64xf32>
    %c0_3 = arith.constant 0 : index
    %c0_4 = arith.constant 0 : index
    %3 = vector.load %arg2[%c0_3, %c0_4] : memref<1x64xf32, #tpu.memory_space<vmem>>, vector<1x64xf32>
    %4 = vector.broadcast %3 : vector<1x64xf32> to vector<648x64xf32>
    %5 = arith.addf %2, %4 : vector<648x64xf32>
    %cst_5 = arith.constant 0.000000e+00 : f32
    %6 = vector.broadcast %cst_5 : f32 to vector<648x64xf32>
    %7 = arith.maximumf %5, %6 : vector<648x64xf32>
    %c0_6 = arith.constant 0 : index
    %c0_7 = arith.constant 0 : index
    %8 = vector.load %arg3[%c0_6, %c0_7] : memref<648x64xf32, #tpu.memory_space<vmem>>, vector<648x64xf32>
    tpu.vector_store %arg3[%c0_6, %c0_7], %7 {strides = array<i32>} : memref<648x64xf32, #tpu.memory_space<vmem>>, vector<648x64xf32>,
    return
  }
}

module attributes {stable_mosaic.version = 11 : i64} {
  func.func @_mm_bias_relu_kernel(%arg0: memref<162x576xf32, #tpu.memory_space<vmem>>, %arg1: memref<576x128xf32, #tpu.memory_space<vmem>>, %arg2: memref<1x128xf32, #tpu.memory_space<vmem>>, %arg3: memref<162x128xf32, #tpu.memory_space<vmem>>) attributes {dimension_semantics = [], scalar_prefetch = 0 : i64, scratch_operands = 0 : i64, tpu.core_type = #tpu.core_type<tc>} {
    %c0 = arith.constant 0 : index
    %c0_0 = arith.constant 0 : index
    %0 = vector.load %arg0[%c0, %c0_0] : memref<162x576xf32, #tpu.memory_space<vmem>>, vector<162x576xf32>
    %c0_1 = arith.constant 0 : index
    %c0_2 = arith.constant 0 : index
    %1 = vector.load %arg1[%c0_1, %c0_2] : memref<576x128xf32, #tpu.memory_space<vmem>>, vector<576x128xf32>
    %cst = arith.constant dense<0.000000e+00> : vector<162x128xf32>
    %2 = tpu.matmul %0, %1, %cst {dimension_numbers = #tpu.dot_dimension_numbers<[1], [0], [0], [1], [0, 0, 1, 1], [], []>} : vector<162x576xf32>, vector<576x128xf32>, vector<162x128xf32> -> vector<162x128xf32>
    %c0_3 = arith.constant 0 : index
    %c0_4 = arith.constant 0 : index
    %3 = vector.load %arg2[%c0_3, %c0_4] : memref<1x128xf32, #tpu.memory_space<vmem>>, vector<1x128xf32>
    %4 = vector.broadcast %3 : vector<1x128xf32> to vector<162x128xf32>
    %5 = arith.addf %2, %4 : vector<162x128xf32>
    %cst_5 = arith.constant 0.000000e+00 : f32
    %6 = vector.broadcast %cst_5 : f32 to vector<162x128xf32>
    %7 = arith.maximumf %5, %6 : vector<162x128xf32>
    %c0_6 = arith.constant 0 : index
    %c0_7 = arith.constant 0 : index
    %8 = vector.load %arg3[%c0_6, %c0_7] : memref<162x128xf32, #tpu.memory_space<vmem>>, vector<162x128xf32>
    tpu.vector_store %arg3[%c0_6, %c0_7], %7 {strides = array<i32>} : memref<162x128xf32, #tpu.memory_space<vmem>>, vector<162x128xf32>,
    return
  }
}

module attributes {stable_mosaic.version = 11 : i64} {
  func.func @_mm_bias_relu_kernel(%arg0: memref<2x10368xf32, #tpu.memory_space<vmem>>, %arg1: memref<10368x256xbf16, #tpu.memory_space<vmem>>, %arg2: memref<1x256xf32, #tpu.memory_space<vmem>>, %arg3: memref<2x256xf32, #tpu.memory_space<vmem>>) attributes {dimension_semantics = [], scalar_prefetch = 0 : i64, scratch_operands = 0 : i64, tpu.core_type = #tpu.core_type<tc>} {
    %c0 = arith.constant 0 : index
    %c0_0 = arith.constant 0 : index
    %0 = vector.load %arg0[%c0, %c0_0] : memref<2x10368xf32, #tpu.memory_space<vmem>>, vector<2x10368xf32>
    %c0_1 = arith.constant 0 : index
    %c0_2 = arith.constant 0 : index
    %1 = vector.load %arg1[%c0_1, %c0_2] : memref<10368x256xbf16, #tpu.memory_space<vmem>>, vector<10368x256xbf16>
    %2 = arith.truncf %0 : vector<2x10368xf32> to vector<2x10368xbf16>
    %cst = arith.constant dense<0.000000e+00> : vector<2x256xf32>
    %3 = tpu.matmul %2, %1, %cst {dimension_numbers = #tpu.dot_dimension_numbers<[1], [0], [0], [1], [0, 0, 1, 1], [], []>} : vector<2x10368xbf16>, vector<10368x256xbf16>, vector<2x256xf32> -> vector<2x256xf32>
    %c0_3 = arith.constant 0 : index
    %c0_4 = arith.constant 0 : index
    %4 = vector.load %arg2[%c0_3, %c0_4] : memref<1x256xf32, #tpu.memory_space<vmem>>, vector<1x256xf32>
    %5 = vector.broadcast %4 : vector<1x256xf32> to vector<2x256xf32>
    %6 = arith.addf %3, %5 : vector<2x256xf32>
    %cst_5 = arith.constant 0.000000e+00 : f32
    %7 = vector.broadcast %cst_5 : f32 to vector<2x256xf32>
    %8 = arith.maximumf %6, %7 : vector<2x256xf32>
    %c0_6 = arith.constant 0 : index
    %c0_7 = arith.constant 0 : index
    %9 = vector.load %arg3[%c0_6, %c0_7] : memref<2x256xf32, #tpu.memory_space<vmem>>, vector<2x256xf32>
    tpu.vector_store %arg3[%c0_6, %c0_7], %8 {strides = array<i32>} : memref<2x256xf32, #tpu.memory_space<vmem>>, vector<2x256xf32>,
    return
  }
}

</mosaic_0001>

<llo_original>
// kernel: conv_layer_forward.3
$region0: #{conv_layer_forward.3}
  #allocation0 [shape = 'u32[]', space=smem, size = 0x4, offset = 0x4, fixed_abs, tag = 'smem constant byte address 0x4 - core index']
  #allocation1 [shape = 'u32[144,128]{1,0:T(1,128)}', space=vmem, size = 0x12000, scoped, tag = 'internal scratch']
  %s0 = inlined_call_operand.vmem [shape: f32[648,9], index: 0, kind: input, shape index: {}]
  %s1 = inlined_call_operand.vmem [shape: f32[9,64], index: 1, kind: input, shape index: {}]
  %s2 = inlined_call_operand.vmem [shape: f32[1,64], index: 2, kind: input, shape index: {}]
  %s3 = inlined_call_operand.vmem [shape: f32[648,64], index: 3, kind: output, shape index: {}]
  %s4 = sld [smem:[#allocation0]]
  $region22: #{conv_layer_forward.3} parent=0
    _
  %s6 = ssub.s32 1, %s4
  %s7 = scalar_select 0, %s6, %s4
  // Predicated region
  $region2: #{conv_layer_forward.3} parent=0 // pred_check
    _
  $region3: #{conv_layer_forward.3} parent=0 // pred_check_branch
    %9 = sbr.rel (0) target = $region5
  $region4: #{conv_layer_forward.3} parent=0 // pred_region
    _
  $region5: #{conv_layer_forward.3} parent=0 // pred_fallthru
    _
  // Predicated region
  $region6: #{conv_layer_forward.3} parent=0 // pred_check
    _
  $region7: #{conv_layer_forward.3} parent=0 // pred_check_branch
    %11 = sbr.rel (0) target = $region9
  $region8: #{conv_layer_forward.3} parent=0 // pred_region
    _
  $region9: #{conv_layer_forward.3} parent=0 // pred_fallthru
    _
  // Predicated region
  $region10: #{conv_layer_forward.3} parent=0 // pred_check
    _
  $region11: #{conv_layer_forward.3} parent=0 // pred_check_branch
    %13 = sbr.rel (0) target = $region13
  $region12: #{conv_layer_forward.3} parent=0 // pred_region
    _
  $region13: #{conv_layer_forward.3} parent=0 // pred_fallthru
    _
  %v14 = vld [vmem:[%s0] sm:$0xff]
  %v15 = vld [vmem:[%s0 + $0x8] sm:$0xff]
  %v16 = vld [vmem:[%s0 + $0x10] sm:$0xff]
  %v17 = vld [vmem:[%s0 + $0x18] sm:$0xff]
  %v18 = vld [vmem:[%s0 + $0x20] sm:$0xff]
  %v19 = vld [vmem:[%s0 + $0x28] sm:$0xff]
  %v20 = vld [vmem:[%s0 + $0x30] sm:$0xff]
  %v21 = vld [vmem:[%s0 + $0x38] sm:$0xff]
  %v22 = vld [vmem:[%s0 + $0x40] sm:$0xff]
  %v23 = vld [vmem:[%s0 + $0x48] sm:$0xff]
  %v24 = vld [vmem:[%s0 + $0x50] sm:$0xff]
  %v25 = vld [vmem:[%s0 + $0x58] sm:$0xff]
  %v26 = vld [vmem:[%s0 + $0x60] sm:$0xff]
  %v27 = vld [vmem:[%s0 + $0x68] sm:$0xff]
  %v28 = vld [vmem:[%s0 + $0x70] sm:$0xff]
  %v29 = vld [vmem:[%s0 + $0x78] sm:$0xff]
  %v30 = vld [vmem:[%s0 + $0x80] sm:$0xff]
  %v31 = vld [vmem:[%s0 + $0x88] sm:$0xff]
  %v32 = vld [vmem:[%s0 + $0x90] sm:$0xff]
  %v33 = vld [vmem:[%s0 + $0x98] sm:$0xff]
  %v34 = vld [vmem:[%s0 + $0xa0] sm:$0xff]
  %v35 = vld [vmem:[%s0 + $0xa8] sm:$0xff]
  %v36 = vld [vmem:[%s0 + $0xb0] sm:$0xff]
  %v37 = vld [vmem:[%s0 + $0xb8] sm:$0xff]
  %v38 = vld [vmem:[%s0 + $0xc0] sm:$0xff]
  %v39 = vld [vmem:[%s0 + $0xc8] sm:$0xff]
  %v40 = vld [vmem:[%s0 + $0xd0] sm:$0xff]
  %v41 = vld [vmem:[%s0 + $0xd8] sm:$0xff]
  %v42 = vld [vmem:[%s0 + $0xe0] sm:$0xff]
  %v43 = vld [vmem:[%s0 + $0xe8] sm:$0xff]
  %v44 = vld [vmem:[%s0 + $0xf0] sm:$0xff]
  %v45 = vld [vmem:[%s0 + $0xf8] sm:$0xff]
  %v46 = vld [vmem:[%s0 + $0x100] sm:$0xff]
  %v47 = vld [vmem:[%s0 + $0x108] sm:$0xff]
  %v48 = vld [vmem:[%s0 + $0x110] sm:$0xff]
  %v49 = vld [vmem:[%s0 + $0x118] sm:$0xff]
  %v50 = vld [vmem:[%s0 + $0x120] sm:$0xff]
  %v51 = vld [vmem:[%s0 + $0x128] sm:$0xff]
  %v52 = vld [vmem:[%s0 + $0x130] sm:$0xff]
  %v53 = vld [vmem:[%s0 + $0x138] sm:$0xff]
  %v54 = vld [vmem:[%s0 + $0x140] sm:$0xff]
  %v55 = vld [vmem:[%s0 + $0x148] sm:$0xff]
  %v56 = vld [vmem:[%s0 + $0x150] sm:$0xff]
  %v57 = vld [vmem:[%s0 + $0x158] sm:$0xff]
  %v58 = vld [vmem:[%s0 + $0x160] sm:$0xff]
  %v59 = vld [vmem:[%s0 + $0x168] sm:$0xff]
  %v60 = vld [vmem:[%s0 + $0x170] sm:$0xff]
  %v61 = vld [vmem:[%s0 + $0x178] sm:$0xff]
  %v62 = vld [vmem:[%s0 + $0x180] sm:$0xff]
  %v63 = vld [vmem:[%s0 + $0x188] sm:$0xff]
  %v64 = vld [vmem:[%s0 + $0x190] sm:$0xff]
  %v65 = vld [vmem:[%s0 + $0x198] sm:$0xff]
  %v66 = vld [vmem:[%s0 + $0x1a0] sm:$0xff]
  %v67 = vld [vmem:[%s0 + $0x1a8] sm:$0xff]
  %v68 = vld [vmem:[%s0 + $0x1b0] sm:$0xff]
  %v69 = vld [vmem:[%s0 + $0x1b8] sm:$0xff]
  %v70 = vld [vmem:[%s0 + $0x1c0] sm:$0xff]
  %v71 = vld [vmem:[%s0 + $0x1c8] sm:$0xff]
  %v72 = vld [vmem:[%s0 + $0x1d0] sm:$0xff]
  %v73 = vld [vmem:[%s0 + $0x1d8] sm:$0xff]
  %v74 = vld [vmem:[%s0 + $0x1e0] sm:$0xff]
  %v75 = vld [vmem:[%s0 + $0x1e8] sm:$0xff]
  %v76 = vld [vmem:[%s0 + $0x1f0] sm:$0xff]
  %v77 = vld [vmem:[%s0 + $0x1f8] sm:$0xff]
  %v78 = vld [vmem:[%s0 + $0x200] sm:$0xff]
  %v79 = vld [vmem:[%s0 + $0x208] sm:$0xff]
  %v80 = vld [vmem:[%s0 + $0x210] sm:$0xff]
  %v81 = vld [vmem:[%s0 + $0x218] sm:$0xff]
  %v82 = vld [vmem:[%s0 + $0x220] sm:$0xff]
  %v83 = vld [vmem:[%s0 + $0x228] sm:$0xff]
  %v84 = vld [vmem:[%s0 + $0x230] sm:$0xff]
  %v85 = vld [vmem:[%s0 + $0x238] sm:$0xff]
  %v86 = vld [vmem:[%s0 + $0x240] sm:$0xff]
  %v87 = vld [vmem:[%s0 + $0x248] sm:$0xff]
  %v88 = vld [vmem:[%s0 + $0x250] sm:$0xff]
  %v89 = vld [vmem:[%s0 + $0x258] sm:$0xff]
  %v90 = vld [vmem:[%s0 + $0x260] sm:$0xff]
  %v91 = vld [vmem:[%s0 + $0x268] sm:$0xff]
  %v92 = vld [vmem:[%s0 + $0x270] sm:$0xff]
  %v93 = vld [vmem:[%s0 + $0x278] sm:$0xff]
  %v94 = vld [vmem:[%s0 + $0x280] sm:$0xff]
  %v95 = vld [vmem:[%s1] sm:$0xff]
  %v96 = vld [vmem:[%s1 + $0x8] sm:$0x1]
  %v97 = vld [vmem:[%s2] sm:$0x1]
  %v99 = vlaneseq
  %v100 = vshrl.u32 %v99, 7
  %v101 = vsub.s32 0, %v100
  %v102 = vrot.slane %v97, %v101
  %vm104 = vcmask 72704
  %v106 = vsel %vm104, %v14, 0
  %v109 = vsel %vm104, %v15, 0
  %v112 = vsel %vm104, %v16, 0
  %v115 = vsel %vm104, %v17, 0
  %v118 = vsel %vm104, %v18, 0
  %v121 = vsel %vm104, %v19, 0
  %v124 = vsel %vm104, %v20, 0
  %v127 = vsel %vm104, %v21, 0
  %v130 = vsel %vm104, %v22, 0
  %v133 = vsel %vm104, %v23, 0
  %v136 = vsel %vm104, %v24, 0
  %v139 = vsel %vm104, %v25, 0
  %v142 = vsel %vm104, %v26, 0
  %v145 = vsel %vm104, %v27, 0
  %v148 = vsel %vm104, %v28, 0
  %v151 = vsel %vm104, %v29, 0
  %v154 = vsel %vm104, %v30, 0
  %v157 = vsel %vm104, %v31, 0
  %v160 = vsel %vm104, %v32, 0
  %v163 = vsel %vm104, %v33, 0
  %v166 = vsel %vm104, %v34, 0
  %v169 = vsel %vm104, %v35, 0
  %v172 = vsel %vm104, %v36, 0
  %v175 = vsel %vm104, %v37, 0
  %v178 = vsel %vm104, %v38, 0
  %v181 = vsel %vm104, %v39, 0
  %v184 = vsel %vm104, %v40, 0
  %v187 = vsel %vm104, %v41, 0
  %v190 = vsel %vm104, %v42, 0
  %v193 = vsel %vm104, %v43, 0
  %v196 = vsel %vm104, %v44, 0
  %v199 = vsel %vm104, %v45, 0
  %v202 = vsel %vm104, %v46, 0
  %v205 = vsel %vm104, %v47, 0
  %v208 = vsel %vm104, %v48, 0
  %v211 = vsel %vm104, %v49, 0
  %v214 = vsel %vm104, %v50, 0
  %v217 = vsel %vm104, %v51, 0
  %v220 = vsel %vm104, %v52, 0
  %v223 = vsel %vm104, %v53, 0
  %v226 = vsel %vm104, %v54, 0
  %v229 = vsel %vm104, %v55, 0
  %v232 = vsel %vm104, %v56, 0
  %v235 = vsel %vm104, %v57, 0
  %v238 = vsel %vm104, %v58, 0
  %v241 = vsel %vm104, %v59, 0
  %v244 = vsel %vm104, %v60, 0
  %v247 = vsel %vm104, %v61, 0
  %v250 = vsel %vm104, %v62, 0
  %v253 = vsel %vm104, %v63, 0
  %v256 = vsel %vm104, %v64, 0
  %v259 = vsel %vm104, %v65, 0
  %v262 = vsel %vm104, %v66, 0
  %v265 = vsel %vm104, %v67, 0
  %v268 = vsel %vm104, %v68, 0
  %v271 = vsel %vm104, %v69, 0
  %v274 = vsel %vm104, %v70, 0
  %v277 = vsel %vm104, %v71, 0
  %v280 = vsel %vm104, %v72, 0
  %v283 = vsel %vm104, %v73, 0
  %v286 = vsel %vm104, %v74, 0
  %v289 = vsel %vm104, %v75, 0
  %v292 = vsel %vm104, %v76, 0
  %v295 = vsel %vm104, %v77, 0
  %v298 = vsel %vm104, %v78, 0
  %v301 = vsel %vm104, %v79, 0
  %v304 = vsel %vm104, %v80, 0
  %v307 = vsel %vm104, %v81, 0
  %v310 = vsel %vm104, %v82, 0
  %v313 = vsel %vm104, %v83, 0
  %v316 = vsel %vm104, %v84, 0
  %v319 = vsel %vm104, %v85, 0
  %v322 = vsel %vm104, %v86, 0
  %v325 = vsel %vm104, %v87, 0
  %v328 = vsel %vm104, %v88, 0
  %v331 = vsel %vm104, %v89, 0
  %v334 = vsel %vm104, %v90, 0
  %v337 = vsel %vm104, %v91, 0
  %v340 = vsel %vm104, %v92, 0
  %v343 = vsel %vm104, %v93, 0
  %v346 = vsel %vm104, %v94, 0
  %vm348 = vcmask 1040384
  %v350 = vsel %vm348, %v96, 0
  %352 = vmatprep.subr.mxu0 0.0
  %353 = vmatpush1.msra.mxu0 %v95
  %354 = vmatprep.subr.mxu0 0.0
  %355 = vmatpush1.msra.mxu0 %v350
  %356 = vmatprep.subr.mxu0 0.0
  %357 = vmatpush1.msra.mxu0 0.0
  %358 = vmatprep.subr.mxu0 0.0
  %359 = vmatpush1.msra.mxu0 0.0
  %360 = vmatprep.subr.mxu0 0.0
  %361 = vmatpush1.msra.mxu0 0.0
  %362 = vmatprep.subr.mxu0 0.0
  %363 = vmatpush1.msra.mxu0 0.0
  %364 = vmatprep.subr.mxu0 0.0
  %365 = vmatpush1.msra.mxu0 0.0
  %366 = vmatprep.subr.mxu0 0.0
  %367 = vmatpush1.msra.mxu0 0.0
  %368 = vmatprep.subr.mxu0 0.0
  %369 = vmatpush1.msra.mxu0 0.0
  %370 = vmatprep.subr.mxu0 0.0
  %371 = vmatpush1.msra.mxu0 0.0
  %372 = vmatprep.subr.mxu0 0.0
  %373 = vmatpush1.msra.mxu0 0.0
  %374 = vmatprep.subr.mxu0 0.0
  %375 = vmatpush1.msra.mxu0 0.0
  %376 = vmatprep.subr.mxu0 0.0
  %377 = vmatpush1.msra.mxu0 0.0
  %378 = vmatprep.subr.mxu0 0.0
  %379 = vmatpush1.msra.mxu0 0.0
  %380 = vmatprep.subr.mxu0 0.0
  %381 = vmatpush1.msra.mxu0 0.0
  %382 = vmatprep.subr.mxu0 0.0
  %383 = vmatpush1.msra.mxu0 0.0
  %384 = vmatprep.subr.mxu0 0.0
  %385 = vmatpush1.msra.mxu0 0.0
  %386 = vmatprep.subr.mxu0 0.0
  %387 = vmatpush1.msra.mxu0 0.0
  %388 = vmatprep.subr.mxu0 0.0
  %389 = vmatpush1.msra.mxu0 0.0
  %390 = vmatprep.subr.mxu0 0.0
  %391 = vmatpush1.msra.mxu0 0.0
  %392 = vmatprep.subr.mxu0 0.0
  %393 = vmatpush1.msra.mxu0 0.0
  %394 = vmatprep.subr.mxu0 0.0
  %395 = vmatpush1.msra.mxu0 0.0
  %396 = vmatprep.subr.mxu0 0.0
  %397 = vmatpush1.msra.mxu0 0.0
  %398 = vmatprep.subr.mxu0 0.0
  %399 = vmatpush1.msra.mxu0 0.0
  %400 = vmatprep.subr.mxu0 0.0
  %401 = vmatpush1.msra.mxu0 0.0
  %402 = vmatprep.subr.mxu0 0.0
  %403 = vmatpush1.msra.mxu0 0.0
  %404 = vmatprep.subr.mxu0 0.0
  %405 = vmatpush1.msra.mxu0 0.0
  %406 = vmatprep.subr.mxu0 0.0
  %407 = vmatpush1.msra.mxu0 0.0
  %408 = vmatprep.subr.mxu0 0.0
  %409 = vmatpush1.msra.mxu0 0.0
  %410 = vmatprep.subr.mxu0 0.0
  %411 = vmatpush1.msra.mxu0 0.0
  %412 = vmatprep.subr.mxu0 0.0
  %413 = vmatpush1.msra.mxu0 0.0
  %414 = vmatprep.subr.mxu0 0.0
  %415 = vmatpush1.msra.mxu0 0.0
  %416 = vmatprep.mubr.f32.mxu0 0.0
  %417 = vmatmul.mubr.f32.gmra.mrb[0].mxu0 %v106
  %v418 = vpop.f32.mrb[0].mxu0
  %v419 = vadd.f32 %v102, %v418
  %v420 = vpop.f32.mrb[0].mxu0
  %421 = vmatprep.mubr.f32.mxu0 0.0
  %422 = vmatmul.mubr.f32.gmra.mrb[0].mxu0 %v109
  %v423 = vpop.f32.mrb[0].mxu0
  %v424 = vadd.f32 %v102, %v423
  %v425 = vpop.f32.mrb[0].mxu0
  %426 = vmatprep.mubr.f32.mxu0 0.0
  %427 = vmatmul.mubr.f32.gmra.mrb[0].mxu0 %v112
  %v428 = vpop.f32.mrb[0].mxu0
  %v429 = vadd.f32 %v102, %v428
  %v430 = vpop.f32.mrb[0].mxu0
  %431 = vmatprep.mubr.f32.mxu0 0.0
  %432 = vmatmul.mubr.f32.gmra.mrb[0].mxu0 %v115
  %v433 = vpop.f32.mrb[0].mxu0
  %v434 = vadd.f32 %v102, %v433
  %v435 = vpop.f32.mrb[0].mxu0
  %436 = vmatprep.mubr.f32.mxu0 0.0
  %437 = vmatmul.mubr.f32.gmra.mrb[0].mxu0 %v118
  %v438 = vpop.f32.mrb[0].mxu0
  %v439 = vadd.f32 %v102, %v438
  %v440 = vpop.f32.mrb[0].mxu0
  %441 = vmatprep.mubr.f32.mxu0 0.0
  %442 = vmatmul.mubr.f32.gmra.mrb[0].mxu0 %v121
  %v443 = vpop.f32.mrb[0].mxu0
  %v444 = vadd.f32 %v102, %v443
  %v445 = vpop.f32.mrb[0].mxu0
  %446 = vmatprep.mubr.f32.mxu0 0.0
  %447 = vmatmul.mubr.f32.gmra.mrb[0].mxu0 %v124
  %v448 = vpop.f32.mrb[0].mxu0
  %v449 = vadd.f32 %v102, %v448
  %v450 = vpop.f32.mrb[0].mxu0
  %451 = vmatprep.mubr.f32.mxu0 0.0
  %452 = vmatmul.mubr.f32.gmra.mrb[0].mxu0 %v127
  %v453 = vpop.f32.mrb[0].mxu0
  %v454 = vadd.f32 %v102, %v453
  %v455 = vpop.f32.mrb[0].mxu0
  %456 = vmatprep.mubr.f32.mxu0 0.0
  %457 = vmatmul.mubr.f32.gmra.mrb[0].mxu0 %v130
  %v458 = vpop.f32.mrb[0].mxu0
  %v459 = vadd.f32 %v102, %v458
  %v460 = vpop.f32.mrb[0].mxu0
  %461 = vmatprep.mubr.f32.mxu0 0.0
  %462 = vmatmul.mubr.f32.gmra.mrb[0].mxu0 %v133
  %v463 = vpop.f32.mrb[0].mxu0
  %v464 = vadd.f32 %v102, %v463
  %v465 = vpop.f32.mrb[0].mxu0
  %466 = vmatprep.mubr.f32.mxu0 0.0
  %467 = vmatmul.mubr.f32.gmra.mrb[0].mxu0 %v136
  %v468 = vpop.f32.mrb[0].mxu0
  %v469 = vadd.f32 %v102, %v468
  %v470 = vpop.f32.mrb[0].mxu0
  %471 = vmatprep.mubr.f32.mxu0 0.0
  %472 = vmatmul.mubr.f32.gmra.mrb[0].mxu0 %v139
  %v473 = vpop.f32.mrb[0].mxu0
  %v474 = vadd.f32 %v102, %v473
  %v475 = vpop.f32.mrb[0].mxu0
  %476 = vmatprep.mubr.f32.mxu0 0.0
  %477 = vmatmul.mubr.f32.gmra.mrb[0].mxu0 %v142
  %v478 = vpop.f32.mrb[0].mxu0
  %v479 = vadd.f32 %v102, %v478
  %v480 = vpop.f32.mrb[0].mxu0
  %481 = vmatprep.mubr.f32.mxu0 0.0
  %482 = vmatmul.mubr.f32.gmra.mrb[0].mxu0 %v145
  %v483 = vpop.f32.mrb[0].mxu0
  %v484 = vadd.f32 %v102, %v483
  %v485 = vpop.f32.mrb[0].mxu0
  %486 = vmatprep.mubr.f32.mxu0 0.0
  %487 = vmatmul.mubr.f32.gmra.mrb[0].mxu0 %v148
  %v488 = vpop.f32.mrb[0].mxu0
  %v489 = vadd.f32 %v102, %v488
  %v490 = vpop.f32.mrb[0].mxu0
  %491 = vmatprep.mubr.f32.mxu0 0.0
  %492 = vmatmul.mubr.f32.gmra.mrb[0].mxu0 %v151
  %v493 = vpop.f32.mrb[0].mxu0
  %v494 = vadd.f32 %v102, %v493
  %v495 = vpop.f32.mrb[0].mxu0
  %496 = vmatprep.mubr.f32.mxu0 0.0
  %497 = vmatmul.mubr.f32.gmra.mrb[0].mxu0 %v154
  %v498 = vpop.f32.mrb[0].mxu0
  %v499 = vadd.f32 %v102, %v498
  %v500 = vpop.f32.mrb[0].mxu0
  %501 = vmatprep.mubr.f32.mxu0 0.0
  %502 = vmatmul.mubr.f32.gmra.mrb[0].mxu0 %v157
  %v503 = vpop.f32.mrb[0].mxu0
  %v504 = vadd.f32 %v102, %v503
  %v505 = vpop.f32.mrb[0].mxu0
  %506 = vmatprep.mubr.f32.mxu0 0.0
  %507 = vmatmul.mubr.f32.gmra.mrb[0].mxu0 %v160
  %v508 = vpop.f32.mrb[0].mxu0
  %v509 = vadd.f32 %v102, %v508
  %v510 = vpop.f32.mrb[0].mxu0
  %511 = vmatprep.mubr.f32.mxu0 0.0
  %512 = vmatmul.mubr.f32.gmra.mrb[0].mxu0 %v163
  %v513 = vpop.f32.mrb[0].mxu0
  %v514 = vadd.f32 %v102, %v513
  %v515 = vpop.f32.mrb[0].mxu0
  %516 = vmatprep.mubr.f32.mxu0 0.0
  %517 = vmatmul.mubr.f32.gmra.mrb[0].mxu0 %v166
  %v518 = vpop.f32.mrb[0].mxu0
  %v519 = vadd.f32 %v102, %v518
  %v520 = vpop.f32.mrb[0].mxu0
  %521 = vmatprep.mubr.f32.mxu0 0.0
  %522 = vmatmul.mubr.f32.gmra.mrb[0].mxu0 %v169
  %v523 = vpop.f32.mrb[0].mxu0
  %v524 = vadd.f32 %v102, %v523
  %v525 = vpop.f32.mrb[0].mxu0
  %526 = vmatprep.mubr.f32.mxu0 0.0
  %527 = vmatmul.mubr.f32.gmra.mrb[0].mxu0 %v172
  %v528 = vpop.f32.mrb[0].mxu0
  %v529 = vadd.f32 %v102, %v528
  %v530 = vpop.f32.mrb[0].mxu0
  %531 = vmatprep.mubr.f32.mxu0 0.0
  %532 = vmatmul.mubr.f32.gmra.mrb[0].mxu0 %v175
  %v533 = vpop.f32.mrb[0].mxu0
  %v534 = vadd.f32 %v102, %v533
  %v535 = vpop.f32.mrb[0].mxu0
  %536 = vmatprep.mubr.f32.mxu0 0.0
  %537 = vmatmul.mubr.f32.gmra.mrb[0].mxu0 %v178
  %v538 = vpop.f32.mrb[0].mxu0
  %v539 = vadd.f32 %v102, %v538
  %v540 = vpop.f32.mrb[0].mxu0
  %541 = vmatprep.mubr.f32.mxu0 0.0
  %542 = vmatmul.mubr.f32.gmra.mrb[0].mxu0 %v181
  %v543 = vpop.f32.mrb[0].mxu0
  %v544 = vadd.f32 %v102, %v543
  %v545 = vpop.f32.mrb[0].mxu0
  %546 = vmatprep.mubr.f32.mxu0 0.0
  %547 = vmatmul.mubr.f32.gmra.mrb[0].mxu0 %v184
  %v548 = vpop.f32.mrb[0].mxu0
  %v549 = vadd.f32 %v102, %v548
  %v550 = vpop.f32.mrb[0].mxu0
  %551 = vmatprep.mubr.f32.mxu0 0.0
  %552 = vmatmul.mubr.f32.gmra.mrb[0].mxu0 %v187
  %v553 = vpop.f32.mrb[0].mxu0
  %v554 = vadd.f32 %v102, %v553
  %v555 = vpop.f32.mrb[0].mxu0
  %556 = vmatprep.mubr.f32.mxu0 0.0
  %557 = vmatmul.mubr.f32.gmra.mrb[0].mxu0 %v190
  %v558 = vpop.f32.mrb[0].mxu0
  %v559 = vadd.f32 %v102, %v558
  %v560 = vpop.f32.mrb[0].mxu0
  %561 = vmatprep.mubr.f32.mxu0 0.0
  %562 = vmatmul.mubr.f32.gmra.mrb[0].mxu0 %v193
  %v563 = vpop.f32.mrb[0].mxu0
  %v564 = vadd.f32 %v102, %v563
  %v565 = vpop.f32.mrb[0].mxu0
  %566 = vmatprep.mubr.f32.mxu0 0.0
  %567 = vmatmul.mubr.f32.gmra.mrb[0].mxu0 %v196
  %v568 = vpop.f32.mrb[0].mxu0
  %v569 = vadd.f32 %v102, %v568
  %v570 = vpop.f32.mrb[0].mxu0
  %571 = vmatprep.mubr.f32.mxu0 0.0
  %572 = vmatmul.mubr.f32.gmra.mrb[0].mxu0 %v199
  %v573 = vpop.f32.mrb[0].mxu0
  %v574 = vadd.f32 %v102, %v573
  %v575 = vpop.f32.mrb[0].mxu0
  %576 = vmatprep.mubr.f32.mxu0 0.0
  %577 = vmatmul.mubr.f32.gmra.mrb[0].mxu0 %v202
  %v578 = vpop.f32.mrb[0].mxu0
  %v579 = vadd.f32 %v102, %v578
  %v580 = vpop.f32.mrb[0].mxu0
  %581 = vmatprep.mubr.f32.mxu0 0.0
  %582 = vmatmul.mubr.f32.gmra.mrb[0].mxu0 %v205
  %v583 = vpop.f32.mrb[0].mxu0
  %v584 = vadd.f32 %v102, %v583
  %v585 = vpop.f32.mrb[0].mxu0
  %586 = vmatprep.mubr.f32.mxu0 0.0
  %587 = vmatmul.mubr.f32.gmra.mrb[0].mxu0 %v208
  %v588 = vpop.f32.mrb[0].mxu0
  %v589 = vadd.f32 %v102, %v588
  %v590 = vpop.f32.mrb[0].mxu0
  %591 = vmatprep.mubr.f32.mxu0 0.0
  %592 = vmatmul.mubr.f32.gmra.mrb[0].mxu0 %v211
  %v593 = vpop.f32.mrb[0].mxu0
  %v594 = vadd.f32 %v102, %v593
  %v595 = vpop.f32.mrb[0].mxu0
  %596 = vmatprep.mubr.f32.mxu0 0.0
  %597 = vmatmul.mubr.f32.gmra.mrb[0].mxu0 %v214
  %v598 = vpop.f32.mrb[0].mxu0
  %v599 = vadd.f32 %v102, %v598
  %v600 = vpop.f32.mrb[0].mxu0
  %601 = vmatprep.mubr.f32.mxu0 0.0
  %602 = vmatmul.mubr.f32.gmra.mrb[0].mxu0 %v217
  %v603 = vpop.f32.mrb[0].mxu0
  %v604 = vadd.f32 %v102, %v603
  %v605 = vpop.f32.mrb[0].mxu0
  %606 = vmatprep.mubr.f32.mxu0 0.0
  %607 = vmatmul.mubr.f32.gmra.mrb[0].mxu0 %v220
  %v608 = vpop.f32.mrb[0].mxu0
  %v609 = vadd.f32 %v102, %v608
  %v610 = vpop.f32.mrb[0].mxu0
  %611 = vmatprep.mubr.f32.mxu0 0.0
  %612 = vmatmul.mubr.f32.gmra.mrb[0].mxu0 %v223
  %v613 = vpop.f32.mrb[0].mxu0
  %v614 = vadd.f32 %v102, %v613
  %v615 = vpop.f32.mrb[0].mxu0
  %616 = vmatprep.mubr.f32.mxu0 0.0
  %617 = vmatmul.mubr.f32.gmra.mrb[0].mxu0 %v226
  %v618 = vpop.f32.mrb[0].mxu0
  %v619 = vadd.f32 %v102, %v618
  %v620 = vpop.f32.mrb[0].mxu0
  %621 = vmatprep.mubr.f32.mxu0 0.0
  %622 = vmatmul.mubr.f32.gmra.mrb[0].mxu0 %v229
  %v623 = vpop.f32.mrb[0].mxu0
  %v624 = vadd.f32 %v102, %v623
  %v625 = vpop.f32.mrb[0].mxu0
  %626 = vmatprep.mubr.f32.mxu0 0.0
  %627 = vmatmul.mubr.f32.gmra.mrb[0].mxu0 %v232
  %v628 = vpop.f32.mrb[0].mxu0
  %v629 = vadd.f32 %v102, %v628
  %v630 = vpop.f32.mrb[0].mxu0
  %631 = vmatprep.mubr.f32.mxu0 0.0
  %632 = vmatmul.mubr.f32.gmra.mrb[0].mxu0 %v235
  %v633 = vpop.f32.mrb[0].mxu0
  %v634 = vadd.f32 %v102, %v633
  %v635 = vpop.f32.mrb[0].mxu0
  %636 = vmatprep.mubr.f32.mxu0 0.0
  %637 = vmatmul.mubr.f32.gmra.mrb[0].mxu0 %v238
  %v638 = vpop.f32.mrb[0].mxu0
  %v639 = vadd.f32 %v102, %v638
  %v640 = vpop.f32.mrb[0].mxu0
  %641 = vmatprep.mubr.f32.mxu0 0.0
  %642 = vmatmul.mubr.f32.gmra.mrb[0].mxu0 %v241
  %v643 = vpop.f32.mrb[0].mxu0
  %v644 = vadd.f32 %v102, %v643
  %v645 = vpop.f32.mrb[0].mxu0
  %646 = vmatprep.mubr.f32.mxu0 0.0
  %647 = vmatmul.mubr.f32.gmra.mrb[0].mxu0 %v244
  %v648 = vpop.f32.mrb[0].mxu0
  %v649 = vadd.f32 %v102, %v648
  %v650 = vpop.f32.mrb[0].mxu0
  %651 = vmatprep.mubr.f32.mxu0 0.0
  %652 = vmatmul.mubr.f32.gmra.mrb[0].mxu0 %v247
  %v653 = vpop.f32.mrb[0].mxu0
  %v654 = vadd.f32 %v102, %v653
  %v655 = vpop.f32.mrb[0].mxu0
  %656 = vmatprep.mubr.f32.mxu0 0.0
  %657 = vmatmul.mubr.f32.gmra.mrb[0].mxu0 %v250
  %v658 = vpop.f32.mrb[0].mxu0
  %v659 = vadd.f32 %v102, %v658
  %v660 = vpop.f32.mrb[0].mxu0
  %661 = vmatprep.mubr.f32.mxu0 0.0
  %662 = vmatmul.mubr.f32.gmra.mrb[0].mxu0 %v253
  %v663 = vpop.f32.mrb[0].mxu0
  %v664 = vadd.f32 %v102, %v663
  %v665 = vpop.f32.mrb[0].mxu0
  %666 = vmatprep.mubr.f32.mxu0 0.0
  %667 = vmatmul.mubr.f32.gmra.mrb[0].mxu0 %v256
  %v668 = vpop.f32.mrb[0].mxu0
  %v669 = vadd.f32 %v102, %v668
  %v670 = vpop.f32.mrb[0].mxu0
  %671 = vmatprep.mubr.f32.mxu0 0.0
  %672 = vmatmul.mubr.f32.gmra.mrb[0].mxu0 %v259
  %v673 = vpop.f32.mrb[0].mxu0
  %v674 = vadd.f32 %v102, %v673
  %v675 = vpop.f32.mrb[0].mxu0
  %676 = vmatprep.mubr.f32.mxu0 0.0
  %677 = vmatmul.mubr.f32.gmra.mrb[0].mxu0 %v262
  %v678 = vpop.f32.mrb[0].mxu0
  %v679 = vadd.f32 %v102, %v678
  %v680 = vpop.f32.mrb[0].mxu0
  %681 = vmatprep.mubr.f32.mxu0 0.0
  %682 = vmatmul.mubr.f32.gmra.mrb[0].mxu0 %v265
  %v683 = vpop.f32.mrb[0].mxu0
  %v684 = vadd.f32 %v102, %v683
  %v685 = vpop.f32.mrb[0].mxu0
  %686 = vmatprep.mubr.f32.mxu0 0.0
  %687 = vmatmul.mubr.f32.gmra.mrb[0].mxu0 %v268
  %v688 = vpop.f32.mrb[0].mxu0
  %v689 = vadd.f32 %v102, %v688
  %v690 = vpop.f32.mrb[0].mxu0
  %691 = vmatprep.mubr.f32.mxu0 0.0
  %692 = vmatmul.mubr.f32.gmra.mrb[0].mxu0 %v271
  %v693 = vpop.f32.mrb[0].mxu0
  %v694 = vadd.f32 %v102, %v693
  %v695 = vpop.f32.mrb[0].mxu0
  %696 = vmatprep.mubr.f32.mxu0 0.0
  %697 = vmatmul.mubr.f32.gmra.mrb[0].mxu0 %v274
  %v698 = vpop.f32.mrb[0].mxu0
  %v699 = vadd.f32 %v102, %v698
  %v700 = vpop.f32.mrb[0].mxu0
  %701 = vmatprep.mubr.f32.mxu0 0.0
  %702 = vmatmul.mubr.f32.gmra.mrb[0].mxu0 %v277
  %v703 = vpop.f32.mrb[0].mxu0
  %v704 = vadd.f32 %v102, %v703
  %v705 = vpop.f32.mrb[0].mxu0
  %706 = vmatprep.mubr.f32.mxu0 0.0
  %707 = vmatmul.mubr.f32.gmra.mrb[0].mxu0 %v280
  %v708 = vpop.f32.mrb[0].mxu0
  %v709 = vadd.f32 %v102, %v708
  %v710 = vpop.f32.mrb[0].mxu0
  %711 = vmatprep.mubr.f32.mxu0 0.0
  %712 = vmatmul.mubr.f32.gmra.mrb[0].mxu0 %v283
  %v713 = vpop.f32.mrb[0].mxu0
  %v714 = vadd.f32 %v102, %v713
  %v715 = vpop.f32.mrb[0].mxu0
  %716 = vmatprep.mubr.f32.mxu0 0.0
  %717 = vmatmul.mubr.f32.gmra.mrb[0].mxu0 %v286
  %v718 = vpop.f32.mrb[0].mxu0
  %v719 = vadd.f32 %v102, %v718
  %v720 = vpop.f32.mrb[0].mxu0
  %721 = vmatprep.mubr.f32.mxu0 0.0
  %722 = vmatmul.mubr.f32.gmra.mrb[0].mxu0 %v289
  %v723 = vpop.f32.mrb[0].mxu0
  %v724 = vadd.f32 %v102, %v723
  %v725 = vpop.f32.mrb[0].mxu0
  %726 = vmatprep.mubr.f32.mxu0 0.0
  %727 = vmatmul.mubr.f32.gmra.mrb[0].mxu0 %v292
  %v728 = vpop.f32.mrb[0].mxu0
  %v729 = vadd.f32 %v102, %v728
  %v730 = vpop.f32.mrb[0].mxu0
  %731 = vmatprep.mubr.f32.mxu0 0.0
  %732 = vmatmul.mubr.f32.gmra.mrb[0].mxu0 %v295
  %v733 = vpop.f32.mrb[0].mxu0
  %v734 = vadd.f32 %v102, %v733
  %v735 = vpop.f32.mrb[0].mxu0
  %736 = vmatprep.mubr.f32.mxu0 0.0
  %737 = vmatmul.mubr.f32.gmra.mrb[0].mxu0 %v298
  %v738 = vpop.f32.mrb[0].mxu0
  %v739 = vadd.f32 %v102, %v738
  %v740 = vpop.f32.mrb[0].mxu0
  %741 = vmatprep.mubr.f32.mxu0 0.0
  %742 = vmatmul.mubr.f32.gmra.mrb[0].mxu0 %v301
  %v743 = vpop.f32.mrb[0].mxu0
  %v744 = vadd.f32 %v102, %v743
  %v745 = vpop.f32.mrb[0].mxu0
  %746 = vmatprep.mubr.f32.mxu0 0.0
  %747 = vmatmul.mubr.f32.gmra.mrb[0].mxu0 %v304
  %v748 = vpop.f32.mrb[0].mxu0
  %v749 = vadd.f32 %v102, %v748
  %v750 = vpop.f32.mrb[0].mxu0
  %751 = vmatprep.mubr.f32.mxu0 0.0
  %752 = vmatmul.mubr.f32.gmra.mrb[0].mxu0 %v307
  %v753 = vpop.f32.mrb[0].mxu0
  %v754 = vadd.f32 %v102, %v753
  %v755 = vpop.f32.mrb[0].mxu0
  %756 = vmatprep.mubr.f32.mxu0 0.0
  %757 = vmatmul.mubr.f32.gmra.mrb[0].mxu0 %v310
  %v758 = vpop.f32.mrb[0].mxu0
  %v759 = vadd.f32 %v102, %v758
  %v760 = vpop.f32.mrb[0].mxu0
  %761 = vmatprep.mubr.f32.mxu0 0.0
  %762 = vmatmul.mubr.f32.gmra.mrb[0].mxu0 %v313
  %v763 = vpop.f32.mrb[0].mxu0
  %v764 = vadd.f32 %v102, %v763
  %v765 = vpop.f32.mrb[0].mxu0
  %766 = vmatprep.mubr.f32.mxu0 0.0
  %767 = vmatmul.mubr.f32.gmra.mrb[0].mxu0 %v316
  %v768 = vpop.f32.mrb[0].mxu0
  %v769 = vadd.f32 %v102, %v768
  %v770 = vpop.f32.mrb[0].mxu0
  %771 = vmatprep.mubr.f32.mxu0 0.0
  %772 = vmatmul.mubr.f32.gmra.mrb[0].mxu0 %v319
  %v773 = vpop.f32.mrb[0].mxu0
  %v774 = vadd.f32 %v102, %v773
  %v775 = vpop.f32.mrb[0].mxu0
  %776 = vmatprep.mubr.f32.mxu0 0.0
  %777 = vmatmul.mubr.f32.gmra.mrb[0].mxu0 %v322
  %v778 = vpop.f32.mrb[0].mxu0
  %v779 = vadd.f32 %v102, %v778
  %v780 = vpop.f32.mrb[0].mxu0
  %781 = vmatprep.mubr.f32.mxu0 0.0
  %782 = vmatmul.mubr.f32.gmra.mrb[0].mxu0 %v325
  %v783 = vpop.f32.mrb[0].mxu0
  %v784 = vadd.f32 %v102, %v783
  %v785 = vpop.f32.mrb[0].mxu0
  %786 = vmatprep.mubr.f32.mxu0 0.0
  %787 = vmatmul.mubr.f32.gmra.mrb[0].mxu0 %v328
  %v788 = vpop.f32.mrb[0].mxu0
  %v789 = vadd.f32 %v102, %v788
  %v790 = vpop.f32.mrb[0].mxu0
  %791 = vmatprep.mubr.f32.mxu0 0.0
  %792 = vmatmul.mubr.f32.gmra.mrb[0].mxu0 %v331
  %v793 = vpop.f32.mrb[0].mxu0
  %v794 = vadd.f32 %v102, %v793
  %v795 = vpop.f32.mrb[0].mxu0
  %796 = vmatprep.mubr.f32.mxu0 0.0
  %797 = vmatmul.mubr.f32.gmra.mrb[0].mxu0 %v334
  %v798 = vpop.f32.mrb[0].mxu0
  %v799 = vadd.f32 %v102, %v798
  %v800 = vpop.f32.mrb[0].mxu0
  %801 = vmatprep.mubr.f32.mxu0 0.0
  %802 = vmatmul.mubr.f32.gmra.mrb[0].mxu0 %v337
  %v803 = vpop.f32.mrb[0].mxu0
  %v804 = vadd.f32 %v102, %v803
  %v805 = vpop.f32.mrb[0].mxu0
  %806 = vmatprep.mubr.f32.mxu0 0.0
  %807 = vmatmul.mubr.f32.gmra.mrb[0].mxu0 %v340
  %v808 = vpop.f32.mrb[0].mxu0
  %v809 = vadd.f32 %v102, %v808
  %v810 = vpop.f32.mrb[0].mxu0
  %811 = vmatprep.mubr.f32.mxu0 0.0
  %812 = vmatmul.mubr.f32.gmra.mrb[0].mxu0 %v343
  %v813 = vpop.f32.mrb[0].mxu0
  %v814 = vadd.f32 %v102, %v813
  %v815 = vpop.f32.mrb[0].mxu0
  %816 = vmatprep.mubr.f32.mxu0 0.0
  %817 = vmatmul.mubr.f32.gmra.mrb[0].mxu0 %v346
  %v818 = vpop.f32.mrb[0].mxu0
  %v819 = vadd.f32 %v102, %v818
  %v820 = vpop.f32.mrb[0].mxu0
  %821 = vdwg.mxu0
  %v822 = vmax.f32 %v419, 0.0
  %v823 = vmax.f32 %v424, 0.0
  %v824 = vmax.f32 %v429, 0.0
  %v825 = vmax.f32 %v434, 0.0
  %v826 = vmax.f32 %v439, 0.0
  %v827 = vmax.f32 %v444, 0.0
  %v828 = vmax.f32 %v449, 0.0
  %v829 = vmax.f32 %v454, 0.0
  %v830 = vmax.f32 %v459, 0.0
  %v831 = vmax.f32 %v464, 0.0
  %v832 = vmax.f32 %v469, 0.0
  %v833 = vmax.f32 %v474, 0.0
  %v834 = vmax.f32 %v479, 0.0
  %v835 = vmax.f32 %v484, 0.0
  %v836 = vmax.f32 %v489, 0.0
  %v837 = vmax.f32 %v494, 0.0
  %v838 = vmax.f32 %v499, 0.0
  %v839 = vmax.f32 %v504, 0.0
  %v840 = vmax.f32 %v509, 0.0
  %v841 = vmax.f32 %v514, 0.0
  %v842 = vmax.f32 %v519, 0.0
  %v843 = vmax.f32 %v524, 0.0
  %v844 = vmax.f32 %v529, 0.0
  %v845 = vmax.f32 %v534, 0.0
  %v846 = vmax.f32 %v539, 0.0
  %v847 = vmax.f32 %v544, 0.0
  %v848 = vmax.f32 %v549, 0.0
  %v849 = vmax.f32 %v554, 0.0
  %v850 = vmax.f32 %v559, 0.0
  %v851 = vmax.f32 %v564, 0.0
  %v852 = vmax.f32 %v569, 0.0
  %v853 = vmax.f32 %v574, 0.0
  %v854 = vmax.f32 %v579, 0.0
  %v855 = vmax.f32 %v584, 0.0
  %v856 = vmax.f32 %v589, 0.0
  %v857 = vmax.f32 %v594, 0.0
  %v858 = vmax.f32 %v599, 0.0
  %v859 = vmax.f32 %v604, 0.0
  %v860 = vmax.f32 %v609, 0.0
  %v861 = vmax.f32 %v614, 0.0
  %v862 = vmax.f32 %v619, 0.0
  %v863 = vmax.f32 %v624, 0.0
  %v864 = vmax.f32 %v629, 0.0
  %v865 = vmax.f32 %v634, 0.0
  %v866 = vmax.f32 %v639, 0.0
  %v867 = vmax.f32 %v644, 0.0
  %v868 = vmax.f32 %v649, 0.0
  %v869 = vmax.f32 %v654, 0.0
  %v870 = vmax.f32 %v659, 0.0
  %v871 = vmax.f32 %v664, 0.0
  %v872 = vmax.f32 %v669, 0.0
  %v873 = vmax.f32 %v674, 0.0
  %v874 = vmax.f32 %v679, 0.0
  %v875 = vmax.f32 %v684, 0.0
  %v876 = vmax.f32 %v689, 0.0
  %v877 = vmax.f32 %v694, 0.0
  %v878 = vmax.f32 %v699, 0.0
  %v879 = vmax.f32 %v704, 0.0
  %v880 = vmax.f32 %v709, 0.0
  %v881 = vmax.f32 %v714, 0.0
  %v882 = vmax.f32 %v719, 0.0
  %v883 = vmax.f32 %v724, 0.0
  %v884 = vmax.f32 %v729, 0.0
  %v885 = vmax.f32 %v734, 0.0
  %v886 = vmax.f32 %v739, 0.0
  %v887 = vmax.f32 %v744, 0.0
  %v888 = vmax.f32 %v749, 0.0
  %v889 = vmax.f32 %v754, 0.0
  %v890 = vmax.f32 %v759, 0.0
  %v891 = vmax.f32 %v764, 0.0
  %v892 = vmax.f32 %v769, 0.0
  %v893 = vmax.f32 %v774, 0.0
  %v894 = vmax.f32 %v779, 0.0
  %v895 = vmax.f32 %v784, 0.0
  %v896 = vmax.f32 %v789, 0.0
  %v897 = vmax.f32 %v794, 0.0
  %v898 = vmax.f32 %v799, 0.0
  %v899 = vmax.f32 %v804, 0.0
  %v900 = vmax.f32 %v809, 0.0
  %v901 = vmax.f32 %v814, 0.0
  %v902 = vmax.f32 %v819, 0.0
  %vm903 = vcmask 523264
  %904 = vst.msk [vmem:[%s3] sm:$0xff] %vm903, %v822
  %905 = vst.msk [vmem:[%s3 + $0x8] sm:$0xff] %vm903, %v823
  %906 = vst.msk [vmem:[%s3 + $0x10] sm:$0xff] %vm903, %v824
  %907 = vst.msk [vmem:[%s3 + $0x18] sm:$0xff] %vm903, %v825
  %908 = vst.msk [vmem:[%s3 + $0x20] sm:$0xff] %vm903, %v826
  %909 = vst.msk [vmem:[%s3 + $0x28] sm:$0xff] %vm903, %v827
  %910 = vst.msk [vmem:[%s3 + $0x30] sm:$0xff] %vm903, %v828
  %911 = vst.msk [vmem:[%s3 + $0x38] sm:$0xff] %vm903, %v829
  %912 = vst.msk [vmem:[%s3 + $0x40] sm:$0xff] %vm903, %v830
  %913 = vst.msk [vmem:[%s3 + $0x48] sm:$0xff] %vm903, %v831
  %914 = vst.msk [vmem:[%s3 + $0x50] sm:$0xff] %vm903, %v832
  %915 = vst.msk [vmem:[%s3 + $0x58] sm:$0xff] %vm903, %v833
  %916 = vst.msk [vmem:[%s3 + $0x60] sm:$0xff] %vm903, %v834
  %917 = vst.msk [vmem:[%s3 + $0x68] sm:$0xff] %vm903, %v835
  %918 = vst.msk [vmem:[%s3 + $0x70] sm:$0xff] %vm903, %v836
  %919 = vst.msk [vmem:[%s3 + $0x78] sm:$0xff] %vm903, %v837
  %920 = vst.msk [vmem:[%s3 + $0x80] sm:$0xff] %vm903, %v838
  %921 = vst.msk [vmem:[%s3 + $0x88] sm:$0xff] %vm903, %v839
  %922 = vst.msk [vmem:[%s3 + $0x90] sm:$0xff] %vm903, %v840
  %923 = vst.msk [vmem:[%s3 + $0x98] sm:$0xff] %vm903, %v841
  %924 = vst.msk [vmem:[%s3 + $0xa0] sm:$0xff] %vm903, %v842
  %925 = vst.msk [vmem:[%s3 + $0xa8] sm:$0xff] %vm903, %v843
  %926 = vst.msk [vmem:[%s3 + $0xb0] sm:$0xff] %vm903, %v844
  %927 = vst.msk [vmem:[%s3 + $0xb8] sm:$0xff] %vm903, %v845
  %928 = vst.msk [vmem:[%s3 + $0xc0] sm:$0xff] %vm903, %v846
  %929 = vst.msk [vmem:[%s3 + $0xc8] sm:$0xff] %vm903, %v847
  %930 = vst.msk [vmem:[%s3 + $0xd0] sm:$0xff] %vm903, %v848
  %931 = vst.msk [vmem:[%s3 + $0xd8] sm:$0xff] %vm903, %v849
  %932 = vst.msk [vmem:[%s3 + $0xe0] sm:$0xff] %vm903, %v850
  %933 = vst.msk [vmem:[%s3 + $0xe8] sm:$0xff] %vm903, %v851
  %934 = vst.msk [vmem:[%s3 + $0xf0] sm:$0xff] %vm903, %v852
  %935 = vst.msk [vmem:[%s3 + $0xf8] sm:$0xff] %vm903, %v853
  %936 = vst.msk [vmem:[%s3 + $0x100] sm:$0xff] %vm903, %v854
  %937 = vst.msk [vmem:[%s3 + $0x108] sm:$0xff] %vm903, %v855
  %938 = vst.msk [vmem:[%s3 + $0x110] sm:$0xff] %vm903, %v856
  %939 = vst.msk [vmem:[%s3 + $0x118] sm:$0xff] %vm903, %v857
  %940 = vst.msk [vmem:[%s3 + $0x120] sm:$0xff] %vm903, %v858
  %941 = vst.msk [vmem:[%s3 + $0x128] sm:$0xff] %vm903, %v859
  %942 = vst.msk [vmem:[%s3 + $0x130] sm:$0xff] %vm903, %v860
  %943 = vst.msk [vmem:[%s3 + $0x138] sm:$0xff] %vm903, %v861
  %944 = vst.msk [vmem:[%s3 + $0x140] sm:$0xff] %vm903, %v862
  %945 = vst.msk [vmem:[%s3 + $0x148] sm:$0xff] %vm903, %v863
  %946 = vst.msk [vmem:[%s3 + $0x150] sm:$0xff] %vm903, %v864
  %947 = vst.msk [vmem:[%s3 + $0x158] sm:$0xff] %vm903, %v865
  %948 = vst.msk [vmem:[%s3 + $0x160] sm:$0xff] %vm903, %v866
  %949 = vst.msk [vmem:[%s3 + $0x168] sm:$0xff] %vm903, %v867
  %950 = vst.msk [vmem:[%s3 + $0x170] sm:$0xff] %vm903, %v868
  %951 = vst.msk [vmem:[%s3 + $0x178] sm:$0xff] %vm903, %v869
  %952 = vst.msk [vmem:[%s3 + $0x180] sm:$0xff] %vm903, %v870
  %953 = vst.msk [vmem:[%s3 + $0x188] sm:$0xff] %vm903, %v871
  %954 = vst.msk [vmem:[%s3 + $0x190] sm:$0xff] %vm903, %v872
  %955 = vst.msk [vmem:[%s3 + $0x198] sm:$0xff] %vm903, %v873
  %956 = vst.msk [vmem:[%s3 + $0x1a0] sm:$0xff] %vm903, %v874
  %957 = vst.msk [vmem:[%s3 + $0x1a8] sm:$0xff] %vm903, %v875
  %958 = vst.msk [vmem:[%s3 + $0x1b0] sm:$0xff] %vm903, %v876
  %959 = vst.msk [vmem:[%s3 + $0x1b8] sm:$0xff] %vm903, %v877
  %960 = vst.msk [vmem:[%s3 + $0x1c0] sm:$0xff] %vm903, %v878
  %961 = vst.msk [vmem:[%s3 + $0x1c8] sm:$0xff] %vm903, %v879
  %962 = vst.msk [vmem:[%s3 + $0x1d0] sm:$0xff] %vm903, %v880
  %963 = vst.msk [vmem:[%s3 + $0x1d8] sm:$0xff] %vm903, %v881
  %964 = vst.msk [vmem:[%s3 + $0x1e0] sm:$0xff] %vm903, %v882
  %965 = vst.msk [vmem:[%s3 + $0x1e8] sm:$0xff] %vm903, %v883
  %966 = vst.msk [vmem:[%s3 + $0x1f0] sm:$0xff] %vm903, %v884
  %967 = vst.msk [vmem:[%s3 + $0x1f8] sm:$0xff] %vm903, %v885
  %968 = vst.msk [vmem:[%s3 + $0x200] sm:$0xff] %vm903, %v886
  %969 = vst.msk [vmem:[%s3 + $0x208] sm:$0xff] %vm903, %v887
  %970 = vst.msk [vmem:[%s3 + $0x210] sm:$0xff] %vm903, %v888
  %971 = vst.msk [vmem:[%s3 + $0x218] sm:$0xff] %vm903, %v889
  %972 = vst.msk [vmem:[%s3 + $0x220] sm:$0xff] %vm903, %v890
  %973 = vst.msk [vmem:[%s3 + $0x228] sm:$0xff] %vm903, %v891
  %974 = vst.msk [vmem:[%s3 + $0x230] sm:$0xff] %vm903, %v892
  %975 = vst.msk [vmem:[%s3 + $0x238] sm:$0xff] %vm903, %v893
  %976 = vst.msk [vmem:[%s3 + $0x240] sm:$0xff] %vm903, %v894
  %977 = vst.msk [vmem:[%s3 + $0x248] sm:$0xff] %vm903, %v895
  %978 = vst.msk [vmem:[%s3 + $0x250] sm:$0xff] %vm903, %v896
  %979 = vst.msk [vmem:[%s3 + $0x258] sm:$0xff] %vm903, %v897
  %980 = vst.msk [vmem:[%s3 + $0x260] sm:$0xff] %vm903, %v898
  %981 = vst.msk [vmem:[%s3 + $0x268] sm:$0xff] %vm903, %v899
  %982 = vst.msk [vmem:[%s3 + $0x270] sm:$0xff] %vm903, %v900
  %983 = vst.msk [vmem:[%s3 + $0x278] sm:$0xff] %vm903, %v901
  %984 = vst.msk [vmem:[%s3 + $0x280] sm:$0xff] %vm903, %v902
  // Predicated region
  $region14: #{conv_layer_forward.3} parent=0 // pred_check
    _
  $region15: #{conv_layer_forward.3} parent=0 // pred_check_branch
    %986 = sbr.rel (0) target = $region17
  $region16: #{conv_layer_forward.3} parent=0 // pred_region
    _
  $region17: #{conv_layer_forward.3} parent=0 // pred_fallthru
    _
  // Predicated region
  $region18: #{conv_layer_forward.3} parent=0 // pred_check
    _
  $region19: #{conv_layer_forward.3} parent=0 // pred_check_branch
    %988 = sbr.rel (0) target = $region21
  $region20: #{conv_layer_forward.3} parent=0 // pred_region
    _
  $region21: #{conv_layer_forward.3} parent=0 // pred_fallthru
    _

// kernel: conv_layer_forward.4
$region0: #{conv_layer_forward.4}
  #allocation0 [shape = 'u32[]', space=smem, size = 0x4, offset = 0x4, fixed_abs, tag = 'smem constant byte address 0x4 - core index']
  #allocation1 [shape = 'u32[144,128]{1,0:T(1,128)}', space=vmem, size = 0x12000, scoped, tag = 'internal scratch']
  %s0 = inlined_call_operand.vmem [shape: f32[162,576], index: 0, kind: input, shape index: {}]
  %s1 = inlined_call_operand.vmem [shape: f32[576,128], index: 1, kind: input, shape index: {}]
  %s2 = inlined_call_operand.vmem [shape: f32[1,128], index: 2, kind: input, shape index: {}]
  %s3 = inlined_call_operand.vmem [shape: f32[162,128], index: 3, kind: output, shape index: {}]
  %s4 = sld [smem:[#allocation0]]
  $region22: #{conv_layer_forward.4} parent=0
    _
  %s6 = ssub.s32 1, %s4
  %s7 = scalar_select 0, %s6, %s4
  // Predicated region
  $region2: #{conv_layer_forward.4} parent=0 // pred_check
    _
  $region3: #{conv_layer_forward.4} parent=0 // pred_check_branch
    %9 = sbr.rel (0) target = $region5
  $region4: #{conv_layer_forward.4} parent=0 // pred_region
    _
  $region5: #{conv_layer_forward.4} parent=0 // pred_fallthru
    _
  // Predicated region
  $region6: #{conv_layer_forward.4} parent=0 // pred_check
    _
  $region7: #{conv_layer_forward.4} parent=0 // pred_check_branch
    %11 = sbr.rel (0) target = $region9
  $region8: #{conv_layer_forward.4} parent=0 // pred_region
    _
  $region9: #{conv_layer_forward.4} parent=0 // pred_fallthru
    _
  // Predicated region
  $region10: #{conv_layer_forward.4} parent=0 // pred_check
    _
  $region11: #{conv_layer_forward.4} parent=0 // pred_check_branch
    %13 = sbr.rel (0) target = $region13
  $region12: #{conv_layer_forward.4} parent=0 // pred_region
    _
  $region13: #{conv_layer_forward.4} parent=0 // pred_fallthru
    _
  %v14 = vld [vmem:[%s0] sm:$0xff]
  %v15 = vld [vmem:[%s0 + $0x8] sm:$0xff]
  %v16 = vld [vmem:[%s0 + $0x10] sm:$0xff]
  %v17 = vld [vmem:[%s0 + $0x18] sm:$0xff]
  %v18 = vld [vmem:[%s0 + $0x20] sm:$0xff]
  %v19 = vld [vmem:[%s0 + $0x28] sm:$0xff]
  %v20 = vld [vmem:[%s0 + $0x30] sm:$0xff]
  %v21 = vld [vmem:[%s0 + $0x38] sm:$0xff]
  %v22 = vld [vmem:[%s0 + $0x40] sm:$0xff]
  %v23 = vld [vmem:[%s0 + $0x48] sm:$0xff]
  %v24 = vld [vmem:[%s0 + $0x50] sm:$0xff]
  %v25 = vld [vmem:[%s0 + $0x58] sm:$0xff]
  %v26 = vld [vmem:[%s0 + $0x60] sm:$0xff]
  %v27 = vld [vmem:[%s0 + $0x68] sm:$0xff]
  %v28 = vld [vmem:[%s0 + $0x70] sm:$0xff]
  %v29 = vld [vmem:[%s0 + $0x78] sm:$0xff]
  %v30 = vld [vmem:[%s0 + $0x80] sm:$0xff]
  %v31 = vld [vmem:[%s0 + $0x88] sm:$0xff]
  %v32 = vld [vmem:[%s0 + $0x90] sm:$0xff]
  %v33 = vld [vmem:[%s0 + $0x98] sm:$0xff]
  %v34 = vld [vmem:[%s0 + $0xa0] sm:$0xff]
  %v35 = vld [vmem:[%s0 + $0xa8] sm:$0xff]
  %v36 = vld [vmem:[%s0 + $0xb0] sm:$0xff]
  %v37 = vld [vmem:[%s0 + $0xb8] sm:$0xff]
  %v38 = vld [vmem:[%s0 + $0xc0] sm:$0xff]
  %v39 = vld [vmem:[%s0 + $0xc8] sm:$0xff]
  %v40 = vld [vmem:[%s0 + $0xd0] sm:$0xff]
  %v41 = vld [vmem:[%s0 + $0xd8] sm:$0xff]
  %v42 = vld [vmem:[%s0 + $0xe0] sm:$0xff]
  %v43 = vld [vmem:[%s0 + $0xe8] sm:$0xff]
  %v44 = vld [vmem:[%s0 + $0xf0] sm:$0xff]
  %v45 = vld [vmem:[%s0 + $0xf8] sm:$0xff]
  %v46 = vld [vmem:[%s0 + $0x100] sm:$0xff]
  %v47 = vld [vmem:[%s0 + $0x108] sm:$0xff]
  %v48 = vld [vmem:[%s0 + $0x110] sm:$0xff]
  %v49 = vld [vmem:[%s0 + $0x118] sm:$0xff]
  %v50 = vld [vmem:[%s0 + $0x120] sm:$0xff]
  %v51 = vld [vmem:[%s0 + $0x128] sm:$0xff]
  %v52 = vld [vmem:[%s0 + $0x130] sm:$0xff]
  %v53 = vld [vmem:[%s0 + $0x138] sm:$0xff]
  %v54 = vld [vmem:[%s0 + $0x140] sm:$0xff]
  %v55 = vld [vmem:[%s0 + $0x148] sm:$0xff]
  %v56 = vld [vmem:[%s0 + $0x150] sm:$0xff]
  %v57 = vld [vmem:[%s0 + $0x158] sm:$0xff]
  %v58 = vld [vmem:[%s0 + $0x160] sm:$0xff]
  %v59 = vld [vmem:[%s0 + $0x168] sm:$0xff]
  %v60 = vld [vmem:[%s0 + $0x170] sm:$0xff]
  %v61 = vld [vmem:[%s0 + $0x178] sm:$0xff]
  %v62 = vld [vmem:[%s0 + $0x180] sm:$0xff]
  %v63 = vld [vmem:[%s0 + $0x188] sm:$0xff]
  %v64 = vld [vmem:[%s0 + $0x190] sm:$0xff]
  %v65 = vld [vmem:[%s0 + $0x198] sm:$0xff]
  %v66 = vld [vmem:[%s0 + $0x1a0] sm:$0xff]
  %v67 = vld [vmem:[%s0 + $0x1a8] sm:$0xff]
  %v68 = vld [vmem:[%s0 + $0x1b0] sm:$0xff]
  %v69 = vld [vmem:[%s0 + $0x1b8] sm:$0xff]
  %v70 = vld [vmem:[%s0 + $0x1c0] sm:$0xff]
  %v71 = vld [vmem:[%s0 + $0x1c8] sm:$0xff]
  %v72 = vld [vmem:[%s0 + $0x1d0] sm:$0xff]
  %v73 = vld [vmem:[%s0 + $0x1d8] sm:$0xff]
  %v74 = vld [vmem:[%s0 + $0x1e0] sm:$0xff]
  %v75 = vld [vmem:[%s0 + $0x1e8] sm:$0xff]
  %v76 = vld [vmem:[%s0 + $0x1f0] sm:$0xff]
  %v77 = vld [vmem:[%s0 + $0x1f8] sm:$0xff]
  %v78 = vld [vmem:[%s0 + $0x200] sm:$0xff]
  %v79 = vld [vmem:[%s0 + $0x208] sm:$0xff]
  %v80 = vld [vmem:[%s0 + $0x210] sm:$0xff]
  %v81 = vld [vmem:[%s0 + $0x218] sm:$0xff]
  %v82 = vld [vmem:[%s0 + $0x220] sm:$0xff]
  %v83 = vld [vmem:[%s0 + $0x228] sm:$0xff]
  %v84 = vld [vmem:[%s0 + $0x230] sm:$0xff]
  %v85 = vld [vmem:[%s0 + $0x238] sm:$0xff]
  %v86 = vld [vmem:[%s0 + $0x240] sm:$0xff]
  %v87 = vld [vmem:[%s0 + $0x248] sm:$0xff]
  %v88 = vld [vmem:[%s0 + $0x250] sm:$0xff]
  %v89 = vld [vmem:[%s0 + $0x258] sm:$0xff]
  %v90 = vld [vmem:[%s0 + $0x260] sm:$0xff]
  %v91 = vld [vmem:[%s0 + $0x268] sm:$0xff]
  %v92 = vld [vmem:[%s0 + $0x270] sm:$0xff]
  %v93 = vld [vmem:[%s0 + $0x278] sm:$0xff]
  %v94 = vld [vmem:[%s0 + $0x280] sm:$0xff]
  %v95 = vld [vmem:[%s0 + $0x288] sm:$0xff]
  %v96 = vld [vmem:[%s0 + $0x290] sm:$0xff]
  %v97 = vld [vmem:[%s0 + $0x298] sm:$0xff]
  %v98 = vld [vmem:[%s0 + $0x2a0] sm:$0xff]
  %v99 = vld [vmem:[%s0 + $0x2a8] sm:$0xff]
  %v100 = vld [vmem:[%s0 + $0x2b0] sm:$0xff]
  %v101 = vld [vmem:[%s0 + $0x2b8] sm:$0xff]
  %v102 = vld [vmem:[%s0 + $0x2c0] sm:$0xff]
  %v103 = vld [vmem:[%s0 + $0x2c8] sm:$0xff]
  %v104 = vld [vmem:[%s0 + $0x2d0] sm:$0xff]
  %v105 = vld [vmem:[%s0 + $0x2d8] sm:$0xff]
  %v106 = vld [vmem:[%s0 + $0x2e0] sm:$0xff]
  %v107 = vld [vmem:[%s0 + $0x2e8] sm:$0xff]
  %v108 = vld [vmem:[%s0 + $0x2f0] sm:$0xff]
  %v109 = vld [vmem:[%s0 + $0x2f8] sm:$0xff]
  %v110 = vld [vmem:[%s0 + $0x300] sm:$0xff]
  %v111 = vld [vmem:[%s0 + $0x308] sm:$0xff]
  %v112 = vld [vmem:[%s0 + $0x310] sm:$0xff]
  %v113 = vld [vmem:[%s0 + $0x318] sm:$0xff]
  %v114 = vld [vmem:[%s0 + $0x320] sm:$0x3]
  %v115 = vld [vmem:[%s0 + $0x328] sm:$0x3]
  %v116 = vld [vmem:[%s0 + $0x330] sm:$0x3]
  %v117 = vld [vmem:[%s0 + $0x338] sm:$0x3]
  %v118 = vld [vmem:[%s0 + $0x340] sm:$0x3]
  %v119 = vld [vmem:[%s1] sm:$0xff]
  %v120 = vld [vmem:[%s1 + $0x8] sm:$0xff]
  %v121 = vld [vmem:[%s1 + $0x10] sm:$0xff]
  %v122 = vld [vmem:[%s1 + $0x18] sm:$0xff]
  %v123 = vld [vmem:[%s1 + $0x20] sm:$0xff]
  %v124 = vld [vmem:[%s1 + $0x28] sm:$0xff]
  %v125 = vld [vmem:[%s1 + $0x30] sm:$0xff]
  %v126 = vld [vmem:[%s1 + $0x38] sm:$0xff]
  %v127 = vld [vmem:[%s1 + $0x40] sm:$0xff]
  %v128 = vld [vmem:[%s1 + $0x48] sm:$0xff]
  %v129 = vld [vmem:[%s1 + $0x50] sm:$0xff]
  %v130 = vld [vmem:[%s1 + $0x58] sm:$0xff]
  %v131 = vld [vmem:[%s1 + $0x60] sm:$0xff]
  %v132 = vld [vmem:[%s1 + $0x68] sm:$0xff]
  %v133 = vld [vmem:[%s1 + $0x70] sm:$0xff]
  %v134 = vld [vmem:[%s1 + $0x78] sm:$0xff]
  %v135 = vld [vmem:[%s1 + $0x80] sm:$0xff]
  %v136 = vld [vmem:[%s1 + $0x88] sm:$0xff]
  %v137 = vld [vmem:[%s1 + $0x90] sm:$0xff]
  %v138 = vld [vmem:[%s1 + $0x98] sm:$0xff]
  %v139 = vld [vmem:[%s1 + $0xa0] sm:$0xff]
  %v140 = vld [vmem:[%s1 + $0xa8] sm:$0xff]
  %v141 = vld [vmem:[%s1 + $0xb0] sm:$0xff]
  %v142 = vld [vmem:[%s1 + $0xb8] sm:$0xff]
  %v143 = vld [vmem:[%s1 + $0xc0] sm:$0xff]
  %v144 = vld [vmem:[%s1 + $0xc8] sm:$0xff]
  %v145 = vld [vmem:[%s1 + $0xd0] sm:$0xff]
  %v146 = vld [vmem:[%s1 + $0xd8] sm:$0xff]
  %v147 = vld [vmem:[%s1 + $0xe0] sm:$0xff]
  %v148 = vld [vmem:[%s1 + $0xe8] sm:$0xff]
  %v149 = vld [vmem:[%s1 + $0xf0] sm:$0xff]
  %v150 = vld [vmem:[%s1 + $0xf8] sm:$0xff]
  %v151 = vld [vmem:[%s1 + $0x100] sm:$0xff]
  %v152 = vld [vmem:[%s1 + $0x108] sm:$0xff]
  %v153 = vld [vmem:[%s1 + $0x110] sm:$0xff]
  %v154 = vld [vmem:[%s1 + $0x118] sm:$0xff]
  %v155 = vld [vmem:[%s1 + $0x120] sm:$0xff]
  %v156 = vld [vmem:[%s1 + $0x128] sm:$0xff]
  %v157 = vld [vmem:[%s1 + $0x130] sm:$0xff]
  %v158 = vld [vmem:[%s1 + $0x138] sm:$0xff]
  %v159 = vld [vmem:[%s1 + $0x140] sm:$0xff]
  %v160 = vld [vmem:[%s1 + $0x148] sm:$0xff]
  %v161 = vld [vmem:[%s1 + $0x150] sm:$0xff]
  %v162 = vld [vmem:[%s1 + $0x158] sm:$0xff]
  %v163 = vld [vmem:[%s1 + $0x160] sm:$0xff]
  %v164 = vld [vmem:[%s1 + $0x168] sm:$0xff]
  %v165 = vld [vmem:[%s1 + $0x170] sm:$0xff]
  %v166 = vld [vmem:[%s1 + $0x178] sm:$0xff]
  %v167 = vld [vmem:[%s1 + $0x180] sm:$0xff]
  %v168 = vld [vmem:[%s1 + $0x188] sm:$0xff]
  %v169 = vld [vmem:[%s1 + $0x190] sm:$0xff]
  %v170 = vld [vmem:[%s1 + $0x198] sm:$0xff]
  %v171 = vld [vmem:[%s1 + $0x1a0] sm:$0xff]
  %v172 = vld [vmem:[%s1 + $0x1a8] sm:$0xff]
  %v173 = vld [vmem:[%s1 + $0x1b0] sm:$0xff]
  %v174 = vld [vmem:[%s1 + $0x1b8] sm:$0xff]
  %v175 = vld [vmem:[%s1 + $0x1c0] sm:$0xff]
  %v176 = vld [vmem:[%s1 + $0x1c8] sm:$0xff]
  %v177 = vld [vmem:[%s1 + $0x1d0] sm:$0xff]
  %v178 = vld [vmem:[%s1 + $0x1d8] sm:$0xff]
  %v179 = vld [vmem:[%s1 + $0x1e0] sm:$0xff]
  %v180 = vld [vmem:[%s1 + $0x1e8] sm:$0xff]
  %v181 = vld [vmem:[%s1 + $0x1f0] sm:$0xff]
  %v182 = vld [vmem:[%s1 + $0x1f8] sm:$0xff]
  %v183 = vld [vmem:[%s1 + $0x200] sm:$0xff]
  %v184 = vld [vmem:[%s1 + $0x208] sm:$0xff]
  %v185 = vld [vmem:[%s1 + $0x210] sm:$0xff]
  %v186 = vld [vmem:[%s1 + $0x218] sm:$0xff]
  %v187 = vld [vmem:[%s1 + $0x220] sm:$0xff]
  %v188 = vld [vmem:[%s1 + $0x228] sm:$0xff]
  %v189 = vld [vmem:[%s1 + $0x230] sm:$0xff]
  %v190 = vld [vmem:[%s1 + $0x238] sm:$0xff]
  %v191 = vld [vmem:[%s2] sm:$0x1]
  %v193 = vlaneseq
  %v194 = vshrl.u32 %v193, 7
  %v195 = vsub.s32 0, %v194
  %v196 = vrot.slane %v191, %v195
  %vm198 = vcmask 523264
  %v200 = vsel %vm198, %v18, 0
  %v203 = vsel %vm198, %v23, 0
  %v206 = vsel %vm198, %v28, 0
  %v209 = vsel %vm198, %v33, 0
  %v212 = vsel %vm198, %v38, 0
  %v215 = vsel %vm198, %v43, 0
  %v218 = vsel %vm198, %v48, 0
  %v221 = vsel %vm198, %v53, 0
  %v224 = vsel %vm198, %v58, 0
  %v227 = vsel %vm198, %v63, 0
  %v230 = vsel %vm198, %v68, 0
  %v233 = vsel %vm198, %v73, 0
  %v236 = vsel %vm198, %v78, 0
  %v239 = vsel %vm198, %v83, 0
  %v242 = vsel %vm198, %v88, 0
  %v245 = vsel %vm198, %v93, 0
  %v248 = vsel %vm198, %v98, 0
  %v251 = vsel %vm198, %v103, 0
  %v254 = vsel %vm198, %v108, 0
  %v257 = vsel %vm198, %v113, 0
  %v260 = vsel %vm198, %v118, 0
  %262 = vmatprep.subr.mxu0 0.0
  %263 = vmatpush1.msra.mxu0 %v119
  %264 = vmatprep.subr.mxu0 0.0
  %265 = vmatpush1.msra.mxu0 %v120
  %266 = vmatprep.subr.mxu0 0.0
  %267 = vmatpush1.msra.mxu0 %v121
  %268 = vmatprep.subr.mxu0 0.0
  %269 = vmatpush1.msra.mxu0 %v122
  %270 = vmatprep.subr.mxu0 0.0
  %271 = vmatpush1.msra.mxu0 %v123
  %272 = vmatprep.subr.mxu0 0.0
  %273 = vmatpush1.msra.mxu0 %v124
  %274 = vmatprep.subr.mxu0 0.0
  %275 = vmatpush1.msra.mxu0 %v125
  %276 = vmatprep.subr.mxu0 0.0
  %277 = vmatpush1.msra.mxu0 %v126
  %278 = vmatprep.subr.mxu0 0.0
  %279 = vmatpush1.msra.mxu0 %v127
  %280 = vmatprep.subr.mxu0 0.0
  %281 = vmatpush1.msra.mxu0 %v128
  %282 = vmatprep.subr.mxu0 0.0
  %283 = vmatpush1.msra.mxu0 %v129
  %284 = vmatprep.subr.mxu0 0.0
  %285 = vmatpush1.msra.mxu0 %v130
  %286 = vmatprep.subr.mxu0 0.0
  %287 = vmatpush1.msra.mxu0 %v131
  %288 = vmatprep.subr.mxu0 0.0
  %289 = vmatpush1.msra.mxu0 %v132
  %290 = vmatprep.subr.mxu0 0.0
  %291 = vmatpush1.msra.mxu0 %v133
  %292 = vmatprep.subr.mxu0 0.0
  %293 = vmatpush1.msra.mxu0 %v134
  %294 = vmatprep.subr.mxu0 0.0
  %295 = vmatpush1.msra.mxu0 %v135
  %296 = vmatprep.subr.mxu0 0.0
  %297 = vmatpush1.msra.mxu0 %v136
  %298 = vmatprep.subr.mxu0 0.0
  %299 = vmatpush1.msra.mxu0 %v137
  %300 = vmatprep.subr.mxu0 0.0
  %301 = vmatpush1.msra.mxu0 %v138
  %302 = vmatprep.subr.mxu0 0.0
  %303 = vmatpush1.msra.mxu0 %v139
  %304 = vmatprep.subr.mxu0 0.0
  %305 = vmatpush1.msra.mxu0 %v140
  %306 = vmatprep.subr.mxu0 0.0
  %307 = vmatpush1.msra.mxu0 %v141
  %308 = vmatprep.subr.mxu0 0.0
  %309 = vmatpush1.msra.mxu0 %v142
  %310 = vmatprep.subr.mxu0 0.0
  %311 = vmatpush1.msra.mxu0 %v143
  %312 = vmatprep.subr.mxu0 0.0
  %313 = vmatpush1.msra.mxu0 %v144
  %314 = vmatprep.subr.mxu0 0.0
  %315 = vmatpush1.msra.mxu0 %v145
  %316 = vmatprep.subr.mxu0 0.0
  %317 = vmatpush1.msra.mxu0 %v146
  %318 = vmatprep.subr.mxu0 0.0
  %319 = vmatpush1.msra.mxu0 %v147
  %320 = vmatprep.subr.mxu0 0.0
  %321 = vmatpush1.msra.mxu0 %v148
  %322 = vmatprep.subr.mxu0 0.0
  %323 = vmatpush1.msra.mxu0 %v149
  %324 = vmatprep.subr.mxu0 0.0
  %325 = vmatpush1.msra.mxu0 %v150
  %326 = vmatprep.mubr.f32.mxu0 %v15
  %327 = vmatmul.mubr.f32.gmra.mrb[0].mxu0 %v14
  %v328 = vpop.f32.mrb[0].mxu0
  %v329 = vadd.f32 %v196, %v328
  %v330 = vpop.f32.mrb[0].mxu0
  %331 = vmatprep.mubr.f32.mxu0 %v20
  %332 = vmatmul.mubr.f32.gmra.mrb[0].mxu0 %v19
  %v333 = vpop.f32.mrb[0].mxu0
  %v334 = vadd.f32 %v196, %v333
  %v335 = vpop.f32.mrb[0].mxu0
  %336 = vmatprep.mubr.f32.mxu0 %v25
  %337 = vmatmul.mubr.f32.gmra.mrb[0].mxu0 %v24
  %v338 = vpop.f32.mrb[0].mxu0
  %v339 = vadd.f32 %v196, %v338
  %v340 = vpop.f32.mrb[0].mxu0
  %341 = vmatprep.mubr.f32.mxu0 %v30
  %342 = vmatmul.mubr.f32.gmra.mrb[0].mxu0 %v29
  %v343 = vpop.f32.mrb[0].mxu0
  %v344 = vadd.f32 %v196, %v343
  %v345 = vpop.f32.mrb[0].mxu0
  %346 = vmatprep.mubr.f32.mxu0 %v35
  %347 = vmatmul.mubr.f32.gmra.mrb[0].mxu0 %v34
  %v348 = vpop.f32.mrb[0].mxu0
  %v349 = vadd.f32 %v196, %v348
  %v350 = vpop.f32.mrb[0].mxu0
  %351 = vmatprep.mubr.f32.mxu0 %v40
  %352 = vmatmul.mubr.f32.gmra.mrb[0].mxu0 %v39
  %v353 = vpop.f32.mrb[0].mxu0
  %v354 = vadd.f32 %v196, %v353
  %v355 = vpop.f32.mrb[0].mxu0
  %356 = vmatprep.mubr.f32.mxu0 %v45
  %357 = vmatmul.mubr.f32.gmra.mrb[0].mxu0 %v44
  %v358 = vpop.f32.mrb[0].mxu0
  %v359 = vadd.f32 %v196, %v358
  %v360 = vpop.f32.mrb[0].mxu0
  %361 = vmatprep.mubr.f32.mxu0 %v50
  %362 = vmatmul.mubr.f32.gmra.mrb[0].mxu0 %v49
  %v363 = vpop.f32.mrb[0].mxu0
  %v364 = vadd.f32 %v196, %v363
  %v365 = vpop.f32.mrb[0].mxu0
  %366 = vmatprep.mubr.f32.mxu0 %v55
  %367 = vmatmul.mubr.f32.gmra.mrb[0].mxu0 %v54
  %v368 = vpop.f32.mrb[0].mxu0
  %v369 = vadd.f32 %v196, %v368
  %v370 = vpop.f32.mrb[0].mxu0
  %371 = vmatprep.mubr.f32.mxu0 %v60
  %372 = vmatmul.mubr.f32.gmra.mrb[0].mxu0 %v59
  %v373 = vpop.f32.mrb[0].mxu0
  %v374 = vadd.f32 %v196, %v373
  %v375 = vpop.f32.mrb[0].mxu0
  %376 = vmatprep.mubr.f32.mxu0 %v65
  %377 = vmatmul.mubr.f32.gmra.mrb[0].mxu0 %v64
  %v378 = vpop.f32.mrb[0].mxu0
  %v379 = vadd.f32 %v196, %v378
  %v380 = vpop.f32.mrb[0].mxu0
  %381 = vmatprep.mubr.f32.mxu0 %v70
  %382 = vmatmul.mubr.f32.gmra.mrb[0].mxu0 %v69
  %v383 = vpop.f32.mrb[0].mxu0
  %v384 = vadd.f32 %v196, %v383
  %v385 = vpop.f32.mrb[0].mxu0
  %386 = vmatprep.mubr.f32.mxu0 %v75
  %387 = vmatmul.mubr.f32.gmra.mrb[0].mxu0 %v74
  %v388 = vpop.f32.mrb[0].mxu0
  %v389 = vadd.f32 %v196, %v388
  %v390 = vpop.f32.mrb[0].mxu0
  %391 = vmatprep.mubr.f32.mxu0 %v80
  %392 = vmatmul.mubr.f32.gmra.mrb[0].mxu0 %v79
  %v393 = vpop.f32.mrb[0].mxu0
  %v394 = vadd.f32 %v196, %v393
  %v395 = vpop.f32.mrb[0].mxu0
  %396 = vmatprep.mubr.f32.mxu0 %v85
  %397 = vmatmul.mubr.f32.gmra.mrb[0].mxu0 %v84
  %v398 = vpop.f32.mrb[0].mxu0
  %v399 = vadd.f32 %v196, %v398
  %v400 = vpop.f32.mrb[0].mxu0
  %401 = vmatprep.mubr.f32.mxu0 %v90
  %402 = vmatmul.mubr.f32.gmra.mrb[0].mxu0 %v89
  %v403 = vpop.f32.mrb[0].mxu0
  %v404 = vadd.f32 %v196, %v403
  %v405 = vpop.f32.mrb[0].mxu0
  %406 = vmatprep.mubr.f32.mxu0 %v95
  %407 = vmatmul.mubr.f32.gmra.mrb[0].mxu0 %v94
  %v408 = vpop.f32.mrb[0].mxu0
  %v409 = vadd.f32 %v196, %v408
  %v410 = vpop.f32.mrb[0].mxu0
  %411 = vmatprep.mubr.f32.mxu0 %v100
  %412 = vmatmul.mubr.f32.gmra.mrb[0].mxu0 %v99
  %v413 = vpop.f32.mrb[0].mxu0
  %v414 = vadd.f32 %v196, %v413
  %v415 = vpop.f32.mrb[0].mxu0
  %416 = vmatprep.mubr.f32.mxu0 %v105
  %417 = vmatmul.mubr.f32.gmra.mrb[0].mxu0 %v104
  %v418 = vpop.f32.mrb[0].mxu0
  %v419 = vadd.f32 %v196, %v418
  %v420 = vpop.f32.mrb[0].mxu0
  %421 = vmatprep.mubr.f32.mxu0 %v110
  %422 = vmatmul.mubr.f32.gmra.mrb[0].mxu0 %v109
  %v423 = vpop.f32.mrb[0].mxu0
  %v424 = vadd.f32 %v196, %v423
  %v425 = vpop.f32.mrb[0].mxu0
  %426 = vmatprep.mubr.f32.mxu0 %v115
  %427 = vmatmul.mubr.f32.gmra.mrb[0].mxu0 %v114
  %v428 = vpop.f32.mrb[0].mxu0
  %v429 = vadd.f32 %v196, %v428
  %v430 = vpop.f32.mrb[0].mxu0
  %431 = vdwg.mxu0
  %432 = vmatprep.subr.mxu0 0.0
  %433 = vmatpush1.msra.mxu0 %v151
  %434 = vmatprep.subr.mxu0 0.0
  %435 = vmatpush1.msra.mxu0 %v152
  %436 = vmatprep.subr.mxu0 0.0
  %437 = vmatpush1.msra.mxu0 %v153
  %438 = vmatprep.subr.mxu0 0.0
  %439 = vmatpush1.msra.mxu0 %v154
  %440 = vmatprep.subr.mxu0 0.0
  %441 = vmatpush1.msra.mxu0 %v155
  %442 = vmatprep.subr.mxu0 0.0
  %443 = vmatpush1.msra.mxu0 %v156
  %444 = vmatprep.subr.mxu0 0.0
  %445 = vmatpush1.msra.mxu0 %v157
  %446 = vmatprep.subr.mxu0 0.0
  %447 = vmatpush1.msra.mxu0 %v158
  %448 = vmatprep.subr.mxu0 0.0
  %449 = vmatpush1.msra.mxu0 %v159
  %450 = vmatprep.subr.mxu0 0.0
  %451 = vmatpush1.msra.mxu0 %v160
  %452 = vmatprep.subr.mxu0 0.0
  %453 = vmatpush1.msra.mxu0 %v161
  %454 = vmatprep.subr.mxu0 0.0
  %455 = vmatpush1.msra.mxu0 %v162
  %456 = vmatprep.subr.mxu0 0.0
  %457 = vmatpush1.msra.mxu0 %v163
  %458 = vmatprep.subr.mxu0 0.0
  %459 = vmatpush1.msra.mxu0 %v164
  %460 = vmatprep.subr.mxu0 0.0
  %461 = vmatpush1.msra.mxu0 %v165
  %462 = vmatprep.subr.mxu0 0.0
  %463 = vmatpush1.msra.mxu0 %v166
  %464 = vmatprep.subr.mxu0 0.0
  %465 = vmatpush1.msra.mxu0 %v167
  %466 = vmatprep.subr.mxu0 0.0
  %467 = vmatpush1.msra.mxu0 %v168
  %468 = vmatprep.subr.mxu0 0.0
  %469 = vmatpush1.msra.mxu0 %v169
  %470 = vmatprep.subr.mxu0 0.0
  %471 = vmatpush1.msra.mxu0 %v170
  %472 = vmatprep.subr.mxu0 0.0
  %473 = vmatpush1.msra.mxu0 %v171
  %474 = vmatprep.subr.mxu0 0.0
  %475 = vmatpush1.msra.mxu0 %v172
  %476 = vmatprep.subr.mxu0 0.0
  %477 = vmatpush1.msra.mxu0 %v173
  %478 = vmatprep.subr.mxu0 0.0
  %479 = vmatpush1.msra.mxu0 %v174
  %480 = vmatprep.subr.mxu0 0.0
  %481 = vmatpush1.msra.mxu0 %v175
  %482 = vmatprep.subr.mxu0 0.0
  %483 = vmatpush1.msra.mxu0 %v176
  %484 = vmatprep.subr.mxu0 0.0
  %485 = vmatpush1.msra.mxu0 %v177
  %486 = vmatprep.subr.mxu0 0.0
  %487 = vmatpush1.msra.mxu0 %v178
  %488 = vmatprep.subr.mxu0 0.0
  %489 = vmatpush1.msra.mxu0 %v179
  %490 = vmatprep.subr.mxu0 0.0
  %491 = vmatpush1.msra.mxu0 %v180
  %492 = vmatprep.subr.mxu0 0.0
  %493 = vmatpush1.msra.mxu0 %v181
  %494 = vmatprep.subr.mxu0 0.0
  %495 = vmatpush1.msra.mxu0 %v182
  %496 = vmatprep.mubr.f32.mxu0 %v17
  %497 = vmatmul.mubr.f32.gmra.mrb[0].mxu0 %v16
  %v498 = vpop.f32.mrb[0].mxu0
  %v499 = vadd.f32 %v329, %v498
  %v500 = vpop.f32.mrb[0].mxu0
  %501 = vmatprep.mubr.f32.mxu0 %v22
  %502 = vmatmul.mubr.f32.gmra.mrb[0].mxu0 %v21
  %v503 = vpop.f32.mrb[0].mxu0
  %v504 = vadd.f32 %v334, %v503
  %v505 = vpop.f32.mrb[0].mxu0
  %506 = vmatprep.mubr.f32.mxu0 %v27
  %507 = vmatmul.mubr.f32.gmra.mrb[0].mxu0 %v26
  %v508 = vpop.f32.mrb[0].mxu0
  %v509 = vadd.f32 %v339, %v508
  %v510 = vpop.f32.mrb[0].mxu0
  %511 = vmatprep.mubr.f32.mxu0 %v32
  %512 = vmatmul.mubr.f32.gmra.mrb[0].mxu0 %v31
  %v513 = vpop.f32.mrb[0].mxu0
  %v514 = vadd.f32 %v344, %v513
  %v515 = vpop.f32.mrb[0].mxu0
  %516 = vmatprep.mubr.f32.mxu0 %v37
  %517 = vmatmul.mubr.f32.gmra.mrb[0].mxu0 %v36
  %v518 = vpop.f32.mrb[0].mxu0
  %v519 = vadd.f32 %v349, %v518
  %v520 = vpop.f32.mrb[0].mxu0
  %521 = vmatprep.mubr.f32.mxu0 %v42
  %522 = vmatmul.mubr.f32.gmra.mrb[0].mxu0 %v41
  %v523 = vpop.f32.mrb[0].mxu0
  %v524 = vadd.f32 %v354, %v523
  %v525 = vpop.f32.mrb[0].mxu0
  %526 = vmatprep.mubr.f32.mxu0 %v47
  %527 = vmatmul.mubr.f32.gmra.mrb[0].mxu0 %v46
  %v528 = vpop.f32.mrb[0].mxu0
  %v529 = vadd.f32 %v359, %v528
  %v530 = vpop.f32.mrb[0].mxu0
  %531 = vmatprep.mubr.f32.mxu0 %v52
  %532 = vmatmul.mubr.f32.gmra.mrb[0].mxu0 %v51
  %v533 = vpop.f32.mrb[0].mxu0
  %v534 = vadd.f32 %v364, %v533
  %v535 = vpop.f32.mrb[0].mxu0
  %536 = vmatprep.mubr.f32.mxu0 %v57
  %537 = vmatmul.mubr.f32.gmra.mrb[0].mxu0 %v56
  %v538 = vpop.f32.mrb[0].mxu0
  %v539 = vadd.f32 %v369, %v538
  %v540 = vpop.f32.mrb[0].mxu0
  %541 = vmatprep.mubr.f32.mxu0 %v62
  %542 = vmatmul.mubr.f32.gmra.mrb[0].mxu0 %v61
  %v543 = vpop.f32.mrb[0].mxu0
  %v544 = vadd.f32 %v374, %v543
  %v545 = vpop.f32.mrb[0].mxu0
  %546 = vmatprep.mubr.f32.mxu0 %v67
  %547 = vmatmul.mubr.f32.gmra.mrb[0].mxu0 %v66
  %v548 = vpop.f32.mrb[0].mxu0
  %v549 = vadd.f32 %v379, %v548
  %v550 = vpop.f32.mrb[0].mxu0
  %551 = vmatprep.mubr.f32.mxu0 %v72
  %552 = vmatmul.mubr.f32.gmra.mrb[0].mxu0 %v71
  %v553 = vpop.f32.mrb[0].mxu0
  %v554 = vadd.f32 %v384, %v553
  %v555 = vpop.f32.mrb[0].mxu0
  %556 = vmatprep.mubr.f32.mxu0 %v77
  %557 = vmatmul.mubr.f32.gmra.mrb[0].mxu0 %v76
  %v558 = vpop.f32.mrb[0].mxu0
  %v559 = vadd.f32 %v389, %v558
  %v560 = vpop.f32.mrb[0].mxu0
  %561 = vmatprep.mubr.f32.mxu0 %v82
  %562 = vmatmul.mubr.f32.gmra.mrb[0].mxu0 %v81
  %v563 = vpop.f32.mrb[0].mxu0
  %v564 = vadd.f32 %v394, %v563
  %v565 = vpop.f32.mrb[0].mxu0
  %566 = vmatprep.mubr.f32.mxu0 %v87
  %567 = vmatmul.mubr.f32.gmra.mrb[0].mxu0 %v86
  %v568 = vpop.f32.mrb[0].mxu0
  %v569 = vadd.f32 %v399, %v568
  %v570 = vpop.f32.mrb[0].mxu0
  %571 = vmatprep.mubr.f32.mxu0 %v92
  %572 = vmatmul.mubr.f32.gmra.mrb[0].mxu0 %v91
  %v573 = vpop.f32.mrb[0].mxu0
  %v574 = vadd.f32 %v404, %v573
  %v575 = vpop.f32.mrb[0].mxu0
  %576 = vmatprep.mubr.f32.mxu0 %v97
  %577 = vmatmul.mubr.f32.gmra.mrb[0].mxu0 %v96
  %v578 = vpop.f32.mrb[0].mxu0
  %v579 = vadd.f32 %v409, %v578
  %v580 = vpop.f32.mrb[0].mxu0
  %581 = vmatprep.mubr.f32.mxu0 %v102
  %582 = vmatmul.mubr.f32.gmra.mrb[0].mxu0 %v101
  %v583 = vpop.f32.mrb[0].mxu0
  %v584 = vadd.f32 %v414, %v583
  %v585 = vpop.f32.mrb[0].mxu0
  %586 = vmatprep.mubr.f32.mxu0 %v107
  %587 = vmatmul.mubr.f32.gmra.mrb[0].mxu0 %v106
  %v588 = vpop.f32.mrb[0].mxu0
  %v589 = vadd.f32 %v419, %v588
  %v590 = vpop.f32.mrb[0].mxu0
  %591 = vmatprep.mubr.f32.mxu0 %v112
  %592 = vmatmul.mubr.f32.gmra.mrb[0].mxu0 %v111
  %v593 = vpop.f32.mrb[0].mxu0
  %v594 = vadd.f32 %v424, %v593
  %v595 = vpop.f32.mrb[0].mxu0
  %596 = vmatprep.mubr.f32.mxu0 %v117
  %597 = vmatmul.mubr.f32.gmra.mrb[0].mxu0 %v116
  %v598 = vpop.f32.mrb[0].mxu0
  %v599 = vadd.f32 %v429, %v598
  %v600 = vpop.f32.mrb[0].mxu0
  %601 = vdwg.mxu0
  %602 = vmatprep.subr.mxu0 0.0
  %603 = vmatpush1.msra.mxu0 %v183
  %604 = vmatprep.subr.mxu0 0.0
  %605 = vmatpush1.msra.mxu0 %v184
  %606 = vmatprep.subr.mxu0 0.0
  %607 = vmatpush1.msra.mxu0 %v185
  %608 = vmatprep.subr.mxu0 0.0
  %609 = vmatpush1.msra.mxu0 %v186
  %610 = vmatprep.subr.mxu0 0.0
  %611 = vmatpush1.msra.mxu0 %v187
  %612 = vmatprep.subr.mxu0 0.0
  %613 = vmatpush1.msra.mxu0 %v188
  %614 = vmatprep.subr.mxu0 0.0
  %615 = vmatpush1.msra.mxu0 %v189
  %616 = vmatprep.subr.mxu0 0.0
  %617 = vmatpush1.msra.mxu0 %v190
  %618 = vmatprep.subr.mxu0 0.0
  %619 = vmatpush1.msra.mxu0 0.0
  %620 = vmatprep.subr.mxu0 0.0
  %621 = vmatpush1.msra.mxu0 0.0
  %622 = vmatprep.subr.mxu0 0.0
  %623 = vmatpush1.msra.mxu0 0.0
  %624 = vmatprep.subr.mxu0 0.0
  %625 = vmatpush1.msra.mxu0 0.0
  %626 = vmatprep.subr.mxu0 0.0
  %627 = vmatpush1.msra.mxu0 0.0
  %628 = vmatprep.subr.mxu0 0.0
  %629 = vmatpush1.msra.mxu0 0.0
  %630 = vmatprep.subr.mxu0 0.0
  %631 = vmatpush1.msra.mxu0 0.0
  %632 = vmatprep.subr.mxu0 0.0
  %633 = vmatpush1.msra.mxu0 0.0
  %634 = vmatprep.subr.mxu0 0.0
  %635 = vmatpush1.msra.mxu0 0.0
  %636 = vmatprep.subr.mxu0 0.0
  %637 = vmatpush1.msra.mxu0 0.0
  %638 = vmatprep.subr.mxu0 0.0
  %639 = vmatpush1.msra.mxu0 0.0
  %640 = vmatprep.subr.mxu0 0.0
  %641 = vmatpush1.msra.mxu0 0.0
  %642 = vmatprep.subr.mxu0 0.0
  %643 = vmatpush1.msra.mxu0 0.0
  %644 = vmatprep.subr.mxu0 0.0
  %645 = vmatpush1.msra.mxu0 0.0
  %646 = vmatprep.subr.mxu0 0.0
  %647 = vmatpush1.msra.mxu0 0.0
  %648 = vmatprep.subr.mxu0 0.0
  %649 = vmatpush1.msra.mxu0 0.0
  %650 = vmatprep.subr.mxu0 0.0
  %651 = vmatpush1.msra.mxu0 0.0
  %652 = vmatprep.subr.mxu0 0.0
  %653 = vmatpush1.msra.mxu0 0.0
  %654 = vmatprep.subr.mxu0 0.0
  %655 = vmatpush1.msra.mxu0 0.0
  %656 = vmatprep.subr.mxu0 0.0
  %657 = vmatpush1.msra.mxu0 0.0
  %658 = vmatprep.subr.mxu0 0.0
  %659 = vmatpush1.msra.mxu0 0.0
  %660 = vmatprep.subr.mxu0 0.0
  %661 = vmatpush1.msra.mxu0 0.0
  %662 = vmatprep.subr.mxu0 0.0
  %663 = vmatpush1.msra.mxu0 0.0
  %664 = vmatprep.subr.mxu0 0.0
  %665 = vmatpush1.msra.mxu0 0.0
  %666 = vmatprep.mubr.f32.mxu0 0.0
  %667 = vmatmul.mubr.f32.gmra.mrb[0].mxu0 %v200
  %v668 = vpop.f32.mrb[0].mxu0
  %v669 = vadd.f32 %v499, %v668
  %v670 = vpop.f32.mrb[0].mxu0
  %671 = vmatprep.mubr.f32.mxu0 0.0
  %672 = vmatmul.mubr.f32.gmra.mrb[0].mxu0 %v203
  %v673 = vpop.f32.mrb[0].mxu0
  %v674 = vadd.f32 %v504, %v673
  %v675 = vpop.f32.mrb[0].mxu0
  %676 = vmatprep.mubr.f32.mxu0 0.0
  %677 = vmatmul.mubr.f32.gmra.mrb[0].mxu0 %v206
  %v678 = vpop.f32.mrb[0].mxu0
  %v679 = vadd.f32 %v509, %v678
  %v680 = vpop.f32.mrb[0].mxu0
  %681 = vmatprep.mubr.f32.mxu0 0.0
  %682 = vmatmul.mubr.f32.gmra.mrb[0].mxu0 %v209
  %v683 = vpop.f32.mrb[0].mxu0
  %v684 = vadd.f32 %v514, %v683
  %v685 = vpop.f32.mrb[0].mxu0
  %686 = vmatprep.mubr.f32.mxu0 0.0
  %687 = vmatmul.mubr.f32.gmra.mrb[0].mxu0 %v212
  %v688 = vpop.f32.mrb[0].mxu0
  %v689 = vadd.f32 %v519, %v688
  %v690 = vpop.f32.mrb[0].mxu0
  %691 = vmatprep.mubr.f32.mxu0 0.0
  %692 = vmatmul.mubr.f32.gmra.mrb[0].mxu0 %v215
  %v693 = vpop.f32.mrb[0].mxu0
  %v694 = vadd.f32 %v524, %v693
  %v695 = vpop.f32.mrb[0].mxu0
  %696 = vmatprep.mubr.f32.mxu0 0.0
  %697 = vmatmul.mubr.f32.gmra.mrb[0].mxu0 %v218
  %v698 = vpop.f32.mrb[0].mxu0
  %v699 = vadd.f32 %v529, %v698
  %v700 = vpop.f32.mrb[0].mxu0
  %701 = vmatprep.mubr.f32.mxu0 0.0
  %702 = vmatmul.mubr.f32.gmra.mrb[0].mxu0 %v221
  %v703 = vpop.f32.mrb[0].mxu0
  %v704 = vadd.f32 %v534, %v703
  %v705 = vpop.f32.mrb[0].mxu0
  %706 = vmatprep.mubr.f32.mxu0 0.0
  %707 = vmatmul.mubr.f32.gmra.mrb[0].mxu0 %v224
  %v708 = vpop.f32.mrb[0].mxu0
  %v709 = vadd.f32 %v539, %v708
  %v710 = vpop.f32.mrb[0].mxu0
  %711 = vmatprep.mubr.f32.mxu0 0.0
  %712 = vmatmul.mubr.f32.gmra.mrb[0].mxu0 %v227
  %v713 = vpop.f32.mrb[0].mxu0
  %v714 = vadd.f32 %v544, %v713
  %v715 = vpop.f32.mrb[0].mxu0
  %716 = vmatprep.mubr.f32.mxu0 0.0
  %717 = vmatmul.mubr.f32.gmra.mrb[0].mxu0 %v230
  %v718 = vpop.f32.mrb[0].mxu0
  %v719 = vadd.f32 %v549, %v718
  %v720 = vpop.f32.mrb[0].mxu0
  %721 = vmatprep.mubr.f32.mxu0 0.0
  %722 = vmatmul.mubr.f32.gmra.mrb[0].mxu0 %v233
  %v723 = vpop.f32.mrb[0].mxu0
  %v724 = vadd.f32 %v554, %v723
  %v725 = vpop.f32.mrb[0].mxu0
  %726 = vmatprep.mubr.f32.mxu0 0.0
  %727 = vmatmul.mubr.f32.gmra.mrb[0].mxu0 %v236
  %v728 = vpop.f32.mrb[0].mxu0
  %v729 = vadd.f32 %v559, %v728
  %v730 = vpop.f32.mrb[0].mxu0
  %731 = vmatprep.mubr.f32.mxu0 0.0
  %732 = vmatmul.mubr.f32.gmra.mrb[0].mxu0 %v239
  %v733 = vpop.f32.mrb[0].mxu0
  %v734 = vadd.f32 %v564, %v733
  %v735 = vpop.f32.mrb[0].mxu0
  %736 = vmatprep.mubr.f32.mxu0 0.0
  %737 = vmatmul.mubr.f32.gmra.mrb[0].mxu0 %v242
  %v738 = vpop.f32.mrb[0].mxu0
  %v739 = vadd.f32 %v569, %v738
  %v740 = vpop.f32.mrb[0].mxu0
  %741 = vmatprep.mubr.f32.mxu0 0.0
  %742 = vmatmul.mubr.f32.gmra.mrb[0].mxu0 %v245
  %v743 = vpop.f32.mrb[0].mxu0
  %v744 = vadd.f32 %v574, %v743
  %v745 = vpop.f32.mrb[0].mxu0
  %746 = vmatprep.mubr.f32.mxu0 0.0
  %747 = vmatmul.mubr.f32.gmra.mrb[0].mxu0 %v248
  %v748 = vpop.f32.mrb[0].mxu0
  %v749 = vadd.f32 %v579, %v748
  %v750 = vpop.f32.mrb[0].mxu0
  %751 = vmatprep.mubr.f32.mxu0 0.0
  %752 = vmatmul.mubr.f32.gmra.mrb[0].mxu0 %v251
  %v753 = vpop.f32.mrb[0].mxu0
  %v754 = vadd.f32 %v584, %v753
  %v755 = vpop.f32.mrb[0].mxu0
  %756 = vmatprep.mubr.f32.mxu0 0.0
  %757 = vmatmul.mubr.f32.gmra.mrb[0].mxu0 %v254
  %v758 = vpop.f32.mrb[0].mxu0
  %v759 = vadd.f32 %v589, %v758
  %v760 = vpop.f32.mrb[0].mxu0
  %761 = vmatprep.mubr.f32.mxu0 0.0
  %762 = vmatmul.mubr.f32.gmra.mrb[0].mxu0 %v257
  %v763 = vpop.f32.mrb[0].mxu0
  %v764 = vadd.f32 %v594, %v763
  %v765 = vpop.f32.mrb[0].mxu0
  %766 = vmatprep.mubr.f32.mxu0 0.0
  %767 = vmatmul.mubr.f32.gmra.mrb[0].mxu0 %v260
  %v768 = vpop.f32.mrb[0].mxu0
  %v769 = vadd.f32 %v599, %v768
  %v770 = vpop.f32.mrb[0].mxu0
  %771 = vdwg.mxu0
  %v772 = vmax.f32 %v669, 0.0
  %v773 = vmax.f32 %v674, 0.0
  %v774 = vmax.f32 %v679, 0.0
  %v775 = vmax.f32 %v684, 0.0
  %v776 = vmax.f32 %v689, 0.0
  %v777 = vmax.f32 %v694, 0.0
  %v778 = vmax.f32 %v699, 0.0
  %v779 = vmax.f32 %v704, 0.0
  %v780 = vmax.f32 %v709, 0.0
  %v781 = vmax.f32 %v714, 0.0
  %v782 = vmax.f32 %v719, 0.0
  %v783 = vmax.f32 %v724, 0.0
  %v784 = vmax.f32 %v729, 0.0
  %v785 = vmax.f32 %v734, 0.0
  %v786 = vmax.f32 %v739, 0.0
  %v787 = vmax.f32 %v744, 0.0
  %v788 = vmax.f32 %v749, 0.0
  %v789 = vmax.f32 %v754, 0.0
  %v790 = vmax.f32 %v759, 0.0
  %v791 = vmax.f32 %v764, 0.0
  %v792 = vmax.f32 %v769, 0.0
  %793 = vst [vmem:[%s3] sm:$0xff] %v772
  %794 = vst [vmem:[%s3 + $0x8] sm:$0xff] %v773
  %795 = vst [vmem:[%s3 + $0x10] sm:$0xff] %v774
  %796 = vst [vmem:[%s3 + $0x18] sm:$0xff] %v775
  %797 = vst [vmem:[%s3 + $0x20] sm:$0xff] %v776
  %798 = vst [vmem:[%s3 + $0x28] sm:$0xff] %v777
  %799 = vst [vmem:[%s3 + $0x30] sm:$0xff] %v778
  %800 = vst [vmem:[%s3 + $0x38] sm:$0xff] %v779
  %801 = vst [vmem:[%s3 + $0x40] sm:$0xff] %v780
  %802 = vst [vmem:[%s3 + $0x48] sm:$0xff] %v781
  %803 = vst [vmem:[%s3 + $0x50] sm:$0xff] %v782
  %804 = vst [vmem:[%s3 + $0x58] sm:$0xff] %v783
  %805 = vst [vmem:[%s3 + $0x60] sm:$0xff] %v784
  %806 = vst [vmem:[%s3 + $0x68] sm:$0xff] %v785
  %807 = vst [vmem:[%s3 + $0x70] sm:$0xff] %v786
  %808 = vst [vmem:[%s3 + $0x78] sm:$0xff] %v787
  %809 = vst [vmem:[%s3 + $0x80] sm:$0xff] %v788
  %810 = vst [vmem:[%s3 + $0x88] sm:$0xff] %v789
  %811 = vst [vmem:[%s3 + $0x90] sm:$0xff] %v790
  %812 = vst [vmem:[%s3 + $0x98] sm:$0xff] %v791
  %813 = vst [vmem:[%s3 + $0xa0] sm:$0x3] %v792
  // Predicated region
  $region14: #{conv_layer_forward.4} parent=0 // pred_check
    _
  $region15: #{conv_layer_forward.4} parent=0 // pred_check_branch
    %815 = sbr.rel (0) target = $region17
  $region16: #{conv_layer_forward.4} parent=0 // pred_region
    _
  $region17: #{conv_layer_forward.4} parent=0 // pred_fallthru
    _
  // Predicated region
  $region18: #{conv_layer_forward.4} parent=0 // pred_check
    _
  $region19: #{conv_layer_forward.4} parent=0 // pred_check_branch
    %817 = sbr.rel (0) target = $region21
  $region20: #{conv_layer_forward.4} parent=0 // pred_region
    _
  $region21: #{conv_layer_forward.4} parent=0 // pred_fallthru
    _

// kernel: conv_layer_forward.5
$region0: #{conv_layer_forward.5}
  #allocation0 [shape = 'u32[]', space=smem, size = 0x4, offset = 0x4, fixed_abs, tag = 'smem constant byte address 0x4 - core index']
  #allocation1 [shape = 'u32[144,128]{1,0:T(1,128)}', space=vmem, size = 0x12000, scoped, tag = 'internal scratch']
  %s0 = inlined_call_operand.vmem [shape: f32[2,10368], index: 0, kind: input, shape index: {}]
  %s1 = inlined_call_operand.vmem [shape: bf16[10368,256], index: 1, kind: input, shape index: {}]
  %s2 = inlined_call_operand.vmem [shape: f32[1,256], index: 2, kind: input, shape index: {}]
  %s3 = inlined_call_operand.vmem [shape: f32[2,256], index: 3, kind: output, shape index: {}]
  %s4 = sld [smem:[#allocation0]]
  $region22: #{conv_layer_forward.5} parent=0
    _
  %s6 = ssub.s32 1, %s4
  %s7 = scalar_select 0, %s6, %s4
  // Predicated region
  $region2: #{conv_layer_forward.5} parent=0 // pred_check
    _
  $region3: #{conv_layer_forward.5} parent=0 // pred_check_branch
    %9 = sbr.rel (0) target = $region5
  $region4: #{conv_layer_forward.5} parent=0 // pred_region
    _
  $region5: #{conv_layer_forward.5} parent=0 // pred_fallthru
    _
  // Predicated region
  $region6: #{conv_layer_forward.5} parent=0 // pred_check
    _
  $region7: #{conv_layer_forward.5} parent=0 // pred_check_branch
    %11 = sbr.rel (0) target = $region9
  $region8: #{conv_layer_forward.5} parent=0 // pred_region
    _
  $region9: #{conv_layer_forward.5} parent=0 // pred_fallthru
    _
  // Predicated region
  $region10: #{conv_layer_forward.5} parent=0 // pred_check
    _
  $region11: #{conv_layer_forward.5} parent=0 // pred_check_branch
    %13 = sbr.rel (0) target = $region13
  $region12: #{conv_layer_forward.5} parent=0 // pred_region
    _
  $region13: #{conv_layer_forward.5} parent=0 // pred_fallthru
    _
  %v15 = vld [vmem:[%s0] sm:$0xff]
  %v16 = vld [vmem:[%s0 + $0x8] sm:$0xff]
  %v17 = vld [vmem:[%s0 + $0x10] sm:$0xff]
  %v18 = vld [vmem:[%s0 + $0x18] sm:$0xff]
  %v19 = vld [vmem:[%s0 + $0x20] sm:$0xff]
  %v20 = vld [vmem:[%s0 + $0x28] sm:$0xff]
  %v21 = vld [vmem:[%s0 + $0x30] sm:$0xff]
  %v22 = vld [vmem:[%s0 + $0x38] sm:$0xff]
  %v23 = vld [vmem:[%s0 + $0x40] sm:$0xff]
  %v24 = vld [vmem:[%s0 + $0x48] sm:$0xff]
  %v25 = vld [vmem:[%s0 + $0x50] sm:$0xff]
  %v26 = vld [vmem:[%s0 + $0x58] sm:$0xff]
  %v27 = vld [vmem:[%s0 + $0x60] sm:$0xff]
  %v28 = vld [vmem:[%s0 + $0x68] sm:$0xff]
  %v29 = vld [vmem:[%s0 + $0x70] sm:$0xff]
  %v30 = vld [vmem:[%s0 + $0x78] sm:$0xff]
  %v31 = vld [vmem:[%s0 + $0x80] sm:$0xff]
  %v32 = vld [vmem:[%s0 + $0x88] sm:$0xff]
  %v33 = vld [vmem:[%s0 + $0x90] sm:$0xff]
  %v34 = vld [vmem:[%s0 + $0x98] sm:$0xff]
  %v35 = vld [vmem:[%s0 + $0xa0] sm:$0x3]
  %v36 = vld [vmem:[%s1] sm:$0xff]
  %v37 = vld [vmem:[%s1 + $0x8] sm:$0xff]
  %v38 = vld [vmem:[%s1 + $0x10] sm:$0xff]
  %v39 = vld [vmem:[%s1 + $0x18] sm:$0xff]
  %v40 = vld [vmem:[%s1 + $0x20] sm:$0xff]
  %v41 = vld [vmem:[%s1 + $0x28] sm:$0xff]
  %v42 = vld [vmem:[%s1 + $0x30] sm:$0xff]
  %v43 = vld [vmem:[%s1 + $0x38] sm:$0xff]
  %v44 = vld [vmem:[%s1 + $0x40] sm:$0xff]
  %v45 = vld [vmem:[%s1 + $0x48] sm:$0xff]
  %v46 = vld [vmem:[%s1 + $0x50] sm:$0xff]
  %v47 = vld [vmem:[%s1 + $0x58] sm:$0xff]
  %v48 = vld [vmem:[%s1 + $0x60] sm:$0xff]
  %v49 = vld [vmem:[%s1 + $0x68] sm:$0xff]
  %v50 = vld [vmem:[%s1 + $0x70] sm:$0xff]
  %v51 = vld [vmem:[%s1 + $0x78] sm:$0xff]
  %v52 = vld [vmem:[%s1 + $0x80] sm:$0xff]
  %v53 = vld [vmem:[%s1 + $0x88] sm:$0xff]
  %v54 = vld [vmem:[%s1 + $0x90] sm:$0xff]
  %v55 = vld [vmem:[%s1 + $0x98] sm:$0xff]
  %v56 = vld [vmem:[%s1 + $0xa0] sm:$0xff]
  %v57 = vld [vmem:[%s1 + $0xa8] sm:$0xff]
  %v58 = vld [vmem:[%s1 + $0xb0] sm:$0xff]
  %v59 = vld [vmem:[%s1 + $0xb8] sm:$0xff]
  %v60 = vld [vmem:[%s1 + $0xc0] sm:$0xff]
  %v61 = vld [vmem:[%s1 + $0xc8] sm:$0xff]
  %v62 = vld [vmem:[%s1 + $0xd0] sm:$0xff]
  %v63 = vld [vmem:[%s1 + $0xd8] sm:$0xff]
  %v64 = vld [vmem:[%s1 + $0xe0] sm:$0xff]
  %v65 = vld [vmem:[%s1 + $0xe8] sm:$0xff]
  %v66 = vld [vmem:[%s1 + $0xf0] sm:$0xff]
  %v67 = vld [vmem:[%s1 + $0xf8] sm:$0xff]
  %v68 = vld [vmem:[%s1 + $0x100] sm:$0xff]
  %v69 = vld [vmem:[%s1 + $0x108] sm:$0xff]
  %v70 = vld [vmem:[%s1 + $0x110] sm:$0xff]
  %v71 = vld [vmem:[%s1 + $0x118] sm:$0xff]
  %v72 = vld [vmem:[%s1 + $0x120] sm:$0xff]
  %v73 = vld [vmem:[%s1 + $0x128] sm:$0xff]
  %v74 = vld [vmem:[%s1 + $0x130] sm:$0xff]
  %v75 = vld [vmem:[%s1 + $0x138] sm:$0xff]
  %v76 = vld [vmem:[%s1 + $0x140] sm:$0xff]
  %v77 = vld [vmem:[%s1 + $0x148] sm:$0xff]
  %v78 = vld [vmem:[%s1 + $0x150] sm:$0xff]
  %v79 = vld [vmem:[%s1 + $0x158] sm:$0xff]
  %v80 = vld [vmem:[%s1 + $0x160] sm:$0xff]
  %v81 = vld [vmem:[%s1 + $0x168] sm:$0xff]
  %v82 = vld [vmem:[%s1 + $0x170] sm:$0xff]
  %v83 = vld [vmem:[%s1 + $0x178] sm:$0xff]
  %v84 = vld [vmem:[%s1 + $0x180] sm:$0xff]
  %v85 = vld [vmem:[%s1 + $0x188] sm:$0xff]
  %v86 = vld [vmem:[%s1 + $0x190] sm:$0xff]
  %v87 = vld [vmem:[%s1 + $0x198] sm:$0xff]
  %v88 = vld [vmem:[%s1 + $0x1a0] sm:$0xff]
  %v89 = vld [vmem:[%s1 + $0x1a8] sm:$0xff]
  %v90 = vld [vmem:[%s1 + $0x1b0] sm:$0xff]
  %v91 = vld [vmem:[%s1 + $0x1b8] sm:$0xff]
  %v92 = vld [vmem:[%s1 + $0x1c0] sm:$0xff]
  %v93 = vld [vmem:[%s1 + $0x1c8] sm:$0xff]
  %v94 = vld [vmem:[%s1 + $0x1d0] sm:$0xff]
  %v95 = vld [vmem:[%s1 + $0x1d8] sm:$0xff]
  %v96 = vld [vmem:[%s1 + $0x1e0] sm:$0xff]
  %v97 = vld [vmem:[%s1 + $0x1e8] sm:$0xff]
  %v98 = vld [vmem:[%s1 + $0x1f0] sm:$0xff]
  %v99 = vld [vmem:[%s1 + $0x1f8] sm:$0xff]
  %v100 = vld [vmem:[%s1 + $0x200] sm:$0xff]
  %v101 = vld [vmem:[%s1 + $0x208] sm:$0xff]
  %v102 = vld [vmem:[%s1 + $0x210] sm:$0xff]
  %v103 = vld [vmem:[%s1 + $0x218] sm:$0xff]
  %v104 = vld [vmem:[%s1 + $0x220] sm:$0xff]
  %v105 = vld [vmem:[%s1 + $0x228] sm:$0xff]
  %v106 = vld [vmem:[%s1 + $0x230] sm:$0xff]
  %v107 = vld [vmem:[%s1 + $0x238] sm:$0xff]
  %v108 = vld [vmem:[%s1 + $0x240] sm:$0xff]
  %v109 = vld [vmem:[%s1 + $0x248] sm:$0xff]
  %v110 = vld [vmem:[%s1 + $0x250] sm:$0xff]
  %v111 = vld [vmem:[%s1 + $0x258] sm:$0xff]
  %v112 = vld [vmem:[%s1 + $0x260] sm:$0xff]
  %v113 = vld [vmem:[%s1 + $0x268] sm:$0xff]
  %v114 = vld [vmem:[%s1 + $0x270] sm:$0xff]
  %v115 = vld [vmem:[%s1 + $0x278] sm:$0xff]
  %v116 = vld [vmem:[%s1 + $0x280] sm:$0xff]
  %v117 = vld [vmem:[%s1 + $0x288] sm:$0xff]
  %v118 = vld [vmem:[%s1 + $0x290] sm:$0xff]
  %v119 = vld [vmem:[%s1 + $0x298] sm:$0xff]
  %v120 = vld [vmem:[%s1 + $0x2a0] sm:$0xff]
  %v121 = vld [vmem:[%s1 + $0x2a8] sm:$0xff]
  %v122 = vld [vmem:[%s1 + $0x2b0] sm:$0xff]
  %v123 = vld [vmem:[%s1 + $0x2b8] sm:$0xff]
  %v124 = vld [vmem:[%s1 + $0x2c0] sm:$0xff]
  %v125 = vld [vmem:[%s1 + $0x2c8] sm:$0xff]
  %v126 = vld [vmem:[%s1 + $0x2d0] sm:$0xff]
  %v127 = vld [vmem:[%s1 + $0x2d8] sm:$0xff]
  %v128 = vld [vmem:[%s1 + $0x2e0] sm:$0xff]
  %v129 = vld [vmem:[%s1 + $0x2e8] sm:$0xff]
  %v130 = vld [vmem:[%s1 + $0x2f0] sm:$0xff]
  %v131 = vld [vmem:[%s1 + $0x2f8] sm:$0xff]
  %v132 = vld [vmem:[%s1 + $0x300] sm:$0xff]
  %v133 = vld [vmem:[%s1 + $0x308] sm:$0xff]
  %v134 = vld [vmem:[%s1 + $0x310] sm:$0xff]
  %v135 = vld [vmem:[%s1 + $0x318] sm:$0xff]
  %v136 = vld [vmem:[%s1 + $0x320] sm:$0xff]
  %v137 = vld [vmem:[%s1 + $0x328] sm:$0xff]
  %v138 = vld [vmem:[%s1 + $0x330] sm:$0xff]
  %v139 = vld [vmem:[%s1 + $0x338] sm:$0xff]
  %v140 = vld [vmem:[%s1 + $0x340] sm:$0xff]
  %v141 = vld [vmem:[%s1 + $0x348] sm:$0xff]
  %v142 = vld [vmem:[%s1 + $0x350] sm:$0xff]
  %v143 = vld [vmem:[%s1 + $0x358] sm:$0xff]
  %v144 = vld [vmem:[%s1 + $0x360] sm:$0xff]
  %v145 = vld [vmem:[%s1 + $0x368] sm:$0xff]
  %v146 = vld [vmem:[%s1 + $0x370] sm:$0xff]
  %v147 = vld [vmem:[%s1 + $0x378] sm:$0xff]
  %v148 = vld [vmem:[%s1 + $0x380] sm:$0xff]
  %v149 = vld [vmem:[%s1 + $0x388] sm:$0xff]
  %v150 = vld [vmem:[%s1 + $0x390] sm:$0xff]
  %v151 = vld [vmem:[%s1 + $0x398] sm:$0xff]
  %v152 = vld [vmem:[%s1 + $0x3a0] sm:$0xff]
  %v153 = vld [vmem:[%s1 + $0x3a8] sm:$0xff]
  %v154 = vld [vmem:[%s1 + $0x3b0] sm:$0xff]
  %v155 = vld [vmem:[%s1 + $0x3b8] sm:$0xff]
  %v156 = vld [vmem:[%s1 + $0x3c0] sm:$0xff]
  %v157 = vld [vmem:[%s1 + $0x3c8] sm:$0xff]
  %v158 = vld [vmem:[%s1 + $0x3d0] sm:$0xff]
  %v159 = vld [vmem:[%s1 + $0x3d8] sm:$0xff]
  %v160 = vld [vmem:[%s1 + $0x3e0] sm:$0xff]
  %v161 = vld [vmem:[%s1 + $0x3e8] sm:$0xff]
  %v162 = vld [vmem:[%s1 + $0x3f0] sm:$0xff]
  %v163 = vld [vmem:[%s1 + $0x3f8] sm:$0xff]
  %v164 = vld [vmem:[%s1 + $0x400] sm:$0xff]
  %v165 = vld [vmem:[%s1 + $0x408] sm:$0xff]
  %v166 = vld [vmem:[%s1 + $0x410] sm:$0xff]
  %v167 = vld [vmem:[%s1 + $0x418] sm:$0xff]
  %v168 = vld [vmem:[%s1 + $0x420] sm:$0xff]
  %v169 = vld [vmem:[%s1 + $0x428] sm:$0xff]
  %v170 = vld [vmem:[%s1 + $0x430] sm:$0xff]
  %v171 = vld [vmem:[%s1 + $0x438] sm:$0xff]
  %v172 = vld [vmem:[%s1 + $0x440] sm:$0xff]
  %v173 = vld [vmem:[%s1 + $0x448] sm:$0xff]
  %v174 = vld [vmem:[%s1 + $0x450] sm:$0xff]
  %v175 = vld [vmem:[%s1 + $0x458] sm:$0xff]
  %v176 = vld [vmem:[%s1 + $0x460] sm:$0xff]
  %v177 = vld [vmem:[%s1 + $0x468] sm:$0xff]
  %v178 = vld [vmem:[%s1 + $0x470] sm:$0xff]
  %v179 = vld [vmem:[%s1 + $0x478] sm:$0xff]
  %v180 = vld [vmem:[%s1 + $0x480] sm:$0xff]
  %v181 = vld [vmem:[%s1 + $0x488] sm:$0xff]
  %v182 = vld [vmem:[%s1 + $0x490] sm:$0xff]
  %v183 = vld [vmem:[%s1 + $0x498] sm:$0xff]
  %v184 = vld [vmem:[%s1 + $0x4a0] sm:$0xff]
  %v185 = vld [vmem:[%s1 + $0x4a8] sm:$0xff]
  %v186 = vld [vmem:[%s1 + $0x4b0] sm:$0xff]
  %v187 = vld [vmem:[%s1 + $0x4b8] sm:$0xff]
  %v188 = vld [vmem:[%s1 + $0x4c0] sm:$0xff]
  %v189 = vld [vmem:[%s1 + $0x4c8] sm:$0xff]
  %v190 = vld [vmem:[%s1 + $0x4d0] sm:$0xff]
  %v191 = vld [vmem:[%s1 + $0x4d8] sm:$0xff]
  %v192 = vld [vmem:[%s1 + $0x4e0] sm:$0xff]
  %v193 = vld [vmem:[%s1 + $0x4e8] sm:$0xff]
  %v194 = vld [vmem:[%s1 + $0x4f0] sm:$0xff]
  %v195 = vld [vmem:[%s1 + $0x4f8] sm:$0xff]
  %v196 = vld [vmem:[%s1 + $0x500] sm:$0xff]
  %v197 = vld [vmem:[%s1 + $0x508] sm:$0xff]
  %v198 = vld [vmem:[%s1 + $0x510] sm:$0xff]
  %v199 = vld [vmem:[%s1 + $0x518] sm:$0xff]
  %v200 = vld [vmem:[%s1 + $0x520] sm:$0xff]
  %v201 = vld [vmem:[%s1 + $0x528] sm:$0xff]
  %v202 = vld [vmem:[%s1 + $0x530] sm:$0xff]
  %v203 = vld [vmem:[%s1 + $0x538] sm:$0xff]
  %v204 = vld [vmem:[%s1 + $0x540] sm:$0xff]
  %v205 = vld [vmem:[%s1 + $0x548] sm:$0xff]
  %v206 = vld [vmem:[%s1 + $0x550] sm:$0xff]
  %v207 = vld [vmem:[%s1 + $0x558] sm:$0xff]
  %v208 = vld [vmem:[%s1 + $0x560] sm:$0xff]
  %v209 = vld [vmem:[%s1 + $0x568] sm:$0xff]
  %v210 = vld [vmem:[%s1 + $0x570] sm:$0xff]
  %v211 = vld [vmem:[%s1 + $0x578] sm:$0xff]
  %v212 = vld [vmem:[%s1 + $0x580] sm:$0xff]
  %v213 = vld [vmem:[%s1 + $0x588] sm:$0xff]
  %v214 = vld [vmem:[%s1 + $0x590] sm:$0xff]
  %v215 = vld [vmem:[%s1 + $0x598] sm:$0xff]
  %v216 = vld [vmem:[%s1 + $0x5a0] sm:$0xff]
  %v217 = vld [vmem:[%s1 + $0x5a8] sm:$0xff]
  %v218 = vld [vmem:[%s1 + $0x5b0] sm:$0xff]
  %v219 = vld [vmem:[%s1 + $0x5b8] sm:$0xff]
  %v220 = vld [vmem:[%s1 + $0x5c0] sm:$0xff]
  %v221 = vld [vmem:[%s1 + $0x5c8] sm:$0xff]
  %v222 = vld [vmem:[%s1 + $0x5d0] sm:$0xff]
  %v223 = vld [vmem:[%s1 + $0x5d8] sm:$0xff]
  %v224 = vld [vmem:[%s1 + $0x5e0] sm:$0xff]
  %v225 = vld [vmem:[%s1 + $0x5e8] sm:$0xff]
  %v226 = vld [vmem:[%s1 + $0x5f0] sm:$0xff]
  %v227 = vld [vmem:[%s1 + $0x5f8] sm:$0xff]
  %v228 = vld [vmem:[%s1 + $0x600] sm:$0xff]
  %v229 = vld [vmem:[%s1 + $0x608] sm:$0xff]
  %v230 = vld [vmem:[%s1 + $0x610] sm:$0xff]
  %v231 = vld [vmem:[%s1 + $0x618] sm:$0xff]
  %v232 = vld [vmem:[%s1 + $0x620] sm:$0xff]
  %v233 = vld [vmem:[%s1 + $0x628] sm:$0xff]
  %v234 = vld [vmem:[%s1 + $0x630] sm:$0xff]
  %v235 = vld [vmem:[%s1 + $0x638] sm:$0xff]
  %v236 = vld [vmem:[%s1 + $0x640] sm:$0xff]
  %v237 = vld [vmem:[%s1 + $0x648] sm:$0xff]
  %v238 = vld [vmem:[%s1 + $0x650] sm:$0xff]
  %v239 = vld [vmem:[%s1 + $0x658] sm:$0xff]
  %v240 = vld [vmem:[%s1 + $0x660] sm:$0xff]
  %v241 = vld [vmem:[%s1 + $0x668] sm:$0xff]
  %v242 = vld [vmem:[%s1 + $0x670] sm:$0xff]
  %v243 = vld [vmem:[%s1 + $0x678] sm:$0xff]
  %v244 = vld [vmem:[%s1 + $0x680] sm:$0xff]
  %v245 = vld [vmem:[%s1 + $0x688] sm:$0xff]
  %v246 = vld [vmem:[%s1 + $0x690] sm:$0xff]
  %v247 = vld [vmem:[%s1 + $0x698] sm:$0xff]
  %v248 = vld [vmem:[%s1 + $0x6a0] sm:$0xff]
  %v249 = vld [vmem:[%s1 + $0x6a8] sm:$0xff]
  %v250 = vld [vmem:[%s1 + $0x6b0] sm:$0xff]
  %v251 = vld [vmem:[%s1 + $0x6b8] sm:$0xff]
  %v252 = vld [vmem:[%s1 + $0x6c0] sm:$0xff]
  %v253 = vld [vmem:[%s1 + $0x6c8] sm:$0xff]
  %v254 = vld [vmem:[%s1 + $0x6d0] sm:$0xff]
  %v255 = vld [vmem:[%s1 + $0x6d8] sm:$0xff]
  %v256 = vld [vmem:[%s1 + $0x6e0] sm:$0xff]
  %v257 = vld [vmem:[%s1 + $0x6e8] sm:$0xff]
  %v258 = vld [vmem:[%s1 + $0x6f0] sm:$0xff]
  %v259 = vld [vmem:[%s1 + $0x6f8] sm:$0xff]
  %v260 = vld [vmem:[%s1 + $0x700] sm:$0xff]
  %v261 = vld [vmem:[%s1 + $0x708] sm:$0xff]
  %v262 = vld [vmem:[%s1 + $0x710] sm:$0xff]
  %v263 = vld [vmem:[%s1 + $0x718] sm:$0xff]
  %v264 = vld [vmem:[%s1 + $0x720] sm:$0xff]
  %v265 = vld [vmem:[%s1 + $0x728] sm:$0xff]
  %v266 = vld [vmem:[%s1 + $0x730] sm:$0xff]
  %v267 = vld [vmem:[%s1 + $0x738] sm:$0xff]
  %v268 = vld [vmem:[%s1 + $0x740] sm:$0xff]
  %v269 = vld [vmem:[%s1 + $0x748] sm:$0xff]
  %v270 = vld [vmem:[%s1 + $0x750] sm:$0xff]
  %v271 = vld [vmem:[%s1 + $0x758] sm:$0xff]
  %v272 = vld [vmem:[%s1 + $0x760] sm:$0xff]
  %v273 = vld [vmem:[%s1 + $0x768] sm:$0xff]
  %v274 = vld [vmem:[%s1 + $0x770] sm:$0xff]
  %v275 = vld [vmem:[%s1 + $0x778] sm:$0xff]
  %v276 = vld [vmem:[%s1 + $0x780] sm:$0xff]
  %v277 = vld [vmem:[%s1 + $0x788] sm:$0xff]
  %v278 = vld [vmem:[%s1 + $0x790] sm:$0xff]
  %v279 = vld [vmem:[%s1 + $0x798] sm:$0xff]
  %v280 = vld [vmem:[%s1 + $0x7a0] sm:$0xff]
  %v281 = vld [vmem:[%s1 + $0x7a8] sm:$0xff]
  %v282 = vld [vmem:[%s1 + $0x7b0] sm:$0xff]
  %v283 = vld [vmem:[%s1 + $0x7b8] sm:$0xff]
  %v284 = vld [vmem:[%s1 + $0x7c0] sm:$0xff]
  %v285 = vld [vmem:[%s1 + $0x7c8] sm:$0xff]
  %v286 = vld [vmem:[%s1 + $0x7d0] sm:$0xff]
  %v287 = vld [vmem:[%s1 + $0x7d8] sm:$0xff]
  %v288 = vld [vmem:[%s1 + $0x7e0] sm:$0xff]
  %v289 = vld [vmem:[%s1 + $0x7e8] sm:$0xff]
  %v290 = vld [vmem:[%s1 + $0x7f0] sm:$0xff]
  %v291 = vld [vmem:[%s1 + $0x7f8] sm:$0xff]
  %v292 = vld [vmem:[%s1 + $0x800] sm:$0xff]
  %v293 = vld [vmem:[%s1 + $0x808] sm:$0xff]
  %v294 = vld [vmem:[%s1 + $0x810] sm:$0xff]
  %v295 = vld [vmem:[%s1 + $0x818] sm:$0xff]
  %v296 = vld [vmem:[%s1 + $0x820] sm:$0xff]
  %v297 = vld [vmem:[%s1 + $0x828] sm:$0xff]
  %v298 = vld [vmem:[%s1 + $0x830] sm:$0xff]
  %v299 = vld [vmem:[%s1 + $0x838] sm:$0xff]
  %v300 = vld [vmem:[%s1 + $0x840] sm:$0xff]
  %v301 = vld [vmem:[%s1 + $0x848] sm:$0xff]
  %v302 = vld [vmem:[%s1 + $0x850] sm:$0xff]
  %v303 = vld [vmem:[%s1 + $0x858] sm:$0xff]
  %v304 = vld [vmem:[%s1 + $0x860] sm:$0xff]
  %v305 = vld [vmem:[%s1 + $0x868] sm:$0xff]
  %v306 = vld [vmem:[%s1 + $0x870] sm:$0xff]
  %v307 = vld [vmem:[%s1 + $0x878] sm:$0xff]
  %v308 = vld [vmem:[%s1 + $0x880] sm:$0xff]
  %v309 = vld [vmem:[%s1 + $0x888] sm:$0xff]
  %v310 = vld [vmem:[%s1 + $0x890] sm:$0xff]
  %v311 = vld [vmem:[%s1 + $0x898] sm:$0xff]
  %v312 = vld [vmem:[%s1 + $0x8a0] sm:$0xff]
  %v313 = vld [vmem:[%s1 + $0x8a8] sm:$0xff]
  %v314 = vld [vmem:[%s1 + $0x8b0] sm:$0xff]
  %v315 = vld [vmem:[%s1 + $0x8b8] sm:$0xff]
  %v316 = vld [vmem:[%s1 + $0x8c0] sm:$0xff]
  %v317 = vld [vmem:[%s1 + $0x8c8] sm:$0xff]
  %v318 = vld [vmem:[%s1 + $0x8d0] sm:$0xff]
  %v319 = vld [vmem:[%s1 + $0x8d8] sm:$0xff]
  %v320 = vld [vmem:[%s1 + $0x8e0] sm:$0xff]
  %v321 = vld [vmem:[%s1 + $0x8e8] sm:$0xff]
  %v322 = vld [vmem:[%s1 + $0x8f0] sm:$0xff]
  %v323 = vld [vmem:[%s1 + $0x8f8] sm:$0xff]
  %v324 = vld [vmem:[%s1 + $0x900] sm:$0xff]
  %v325 = vld [vmem:[%s1 + $0x908] sm:$0xff]
  %v326 = vld [vmem:[%s1 + $0x910] sm:$0xff]
  %v327 = vld [vmem:[%s1 + $0x918] sm:$0xff]
  %v328 = vld [vmem:[%s1 + $0x920] sm:$0xff]
  %v329 = vld [vmem:[%s1 + $0x928] sm:$0xff]
  %v330 = vld [vmem:[%s1 + $0x930] sm:$0xff]
  %v331 = vld [vmem:[%s1 + $0x938] sm:$0xff]
  %v332 = vld [vmem:[%s1 + $0x940] sm:$0xff]
  %v333 = vld [vmem:[%s1 + $0x948] sm:$0xff]
  %v334 = vld [vmem:[%s1 + $0x950] sm:$0xff]
  %v335 = vld [vmem:[%s1 + $0x958] sm:$0xff]
  %v336 = vld [vmem:[%s1 + $0x960] sm:$0xff]
  %v337 = vld [vmem:[%s1 + $0x968] sm:$0xff]
  %v338 = vld [vmem:[%s1 + $0x970] sm:$0xff]
  %v339 = vld [vmem:[%s1 + $0x978] sm:$0xff]
  %v340 = vld [vmem:[%s1 + $0x980] sm:$0xff]
  %v341 = vld [vmem:[%s1 + $0x988] sm:$0xff]
  %v342 = vld [vmem:[%s1 + $0x990] sm:$0xff]
  %v343 = vld [vmem:[%s1 + $0x998] sm:$0xff]
  %v344 = vld [vmem:[%s1 + $0x9a0] sm:$0xff]
  %v345 = vld [vmem:[%s1 + $0x9a8] sm:$0xff]
  %v346 = vld [vmem:[%s1 + $0x9b0] sm:$0xff]
  %v347 = vld [vmem:[%s1 + $0x9b8] sm:$0xff]
  %v348 = vld [vmem:[%s1 + $0x9c0] sm:$0xff]
  %v349 = vld [vmem:[%s1 + $0x9c8] sm:$0xff]
  %v350 = vld [vmem:[%s1 + $0x9d0] sm:$0xff]
  %v351 = vld [vmem:[%s1 + $0x9d8] sm:$0xff]
  %v352 = vld [vmem:[%s1 + $0x9e0] sm:$0xff]
  %v353 = vld [vmem:[%s1 + $0x9e8] sm:$0xff]
  %v354 = vld [vmem:[%s1 + $0x9f0] sm:$0xff]
  %v355 = vld [vmem:[%s1 + $0x9f8] sm:$0xff]
  %v356 = vld [vmem:[%s1 + $0xa00] sm:$0xff]
  %v357 = vld [vmem:[%s1 + $0xa08] sm:$0xff]
  %v358 = vld [vmem:[%s1 + $0xa10] sm:$0xff]
  %v359 = vld [vmem:[%s1 + $0xa18] sm:$0xff]
  %v360 = vld [vmem:[%s1 + $0xa20] sm:$0xff]
  %v361 = vld [vmem:[%s1 + $0xa28] sm:$0xff]
  %v362 = vld [vmem:[%s1 + $0xa30] sm:$0xff]
  %v363 = vld [vmem:[%s1 + $0xa38] sm:$0xff]
  %v364 = vld [vmem:[%s1 + $0xa40] sm:$0xff]
  %v365 = vld [vmem:[%s1 + $0xa48] sm:$0xff]
  %v366 = vld [vmem:[%s1 + $0xa50] sm:$0xff]
  %v367 = vld [vmem:[%s1 + $0xa58] sm:$0xff]
  %v368 = vld [vmem:[%s1 + $0xa60] sm:$0xff]
  %v369 = vld [vmem:[%s1 + $0xa68] sm:$0xff]
  %v370 = vld [vmem:[%s1 + $0xa70] sm:$0xff]
  %v371 = vld [vmem:[%s1 + $0xa78] sm:$0xff]
  %v372 = vld [vmem:[%s1 + $0xa80] sm:$0xff]
  %v373 = vld [vmem:[%s1 + $0xa88] sm:$0xff]
  %v374 = vld [vmem:[%s1 + $0xa90] sm:$0xff]
  %v375 = vld [vmem:[%s1 + $0xa98] sm:$0xff]
  %v376 = vld [vmem:[%s1 + $0xaa0] sm:$0xff]
  %v377 = vld [vmem:[%s1 + $0xaa8] sm:$0xff]
  %v378 = vld [vmem:[%s1 + $0xab0] sm:$0xff]
  %v379 = vld [vmem:[%s1 + $0xab8] sm:$0xff]
  %v380 = vld [vmem:[%s1 + $0xac0] sm:$0xff]
  %v381 = vld [vmem:[%s1 + $0xac8] sm:$0xff]
  %v382 = vld [vmem:[%s1 + $0xad0] sm:$0xff]
  %v383 = vld [vmem:[%s1 + $0xad8] sm:$0xff]
  %v384 = vld [vmem:[%s1 + $0xae0] sm:$0xff]
  %v385 = vld [vmem:[%s1 + $0xae8] sm:$0xff]
  %v386 = vld [vmem:[%s1 + $0xaf0] sm:$0xff]
  %v387 = vld [vmem:[%s1 + $0xaf8] sm:$0xff]
  %v388 = vld [vmem:[%s1 + $0xb00] sm:$0xff]
  %v389 = vld [vmem:[%s1 + $0xb08] sm:$0xff]
  %v390 = vld [vmem:[%s1 + $0xb10] sm:$0xff]
  %v391 = vld [vmem:[%s1 + $0xb18] sm:$0xff]
  %v392 = vld [vmem:[%s1 + $0xb20] sm:$0xff]
  %v393 = vld [vmem:[%s1 + $0xb28] sm:$0xff]
  %v394 = vld [vmem:[%s1 + $0xb30] sm:$0xff]
  %v395 = vld [vmem:[%s1 + $0xb38] sm:$0xff]
  %v396 = vld [vmem:[%s1 + $0xb40] sm:$0xff]
  %v397 = vld [vmem:[%s1 + $0xb48] sm:$0xff]
  %v398 = vld [vmem:[%s1 + $0xb50] sm:$0xff]
  %v399 = vld [vmem:[%s1 + $0xb58] sm:$0xff]
  %v400 = vld [vmem:[%s1 + $0xb60] sm:$0xff]
  %v401 = vld [vmem:[%s1 + $0xb68] sm:$0xff]
  %v402 = vld [vmem:[%s1 + $0xb70] sm:$0xff]
  %v403 = vld [vmem:[%s1 + $0xb78] sm:$0xff]
  %v404 = vld [vmem:[%s1 + $0xb80] sm:$0xff]
  %v405 = vld [vmem:[%s1 + $0xb88] sm:$0xff]
  %v406 = vld [vmem:[%s1 + $0xb90] sm:$0xff]
  %v407 = vld [vmem:[%s1 + $0xb98] sm:$0xff]
  %v408 = vld [vmem:[%s1 + $0xba0] sm:$0xff]
  %v409 = vld [vmem:[%s1 + $0xba8] sm:$0xff]
  %v410 = vld [vmem:[%s1 + $0xbb0] sm:$0xff]
  %v411 = vld [vmem:[%s1 + $0xbb8] sm:$0xff]
  %v412 = vld [vmem:[%s1 + $0xbc0] sm:$0xff]
  %v413 = vld [vmem:[%s1 + $0xbc8] sm:$0xff]
  %v414 = vld [vmem:[%s1 + $0xbd0] sm:$0xff]
  %v415 = vld [vmem:[%s1 + $0xbd8] sm:$0xff]
  %v416 = vld [vmem:[%s1 + $0xbe0] sm:$0xff]
  %v417 = vld [vmem:[%s1 + $0xbe8] sm:$0xff]
  %v418 = vld [vmem:[%s1 + $0xbf0] sm:$0xff]
  %v419 = vld [vmem:[%s1 + $0xbf8] sm:$0xff]
  %v420 = vld [vmem:[%s1 + $0xc00] sm:$0xff]
  %v421 = vld [vmem:[%s1 + $0xc08] sm:$0xff]
  %v422 = vld [vmem:[%s1 + $0xc10] sm:$0xff]
  %v423 = vld [vmem:[%s1 + $0xc18] sm:$0xff]
  %v424 = vld [vmem:[%s1 + $0xc20] sm:$0xff]
  %v425 = vld [vmem:[%s1 + $0xc28] sm:$0xff]
  %v426 = vld [vmem:[%s1 + $0xc30] sm:$0xff]
  %v427 = vld [vmem:[%s1 + $0xc38] sm:$0xff]
  %v428 = vld [vmem:[%s1 + $0xc40] sm:$0xff]
  %v429 = vld [vmem:[%s1 + $0xc48] sm:$0xff]
  %v430 = vld [vmem:[%s1 + $0xc50] sm:$0xff]
  %v431 = vld [vmem:[%s1 + $0xc58] sm:$0xff]
  %v432 = vld [vmem:[%s1 + $0xc60] sm:$0xff]
  %v433 = vld [vmem:[%s1 + $0xc68] sm:$0xff]
  %v434 = vld [vmem:[%s1 + $0xc70] sm:$0xff]
  %v435 = vld [vmem:[%s1 + $0xc78] sm:$0xff]
  %v436 = vld [vmem:[%s1 + $0xc80] sm:$0xff]
  %v437 = vld [vmem:[%s1 + $0xc88] sm:$0xff]
  %v438 = vld [vmem:[%s1 + $0xc90] sm:$0xff]
  %v439 = vld [vmem:[%s1 + $0xc98] sm:$0xff]
  %v440 = vld [vmem:[%s1 + $0xca0] sm:$0xff]
  %v441 = vld [vmem:[%s1 + $0xca8] sm:$0xff]
  %v442 = vld [vmem:[%s1 + $0xcb0] sm:$0xff]
  %v443 = vld [vmem:[%s1 + $0xcb8] sm:$0xff]
  %v444 = vld [vmem:[%s1 + $0xcc0] sm:$0xff]
  %v445 = vld [vmem:[%s1 + $0xcc8] sm:$0xff]
  %v446 = vld [vmem:[%s1 + $0xcd0] sm:$0xff]
  %v447 = vld [vmem:[%s1 + $0xcd8] sm:$0xff]
  %v448 = vld [vmem:[%s1 + $0xce0] sm:$0xff]
  %v449 = vld [vmem:[%s1 + $0xce8] sm:$0xff]
  %v450 = vld [vmem:[%s1 + $0xcf0] sm:$0xff]
  %v451 = vld [vmem:[%s1 + $0xcf8] sm:$0xff]
  %v452 = vld [vmem:[%s1 + $0xd00] sm:$0xff]
  %v453 = vld [vmem:[%s1 + $0xd08] sm:$0xff]
  %v454 = vld [vmem:[%s1 + $0xd10] sm:$0xff]
  %v455 = vld [vmem:[%s1 + $0xd18] sm:$0xff]
  %v456 = vld [vmem:[%s1 + $0xd20] sm:$0xff]
  %v457 = vld [vmem:[%s1 + $0xd28] sm:$0xff]
  %v458 = vld [vmem:[%s1 + $0xd30] sm:$0xff]
  %v459 = vld [vmem:[%s1 + $0xd38] sm:$0xff]
  %v460 = vld [vmem:[%s1 + $0xd40] sm:$0xff]
  %v461 = vld [vmem:[%s1 + $0xd48] sm:$0xff]
  %v462 = vld [vmem:[%s1 + $0xd50] sm:$0xff]
  %v463 = vld [vmem:[%s1 + $0xd58] sm:$0xff]
  %v464 = vld [vmem:[%s1 + $0xd60] sm:$0xff]
  %v465 = vld [vmem:[%s1 + $0xd68] sm:$0xff]
  %v466 = vld [vmem:[%s1 + $0xd70] sm:$0xff]
  %v467 = vld [vmem:[%s1 + $0xd78] sm:$0xff]
  %v468 = vld [vmem:[%s1 + $0xd80] sm:$0xff]
  %v469 = vld [vmem:[%s1 + $0xd88] sm:$0xff]
  %v470 = vld [vmem:[%s1 + $0xd90] sm:$0xff]
  %v471 = vld [vmem:[%s1 + $0xd98] sm:$0xff]
  %v472 = vld [vmem:[%s1 + $0xda0] sm:$0xff]
  %v473 = vld [vmem:[%s1 + $0xda8] sm:$0xff]
  %v474 = vld [vmem:[%s1 + $0xdb0] sm:$0xff]
  %v475 = vld [vmem:[%s1 + $0xdb8] sm:$0xff]
  %v476 = vld [vmem:[%s1 + $0xdc0] sm:$0xff]
  %v477 = vld [vmem:[%s1 + $0xdc8] sm:$0xff]
  %v478 = vld [vmem:[%s1 + $0xdd0] sm:$0xff]
  %v479 = vld [vmem:[%s1 + $0xdd8] sm:$0xff]
  %v480 = vld [vmem:[%s1 + $0xde0] sm:$0xff]
  %v481 = vld [vmem:[%s1 + $0xde8] sm:$0xff]
  %v482 = vld [vmem:[%s1 + $0xdf0] sm:$0xff]
  %v483 = vld [vmem:[%s1 + $0xdf8] sm:$0xff]
  %v484 = vld [vmem:[%s1 + $0xe00] sm:$0xff]
  %v485 = vld [vmem:[%s1 + $0xe08] sm:$0xff]
  %v486 = vld [vmem:[%s1 + $0xe10] sm:$0xff]
  %v487 = vld [vmem:[%s1 + $0xe18] sm:$0xff]
  %v488 = vld [vmem:[%s1 + $0xe20] sm:$0xff]
  %v489 = vld [vmem:[%s1 + $0xe28] sm:$0xff]
  %v490 = vld [vmem:[%s1 + $0xe30] sm:$0xff]
  %v491 = vld [vmem:[%s1 + $0xe38] sm:$0xff]
  %v492 = vld [vmem:[%s1 + $0xe40] sm:$0xff]
  %v493 = vld [vmem:[%s1 + $0xe48] sm:$0xff]
  %v494 = vld [vmem:[%s1 + $0xe50] sm:$0xff]
  %v495 = vld [vmem:[%s1 + $0xe58] sm:$0xff]
  %v496 = vld [vmem:[%s1 + $0xe60] sm:$0xff]
  %v497 = vld [vmem:[%s1 + $0xe68] sm:$0xff]
  %v498 = vld [vmem:[%s1 + $0xe70] sm:$0xff]
  %v499 = vld [vmem:[%s1 + $0xe78] sm:$0xff]
  %v500 = vld [vmem:[%s1 + $0xe80] sm:$0xff]
  %v501 = vld [vmem:[%s1 + $0xe88] sm:$0xff]
  %v502 = vld [vmem:[%s1 + $0xe90] sm:$0xff]
  %v503 = vld [vmem:[%s1 + $0xe98] sm:$0xff]
  %v504 = vld [vmem:[%s1 + $0xea0] sm:$0xff]
  %v505 = vld [vmem:[%s1 + $0xea8] sm:$0xff]
  %v506 = vld [vmem:[%s1 + $0xeb0] sm:$0xff]
  %v507 = vld [vmem:[%s1 + $0xeb8] sm:$0xff]
  %v508 = vld [vmem:[%s1 + $0xec0] sm:$0xff]
  %v509 = vld [vmem:[%s1 + $0xec8] sm:$0xff]
  %v510 = vld [vmem:[%s1 + $0xed0] sm:$0xff]
  %v511 = vld [vmem:[%s1 + $0xed8] sm:$0xff]
  %v512 = vld [vmem:[%s1 + $0xee0] sm:$0xff]
  %v513 = vld [vmem:[%s1 + $0xee8] sm:$0xff]
  %v514 = vld [vmem:[%s1 + $0xef0] sm:$0xff]
  %v515 = vld [vmem:[%s1 + $0xef8] sm:$0xff]
  %v516 = vld [vmem:[%s1 + $0xf00] sm:$0xff]
  %v517 = vld [vmem:[%s1 + $0xf08] sm:$0xff]
  %v518 = vld [vmem:[%s1 + $0xf10] sm:$0xff]
  %v519 = vld [vmem:[%s1 + $0xf18] sm:$0xff]
  %v520 = vld [vmem:[%s1 + $0xf20] sm:$0xff]
  %v521 = vld [vmem:[%s1 + $0xf28] sm:$0xff]
  %v522 = vld [vmem:[%s1 + $0xf30] sm:$0xff]
  %v523 = vld [vmem:[%s1 + $0xf38] sm:$0xff]
  %v524 = vld [vmem:[%s1 + $0xf40] sm:$0xff]
  %v525 = vld [vmem:[%s1 + $0xf48] sm:$0xff]
  %v526 = vld [vmem:[%s1 + $0xf50] sm:$0xff]
  %v527 = vld [vmem:[%s1 + $0xf58] sm:$0xff]
  %v528 = vld [vmem:[%s1 + $0xf60] sm:$0xff]
  %v529 = vld [vmem:[%s1 + $0xf68] sm:$0xff]
  %v530 = vld [vmem:[%s1 + $0xf70] sm:$0xff]
  %v531 = vld [vmem:[%s1 + $0xf78] sm:$0xff]
  %v532 = vld [vmem:[%s1 + $0xf80] sm:$0xff]
  %v533 = vld [vmem:[%s1 + $0xf88] sm:$0xff]
  %v534 = vld [vmem:[%s1 + $0xf90] sm:$0xff]
  %v535 = vld [vmem:[%s1 + $0xf98] sm:$0xff]
  %v536 = vld [vmem:[%s1 + $0xfa0] sm:$0xff]
  %v537 = vld [vmem:[%s1 + $0xfa8] sm:$0xff]
  %v538 = vld [vmem:[%s1 + $0xfb0] sm:$0xff]
  %v539 = vld [vmem:[%s1 + $0xfb8] sm:$0xff]
  %v540 = vld [vmem:[%s1 + $0xfc0] sm:$0xff]
  %v541 = vld [vmem:[%s1 + $0xfc8] sm:$0xff]
  %v542 = vld [vmem:[%s1 + $0xfd0] sm:$0xff]
  %v543 = vld [vmem:[%s1 + $0xfd8] sm:$0xff]
  %v544 = vld [vmem:[%s1 + $0xfe0] sm:$0xff]
  %v545 = vld [vmem:[%s1 + $0xfe8] sm:$0xff]
  %v546 = vld [vmem:[%s1 + $0xff0] sm:$0xff]
  %v547 = vld [vmem:[%s1 + $0xff8] sm:$0xff]
  %v548 = vld [vmem:[%s1 + $0x1000] sm:$0xff]
  %v549 = vld [vmem:[%s1 + $0x1008] sm:$0xff]
  %v550 = vld [vmem:[%s1 + $0x1010] sm:$0xff]
  %v551 = vld [vmem:[%s1 + $0x1018] sm:$0xff]
  %v552 = vld [vmem:[%s1 + $0x1020] sm:$0xff]
  %v553 = vld [vmem:[%s1 + $0x1028] sm:$0xff]
  %v554 = vld [vmem:[%s1 + $0x1030] sm:$0xff]
  %v555 = vld [vmem:[%s1 + $0x1038] sm:$0xff]
  %v556 = vld [vmem:[%s1 + $0x1040] sm:$0xff]
  %v557 = vld [vmem:[%s1 + $0x1048] sm:$0xff]
  %v558 = vld [vmem:[%s1 + $0x1050] sm:$0xff]
  %v559 = vld [vmem:[%s1 + $0x1058] sm:$0xff]
  %v560 = vld [vmem:[%s1 + $0x1060] sm:$0xff]
  %v561 = vld [vmem:[%s1 + $0x1068] sm:$0xff]
  %v562 = vld [vmem:[%s1 + $0x1070] sm:$0xff]
  %v563 = vld [vmem:[%s1 + $0x1078] sm:$0xff]
  %v564 = vld [vmem:[%s1 + $0x1080] sm:$0xff]
  %v565 = vld [vmem:[%s1 + $0x1088] sm:$0xff]
  %v566 = vld [vmem:[%s1 + $0x1090] sm:$0xff]
  %v567 = vld [vmem:[%s1 + $0x1098] sm:$0xff]
  %v568 = vld [vmem:[%s1 + $0x10a0] sm:$0xff]
  %v569 = vld [vmem:[%s1 + $0x10a8] sm:$0xff]
  %v570 = vld [vmem:[%s1 + $0x10b0] sm:$0xff]
  %v571 = vld [vmem:[%s1 + $0x10b8] sm:$0xff]
  %v572 = vld [vmem:[%s1 + $0x10c0] sm:$0xff]
  %v573 = vld [vmem:[%s1 + $0x10c8] sm:$0xff]
  %v574 = vld [vmem:[%s1 + $0x10d0] sm:$0xff]
  %v575 = vld [vmem:[%s1 + $0x10d8] sm:$0xff]
  %v576 = vld [vmem:[%s1 + $0x10e0] sm:$0xff]
  %v577 = vld [vmem:[%s1 + $0x10e8] sm:$0xff]
  %v578 = vld [vmem:[%s1 + $0x10f0] sm:$0xff]
  %v579 = vld [vmem:[%s1 + $0x10f8] sm:$0xff]
  %v580 = vld [vmem:[%s1 + $0x1100] sm:$0xff]
  %v581 = vld [vmem:[%s1 + $0x1108] sm:$0xff]
  %v582 = vld [vmem:[%s1 + $0x1110] sm:$0xff]
  %v583 = vld [vmem:[%s1 + $0x1118] sm:$0xff]
  %v584 = vld [vmem:[%s1 + $0x1120] sm:$0xff]
  %v585 = vld [vmem:[%s1 + $0x1128] sm:$0xff]
  %v586 = vld [vmem:[%s1 + $0x1130] sm:$0xff]
  %v587 = vld [vmem:[%s1 + $0x1138] sm:$0xff]
  %v588 = vld [vmem:[%s1 + $0x1140] sm:$0xff]
  %v589 = vld [vmem:[%s1 + $0x1148] sm:$0xff]
  %v590 = vld [vmem:[%s1 + $0x1150] sm:$0xff]
  %v591 = vld [vmem:[%s1 + $0x1158] sm:$0xff]
  %v592 = vld [vmem:[%s1 + $0x1160] sm:$0xff]
  %v593 = vld [vmem:[%s1 + $0x1168] sm:$0xff]
  %v594 = vld [vmem:[%s1 + $0x1170] sm:$0xff]
  %v595 = vld [vmem:[%s1 + $0x1178] sm:$0xff]
  %v596 = vld [vmem:[%s1 + $0x1180] sm:$0xff]
  %v597 = vld [vmem:[%s1 + $0x1188] sm:$0xff]
  %v598 = vld [vmem:[%s1 + $0x1190] sm:$0xff]
  %v599 = vld [vmem:[%s1 + $0x1198] sm:$0xff]
  %v600 = vld [vmem:[%s1 + $0x11a0] sm:$0xff]
  %v601 = vld [vmem:[%s1 + $0x11a8] sm:$0xff]
  %v602 = vld [vmem:[%s1 + $0x11b0] sm:$0xff]
  %v603 = vld [vmem:[%s1 + $0x11b8] sm:$0xff]
  %v604 = vld [vmem:[%s1 + $0x11c0] sm:$0xff]
  %v605 = vld [vmem:[%s1 + $0x11c8] sm:$0xff]
  %v606 = vld [vmem:[%s1 + $0x11d0] sm:$0xff]
  %v607 = vld [vmem:[%s1 + $0x11d8] sm:$0xff]
  %v608 = vld [vmem:[%s1 + $0x11e0] sm:$0xff]
  %v609 = vld [vmem:[%s1 + $0x11e8] sm:$0xff]
  %v610 = vld [vmem:[%s1 + $0x11f0] sm:$0xff]
  %v611 = vld [vmem:[%s1 + $0x11f8] sm:$0xff]
  %v612 = vld [vmem:[%s1 + $0x1200] sm:$0xff]
  %v613 = vld [vmem:[%s1 + $0x1208] sm:$0xff]
  %v614 = vld [vmem:[%s1 + $0x1210] sm:$0xff]
  %v615 = vld [vmem:[%s1 + $0x1218] sm:$0xff]
  %v616 = vld [vmem:[%s1 + $0x1220] sm:$0xff]
  %v617 = vld [vmem:[%s1 + $0x1228] sm:$0xff]
  %v618 = vld [vmem:[%s1 + $0x1230] sm:$0xff]
  %v619 = vld [vmem:[%s1 + $0x1238] sm:$0xff]
  %v620 = vld [vmem:[%s1 + $0x1240] sm:$0xff]
  %v621 = vld [vmem:[%s1 + $0x1248] sm:$0xff]
  %v622 = vld [vmem:[%s1 + $0x1250] sm:$0xff]
  %v623 = vld [vmem:[%s1 + $0x1258] sm:$0xff]
  %v624 = vld [vmem:[%s1 + $0x1260] sm:$0xff]
  %v625 = vld [vmem:[%s1 + $0x1268] sm:$0xff]
  %v626 = vld [vmem:[%s1 + $0x1270] sm:$0xff]
  %v627 = vld [vmem:[%s1 + $0x1278] sm:$0xff]
  %v628 = vld [vmem:[%s1 + $0x1280] sm:$0xff]
  %v629 = vld [vmem:[%s1 + $0x1288] sm:$0xff]
  %v630 = vld [vmem:[%s1 + $0x1290] sm:$0xff]
  %v631 = vld [vmem:[%s1 + $0x1298] sm:$0xff]
  %v632 = vld [vmem:[%s1 + $0x12a0] sm:$0xff]
  %v633 = vld [vmem:[%s1 + $0x12a8] sm:$0xff]
  %v634 = vld [vmem:[%s1 + $0x12b0] sm:$0xff]
  %v635 = vld [vmem:[%s1 + $0x12b8] sm:$0xff]
  %v636 = vld [vmem:[%s1 + $0x12c0] sm:$0xff]
  %v637 = vld [vmem:[%s1 + $0x12c8] sm:$0xff]
  %v638 = vld [vmem:[%s1 + $0x12d0] sm:$0xff]
  %v639 = vld [vmem:[%s1 + $0x12d8] sm:$0xff]
  %v640 = vld [vmem:[%s1 + $0x12e0] sm:$0xff]
  %v641 = vld [vmem:[%s1 + $0x12e8] sm:$0xff]
  %v642 = vld [vmem:[%s1 + $0x12f0] sm:$0xff]
  %v643 = vld [vmem:[%s1 + $0x12f8] sm:$0xff]
  %v644 = vld [vmem:[%s1 + $0x1300] sm:$0xff]
  %v645 = vld [vmem:[%s1 + $0x1308] sm:$0xff]
  %v646 = vld [vmem:[%s1 + $0x1310] sm:$0xff]
  %v647 = vld [vmem:[%s1 + $0x1318] sm:$0xff]
  %v648 = vld [vmem:[%s1 + $0x1320] sm:$0xff]
  %v649 = vld [vmem:[%s1 + $0x1328] sm:$0xff]
  %v650 = vld [vmem:[%s1 + $0x1330] sm:$0xff]
  %v651 = vld [vmem:[%s1 + $0x1338] sm:$0xff]
  %v652 = vld [vmem:[%s1 + $0x1340] sm:$0xff]
  %v653 = vld [vmem:[%s1 + $0x1348] sm:$0xff]
  %v654 = vld [vmem:[%s1 + $0x1350] sm:$0xff]
  %v655 = vld [vmem:[%s1 + $0x1358] sm:$0xff]
  %v656 = vld [vmem:[%s1 + $0x1360] sm:$0xff]
  %v657 = vld [vmem:[%s1 + $0x1368] sm:$0xff]
  %v658 = vld [vmem:[%s1 + $0x1370] sm:$0xff]
  %v659 = vld [vmem:[%s1 + $0x1378] sm:$0xff]
  %v660 = vld [vmem:[%s1 + $0x1380] sm:$0xff]
  %v661 = vld [vmem:[%s1 + $0x1388] sm:$0xff]
  %v662 = vld [vmem:[%s1 + $0x1390] sm:$0xff]
  %v663 = vld [vmem:[%s1 + $0x1398] sm:$0xff]
  %v664 = vld [vmem:[%s1 + $0x13a0] sm:$0xff]
  %v665 = vld [vmem:[%s1 + $0x13a8] sm:$0xff]
  %v666 = vld [vmem:[%s1 + $0x13b0] sm:$0xff]
  %v667 = vld [vmem:[%s1 + $0x13b8] sm:$0xff]
  %v668 = vld [vmem:[%s1 + $0x13c0] sm:$0xff]
  %v669 = vld [vmem:[%s1 + $0x13c8] sm:$0xff]
  %v670 = vld [vmem:[%s1 + $0x13d0] sm:$0xff]
  %v671 = vld [vmem:[%s1 + $0x13d8] sm:$0xff]
  %v672 = vld [vmem:[%s1 + $0x13e0] sm:$0xff]
  %v673 = vld [vmem:[%s1 + $0x13e8] sm:$0xff]
  %v674 = vld [vmem:[%s1 + $0x13f0] sm:$0xff]
  %v675 = vld [vmem:[%s1 + $0x13f8] sm:$0xff]
  %v676 = vld [vmem:[%s1 + $0x1400] sm:$0xff]
  %v677 = vld [vmem:[%s1 + $0x1408] sm:$0xff]
  %v678 = vld [vmem:[%s1 + $0x1410] sm:$0xff]
  %v679 = vld [vmem:[%s1 + $0x1418] sm:$0xff]
  %v680 = vld [vmem:[%s1 + $0x1420] sm:$0xff]
  %v681 = vld [vmem:[%s1 + $0x1428] sm:$0xff]
  %v682 = vld [vmem:[%s1 + $0x1430] sm:$0xff]
  %v683 = vld [vmem:[%s1 + $0x1438] sm:$0xff]
  %v684 = vld [vmem:[%s1 + $0x1440] sm:$0xff]
  %v685 = vld [vmem:[%s1 + $0x1448] sm:$0xff]
  %v686 = vld [vmem:[%s1 + $0x1450] sm:$0xff]
  %v687 = vld [vmem:[%s1 + $0x1458] sm:$0xff]
  %v688 = vld [vmem:[%s1 + $0x1460] sm:$0xff]
  %v689 = vld [vmem:[%s1 + $0x1468] sm:$0xff]
  %v690 = vld [vmem:[%s1 + $0x1470] sm:$0xff]
  %v691 = vld [vmem:[%s1 + $0x1478] sm:$0xff]
  %v692 = vld [vmem:[%s1 + $0x1480] sm:$0xff]
  %v693 = vld [vmem:[%s1 + $0x1488] sm:$0xff]
  %v694 = vld [vmem:[%s1 + $0x1490] sm:$0xff]
  %v695 = vld [vmem:[%s1 + $0x1498] sm:$0xff]
  %v696 = vld [vmem:[%s1 + $0x14a0] sm:$0xff]
  %v697 = vld [vmem:[%s1 + $0x14a8] sm:$0xff]
  %v698 = vld [vmem:[%s1 + $0x14b0] sm:$0xff]
  %v699 = vld [vmem:[%s1 + $0x14b8] sm:$0xff]
  %v700 = vld [vmem:[%s1 + $0x14c0] sm:$0xff]
  %v701 = vld [vmem:[%s1 + $0x14c8] sm:$0xff]
  %v702 = vld [vmem:[%s1 + $0x14d0] sm:$0xff]
  %v703 = vld [vmem:[%s1 + $0x14d8] sm:$0xff]
  %v704 = vld [vmem:[%s1 + $0x14e0] sm:$0xff]
  %v705 = vld [vmem:[%s1 + $0x14e8] sm:$0xff]
  %v706 = vld [vmem:[%s1 + $0x14f0] sm:$0xff]
  %v707 = vld [vmem:[%s1 + $0x14f8] sm:$0xff]
  %v708 = vld [vmem:[%s1 + $0x1500] sm:$0xff]
  %v709 = vld [vmem:[%s1 + $0x1508] sm:$0xff]
  %v710 = vld [vmem:[%s1 + $0x1510] sm:$0xff]
  %v711 = vld [vmem:[%s1 + $0x1518] sm:$0xff]
  %v712 = vld [vmem:[%s1 + $0x1520] sm:$0xff]
  %v713 = vld [vmem:[%s1 + $0x1528] sm:$0xff]
  %v714 = vld [vmem:[%s1 + $0x1530] sm:$0xff]
  %v715 = vld [vmem:[%s1 + $0x1538] sm:$0xff]
  %v716 = vld [vmem:[%s1 + $0x1540] sm:$0xff]
  %v717 = vld [vmem:[%s1 + $0x1548] sm:$0xff]
  %v718 = vld [vmem:[%s1 + $0x1550] sm:$0xff]
  %v719 = vld [vmem:[%s1 + $0x1558] sm:$0xff]
  %v720 = vld [vmem:[%s1 + $0x1560] sm:$0xff]
  %v721 = vld [vmem:[%s1 + $0x1568] sm:$0xff]
  %v722 = vld [vmem:[%s1 + $0x1570] sm:$0xff]
  %v723 = vld [vmem:[%s1 + $0x1578] sm:$0xff]
  %v724 = vld [vmem:[%s1 + $0x1580] sm:$0xff]
  %v725 = vld [vmem:[%s1 + $0x1588] sm:$0xff]
  %v726 = vld [vmem:[%s1 + $0x1590] sm:$0xff]
  %v727 = vld [vmem:[%s1 + $0x1598] sm:$0xff]
  %v728 = vld [vmem:[%s1 + $0x15a0] sm:$0xff]
  %v729 = vld [vmem:[%s1 + $0x15a8] sm:$0xff]
  %v730 = vld [vmem:[%s1 + $0x15b0] sm:$0xff]
  %v731 = vld [vmem:[%s1 + $0x15b8] sm:$0xff]
  %v732 = vld [vmem:[%s1 + $0x15c0] sm:$0xff]
  %v733 = vld [vmem:[%s1 + $0x15c8] sm:$0xff]
  %v734 = vld [vmem:[%s1 + $0x15d0] sm:$0xff]
  %v735 = vld [vmem:[%s1 + $0x15d8] sm:$0xff]
  %v736 = vld [vmem:[%s1 + $0x15e0] sm:$0xff]
  %v737 = vld [vmem:[%s1 + $0x15e8] sm:$0xff]
  %v738 = vld [vmem:[%s1 + $0x15f0] sm:$0xff]
  %v739 = vld [vmem:[%s1 + $0x15f8] sm:$0xff]
  %v740 = vld [vmem:[%s1 + $0x1600] sm:$0xff]
  %v741 = vld [vmem:[%s1 + $0x1608] sm:$0xff]
  %v742 = vld [vmem:[%s1 + $0x1610] sm:$0xff]
  %v743 = vld [vmem:[%s1 + $0x1618] sm:$0xff]
  %v744 = vld [vmem:[%s1 + $0x1620] sm:$0xff]
  %v745 = vld [vmem:[%s1 + $0x1628] sm:$0xff]
  %v746 = vld [vmem:[%s1 + $0x1630] sm:$0xff]
  %v747 = vld [vmem:[%s1 + $0x1638] sm:$0xff]
  %v748 = vld [vmem:[%s1 + $0x1640] sm:$0xff]
  %v749 = vld [vmem:[%s1 + $0x1648] sm:$0xff]
  %v750 = vld [vmem:[%s1 + $0x1650] sm:$0xff]
  %v751 = vld [vmem:[%s1 + $0x1658] sm:$0xff]
  %v752 = vld [vmem:[%s1 + $0x1660] sm:$0xff]
  %v753 = vld [vmem:[%s1 + $0x1668] sm:$0xff]
  %v754 = vld [vmem:[%s1 + $0x1670] sm:$0xff]
  %v755 = vld [vmem:[%s1 + $0x1678] sm:$0xff]
  %v756 = vld [vmem:[%s1 + $0x1680] sm:$0xff]
  %v757 = vld [vmem:[%s1 + $0x1688] sm:$0xff]
  %v758 = vld [vmem:[%s1 + $0x1690] sm:$0xff]
  %v759 = vld [vmem:[%s1 + $0x1698] sm:$0xff]
  %v760 = vld [vmem:[%s1 + $0x16a0] sm:$0xff]
  %v761 = vld [vmem:[%s1 + $0x16a8] sm:$0xff]
  %v762 = vld [vmem:[%s1 + $0x16b0] sm:$0xff]
  %v763 = vld [vmem:[%s1 + $0x16b8] sm:$0xff]
  %v764 = vld [vmem:[%s1 + $0x16c0] sm:$0xff]
  %v765 = vld [vmem:[%s1 + $0x16c8] sm:$0xff]
  %v766 = vld [vmem:[%s1 + $0x16d0] sm:$0xff]
  %v767 = vld [vmem:[%s1 + $0x16d8] sm:$0xff]
  %v768 = vld [vmem:[%s1 + $0x16e0] sm:$0xff]
  %v769 = vld [vmem:[%s1 + $0x16e8] sm:$0xff]
  %v770 = vld [vmem:[%s1 + $0x16f0] sm:$0xff]
  %v771 = vld [vmem:[%s1 + $0x16f8] sm:$0xff]
  %v772 = vld [vmem:[%s1 + $0x1700] sm:$0xff]
  %v773 = vld [vmem:[%s1 + $0x1708] sm:$0xff]
  %v774 = vld [vmem:[%s1 + $0x1710] sm:$0xff]
  %v775 = vld [vmem:[%s1 + $0x1718] sm:$0xff]
  %v776 = vld [vmem:[%s1 + $0x1720] sm:$0xff]
  %v777 = vld [vmem:[%s1 + $0x1728] sm:$0xff]
  %v778 = vld [vmem:[%s1 + $0x1730] sm:$0xff]
  %v779 = vld [vmem:[%s1 + $0x1738] sm:$0xff]
  %v780 = vld [vmem:[%s1 + $0x1740] sm:$0xff]
  %v781 = vld [vmem:[%s1 + $0x1748] sm:$0xff]
  %v782 = vld [vmem:[%s1 + $0x1750] sm:$0xff]
  %v783 = vld [vmem:[%s1 + $0x1758] sm:$0xff]
  %v784 = vld [vmem:[%s1 + $0x1760] sm:$0xff]
  %v785 = vld [vmem:[%s1 + $0x1768] sm:$0xff]
  %v786 = vld [vmem:[%s1 + $0x1770] sm:$0xff]
  %v787 = vld [vmem:[%s1 + $0x1778] sm:$0xff]
  %v788 = vld [vmem:[%s1 + $0x1780] sm:$0xff]
  %v789 = vld [vmem:[%s1 + $0x1788] sm:$0xff]
  %v790 = vld [vmem:[%s1 + $0x1790] sm:$0xff]
  %v791 = vld [vmem:[%s1 + $0x1798] sm:$0xff]
  %v792 = vld [vmem:[%s1 + $0x17a0] sm:$0xff]
  %v793 = vld [vmem:[%s1 + $0x17a8] sm:$0xff]
  %v794 = vld [vmem:[%s1 + $0x17b0] sm:$0xff]
  %v795 = vld [vmem:[%s1 + $0x17b8] sm:$0xff]
  %v796 = vld [vmem:[%s1 + $0x17c0] sm:$0xff]
  %v797 = vld [vmem:[%s1 + $0x17c8] sm:$0xff]
  %v798 = vld [vmem:[%s1 + $0x17d0] sm:$0xff]
  %v799 = vld [vmem:[%s1 + $0x17d8] sm:$0xff]
  %v800 = vld [vmem:[%s1 + $0x17e0] sm:$0xff]
  %v801 = vld [vmem:[%s1 + $0x17e8] sm:$0xff]
  %v802 = vld [vmem:[%s1 + $0x17f0] sm:$0xff]
  %v803 = vld [vmem:[%s1 + $0x17f8] sm:$0xff]
  %v804 = vld [vmem:[%s1 + $0x1800] sm:$0xff]
  %v805 = vld [vmem:[%s1 + $0x1808] sm:$0xff]
  %v806 = vld [vmem:[%s1 + $0x1810] sm:$0xff]
  %v807 = vld [vmem:[%s1 + $0x1818] sm:$0xff]
  %v808 = vld [vmem:[%s1 + $0x1820] sm:$0xff]
  %v809 = vld [vmem:[%s1 + $0x1828] sm:$0xff]
  %v810 = vld [vmem:[%s1 + $0x1830] sm:$0xff]
  %v811 = vld [vmem:[%s1 + $0x1838] sm:$0xff]
  %v812 = vld [vmem:[%s1 + $0x1840] sm:$0xff]
  %v813 = vld [vmem:[%s1 + $0x1848] sm:$0xff]
  %v814 = vld [vmem:[%s1 + $0x1850] sm:$0xff]
  %v815 = vld [vmem:[%s1 + $0x1858] sm:$0xff]
  %v816 = vld [vmem:[%s1 + $0x1860] sm:$0xff]
  %v817 = vld [vmem:[%s1 + $0x1868] sm:$0xff]
  %v818 = vld [vmem:[%s1 + $0x1870] sm:$0xff]
  %v819 = vld [vmem:[%s1 + $0x1878] sm:$0xff]
  %v820 = vld [vmem:[%s1 + $0x1880] sm:$0xff]
  %v821 = vld [vmem:[%s1 + $0x1888] sm:$0xff]
  %v822 = vld [vmem:[%s1 + $0x1890] sm:$0xff]
  %v823 = vld [vmem:[%s1 + $0x1898] sm:$0xff]
  %v824 = vld [vmem:[%s1 + $0x18a0] sm:$0xff]
  %v825 = vld [vmem:[%s1 + $0x18a8] sm:$0xff]
  %v826 = vld [vmem:[%s1 + $0x18b0] sm:$0xff]
  %v827 = vld [vmem:[%s1 + $0x18b8] sm:$0xff]
  %v828 = vld [vmem:[%s1 + $0x18c0] sm:$0xff]
  %v829 = vld [vmem:[%s1 + $0x18c8] sm:$0xff]
  %v830 = vld [vmem:[%s1 + $0x18d0] sm:$0xff]
  %v831 = vld [vmem:[%s1 + $0x18d8] sm:$0xff]
  %v832 = vld [vmem:[%s1 + $0x18e0] sm:$0xff]
  %v833 = vld [vmem:[%s1 + $0x18e8] sm:$0xff]
  %v834 = vld [vmem:[%s1 + $0x18f0] sm:$0xff]
  %v835 = vld [vmem:[%s1 + $0x18f8] sm:$0xff]
  %v836 = vld [vmem:[%s1 + $0x1900] sm:$0xff]
  %v837 = vld [vmem:[%s1 + $0x1908] sm:$0xff]
  %v838 = vld [vmem:[%s1 + $0x1910] sm:$0xff]
  %v839 = vld [vmem:[%s1 + $0x1918] sm:$0xff]
  %v840 = vld [vmem:[%s1 + $0x1920] sm:$0xff]
  %v841 = vld [vmem:[%s1 + $0x1928] sm:$0xff]
  %v842 = vld [vmem:[%s1 + $0x1930] sm:$0xff]
  %v843 = vld [vmem:[%s1 + $0x1938] sm:$0xff]
  %v844 = vld [vmem:[%s1 + $0x1940] sm:$0xff]
  %v845 = vld [vmem:[%s1 + $0x1948] sm:$0xff]
  %v846 = vld [vmem:[%s1 + $0x1950] sm:$0xff]
  %v847 = vld [vmem:[%s1 + $0x1958] sm:$0xff]
  %v848 = vld [vmem:[%s1 + $0x1960] sm:$0xff]
  %v849 = vld [vmem:[%s1 + $0x1968] sm:$0xff]
  %v850 = vld [vmem:[%s1 + $0x1970] sm:$0xff]
  %v851 = vld [vmem:[%s1 + $0x1978] sm:$0xff]
  %v852 = vld [vmem:[%s1 + $0x1980] sm:$0xff]
  %v853 = vld [vmem:[%s1 + $0x1988] sm:$0xff]
  %v854 = vld [vmem:[%s1 + $0x1990] sm:$0xff]
  %v855 = vld [vmem:[%s1 + $0x1998] sm:$0xff]
  %v856 = vld [vmem:[%s1 + $0x19a0] sm:$0xff]
  %v857 = vld [vmem:[%s1 + $0x19a8] sm:$0xff]
  %v858 = vld [vmem:[%s1 + $0x19b0] sm:$0xff]
  %v859 = vld [vmem:[%s1 + $0x19b8] sm:$0xff]
  %v860 = vld [vmem:[%s1 + $0x19c0] sm:$0xff]
  %v861 = vld [vmem:[%s1 + $0x19c8] sm:$0xff]
  %v862 = vld [vmem:[%s1 + $0x19d0] sm:$0xff]
  %v863 = vld [vmem:[%s1 + $0x19d8] sm:$0xff]
  %v864 = vld [vmem:[%s1 + $0x19e0] sm:$0xff]
  %v865 = vld [vmem:[%s1 + $0x19e8] sm:$0xff]
  %v866 = vld [vmem:[%s1 + $0x19f0] sm:$0xff]
  %v867 = vld [vmem:[%s1 + $0x19f8] sm:$0xff]
  %v868 = vld [vmem:[%s1 + $0x1a00] sm:$0xff]
  %v869 = vld [vmem:[%s1 + $0x1a08] sm:$0xff]
  %v870 = vld [vmem:[%s1 + $0x1a10] sm:$0xff]
  %v871 = vld [vmem:[%s1 + $0x1a18] sm:$0xff]
  %v872 = vld [vmem:[%s1 + $0x1a20] sm:$0xff]
  %v873 = vld [vmem:[%s1 + $0x1a28] sm:$0xff]
  %v874 = vld [vmem:[%s1 + $0x1a30] sm:$0xff]
  %v875 = vld [vmem:[%s1 + $0x1a38] sm:$0xff]
  %v876 = vld [vmem:[%s1 + $0x1a40] sm:$0xff]
  %v877 = vld [vmem:[%s1 + $0x1a48] sm:$0xff]
  %v878 = vld [vmem:[%s1 + $0x1a50] sm:$0xff]
  %v879 = vld [vmem:[%s1 + $0x1a58] sm:$0xff]
  %v880 = vld [vmem:[%s1 + $0x1a60] sm:$0xff]
  %v881 = vld [vmem:[%s1 + $0x1a68] sm:$0xff]
  %v882 = vld [vmem:[%s1 + $0x1a70] sm:$0xff]
  %v883 = vld [vmem:[%s1 + $0x1a78] sm:$0xff]
  %v884 = vld [vmem:[%s1 + $0x1a80] sm:$0xff]
  %v885 = vld [vmem:[%s1 + $0x1a88] sm:$0xff]
  %v886 = vld [vmem:[%s1 + $0x1a90] sm:$0xff]
  %v887 = vld [vmem:[%s1 + $0x1a98] sm:$0xff]
  %v888 = vld [vmem:[%s1 + $0x1aa0] sm:$0xff]
  %v889 = vld [vmem:[%s1 + $0x1aa8] sm:$0xff]
  %v890 = vld [vmem:[%s1 + $0x1ab0] sm:$0xff]
  %v891 = vld [vmem:[%s1 + $0x1ab8] sm:$0xff]
  %v892 = vld [vmem:[%s1 + $0x1ac0] sm:$0xff]
  %v893 = vld [vmem:[%s1 + $0x1ac8] sm:$0xff]
  %v894 = vld [vmem:[%s1 + $0x1ad0] sm:$0xff]
  %v895 = vld [vmem:[%s1 + $0x1ad8] sm:$0xff]
  %v896 = vld [vmem:[%s1 + $0x1ae0] sm:$0xff]
  %v897 = vld [vmem:[%s1 + $0x1ae8] sm:$0xff]
  %v898 = vld [vmem:[%s1 + $0x1af0] sm:$0xff]
  %v899 = vld [vmem:[%s1 + $0x1af8] sm:$0xff]
  %v900 = vld [vmem:[%s1 + $0x1b00] sm:$0xff]
  %v901 = vld [vmem:[%s1 + $0x1b08] sm:$0xff]
  %v902 = vld [vmem:[%s1 + $0x1b10] sm:$0xff]
  %v903 = vld [vmem:[%s1 + $0x1b18] sm:$0xff]
  %v904 = vld [vmem:[%s1 + $0x1b20] sm:$0xff]
  %v905 = vld [vmem:[%s1 + $0x1b28] sm:$0xff]
  %v906 = vld [vmem:[%s1 + $0x1b30] sm:$0xff]
  %v907 = vld [vmem:[%s1 + $0x1b38] sm:$0xff]
  %v908 = vld [vmem:[%s1 + $0x1b40] sm:$0xff]
  %v909 = vld [vmem:[%s1 + $0x1b48] sm:$0xff]
  %v910 = vld [vmem:[%s1 + $0x1b50] sm:$0xff]
  %v911 = vld [vmem:[%s1 + $0x1b58] sm:$0xff]
  %v912 = vld [vmem:[%s1 + $0x1b60] sm:$0xff]
  %v913 = vld [vmem:[%s1 + $0x1b68] sm:$0xff]
  %v914 = vld [vmem:[%s1 + $0x1b70] sm:$0xff]
  %v915 = vld [vmem:[%s1 + $0x1b78] sm:$0xff]
  %v916 = vld [vmem:[%s1 + $0x1b80] sm:$0xff]
  %v917 = vld [vmem:[%s1 + $0x1b88] sm:$0xff]
  %v918 = vld [vmem:[%s1 + $0x1b90] sm:$0xff]
  %v919 = vld [vmem:[%s1 + $0x1b98] sm:$0xff]
  %v920 = vld [vmem:[%s1 + $0x1ba0] sm:$0xff]
  %v921 = vld [vmem:[%s1 + $0x1ba8] sm:$0xff]
  %v922 = vld [vmem:[%s1 + $0x1bb0] sm:$0xff]
  %v923 = vld [vmem:[%s1 + $0x1bb8] sm:$0xff]
  %v924 = vld [vmem:[%s1 + $0x1bc0] sm:$0xff]
  %v925 = vld [vmem:[%s1 + $0x1bc8] sm:$0xff]
  %v926 = vld [vmem:[%s1 + $0x1bd0] sm:$0xff]
  %v927 = vld [vmem:[%s1 + $0x1bd8] sm:$0xff]
  %v928 = vld [vmem:[%s1 + $0x1be0] sm:$0xff]
  %v929 = vld [vmem:[%s1 + $0x1be8] sm:$0xff]
  %v930 = vld [vmem:[%s1 + $0x1bf0] sm:$0xff]
  %v931 = vld [vmem:[%s1 + $0x1bf8] sm:$0xff]
  %v932 = vld [vmem:[%s1 + $0x1c00] sm:$0xff]
  %v933 = vld [vmem:[%s1 + $0x1c08] sm:$0xff]
  %v934 = vld [vmem:[%s1 + $0x1c10] sm:$0xff]
  %v935 = vld [vmem:[%s1 + $0x1c18] sm:$0xff]
  %v936 = vld [vmem:[%s1 + $0x1c20] sm:$0xff]
  %v937 = vld [vmem:[%s1 + $0x1c28] sm:$0xff]
  %v938 = vld [vmem:[%s1 + $0x1c30] sm:$0xff]
  %v939 = vld [vmem:[%s1 + $0x1c38] sm:$0xff]
  %v940 = vld [vmem:[%s1 + $0x1c40] sm:$0xff]
  %v941 = vld [vmem:[%s1 + $0x1c48] sm:$0xff]
  %v942 = vld [vmem:[%s1 + $0x1c50] sm:$0xff]
  %v943 = vld [vmem:[%s1 + $0x1c58] sm:$0xff]
  %v944 = vld [vmem:[%s1 + $0x1c60] sm:$0xff]
  %v945 = vld [vmem:[%s1 + $0x1c68] sm:$0xff]
  %v946 = vld [vmem:[%s1 + $0x1c70] sm:$0xff]
  %v947 = vld [vmem:[%s1 + $0x1c78] sm:$0xff]
  %v948 = vld [vmem:[%s1 + $0x1c80] sm:$0xff]
  %v949 = vld [vmem:[%s1 + $0x1c88] sm:$0xff]
  %v950 = vld [vmem:[%s1 + $0x1c90] sm:$0xff]
  %v951 = vld [vmem:[%s1 + $0x1c98] sm:$0xff]
  %v952 = vld [vmem:[%s1 + $0x1ca0] sm:$0xff]
  %v953 = vld [vmem:[%s1 + $0x1ca8] sm:$0xff]
  %v954 = vld [vmem:[%s1 + $0x1cb0] sm:$0xff]
  %v955 = vld [vmem:[%s1 + $0x1cb8] sm:$0xff]
  %v956 = vld [vmem:[%s1 + $0x1cc0] sm:$0xff]
  %v957 = vld [vmem:[%s1 + $0x1cc8] sm:$0xff]
  %v958 = vld [vmem:[%s1 + $0x1cd0] sm:$0xff]
  %v959 = vld [vmem:[%s1 + $0x1cd8] sm:$0xff]
  %v960 = vld [vmem:[%s1 + $0x1ce0] sm:$0xff]
  %v961 = vld [vmem:[%s1 + $0x1ce8] sm:$0xff]
  %v962 = vld [vmem:[%s1 + $0x1cf0] sm:$0xff]
  %v963 = vld [vmem:[%s1 + $0x1cf8] sm:$0xff]
  %v964 = vld [vmem:[%s1 + $0x1d00] sm:$0xff]
  %v965 = vld [vmem:[%s1 + $0x1d08] sm:$0xff]
  %v966 = vld [vmem:[%s1 + $0x1d10] sm:$0xff]
  %v967 = vld [vmem:[%s1 + $0x1d18] sm:$0xff]
  %v968 = vld [vmem:[%s1 + $0x1d20] sm:$0xff]
  %v969 = vld [vmem:[%s1 + $0x1d28] sm:$0xff]
  %v970 = vld [vmem:[%s1 + $0x1d30] sm:$0xff]
  %v971 = vld [vmem:[%s1 + $0x1d38] sm:$0xff]
  %v972 = vld [vmem:[%s1 + $0x1d40] sm:$0xff]
  %v973 = vld [vmem:[%s1 + $0x1d48] sm:$0xff]
  %v974 = vld [vmem:[%s1 + $0x1d50] sm:$0xff]
  %v975 = vld [vmem:[%s1 + $0x1d58] sm:$0xff]
  %v976 = vld [vmem:[%s1 + $0x1d60] sm:$0xff]
  %v977 = vld [vmem:[%s1 + $0x1d68] sm:$0xff]
  %v978 = vld [vmem:[%s1 + $0x1d70] sm:$0xff]
  %v979 = vld [vmem:[%s1 + $0x1d78] sm:$0xff]
  %v980 = vld [vmem:[%s1 + $0x1d80] sm:$0xff]
  %v981 = vld [vmem:[%s1 + $0x1d88] sm:$0xff]
  %v982 = vld [vmem:[%s1 + $0x1d90] sm:$0xff]
  %v983 = vld [vmem:[%s1 + $0x1d98] sm:$0xff]
  %v984 = vld [vmem:[%s1 + $0x1da0] sm:$0xff]
  %v985 = vld [vmem:[%s1 + $0x1da8] sm:$0xff]
  %v986 = vld [vmem:[%s1 + $0x1db0] sm:$0xff]
  %v987 = vld [vmem:[%s1 + $0x1db8] sm:$0xff]
  %v988 = vld [vmem:[%s1 + $0x1dc0] sm:$0xff]
  %v989 = vld [vmem:[%s1 + $0x1dc8] sm:$0xff]
  %v990 = vld [vmem:[%s1 + $0x1dd0] sm:$0xff]
  %v991 = vld [vmem:[%s1 + $0x1dd8] sm:$0xff]
  %v992 = vld [vmem:[%s1 + $0x1de0] sm:$0xff]
  %v993 = vld [vmem:[%s1 + $0x1de8] sm:$0xff]
  %v994 = vld [vmem:[%s1 + $0x1df0] sm:$0xff]
  %v995 = vld [vmem:[%s1 + $0x1df8] sm:$0xff]
  %v996 = vld [vmem:[%s1 + $0x1e00] sm:$0xff]
  %v997 = vld [vmem:[%s1 + $0x1e08] sm:$0xff]
  %v998 = vld [vmem:[%s1 + $0x1e10] sm:$0xff]
  %v999 = vld [vmem:[%s1 + $0x1e18] sm:$0xff]
  %v1000 = vld [vmem:[%s1 + $0x1e20] sm:$0xff]
  %v1001 = vld [vmem:[%s1 + $0x1e28] sm:$0xff]
  %v1002 = vld [vmem:[%s1 + $0x1e30] sm:$0xff]
  %v1003 = vld [vmem:[%s1 + $0x1e38] sm:$0xff]
  %v1004 = vld [vmem:[%s1 + $0x1e40] sm:$0xff]
  %v1005 = vld [vmem:[%s1 + $0x1e48] sm:$0xff]
  %v1006 = vld [vmem:[%s1 + $0x1e50] sm:$0xff]
  %v1007 = vld [vmem:[%s1 + $0x1e58] sm:$0xff]
  %v1008 = vld [vmem:[%s1 + $0x1e60] sm:$0xff]
  %v1009 = vld [vmem:[%s1 + $0x1e68] sm:$0xff]
  %v1010 = vld [vmem:[%s1 + $0x1e70] sm:$0xff]
  %v1011 = vld [vmem:[%s1 + $0x1e78] sm:$0xff]
  %v1012 = vld [vmem:[%s1 + $0x1e80] sm:$0xff]
  %v1013 = vld [vmem:[%s1 + $0x1e88] sm:$0xff]
  %v1014 = vld [vmem:[%s1 + $0x1e90] sm:$0xff]
  %v1015 = vld [vmem:[%s1 + $0x1e98] sm:$0xff]
  %v1016 = vld [vmem:[%s1 + $0x1ea0] sm:$0xff]
  %v1017 = vld [vmem:[%s1 + $0x1ea8] sm:$0xff]
  %v1018 = vld [vmem:[%s1 + $0x1eb0] sm:$0xff]
  %v1019 = vld [vmem:[%s1 + $0x1eb8] sm:$0xff]
  %v1020 = vld [vmem:[%s1 + $0x1ec0] sm:$0xff]
  %v1021 = vld [vmem:[%s1 + $0x1ec8] sm:$0xff]
  %v1022 = vld [vmem:[%s1 + $0x1ed0] sm:$0xff]
  %v1023 = vld [vmem:[%s1 + $0x1ed8] sm:$0xff]
  %v1024 = vld [vmem:[%s1 + $0x1ee0] sm:$0xff]
  %v1025 = vld [vmem:[%s1 + $0x1ee8] sm:$0xff]
  %v1026 = vld [vmem:[%s1 + $0x1ef0] sm:$0xff]
  %v1027 = vld [vmem:[%s1 + $0x1ef8] sm:$0xff]
  %v1028 = vld [vmem:[%s1 + $0x1f00] sm:$0xff]
  %v1029 = vld [vmem:[%s1 + $0x1f08] sm:$0xff]
  %v1030 = vld [vmem:[%s1 + $0x1f10] sm:$0xff]
  %v1031 = vld [vmem:[%s1 + $0x1f18] sm:$0xff]
  %v1032 = vld [vmem:[%s1 + $0x1f20] sm:$0xff]
  %v1033 = vld [vmem:[%s1 + $0x1f28] sm:$0xff]
  %v1034 = vld [vmem:[%s1 + $0x1f30] sm:$0xff]
  %v1035 = vld [vmem:[%s1 + $0x1f38] sm:$0xff]
  %v1036 = vld [vmem:[%s1 + $0x1f40] sm:$0xff]
  %v1037 = vld [vmem:[%s1 + $0x1f48] sm:$0xff]
  %v1038 = vld [vmem:[%s1 + $0x1f50] sm:$0xff]
  %v1039 = vld [vmem:[%s1 + $0x1f58] sm:$0xff]
  %v1040 = vld [vmem:[%s1 + $0x1f60] sm:$0xff]
  %v1041 = vld [vmem:[%s1 + $0x1f68] sm:$0xff]
  %v1042 = vld [vmem:[%s1 + $0x1f70] sm:$0xff]
  %v1043 = vld [vmem:[%s1 + $0x1f78] sm:$0xff]
  %v1044 = vld [vmem:[%s1 + $0x1f80] sm:$0xff]
  %v1045 = vld [vmem:[%s1 + $0x1f88] sm:$0xff]
  %v1046 = vld [vmem:[%s1 + $0x1f90] sm:$0xff]
  %v1047 = vld [vmem:[%s1 + $0x1f98] sm:$0xff]
  %v1048 = vld [vmem:[%s1 + $0x1fa0] sm:$0xff]
  %v1049 = vld [vmem:[%s1 + $0x1fa8] sm:$0xff]
  %v1050 = vld [vmem:[%s1 + $0x1fb0] sm:$0xff]
  %v1051 = vld [vmem:[%s1 + $0x1fb8] sm:$0xff]
  %v1052 = vld [vmem:[%s1 + $0x1fc0] sm:$0xff]
  %v1053 = vld [vmem:[%s1 + $0x1fc8] sm:$0xff]
  %v1054 = vld [vmem:[%s1 + $0x1fd0] sm:$0xff]
  %v1055 = vld [vmem:[%s1 + $0x1fd8] sm:$0xff]
  %v1056 = vld [vmem:[%s1 + $0x1fe0] sm:$0xff]
  %v1057 = vld [vmem:[%s1 + $0x1fe8] sm:$0xff]
  %v1058 = vld [vmem:[%s1 + $0x1ff0] sm:$0xff]
  %v1059 = vld [vmem:[%s1 + $0x1ff8] sm:$0xff]
  %v1060 = vld [vmem:[%s1 + $0x2000] sm:$0xff]
  %v1061 = vld [vmem:[%s1 + $0x2008] sm:$0xff]
  %v1062 = vld [vmem:[%s1 + $0x2010] sm:$0xff]
  %v1063 = vld [vmem:[%s1 + $0x2018] sm:$0xff]
  %v1064 = vld [vmem:[%s1 + $0x2020] sm:$0xff]
  %v1065 = vld [vmem:[%s1 + $0x2028] sm:$0xff]
  %v1066 = vld [vmem:[%s1 + $0x2030] sm:$0xff]
  %v1067 = vld [vmem:[%s1 + $0x2038] sm:$0xff]
  %v1068 = vld [vmem:[%s1 + $0x2040] sm:$0xff]
  %v1069 = vld [vmem:[%s1 + $0x2048] sm:$0xff]
  %v1070 = vld [vmem:[%s1 + $0x2050] sm:$0xff]
  %v1071 = vld [vmem:[%s1 + $0x2058] sm:$0xff]
  %v1072 = vld [vmem:[%s1 + $0x2060] sm:$0xff]
  %v1073 = vld [vmem:[%s1 + $0x2068] sm:$0xff]
  %v1074 = vld [vmem:[%s1 + $0x2070] sm:$0xff]
  %v1075 = vld [vmem:[%s1 + $0x2078] sm:$0xff]
  %v1076 = vld [vmem:[%s1 + $0x2080] sm:$0xff]
  %v1077 = vld [vmem:[%s1 + $0x2088] sm:$0xff]
  %v1078 = vld [vmem:[%s1 + $0x2090] sm:$0xff]
  %v1079 = vld [vmem:[%s1 + $0x2098] sm:$0xff]
  %v1080 = vld [vmem:[%s1 + $0x20a0] sm:$0xff]
  %v1081 = vld [vmem:[%s1 + $0x20a8] sm:$0xff]
  %v1082 = vld [vmem:[%s1 + $0x20b0] sm:$0xff]
  %v1083 = vld [vmem:[%s1 + $0x20b8] sm:$0xff]
  %v1084 = vld [vmem:[%s1 + $0x20c0] sm:$0xff]
  %v1085 = vld [vmem:[%s1 + $0x20c8] sm:$0xff]
  %v1086 = vld [vmem:[%s1 + $0x20d0] sm:$0xff]
  %v1087 = vld [vmem:[%s1 + $0x20d8] sm:$0xff]
  %v1088 = vld [vmem:[%s1 + $0x20e0] sm:$0xff]
  %v1089 = vld [vmem:[%s1 + $0x20e8] sm:$0xff]
  %v1090 = vld [vmem:[%s1 + $0x20f0] sm:$0xff]
  %v1091 = vld [vmem:[%s1 + $0x20f8] sm:$0xff]
  %v1092 = vld [vmem:[%s1 + $0x2100] sm:$0xff]
  %v1093 = vld [vmem:[%s1 + $0x2108] sm:$0xff]
  %v1094 = vld [vmem:[%s1 + $0x2110] sm:$0xff]
  %v1095 = vld [vmem:[%s1 + $0x2118] sm:$0xff]
  %v1096 = vld [vmem:[%s1 + $0x2120] sm:$0xff]
  %v1097 = vld [vmem:[%s1 + $0x2128] sm:$0xff]
  %v1098 = vld [vmem:[%s1 + $0x2130] sm:$0xff]
  %v1099 = vld [vmem:[%s1 + $0x2138] sm:$0xff]
  %v1100 = vld [vmem:[%s1 + $0x2140] sm:$0xff]
  %v1101 = vld [vmem:[%s1 + $0x2148] sm:$0xff]
  %v1102 = vld [vmem:[%s1 + $0x2150] sm:$0xff]
  %v1103 = vld [vmem:[%s1 + $0x2158] sm:$0xff]
  %v1104 = vld [vmem:[%s1 + $0x2160] sm:$0xff]
  %v1105 = vld [vmem:[%s1 + $0x2168] sm:$0xff]
  %v1106 = vld [vmem:[%s1 + $0x2170] sm:$0xff]
  %v1107 = vld [vmem:[%s1 + $0x2178] sm:$0xff]
  %v1108 = vld [vmem:[%s1 + $0x2180] sm:$0xff]
  %v1109 = vld [vmem:[%s1 + $0x2188] sm:$0xff]
  %v1110 = vld [vmem:[%s1 + $0x2190] sm:$0xff]
  %v1111 = vld [vmem:[%s1 + $0x2198] sm:$0xff]
  %v1112 = vld [vmem:[%s1 + $0x21a0] sm:$0xff]
  %v1113 = vld [vmem:[%s1 + $0x21a8] sm:$0xff]
  %v1114 = vld [vmem:[%s1 + $0x21b0] sm:$0xff]
  %v1115 = vld [vmem:[%s1 + $0x21b8] sm:$0xff]
  %v1116 = vld [vmem:[%s1 + $0x21c0] sm:$0xff]
  %v1117 = vld [vmem:[%s1 + $0x21c8] sm:$0xff]
  %v1118 = vld [vmem:[%s1 + $0x21d0] sm:$0xff]
  %v1119 = vld [vmem:[%s1 + $0x21d8] sm:$0xff]
  %v1120 = vld [vmem:[%s1 + $0x21e0] sm:$0xff]
  %v1121 = vld [vmem:[%s1 + $0x21e8] sm:$0xff]
  %v1122 = vld [vmem:[%s1 + $0x21f0] sm:$0xff]
  %v1123 = vld [vmem:[%s1 + $0x21f8] sm:$0xff]
  %v1124 = vld [vmem:[%s1 + $0x2200] sm:$0xff]
  %v1125 = vld [vmem:[%s1 + $0x2208] sm:$0xff]
  %v1126 = vld [vmem:[%s1 + $0x2210] sm:$0xff]
  %v1127 = vld [vmem:[%s1 + $0x2218] sm:$0xff]
  %v1128 = vld [vmem:[%s1 + $0x2220] sm:$0xff]
  %v1129 = vld [vmem:[%s1 + $0x2228] sm:$0xff]
  %v1130 = vld [vmem:[%s1 + $0x2230] sm:$0xff]
  %v1131 = vld [vmem:[%s1 + $0x2238] sm:$0xff]
  %v1132 = vld [vmem:[%s1 + $0x2240] sm:$0xff]
  %v1133 = vld [vmem:[%s1 + $0x2248] sm:$0xff]
  %v1134 = vld [vmem:[%s1 + $0x2250] sm:$0xff]
  %v1135 = vld [vmem:[%s1 + $0x2258] sm:$0xff]
  %v1136 = vld [vmem:[%s1 + $0x2260] sm:$0xff]
  %v1137 = vld [vmem:[%s1 + $0x2268] sm:$0xff]
  %v1138 = vld [vmem:[%s1 + $0x2270] sm:$0xff]
  %v1139 = vld [vmem:[%s1 + $0x2278] sm:$0xff]
  %v1140 = vld [vmem:[%s1 + $0x2280] sm:$0xff]
  %v1141 = vld [vmem:[%s1 + $0x2288] sm:$0xff]
  %v1142 = vld [vmem:[%s1 + $0x2290] sm:$0xff]
  %v1143 = vld [vmem:[%s1 + $0x2298] sm:$0xff]
  %v1144 = vld [vmem:[%s1 + $0x22a0] sm:$0xff]
  %v1145 = vld [vmem:[%s1 + $0x22a8] sm:$0xff]
  %v1146 = vld [vmem:[%s1 + $0x22b0] sm:$0xff]
  %v1147 = vld [vmem:[%s1 + $0x22b8] sm:$0xff]
  %v1148 = vld [vmem:[%s1 + $0x22c0] sm:$0xff]
  %v1149 = vld [vmem:[%s1 + $0x22c8] sm:$0xff]
  %v1150 = vld [vmem:[%s1 + $0x22d0] sm:$0xff]
  %v1151 = vld [vmem:[%s1 + $0x22d8] sm:$0xff]
  %v1152 = vld [vmem:[%s1 + $0x22e0] sm:$0xff]
  %v1153 = vld [vmem:[%s1 + $0x22e8] sm:$0xff]
  %v1154 = vld [vmem:[%s1 + $0x22f0] sm:$0xff]
  %v1155 = vld [vmem:[%s1 + $0x22f8] sm:$0xff]
  %v1156 = vld [vmem:[%s1 + $0x2300] sm:$0xff]
  %v1157 = vld [vmem:[%s1 + $0x2308] sm:$0xff]
  %v1158 = vld [vmem:[%s1 + $0x2310] sm:$0xff]
  %v1159 = vld [vmem:[%s1 + $0x2318] sm:$0xff]
  %v1160 = vld [vmem:[%s1 + $0x2320] sm:$0xff]
  %v1161 = vld [vmem:[%s1 + $0x2328] sm:$0xff]
  %v1162 = vld [vmem:[%s1 + $0x2330] sm:$0xff]
  %v1163 = vld [vmem:[%s1 + $0x2338] sm:$0xff]
  %v1164 = vld [vmem:[%s1 + $0x2340] sm:$0xff]
  %v1165 = vld [vmem:[%s1 + $0x2348] sm:$0xff]
  %v1166 = vld [vmem:[%s1 + $0x2350] sm:$0xff]
  %v1167 = vld [vmem:[%s1 + $0x2358] sm:$0xff]
  %v1168 = vld [vmem:[%s1 + $0x2360] sm:$0xff]
  %v1169 = vld [vmem:[%s1 + $0x2368] sm:$0xff]
  %v1170 = vld [vmem:[%s1 + $0x2370] sm:$0xff]
  %v1171 = vld [vmem:[%s1 + $0x2378] sm:$0xff]
  %v1172 = vld [vmem:[%s1 + $0x2380] sm:$0xff]
  %v1173 = vld [vmem:[%s1 + $0x2388] sm:$0xff]
  %v1174 = vld [vmem:[%s1 + $0x2390] sm:$0xff]
  %v1175 = vld [vmem:[%s1 + $0x2398] sm:$0xff]
  %v1176 = vld [vmem:[%s1 + $0x23a0] sm:$0xff]
  %v1177 = vld [vmem:[%s1 + $0x23a8] sm:$0xff]
  %v1178 = vld [vmem:[%s1 + $0x23b0] sm:$0xff]
  %v1179 = vld [vmem:[%s1 + $0x23b8] sm:$0xff]
  %v1180 = vld [vmem:[%s1 + $0x23c0] sm:$0xff]
  %v1181 = vld [vmem:[%s1 + $0x23c8] sm:$0xff]
  %v1182 = vld [vmem:[%s1 + $0x23d0] sm:$0xff]
  %v1183 = vld [vmem:[%s1 + $0x23d8] sm:$0xff]
  %v1184 = vld [vmem:[%s1 + $0x23e0] sm:$0xff]
  %v1185 = vld [vmem:[%s1 + $0x23e8] sm:$0xff]
  %v1186 = vld [vmem:[%s1 + $0x23f0] sm:$0xff]
  %v1187 = vld [vmem:[%s1 + $0x23f8] sm:$0xff]
  %v1188 = vld [vmem:[%s1 + $0x2400] sm:$0xff]
  %v1189 = vld [vmem:[%s1 + $0x2408] sm:$0xff]
  %v1190 = vld [vmem:[%s1 + $0x2410] sm:$0xff]
  %v1191 = vld [vmem:[%s1 + $0x2418] sm:$0xff]
  %v1192 = vld [vmem:[%s1 + $0x2420] sm:$0xff]
  %v1193 = vld [vmem:[%s1 + $0x2428] sm:$0xff]
  %v1194 = vld [vmem:[%s1 + $0x2430] sm:$0xff]
  %v1195 = vld [vmem:[%s1 + $0x2438] sm:$0xff]
  %v1196 = vld [vmem:[%s1 + $0x2440] sm:$0xff]
  %v1197 = vld [vmem:[%s1 + $0x2448] sm:$0xff]
  %v1198 = vld [vmem:[%s1 + $0x2450] sm:$0xff]
  %v1199 = vld [vmem:[%s1 + $0x2458] sm:$0xff]
  %v1200 = vld [vmem:[%s1 + $0x2460] sm:$0xff]
  %v1201 = vld [vmem:[%s1 + $0x2468] sm:$0xff]
  %v1202 = vld [vmem:[%s1 + $0x2470] sm:$0xff]
  %v1203 = vld [vmem:[%s1 + $0x2478] sm:$0xff]
  %v1204 = vld [vmem:[%s1 + $0x2480] sm:$0xff]
  %v1205 = vld [vmem:[%s1 + $0x2488] sm:$0xff]
  %v1206 = vld [vmem:[%s1 + $0x2490] sm:$0xff]
  %v1207 = vld [vmem:[%s1 + $0x2498] sm:$0xff]
  %v1208 = vld [vmem:[%s1 + $0x24a0] sm:$0xff]
  %v1209 = vld [vmem:[%s1 + $0x24a8] sm:$0xff]
  %v1210 = vld [vmem:[%s1 + $0x24b0] sm:$0xff]
  %v1211 = vld [vmem:[%s1 + $0x24b8] sm:$0xff]
  %v1212 = vld [vmem:[%s1 + $0x24c0] sm:$0xff]
  %v1213 = vld [vmem:[%s1 + $0x24c8] sm:$0xff]
  %v1214 = vld [vmem:[%s1 + $0x24d0] sm:$0xff]
  %v1215 = vld [vmem:[%s1 + $0x24d8] sm:$0xff]
  %v1216 = vld [vmem:[%s1 + $0x24e0] sm:$0xff]
  %v1217 = vld [vmem:[%s1 + $0x24e8] sm:$0xff]
  %v1218 = vld [vmem:[%s1 + $0x24f0] sm:$0xff]
  %v1219 = vld [vmem:[%s1 + $0x24f8] sm:$0xff]
  %v1220 = vld [vmem:[%s1 + $0x2500] sm:$0xff]
  %v1221 = vld [vmem:[%s1 + $0x2508] sm:$0xff]
  %v1222 = vld [vmem:[%s1 + $0x2510] sm:$0xff]
  %v1223 = vld [vmem:[%s1 + $0x2518] sm:$0xff]
  %v1224 = vld [vmem:[%s1 + $0x2520] sm:$0xff]
  %v1225 = vld [vmem:[%s1 + $0x2528] sm:$0xff]
  %v1226 = vld [vmem:[%s1 + $0x2530] sm:$0xff]
  %v1227 = vld [vmem:[%s1 + $0x2538] sm:$0xff]
  %v1228 = vld [vmem:[%s1 + $0x2540] sm:$0xff]
  %v1229 = vld [vmem:[%s1 + $0x2548] sm:$0xff]
  %v1230 = vld [vmem:[%s1 + $0x2550] sm:$0xff]
  %v1231 = vld [vmem:[%s1 + $0x2558] sm:$0xff]
  %v1232 = vld [vmem:[%s1 + $0x2560] sm:$0xff]
  %v1233 = vld [vmem:[%s1 + $0x2568] sm:$0xff]
  %v1234 = vld [vmem:[%s1 + $0x2570] sm:$0xff]
  %v1235 = vld [vmem:[%s1 + $0x2578] sm:$0xff]
  %v1236 = vld [vmem:[%s1 + $0x2580] sm:$0xff]
  %v1237 = vld [vmem:[%s1 + $0x2588] sm:$0xff]
  %v1238 = vld [vmem:[%s1 + $0x2590] sm:$0xff]
  %v1239 = vld [vmem:[%s1 + $0x2598] sm:$0xff]
  %v1240 = vld [vmem:[%s1 + $0x25a0] sm:$0xff]
  %v1241 = vld [vmem:[%s1 + $0x25a8] sm:$0xff]
  %v1242 = vld [vmem:[%s1 + $0x25b0] sm:$0xff]
  %v1243 = vld [vmem:[%s1 + $0x25b8] sm:$0xff]
  %v1244 = vld [vmem:[%s1 + $0x25c0] sm:$0xff]
  %v1245 = vld [vmem:[%s1 + $0x25c8] sm:$0xff]
  %v1246 = vld [vmem:[%s1 + $0x25d0] sm:$0xff]
  %v1247 = vld [vmem:[%s1 + $0x25d8] sm:$0xff]
  %v1248 = vld [vmem:[%s1 + $0x25e0] sm:$0xff]
  %v1249 = vld [vmem:[%s1 + $0x25e8] sm:$0xff]
  %v1250 = vld [vmem:[%s1 + $0x25f0] sm:$0xff]
  %v1251 = vld [vmem:[%s1 + $0x25f8] sm:$0xff]
  %v1252 = vld [vmem:[%s1 + $0x2600] sm:$0xff]
  %v1253 = vld [vmem:[%s1 + $0x2608] sm:$0xff]
  %v1254 = vld [vmem:[%s1 + $0x2610] sm:$0xff]
  %v1255 = vld [vmem:[%s1 + $0x2618] sm:$0xff]
  %v1256 = vld [vmem:[%s1 + $0x2620] sm:$0xff]
  %v1257 = vld [vmem:[%s1 + $0x2628] sm:$0xff]
  %v1258 = vld [vmem:[%s1 + $0x2630] sm:$0xff]
  %v1259 = vld [vmem:[%s1 + $0x2638] sm:$0xff]
  %v1260 = vld [vmem:[%s1 + $0x2640] sm:$0xff]
  %v1261 = vld [vmem:[%s1 + $0x2648] sm:$0xff]
  %v1262 = vld [vmem:[%s1 + $0x2650] sm:$0xff]
  %v1263 = vld [vmem:[%s1 + $0x2658] sm:$0xff]
  %v1264 = vld [vmem:[%s1 + $0x2660] sm:$0xff]
  %v1265 = vld [vmem:[%s1 + $0x2668] sm:$0xff]
  %v1266 = vld [vmem:[%s1 + $0x2670] sm:$0xff]
  %v1267 = vld [vmem:[%s1 + $0x2678] sm:$0xff]
  %v1268 = vld [vmem:[%s1 + $0x2680] sm:$0xff]
  %v1269 = vld [vmem:[%s1 + $0x2688] sm:$0xff]
  %v1270 = vld [vmem:[%s1 + $0x2690] sm:$0xff]
  %v1271 = vld [vmem:[%s1 + $0x2698] sm:$0xff]
  %v1272 = vld [vmem:[%s1 + $0x26a0] sm:$0xff]
  %v1273 = vld [vmem:[%s1 + $0x26a8] sm:$0xff]
  %v1274 = vld [vmem:[%s1 + $0x26b0] sm:$0xff]
  %v1275 = vld [vmem:[%s1 + $0x26b8] sm:$0xff]
  %v1276 = vld [vmem:[%s1 + $0x26c0] sm:$0xff]
  %v1277 = vld [vmem:[%s1 + $0x26c8] sm:$0xff]
  %v1278 = vld [vmem:[%s1 + $0x26d0] sm:$0xff]
  %v1279 = vld [vmem:[%s1 + $0x26d8] sm:$0xff]
  %v1280 = vld [vmem:[%s1 + $0x26e0] sm:$0xff]
  %v1281 = vld [vmem:[%s1 + $0x26e8] sm:$0xff]
  %v1282 = vld [vmem:[%s1 + $0x26f0] sm:$0xff]
  %v1283 = vld [vmem:[%s1 + $0x26f8] sm:$0xff]
  %v1284 = vld [vmem:[%s1 + $0x2700] sm:$0xff]
  %v1285 = vld [vmem:[%s1 + $0x2708] sm:$0xff]
  %v1286 = vld [vmem:[%s1 + $0x2710] sm:$0xff]
  %v1287 = vld [vmem:[%s1 + $0x2718] sm:$0xff]
  %v1288 = vld [vmem:[%s1 + $0x2720] sm:$0xff]
  %v1289 = vld [vmem:[%s1 + $0x2728] sm:$0xff]
  %v1290 = vld [vmem:[%s1 + $0x2730] sm:$0xff]
  %v1291 = vld [vmem:[%s1 + $0x2738] sm:$0xff]
  %v1292 = vld [vmem:[%s1 + $0x2740] sm:$0xff]
  %v1293 = vld [vmem:[%s1 + $0x2748] sm:$0xff]
  %v1294 = vld [vmem:[%s1 + $0x2750] sm:$0xff]
  %v1295 = vld [vmem:[%s1 + $0x2758] sm:$0xff]
  %v1296 = vld [vmem:[%s1 + $0x2760] sm:$0xff]
  %v1297 = vld [vmem:[%s1 + $0x2768] sm:$0xff]
  %v1298 = vld [vmem:[%s1 + $0x2770] sm:$0xff]
  %v1299 = vld [vmem:[%s1 + $0x2778] sm:$0xff]
  %v1300 = vld [vmem:[%s1 + $0x2780] sm:$0xff]
  %v1301 = vld [vmem:[%s1 + $0x2788] sm:$0xff]
  %v1302 = vld [vmem:[%s1 + $0x2790] sm:$0xff]
  %v1303 = vld [vmem:[%s1 + $0x2798] sm:$0xff]
  %v1304 = vld [vmem:[%s1 + $0x27a0] sm:$0xff]
  %v1305 = vld [vmem:[%s1 + $0x27a8] sm:$0xff]
  %v1306 = vld [vmem:[%s1 + $0x27b0] sm:$0xff]
  %v1307 = vld [vmem:[%s1 + $0x27b8] sm:$0xff]
  %v1308 = vld [vmem:[%s1 + $0x27c0] sm:$0xff]
  %v1309 = vld [vmem:[%s1 + $0x27c8] sm:$0xff]
  %v1310 = vld [vmem:[%s1 + $0x27d0] sm:$0xff]
  %v1311 = vld [vmem:[%s1 + $0x27d8] sm:$0xff]
  %v1312 = vld [vmem:[%s1 + $0x27e0] sm:$0xff]
  %v1313 = vld [vmem:[%s1 + $0x27e8] sm:$0xff]
  %v1314 = vld [vmem:[%s1 + $0x27f0] sm:$0xff]
  %v1315 = vld [vmem:[%s1 + $0x27f8] sm:$0xff]
  %v1316 = vld [vmem:[%s1 + $0x2800] sm:$0xff]
  %v1317 = vld [vmem:[%s1 + $0x2808] sm:$0xff]
  %v1318 = vld [vmem:[%s1 + $0x2810] sm:$0xff]
  %v1319 = vld [vmem:[%s1 + $0x2818] sm:$0xff]
  %v1320 = vld [vmem:[%s1 + $0x2820] sm:$0xff]
  %v1321 = vld [vmem:[%s1 + $0x2828] sm:$0xff]
  %v1322 = vld [vmem:[%s1 + $0x2830] sm:$0xff]
  %v1323 = vld [vmem:[%s1 + $0x2838] sm:$0xff]
  %v1324 = vld [vmem:[%s1 + $0x2840] sm:$0xff]
  %v1325 = vld [vmem:[%s1 + $0x2848] sm:$0xff]
  %v1326 = vld [vmem:[%s1 + $0x2850] sm:$0xff]
  %v1327 = vld [vmem:[%s1 + $0x2858] sm:$0xff]
  %v1328 = vld [vmem:[%s1 + $0x2860] sm:$0xff]
  %v1329 = vld [vmem:[%s1 + $0x2868] sm:$0xff]
  %v1330 = vld [vmem:[%s1 + $0x2870] sm:$0xff]
  %v1331 = vld [vmem:[%s1 + $0x2878] sm:$0xff]
  %v1353 = vcombine.high %v15, %v15
  %v1355 = vunpack.c.l.s4 1983009808
  %v1356 = vunpack.c.0.s8 %v1355
  %v1357 = vlaneseq
  %v1358 = vshrl.u32 %v1357, 7
  %v1359 = vsub.s32 %v1356, %v1358
  %v1360 = vrot.slane %v15, %v1359
  %v1362 = vunpack.c.l.s4 1983009808
  %v1363 = vunpack.c.0.s8 %v1362
  %v1364 = vlaneseq
  %v1365 = vshrl.u32 %v1364, 7
  %v1366 = vsub.s32 %v1363, %v1365
  %v1367 = vrot.slane %v1353, %v1366
  %v1368 = vcombine.high %v1360, %v1360
  %v1369 = vcombine.high %v1367, %v1367
  %v1370 = vcombine.high %v16, %v16
  %v1372 = vunpack.c.l.s4 1983009808
  %v1373 = vunpack.c.0.s8 %v1372
  %v1374 = vlaneseq
  %v1375 = vshrl.u32 %v1374, 7
  %v1376 = vsub.s32 %v1373, %v1375
  %v1377 = vrot.slane %v16, %v1376
  %v1379 = vunpack.c.l.s4 1983009808
  %v1380 = vunpack.c.0.s8 %v1379
  %v1381 = vlaneseq
  %v1382 = vshrl.u32 %v1381, 7
  %v1383 = vsub.s32 %v1380, %v1382
  %v1384 = vrot.slane %v1370, %v1383
  %v1385 = vcombine.high %v1377, %v1377
  %v1386 = vcombine.high %v1384, %v1384
  %v1387 = vcombine.high %v17, %v17
  %v1389 = vunpack.c.l.s4 1983009808
  %v1390 = vunpack.c.0.s8 %v1389
  %v1391 = vlaneseq
  %v1392 = vshrl.u32 %v1391, 7
  %v1393 = vsub.s32 %v1390, %v1392
  %v1394 = vrot.slane %v17, %v1393
  %v1396 = vunpack.c.l.s4 1983009808
  %v1397 = vunpack.c.0.s8 %v1396
  %v1398 = vlaneseq
  %v1399 = vshrl.u32 %v1398, 7
  %v1400 = vsub.s32 %v1397, %v1399
  %v1401 = vrot.slane %v1387, %v1400
  %v1402 = vcombine.high %v1394, %v1394
  %v1403 = vcombine.high %v1401, %v1401
  %v1404 = vcombine.high %v18, %v18
  %v1406 = vunpack.c.l.s4 1983009808
  %v1407 = vunpack.c.0.s8 %v1406
  %v1408 = vlaneseq
  %v1409 = vshrl.u32 %v1408, 7
  %v1410 = vsub.s32 %v1407, %v1409
  %v1411 = vrot.slane %v18, %v1410
  %v1413 = vunpack.c.l.s4 1983009808
  %v1414 = vunpack.c.0.s8 %v1413
  %v1415 = vlaneseq
  %v1416 = vshrl.u32 %v1415, 7
  %v1417 = vsub.s32 %v1414, %v1416
  %v1418 = vrot.slane %v1404, %v1417
  %v1419 = vcombine.high %v1411, %v1411
  %v1420 = vcombine.high %v1418, %v1418
  %v1421 = vcombine.high %v19, %v19
  %v1423 = vunpack.c.l.s4 1983009808
  %v1424 = vunpack.c.0.s8 %v1423
  %v1425 = vlaneseq
  %v1426 = vshrl.u32 %v1425, 7
  %v1427 = vsub.s32 %v1424, %v1426
  %v1428 = vrot.slane %v19, %v1427
  %v1430 = vunpack.c.l.s4 1983009808
  %v1431 = vunpack.c.0.s8 %v1430
  %v1432 = vlaneseq
  %v1433 = vshrl.u32 %v1432, 7
  %v1434 = vsub.s32 %v1431, %v1433
  %v1435 = vrot.slane %v1421, %v1434
  %v1436 = vcombine.high %v1428, %v1428
  %v1437 = vcombine.high %v1435, %v1435
  %v1438 = vcombine.high %v20, %v20
  %v1440 = vunpack.c.l.s4 1983009808
  %v1441 = vunpack.c.0.s8 %v1440
  %v1442 = vlaneseq
  %v1443 = vshrl.u32 %v1442, 7
  %v1444 = vsub.s32 %v1441, %v1443
  %v1445 = vrot.slane %v20, %v1444
  %v1447 = vunpack.c.l.s4 1983009808
  %v1448 = vunpack.c.0.s8 %v1447
  %v1449 = vlaneseq
  %v1450 = vshrl.u32 %v1449, 7
  %v1451 = vsub.s32 %v1448, %v1450
  %v1452 = vrot.slane %v1438, %v1451
  %v1453 = vcombine.high %v1445, %v1445
  %v1454 = vcombine.high %v1452, %v1452
  %v1455 = vcombine.high %v21, %v21
  %v1457 = vunpack.c.l.s4 1983009808
  %v1458 = vunpack.c.0.s8 %v1457
  %v1459 = vlaneseq
  %v1460 = vshrl.u32 %v1459, 7
  %v1461 = vsub.s32 %v1458, %v1460
  %v1462 = vrot.slane %v21, %v1461
  %v1464 = vunpack.c.l.s4 1983009808
  %v1465 = vunpack.c.0.s8 %v1464
  %v1466 = vlaneseq
  %v1467 = vshrl.u32 %v1466, 7
  %v1468 = vsub.s32 %v1465, %v1467
  %v1469 = vrot.slane %v1455, %v1468
  %v1470 = vcombine.high %v1462, %v1462
  %v1471 = vcombine.high %v1469, %v1469
  %v1472 = vcombine.high %v22, %v22
  %v1474 = vunpack.c.l.s4 1983009808
  %v1475 = vunpack.c.0.s8 %v1474
  %v1476 = vlaneseq
  %v1477 = vshrl.u32 %v1476, 7
  %v1478 = vsub.s32 %v1475, %v1477
  %v1479 = vrot.slane %v22, %v1478
  %v1481 = vunpack.c.l.s4 1983009808
  %v1482 = vunpack.c.0.s8 %v1481
  %v1483 = vlaneseq
  %v1484 = vshrl.u32 %v1483, 7
  %v1485 = vsub.s32 %v1482, %v1484
  %v1486 = vrot.slane %v1472, %v1485
  %v1487 = vcombine.high %v1479, %v1479
  %v1488 = vcombine.high %v1486, %v1486
  %v1489 = vcombine.high %v23, %v23
  %v1491 = vunpack.c.l.s4 1983009808
  %v1492 = vunpack.c.0.s8 %v1491
  %v1493 = vlaneseq
  %v1494 = vshrl.u32 %v1493, 7
  %v1495 = vsub.s32 %v1492, %v1494
  %v1496 = vrot.slane %v23, %v1495
  %v1498 = vunpack.c.l.s4 1983009808
  %v1499 = vunpack.c.0.s8 %v1498
  %v1500 = vlaneseq
  %v1501 = vshrl.u32 %v1500, 7
  %v1502 = vsub.s32 %v1499, %v1501
  %v1503 = vrot.slane %v1489, %v1502
  %v1504 = vcombine.high %v1496, %v1496
  %v1505 = vcombine.high %v1503, %v1503
  %v1506 = vcombine.high %v24, %v24
  %v1508 = vunpack.c.l.s4 1983009808
  %v1509 = vunpack.c.0.s8 %v1508
  %v1510 = vlaneseq
  %v1511 = vshrl.u32 %v1510, 7
  %v1512 = vsub.s32 %v1509, %v1511
  %v1513 = vrot.slane %v24, %v1512
  %v1515 = vunpack.c.l.s4 1983009808
  %v1516 = vunpack.c.0.s8 %v1515
  %v1517 = vlaneseq
  %v1518 = vshrl.u32 %v1517, 7
  %v1519 = vsub.s32 %v1516, %v1518
  %v1520 = vrot.slane %v1506, %v1519
  %v1521 = vcombine.high %v1513, %v1513
  %v1522 = vcombine.high %v1520, %v1520
  %v1523 = vcombine.high %v25, %v25
  %v1525 = vunpack.c.l.s4 1983009808
  %v1526 = vunpack.c.0.s8 %v1525
  %v1527 = vlaneseq
  %v1528 = vshrl.u32 %v1527, 7
  %v1529 = vsub.s32 %v1526, %v1528
  %v1530 = vrot.slane %v25, %v1529
  %v1532 = vunpack.c.l.s4 1983009808
  %v1533 = vunpack.c.0.s8 %v1532
  %v1534 = vlaneseq
  %v1535 = vshrl.u32 %v1534, 7
  %v1536 = vsub.s32 %v1533, %v1535
  %v1537 = vrot.slane %v1523, %v1536
  %v1538 = vcombine.high %v1530, %v1530
  %v1539 = vcombine.high %v1537, %v1537
  %v1540 = vcombine.high %v26, %v26
  %v1542 = vunpack.c.l.s4 1983009808
  %v1543 = vunpack.c.0.s8 %v1542
  %v1544 = vlaneseq
  %v1545 = vshrl.u32 %v1544, 7
  %v1546 = vsub.s32 %v1543, %v1545
  %v1547 = vrot.slane %v26, %v1546
  %v1549 = vunpack.c.l.s4 1983009808
  %v1550 = vunpack.c.0.s8 %v1549
  %v1551 = vlaneseq
  %v1552 = vshrl.u32 %v1551, 7
  %v1553 = vsub.s32 %v1550, %v1552
  %v1554 = vrot.slane %v1540, %v1553
  %v1555 = vcombine.high %v1547, %v1547
  %v1556 = vcombine.high %v1554, %v1554
  %v1557 = vcombine.high %v27, %v27
  %v1559 = vunpack.c.l.s4 1983009808
  %v1560 = vunpack.c.0.s8 %v1559
  %v1561 = vlaneseq
  %v1562 = vshrl.u32 %v1561, 7
  %v1563 = vsub.s32 %v1560, %v1562
  %v1564 = vrot.slane %v27, %v1563
  %v1566 = vunpack.c.l.s4 1983009808
  %v1567 = vunpack.c.0.s8 %v1566
  %v1568 = vlaneseq
  %v1569 = vshrl.u32 %v1568, 7
  %v1570 = vsub.s32 %v1567, %v1569
  %v1571 = vrot.slane %v1557, %v1570
  %v1572 = vcombine.high %v1564, %v1564
  %v1573 = vcombine.high %v1571, %v1571
  %v1574 = vcombine.high %v28, %v28
  %v1576 = vunpack.c.l.s4 1983009808
  %v1577 = vunpack.c.0.s8 %v1576
  %v1578 = vlaneseq
  %v1579 = vshrl.u32 %v1578, 7
  %v1580 = vsub.s32 %v1577, %v1579
  %v1581 = vrot.slane %v28, %v1580
  %v1583 = vunpack.c.l.s4 1983009808
  %v1584 = vunpack.c.0.s8 %v1583
  %v1585 = vlaneseq
  %v1586 = vshrl.u32 %v1585, 7
  %v1587 = vsub.s32 %v1584, %v1586
  %v1588 = vrot.slane %v1574, %v1587
  %v1589 = vcombine.high %v1581, %v1581
  %v1590 = vcombine.high %v1588, %v1588
  %v1591 = vcombine.high %v29, %v29
  %v1593 = vunpack.c.l.s4 1983009808
  %v1594 = vunpack.c.0.s8 %v1593
  %v1595 = vlaneseq
  %v1596 = vshrl.u32 %v1595, 7
  %v1597 = vsub.s32 %v1594, %v1596
  %v1598 = vrot.slane %v29, %v1597
  %v1600 = vunpack.c.l.s4 1983009808
  %v1601 = vunpack.c.0.s8 %v1600
  %v1602 = vlaneseq
  %v1603 = vshrl.u32 %v1602, 7
  %v1604 = vsub.s32 %v1601, %v1603
  %v1605 = vrot.slane %v1591, %v1604
  %v1606 = vcombine.high %v1598, %v1598
  %v1607 = vcombine.high %v1605, %v1605
  %v1608 = vcombine.high %v30, %v30
  %v1610 = vunpack.c.l.s4 1983009808
  %v1611 = vunpack.c.0.s8 %v1610
  %v1612 = vlaneseq
  %v1613 = vshrl.u32 %v1612, 7
  %v1614 = vsub.s32 %v1611, %v1613
  %v1615 = vrot.slane %v30, %v1614
  %v1617 = vunpack.c.l.s4 1983009808
  %v1618 = vunpack.c.0.s8 %v1617
  %v1619 = vlaneseq
  %v1620 = vshrl.u32 %v1619, 7
  %v1621 = vsub.s32 %v1618, %v1620
  %v1622 = vrot.slane %v1608, %v1621
  %v1623 = vcombine.high %v1615, %v1615
  %v1624 = vcombine.high %v1622, %v1622
  %v1625 = vcombine.high %v31, %v31
  %v1627 = vunpack.c.l.s4 1983009808
  %v1628 = vunpack.c.0.s8 %v1627
  %v1629 = vlaneseq
  %v1630 = vshrl.u32 %v1629, 7
  %v1631 = vsub.s32 %v1628, %v1630
  %v1632 = vrot.slane %v31, %v1631
  %v1634 = vunpack.c.l.s4 1983009808
  %v1635 = vunpack.c.0.s8 %v1634
  %v1636 = vlaneseq
  %v1637 = vshrl.u32 %v1636, 7
  %v1638 = vsub.s32 %v1635, %v1637
  %v1639 = vrot.slane %v1625, %v1638
  %v1640 = vcombine.high %v1632, %v1632
  %v1641 = vcombine.high %v1639, %v1639
  %v1642 = vcombine.high %v32, %v32
  %v1644 = vunpack.c.l.s4 1983009808
  %v1645 = vunpack.c.0.s8 %v1644
  %v1646 = vlaneseq
  %v1647 = vshrl.u32 %v1646, 7
  %v1648 = vsub.s32 %v1645, %v1647
  %v1649 = vrot.slane %v32, %v1648
  %v1651 = vunpack.c.l.s4 1983009808
  %v1652 = vunpack.c.0.s8 %v1651
  %v1653 = vlaneseq
  %v1654 = vshrl.u32 %v1653, 7
  %v1655 = vsub.s32 %v1652, %v1654
  %v1656 = vrot.slane %v1642, %v1655
  %v1657 = vcombine.high %v1649, %v1649
  %v1658 = vcombine.high %v1656, %v1656
  %v1659 = vcombine.high %v33, %v33
  %v1661 = vunpack.c.l.s4 1983009808
  %v1662 = vunpack.c.0.s8 %v1661
  %v1663 = vlaneseq
  %v1664 = vshrl.u32 %v1663, 7
  %v1665 = vsub.s32 %v1662, %v1664
  %v1666 = vrot.slane %v33, %v1665
  %v1668 = vunpack.c.l.s4 1983009808
  %v1669 = vunpack.c.0.s8 %v1668
  %v1670 = vlaneseq
  %v1671 = vshrl.u32 %v1670, 7
  %v1672 = vsub.s32 %v1669, %v1671
  %v1673 = vrot.slane %v1659, %v1672
  %v1674 = vcombine.high %v1666, %v1666
  %v1675 = vcombine.high %v1673, %v1673
  %v1676 = vcombine.high %v34, %v34
  %v1678 = vunpack.c.l.s4 1983009808
  %v1679 = vunpack.c.0.s8 %v1678
  %v1680 = vlaneseq
  %v1681 = vshrl.u32 %v1680, 7
  %v1682 = vsub.s32 %v1679, %v1681
  %v1683 = vrot.slane %v34, %v1682
  %v1685 = vunpack.c.l.s4 1983009808
  %v1686 = vunpack.c.0.s8 %v1685
  %v1687 = vlaneseq
  %v1688 = vshrl.u32 %v1687, 7
  %v1689 = vsub.s32 %v1686, %v1688
  %v1690 = vrot.slane %v1676, %v1689
  %v1691 = vcombine.high %v1683, %v1683
  %v1692 = vcombine.high %v1690, %v1690
  %v1694 = vunpack.c.l.s4 1983009808
  %v1695 = vunpack.c.0.s8 %v1694
  %v1696 = vlaneseq
  %v1697 = vshrl.u32 %v1696, 7
  %v1698 = vsub.s32 %v1695, %v1697
  %v1699 = vrot.slane %v35, %v1698
  %v1781 = vpack.c.bf16 %v1360, %v1360
  %v1782 = vpack.c.bf16 %v1368, %v1368
  %v1783 = vpack.c.bf16 %v1367, %v1367
  %v1784 = vpack.c.bf16 %v1369, %v1369
  %v1785 = vpack.c.bf16 %v1377, %v1377
  %v1786 = vpack.c.bf16 %v1385, %v1385
  %v1787 = vpack.c.bf16 %v1384, %v1384
  %v1788 = vpack.c.bf16 %v1386, %v1386
  %v1789 = vpack.c.bf16 %v1394, %v1394
  %v1790 = vpack.c.bf16 %v1402, %v1402
  %v1791 = vpack.c.bf16 %v1401, %v1401
  %v1792 = vpack.c.bf16 %v1403, %v1403
  %v1793 = vpack.c.bf16 %v1411, %v1411
  %v1794 = vpack.c.bf16 %v1419, %v1419
  %v1795 = vpack.c.bf16 %v1418, %v1418
  %v1796 = vpack.c.bf16 %v1420, %v1420
  %v1797 = vpack.c.bf16 %v1428, %v1428
  %v1798 = vpack.c.bf16 %v1436, %v1436
  %v1799 = vpack.c.bf16 %v1435, %v1435
  %v1800 = vpack.c.bf16 %v1437, %v1437
  %v1801 = vpack.c.bf16 %v1445, %v1445
  %v1802 = vpack.c.bf16 %v1453, %v1453
  %v1803 = vpack.c.bf16 %v1452, %v1452
  %v1804 = vpack.c.bf16 %v1454, %v1454
  %v1805 = vpack.c.bf16 %v1462, %v1462
  %v1806 = vpack.c.bf16 %v1470, %v1470
  %v1807 = vpack.c.bf16 %v1469, %v1469
  %v1808 = vpack.c.bf16 %v1471, %v1471
  %v1809 = vpack.c.bf16 %v1479, %v1479
  %v1810 = vpack.c.bf16 %v1487, %v1487
  %v1811 = vpack.c.bf16 %v1486, %v1486
  %v1812 = vpack.c.bf16 %v1488, %v1488
  %v1813 = vpack.c.bf16 %v1496, %v1496
  %v1814 = vpack.c.bf16 %v1504, %v1504
  %v1815 = vpack.c.bf16 %v1503, %v1503
  %v1816 = vpack.c.bf16 %v1505, %v1505
  %v1817 = vpack.c.bf16 %v1513, %v1513
  %v1818 = vpack.c.bf16 %v1521, %v1521
  %v1819 = vpack.c.bf16 %v1520, %v1520
  %v1820 = vpack.c.bf16 %v1522, %v1522
  %v1821 = vpack.c.bf16 %v1530, %v1530
  %v1822 = vpack.c.bf16 %v1538, %v1538
  %v1823 = vpack.c.bf16 %v1537, %v1537
  %v1824 = vpack.c.bf16 %v1539, %v1539
  %v1825 = vpack.c.bf16 %v1547, %v1547
  %v1826 = vpack.c.bf16 %v1555, %v1555
  %v1827 = vpack.c.bf16 %v1554, %v1554
  %v1828 = vpack.c.bf16 %v1556, %v1556
  %v1829 = vpack.c.bf16 %v1564, %v1564
  %v1830 = vpack.c.bf16 %v1572, %v1572
  %v1831 = vpack.c.bf16 %v1571, %v1571
  %v1832 = vpack.c.bf16 %v1573, %v1573
  %v1833 = vpack.c.bf16 %v1581, %v1581
  %v1834 = vpack.c.bf16 %v1589, %v1589
  %v1835 = vpack.c.bf16 %v1588, %v1588
  %v1836 = vpack.c.bf16 %v1590, %v1590
  %v1837 = vpack.c.bf16 %v1598, %v1598
  %v1838 = vpack.c.bf16 %v1606, %v1606
  %v1839 = vpack.c.bf16 %v1605, %v1605
  %v1840 = vpack.c.bf16 %v1607, %v1607
  %v1841 = vpack.c.bf16 %v1615, %v1615
  %v1842 = vpack.c.bf16 %v1623, %v1623
  %v1843 = vpack.c.bf16 %v1622, %v1622
  %v1844 = vpack.c.bf16 %v1624, %v1624
  %v1845 = vpack.c.bf16 %v1632, %v1632
  %v1846 = vpack.c.bf16 %v1640, %v1640
  %v1847 = vpack.c.bf16 %v1639, %v1639
  %v1848 = vpack.c.bf16 %v1641, %v1641
  %v1849 = vpack.c.bf16 %v1649, %v1649
  %v1850 = vpack.c.bf16 %v1657, %v1657
  %v1851 = vpack.c.bf16 %v1656, %v1656
  %v1852 = vpack.c.bf16 %v1658, %v1658
  %v1853 = vpack.c.bf16 %v1666, %v1666
  %v1854 = vpack.c.bf16 %v1674, %v1674
  %v1855 = vpack.c.bf16 %v1673, %v1673
  %v1856 = vpack.c.bf16 %v1675, %v1675
  %v1857 = vpack.c.bf16 %v1683, %v1683
  %v1858 = vpack.c.bf16 %v1691, %v1691
  %v1859 = vpack.c.bf16 %v1690, %v1690
  %v1860 = vpack.c.bf16 %v1692, %v1692
  %v1861 = vpack.c.bf16 %v1699, %v1699
  %v1862 = vld [vmem:[%s2] sm:$0x3]
  %v1864 = vlaneseq
  %v1865 = vshrl.u32 %v1864, 7
  %v1866 = vsub.s32 0, %v1865
  %v1867 = vrot.slane %v1862, %v1866
  %v1868 = vlaneseq
  %v1869 = vshrl.u32 %v1868, 7
  %v1870 = vsub.s32 1, %v1869
  %v1871 = vrot.slane %v1862, %v1870
  %v3170 = vunpack.c.l.b16 %v36
  %v3171 = vunpack.c.h.b16 %v36
  %v3172 = vunpack.c.l.b16 %v37
  %v3173 = vunpack.c.h.b16 %v37
  %v3174 = vunpack.c.l.b16 %v38
  %v3175 = vunpack.c.h.b16 %v38
  %v3176 = vunpack.c.l.b16 %v39
  %v3177 = vunpack.c.h.b16 %v39
  %v3178 = vunpack.c.l.b16 %v40
  %v3179 = vunpack.c.h.b16 %v40
  %v3180 = vunpack.c.l.b16 %v41
  %v3181 = vunpack.c.h.b16 %v41
  %v3182 = vunpack.c.l.b16 %v42
  %v3183 = vunpack.c.h.b16 %v42
  %v3184 = vunpack.c.l.b16 %v43
  %v3185 = vunpack.c.h.b16 %v43
  %v3186 = vunpack.c.l.b16 %v44
  %v3187 = vunpack.c.h.b16 %v44
  %v3188 = vunpack.c.l.b16 %v45
  %v3189 = vunpack.c.h.b16 %v45
  %v3190 = vunpack.c.l.b16 %v46
  %v3191 = vunpack.c.h.b16 %v46
  %v3192 = vunpack.c.l.b16 %v47
  %v3193 = vunpack.c.h.b16 %v47
  %v3194 = vunpack.c.l.b16 %v48
  %v3195 = vunpack.c.h.b16 %v48
  %v3196 = vunpack.c.l.b16 %v49
  %v3197 = vunpack.c.h.b16 %v49
  %v3198 = vunpack.c.l.b16 %v50
  %v3199 = vunpack.c.h.b16 %v50
  %v3200 = vunpack.c.l.b16 %v51
  %v3201 = vunpack.c.h.b16 %v51
  %v3202 = vunpack.c.l.b16 %v52
  %v3203 = vunpack.c.h.b16 %v52
  %v3204 = vunpack.c.l.b16 %v53
  %v3205 = vunpack.c.h.b16 %v53
  %v3206 = vunpack.c.l.b16 %v54
  %v3207 = vunpack.c.h.b16 %v54
  %v3208 = vunpack.c.l.b16 %v55
  %v3209 = vunpack.c.h.b16 %v55
  %v3210 = vunpack.c.l.b16 %v56
  %v3211 = vunpack.c.h.b16 %v56
  %v3212 = vunpack.c.l.b16 %v57
  %v3213 = vunpack.c.h.b16 %v57
  %v3214 = vunpack.c.l.b16 %v58
  %v3215 = vunpack.c.h.b16 %v58
  %v3216 = vunpack.c.l.b16 %v59
  %v3217 = vunpack.c.h.b16 %v59
  %v3218 = vunpack.c.l.b16 %v60
  %v3219 = vunpack.c.h.b16 %v60
  %v3220 = vunpack.c.l.b16 %v61
  %v3221 = vunpack.c.h.b16 %v61
  %v3222 = vunpack.c.l.b16 %v62
  %v3223 = vunpack.c.h.b16 %v62
  %v3224 = vunpack.c.l.b16 %v63
  %v3225 = vunpack.c.h.b16 %v63
  %v3226 = vunpack.c.l.b16 %v64
  %v3227 = vunpack.c.h.b16 %v64
  %v3228 = vunpack.c.l.b16 %v65
  %v3229 = vunpack.c.h.b16 %v65
  %v3230 = vunpack.c.l.b16 %v66
  %v3231 = vunpack.c.h.b16 %v66
  %v3232 = vunpack.c.l.b16 %v67
  %v3233 = vunpack.c.h.b16 %v67
  %v3234 = vunpack.c.l.b16 %v68
  %v3235 = vunpack.c.h.b16 %v68
  %v3236 = vunpack.c.l.b16 %v69
  %v3237 = vunpack.c.h.b16 %v69
  %v3238 = vunpack.c.l.b16 %v70
  %v3239 = vunpack.c.h.b16 %v70
  %v3240 = vunpack.c.l.b16 %v71
  %v3241 = vunpack.c.h.b16 %v71
  %v3242 = vunpack.c.l.b16 %v72
  %v3243 = vunpack.c.h.b16 %v72
  %v3244 = vunpack.c.l.b16 %v73
  %v3245 = vunpack.c.h.b16 %v73
  %v3246 = vunpack.c.l.b16 %v74
  %v3247 = vunpack.c.h.b16 %v74
  %v3248 = vunpack.c.l.b16 %v75
  %v3249 = vunpack.c.h.b16 %v75
  %v3250 = vunpack.c.l.b16 %v76
  %v3251 = vunpack.c.h.b16 %v76
  %v3252 = vunpack.c.l.b16 %v77
  %v3253 = vunpack.c.h.b16 %v77
  %v3254 = vunpack.c.l.b16 %v78
  %v3255 = vunpack.c.h.b16 %v78
  %v3256 = vunpack.c.l.b16 %v79
  %v3257 = vunpack.c.h.b16 %v79
  %v3258 = vunpack.c.l.b16 %v80
  %v3259 = vunpack.c.h.b16 %v80
  %v3260 = vunpack.c.l.b16 %v81
  %v3261 = vunpack.c.h.b16 %v81
  %v3262 = vunpack.c.l.b16 %v82
  %v3263 = vunpack.c.h.b16 %v82
  %v3264 = vunpack.c.l.b16 %v83
  %v3265 = vunpack.c.h.b16 %v83
  %v3266 = vunpack.c.l.b16 %v84
  %v3267 = vunpack.c.h.b16 %v84
  %v3268 = vunpack.c.l.b16 %v85
  %v3269 = vunpack.c.h.b16 %v85
  %v3270 = vunpack.c.l.b16 %v86
  %v3271 = vunpack.c.h.b16 %v86
  %v3272 = vunpack.c.l.b16 %v87
  %v3273 = vunpack.c.h.b16 %v87
  %v3274 = vunpack.c.l.b16 %v88
  %v3275 = vunpack.c.h.b16 %v88
  %v3276 = vunpack.c.l.b16 %v89
  %v3277 = vunpack.c.h.b16 %v89
  %v3278 = vunpack.c.l.b16 %v90
  %v3279 = vunpack.c.h.b16 %v90
  %v3280 = vunpack.c.l.b16 %v91
  %v3281 = vunpack.c.h.b16 %v91
  %v3282 = vunpack.c.l.b16 %v92
  %v3283 = vunpack.c.h.b16 %v92
  %v3284 = vunpack.c.l.b16 %v93
  %v3285 = vunpack.c.h.b16 %v93
  %v3286 = vunpack.c.l.b16 %v94
  %v3287 = vunpack.c.h.b16 %v94
  %v3288 = vunpack.c.l.b16 %v95
  %v3289 = vunpack.c.h.b16 %v95
  %v3290 = vunpack.c.l.b16 %v96
  %v3291 = vunpack.c.h.b16 %v96
  %v3292 = vunpack.c.l.b16 %v97
  %v3293 = vunpack.c.h.b16 %v97
  %v3294 = vunpack.c.l.b16 %v98
  %v3295 = vunpack.c.h.b16 %v98
  %v3296 = vunpack.c.l.b16 %v99
  %v3297 = vunpack.c.h.b16 %v99
  %v3298 = vunpack.c.l.b16 %v100
  %v3299 = vunpack.c.h.b16 %v100
  %v3300 = vunpack.c.l.b16 %v101
  %v3301 = vunpack.c.h.b16 %v101
  %v3302 = vunpack.c.l.b16 %v102
  %v3303 = vunpack.c.h.b16 %v102
  %v3304 = vunpack.c.l.b16 %v103
  %v3305 = vunpack.c.h.b16 %v103
  %v3306 = vunpack.c.l.b16 %v104
  %v3307 = vunpack.c.h.b16 %v104
  %v3308 = vunpack.c.l.b16 %v105
  %v3309 = vunpack.c.h.b16 %v105
  %v3310 = vunpack.c.l.b16 %v106
  %v3311 = vunpack.c.h.b16 %v106
  %v3312 = vunpack.c.l.b16 %v107
  %v3313 = vunpack.c.h.b16 %v107
  %v3314 = vunpack.c.l.b16 %v108
  %v3315 = vunpack.c.h.b16 %v108
  %v3316 = vunpack.c.l.b16 %v109
  %v3317 = vunpack.c.h.b16 %v109
  %v3318 = vunpack.c.l.b16 %v110
  %v3319 = vunpack.c.h.b16 %v110
  %v3320 = vunpack.c.l.b16 %v111
  %v3321 = vunpack.c.h.b16 %v111
  %v3322 = vunpack.c.l.b16 %v112
  %v3323 = vunpack.c.h.b16 %v112
  %v3324 = vunpack.c.l.b16 %v113
  %v3325 = vunpack.c.h.b16 %v113
  %v3326 = vunpack.c.l.b16 %v114
  %v3327 = vunpack.c.h.b16 %v114
  %v3328 = vunpack.c.l.b16 %v115
  %v3329 = vunpack.c.h.b16 %v115
  %v3330 = vunpack.c.l.b16 %v116
  %v3331 = vunpack.c.h.b16 %v116
  %v3332 = vunpack.c.l.b16 %v117
  %v3333 = vunpack.c.h.b16 %v117
  %v3334 = vunpack.c.l.b16 %v118
  %v3335 = vunpack.c.h.b16 %v118
  %v3336 = vunpack.c.l.b16 %v119
  %v3337 = vunpack.c.h.b16 %v119
  %v3338 = vunpack.c.l.b16 %v120
  %v3339 = vunpack.c.h.b16 %v120
  %v3340 = vunpack.c.l.b16 %v121
  %v3341 = vunpack.c.h.b16 %v121
  %v3342 = vunpack.c.l.b16 %v122
  %v3343 = vunpack.c.h.b16 %v122
  %v3344 = vunpack.c.l.b16 %v123
  %v3345 = vunpack.c.h.b16 %v123
  %v3346 = vunpack.c.l.b16 %v124
  %v3347 = vunpack.c.h.b16 %v124
  %v3348 = vunpack.c.l.b16 %v125
  %v3349 = vunpack.c.h.b16 %v125
  %v3350 = vunpack.c.l.b16 %v126
  %v3351 = vunpack.c.h.b16 %v126
  %v3352 = vunpack.c.l.b16 %v127
  %v3353 = vunpack.c.h.b16 %v127
  %v3354 = vunpack.c.l.b16 %v128
  %v3355 = vunpack.c.h.b16 %v128
  %v3356 = vunpack.c.l.b16 %v129
  %v3357 = vunpack.c.h.b16 %v129
  %v3358 = vunpack.c.l.b16 %v130
  %v3359 = vunpack.c.h.b16 %v130
  %v3360 = vunpack.c.l.b16 %v131
  %v3361 = vunpack.c.h.b16 %v131
  %v3362 = vunpack.c.l.b16 %v132
  %v3363 = vunpack.c.h.b16 %v132
  %v3364 = vunpack.c.l.b16 %v133
  %v3365 = vunpack.c.h.b16 %v133
  %v3366 = vunpack.c.l.b16 %v134
  %v3367 = vunpack.c.h.b16 %v134
  %v3368 = vunpack.c.l.b16 %v135
  %v3369 = vunpack.c.h.b16 %v135
  %v3370 = vunpack.c.l.b16 %v136
  %v3371 = vunpack.c.h.b16 %v136
  %v3372 = vunpack.c.l.b16 %v137
  %v3373 = vunpack.c.h.b16 %v137
  %v3374 = vunpack.c.l.b16 %v138
  %v3375 = vunpack.c.h.b16 %v138
  %v3376 = vunpack.c.l.b16 %v139
  %v3377 = vunpack.c.h.b16 %v139
  %v3378 = vunpack.c.l.b16 %v140
  %v3379 = vunpack.c.h.b16 %v140
  %v3380 = vunpack.c.l.b16 %v141
  %v3381 = vunpack.c.h.b16 %v141
  %v3382 = vunpack.c.l.b16 %v142
  %v3383 = vunpack.c.h.b16 %v142
  %v3384 = vunpack.c.l.b16 %v143
  %v3385 = vunpack.c.h.b16 %v143
  %v3386 = vunpack.c.l.b16 %v144
  %v3387 = vunpack.c.h.b16 %v144
  %v3388 = vunpack.c.l.b16 %v145
  %v3389 = vunpack.c.h.b16 %v145
  %v3390 = vunpack.c.l.b16 %v146
  %v3391 = vunpack.c.h.b16 %v146
  %v3392 = vunpack.c.l.b16 %v147
  %v3393 = vunpack.c.h.b16 %v147
  %v3394 = vunpack.c.l.b16 %v148
  %v3395 = vunpack.c.h.b16 %v148
  %v3396 = vunpack.c.l.b16 %v149
  %v3397 = vunpack.c.h.b16 %v149
  %v3398 = vunpack.c.l.b16 %v150
  %v3399 = vunpack.c.h.b16 %v150
  %v3400 = vunpack.c.l.b16 %v151
  %v3401 = vunpack.c.h.b16 %v151
  %v3402 = vunpack.c.l.b16 %v152
  %v3403 = vunpack.c.h.b16 %v152
  %v3404 = vunpack.c.l.b16 %v153
  %v3405 = vunpack.c.h.b16 %v153
  %v3406 = vunpack.c.l.b16 %v154
  %v3407 = vunpack.c.h.b16 %v154
  %v3408 = vunpack.c.l.b16 %v155
  %v3409 = vunpack.c.h.b16 %v155
  %v3410 = vunpack.c.l.b16 %v156
  %v3411 = vunpack.c.h.b16 %v156
  %v3412 = vunpack.c.l.b16 %v157
  %v3413 = vunpack.c.h.b16 %v157
  %v3414 = vunpack.c.l.b16 %v158
  %v3415 = vunpack.c.h.b16 %v158
  %v3416 = vunpack.c.l.b16 %v159
  %v3417 = vunpack.c.h.b16 %v159
  %v3418 = vunpack.c.l.b16 %v160
  %v3419 = vunpack.c.h.b16 %v160
  %v3420 = vunpack.c.l.b16 %v161
  %v3421 = vunpack.c.h.b16 %v161
  %v3422 = vunpack.c.l.b16 %v162
  %v3423 = vunpack.c.h.b16 %v162
  %v3424 = vunpack.c.l.b16 %v163
  %v3425 = vunpack.c.h.b16 %v163
  %v3426 = vunpack.c.l.b16 %v164
  %v3427 = vunpack.c.h.b16 %v164
  %v3428 = vunpack.c.l.b16 %v165
  %v3429 = vunpack.c.h.b16 %v165
  %v3430 = vunpack.c.l.b16 %v166
  %v3431 = vunpack.c.h.b16 %v166
  %v3432 = vunpack.c.l.b16 %v167
  %v3433 = vunpack.c.h.b16 %v167
  %v3434 = vunpack.c.l.b16 %v168
  %v3435 = vunpack.c.h.b16 %v168
  %v3436 = vunpack.c.l.b16 %v169
  %v3437 = vunpack.c.h.b16 %v169
  %v3438 = vunpack.c.l.b16 %v170
  %v3439 = vunpack.c.h.b16 %v170
  %v3440 = vunpack.c.l.b16 %v171
  %v3441 = vunpack.c.h.b16 %v171
  %v3442 = vunpack.c.l.b16 %v172
  %v3443 = vunpack.c.h.b16 %v172
  %v3444 = vunpack.c.l.b16 %v173
  %v3445 = vunpack.c.h.b16 %v173
  %v3446 = vunpack.c.l.b16 %v174
  %v3447 = vunpack.c.h.b16 %v174
  %v3448 = vunpack.c.l.b16 %v175
  %v3449 = vunpack.c.h.b16 %v175
  %v3450 = vunpack.c.l.b16 %v176
  %v3451 = vunpack.c.h.b16 %v176
  %v3452 = vunpack.c.l.b16 %v177
  %v3453 = vunpack.c.h.b16 %v177
  %v3454 = vunpack.c.l.b16 %v178
  %v3455 = vunpack.c.h.b16 %v178
  %v3456 = vunpack.c.l.b16 %v179
  %v3457 = vunpack.c.h.b16 %v179
  %v3458 = vunpack.c.l.b16 %v180
  %v3459 = vunpack.c.h.b16 %v180
  %v3460 = vunpack.c.l.b16 %v181
  %v3461 = vunpack.c.h.b16 %v181
  %v3462 = vunpack.c.l.b16 %v182
  %v3463 = vunpack.c.h.b16 %v182
  %v3464 = vunpack.c.l.b16 %v183
  %v3465 = vunpack.c.h.b16 %v183
  %v3466 = vunpack.c.l.b16 %v184
  %v3467 = vunpack.c.h.b16 %v184
  %v3468 = vunpack.c.l.b16 %v185
  %v3469 = vunpack.c.h.b16 %v185
  %v3470 = vunpack.c.l.b16 %v186
  %v3471 = vunpack.c.h.b16 %v186
  %v3472 = vunpack.c.l.b16 %v187
  %v3473 = vunpack.c.h.b16 %v187
  %v3474 = vunpack.c.l.b16 %v188
  %v3475 = vunpack.c.h.b16 %v188
  %v3476 = vunpack.c.l.b16 %v189
  %v3477 = vunpack.c.h.b16 %v189
  %v3478 = vunpack.c.l.b16 %v190
  %v3479 = vunpack.c.h.b16 %v190
  %v3480 = vunpack.c.l.b16 %v191
  %v3481 = vunpack.c.h.b16 %v191
  %v3482 = vunpack.c.l.b16 %v192
  %v3483 = vunpack.c.h.b16 %v192
  %v3484 = vunpack.c.l.b16 %v193
  %v3485 = vunpack.c.h.b16 %v193
  %v3486 = vunpack.c.l.b16 %v194
  %v3487 = vunpack.c.h.b16 %v194
  %v3488 = vunpack.c.l.b16 %v195
  %v3489 = vunpack.c.h.b16 %v195
  %v3490 = vunpack.c.l.b16 %v196
  %v3491 = vunpack.c.h.b16 %v196
  %v3492 = vunpack.c.l.b16 %v197
  %v3493 = vunpack.c.h.b16 %v197
  %v3494 = vunpack.c.l.b16 %v198
  %v3495 = vunpack.c.h.b16 %v198
  %v3496 = vunpack.c.l.b16 %v199
  %v3497 = vunpack.c.h.b16 %v199
  %v3498 = vunpack.c.l.b16 %v200
  %v3499 = vunpack.c.h.b16 %v200
  %v3500 = vunpack.c.l.b16 %v201
  %v3501 = vunpack.c.h.b16 %v201
  %v3502 = vunpack.c.l.b16 %v202
  %v3503 = vunpack.c.h.b16 %v202
  %v3504 = vunpack.c.l.b16 %v203
  %v3505 = vunpack.c.h.b16 %v203
  %v3506 = vunpack.c.l.b16 %v204
  %v3507 = vunpack.c.h.b16 %v204
  %v3508 = vunpack.c.l.b16 %v205
  %v3509 = vunpack.c.h.b16 %v205
  %v3510 = vunpack.c.l.b16 %v206
  %v3511 = vunpack.c.h.b16 %v206
  %v3512 = vunpack.c.l.b16 %v207
  %v3513 = vunpack.c.h.b16 %v207
  %v3514 = vunpack.c.l.b16 %v208
  %v3515 = vunpack.c.h.b16 %v208
  %v3516 = vunpack.c.l.b16 %v209
  %v3517 = vunpack.c.h.b16 %v209
  %v3518 = vunpack.c.l.b16 %v210
  %v3519 = vunpack.c.h.b16 %v210
  %v3520 = vunpack.c.l.b16 %v211
  %v3521 = vunpack.c.h.b16 %v211
  %v3522 = vunpack.c.l.b16 %v212
  %v3523 = vunpack.c.h.b16 %v212
  %v3524 = vunpack.c.l.b16 %v213
  %v3525 = vunpack.c.h.b16 %v213
  %v3526 = vunpack.c.l.b16 %v214
  %v3527 = vunpack.c.h.b16 %v214
  %v3528 = vunpack.c.l.b16 %v215
  %v3529 = vunpack.c.h.b16 %v215
  %v3530 = vunpack.c.l.b16 %v216
  %v3531 = vunpack.c.h.b16 %v216
  %v3532 = vunpack.c.l.b16 %v217
  %v3533 = vunpack.c.h.b16 %v217
  %v3534 = vunpack.c.l.b16 %v218
  %v3535 = vunpack.c.h.b16 %v218
  %v3536 = vunpack.c.l.b16 %v219
  %v3537 = vunpack.c.h.b16 %v219
  %v3538 = vunpack.c.l.b16 %v220
  %v3539 = vunpack.c.h.b16 %v220
  %v3540 = vunpack.c.l.b16 %v221
  %v3541 = vunpack.c.h.b16 %v221
  %v3542 = vunpack.c.l.b16 %v222
  %v3543 = vunpack.c.h.b16 %v222
  %v3544 = vunpack.c.l.b16 %v223
  %v3545 = vunpack.c.h.b16 %v223
  %v3546 = vunpack.c.l.b16 %v224
  %v3547 = vunpack.c.h.b16 %v224
  %v3548 = vunpack.c.l.b16 %v225
  %v3549 = vunpack.c.h.b16 %v225
  %v3550 = vunpack.c.l.b16 %v226
  %v3551 = vunpack.c.h.b16 %v226
  %v3552 = vunpack.c.l.b16 %v227
  %v3553 = vunpack.c.h.b16 %v227
  %v3554 = vunpack.c.l.b16 %v228
  %v3555 = vunpack.c.h.b16 %v228
  %v3556 = vunpack.c.l.b16 %v229
  %v3557 = vunpack.c.h.b16 %v229
  %v3558 = vunpack.c.l.b16 %v230
  %v3559 = vunpack.c.h.b16 %v230
  %v3560 = vunpack.c.l.b16 %v231
  %v3561 = vunpack.c.h.b16 %v231
  %v3562 = vunpack.c.l.b16 %v232
  %v3563 = vunpack.c.h.b16 %v232
  %v3564 = vunpack.c.l.b16 %v233
  %v3565 = vunpack.c.h.b16 %v233
  %v3566 = vunpack.c.l.b16 %v234
  %v3567 = vunpack.c.h.b16 %v234
  %v3568 = vunpack.c.l.b16 %v235
  %v3569 = vunpack.c.h.b16 %v235
  %v3570 = vunpack.c.l.b16 %v236
  %v3571 = vunpack.c.h.b16 %v236
  %v3572 = vunpack.c.l.b16 %v237
  %v3573 = vunpack.c.h.b16 %v237
  %v3574 = vunpack.c.l.b16 %v238
  %v3575 = vunpack.c.h.b16 %v238
  %v3576 = vunpack.c.l.b16 %v239
  %v3577 = vunpack.c.h.b16 %v239
  %v3578 = vunpack.c.l.b16 %v240
  %v3579 = vunpack.c.h.b16 %v240
  %v3580 = vunpack.c.l.b16 %v241
  %v3581 = vunpack.c.h.b16 %v241
  %v3582 = vunpack.c.l.b16 %v242
  %v3583 = vunpack.c.h.b16 %v242
  %v3584 = vunpack.c.l.b16 %v243
  %v3585 = vunpack.c.h.b16 %v243
  %v3586 = vunpack.c.l.b16 %v244
  %v3587 = vunpack.c.h.b16 %v244
  %v3588 = vunpack.c.l.b16 %v245
  %v3589 = vunpack.c.h.b16 %v245
  %v3590 = vunpack.c.l.b16 %v246
  %v3591 = vunpack.c.h.b16 %v246
  %v3592 = vunpack.c.l.b16 %v247
  %v3593 = vunpack.c.h.b16 %v247
  %v3594 = vunpack.c.l.b16 %v248
  %v3595 = vunpack.c.h.b16 %v248
  %v3596 = vunpack.c.l.b16 %v249
  %v3597 = vunpack.c.h.b16 %v249
  %v3598 = vunpack.c.l.b16 %v250
  %v3599 = vunpack.c.h.b16 %v250
  %v3600 = vunpack.c.l.b16 %v251
  %v3601 = vunpack.c.h.b16 %v251
  %v3602 = vunpack.c.l.b16 %v252
  %v3603 = vunpack.c.h.b16 %v252
  %v3604 = vunpack.c.l.b16 %v253
  %v3605 = vunpack.c.h.b16 %v253
  %v3606 = vunpack.c.l.b16 %v254
  %v3607 = vunpack.c.h.b16 %v254
  %v3608 = vunpack.c.l.b16 %v255
  %v3609 = vunpack.c.h.b16 %v255
  %v3610 = vunpack.c.l.b16 %v256
  %v3611 = vunpack.c.h.b16 %v256
  %v3612 = vunpack.c.l.b16 %v257
  %v3613 = vunpack.c.h.b16 %v257
  %v3614 = vunpack.c.l.b16 %v258
  %v3615 = vunpack.c.h.b16 %v258
  %v3616 = vunpack.c.l.b16 %v259
  %v3617 = vunpack.c.h.b16 %v259
  %v3618 = vunpack.c.l.b16 %v260
  %v3619 = vunpack.c.h.b16 %v260
  %v3620 = vunpack.c.l.b16 %v261
  %v3621 = vunpack.c.h.b16 %v261
  %v3622 = vunpack.c.l.b16 %v262
  %v3623 = vunpack.c.h.b16 %v262
  %v3624 = vunpack.c.l.b16 %v263
  %v3625 = vunpack.c.h.b16 %v263
  %v3626 = vunpack.c.l.b16 %v264
  %v3627 = vunpack.c.h.b16 %v264
  %v3628 = vunpack.c.l.b16 %v265
  %v3629 = vunpack.c.h.b16 %v265
  %v3630 = vunpack.c.l.b16 %v266
  %v3631 = vunpack.c.h.b16 %v266
  %v3632 = vunpack.c.l.b16 %v267
  %v3633 = vunpack.c.h.b16 %v267
  %v3634 = vunpack.c.l.b16 %v268
  %v3635 = vunpack.c.h.b16 %v268
  %v3636 = vunpack.c.l.b16 %v269
  %v3637 = vunpack.c.h.b16 %v269
  %v3638 = vunpack.c.l.b16 %v270
  %v3639 = vunpack.c.h.b16 %v270
  %v3640 = vunpack.c.l.b16 %v271
  %v3641 = vunpack.c.h.b16 %v271
  %v3642 = vunpack.c.l.b16 %v272
  %v3643 = vunpack.c.h.b16 %v272
  %v3644 = vunpack.c.l.b16 %v273
  %v3645 = vunpack.c.h.b16 %v273
  %v3646 = vunpack.c.l.b16 %v274
  %v3647 = vunpack.c.h.b16 %v274
  %v3648 = vunpack.c.l.b16 %v275
  %v3649 = vunpack.c.h.b16 %v275
  %v3650 = vunpack.c.l.b16 %v276
  %v3651 = vunpack.c.h.b16 %v276
  %v3652 = vunpack.c.l.b16 %v277
  %v3653 = vunpack.c.h.b16 %v277
  %v3654 = vunpack.c.l.b16 %v278
  %v3655 = vunpack.c.h.b16 %v278
  %v3656 = vunpack.c.l.b16 %v279
  %v3657 = vunpack.c.h.b16 %v279
  %v3658 = vunpack.c.l.b16 %v280
  %v3659 = vunpack.c.h.b16 %v280
  %v3660 = vunpack.c.l.b16 %v281
  %v3661 = vunpack.c.h.b16 %v281
  %v3662 = vunpack.c.l.b16 %v282
  %v3663 = vunpack.c.h.b16 %v282
  %v3664 = vunpack.c.l.b16 %v283
  %v3665 = vunpack.c.h.b16 %v283
  %v3666 = vunpack.c.l.b16 %v284
  %v3667 = vunpack.c.h.b16 %v284
  %v3668 = vunpack.c.l.b16 %v285
  %v3669 = vunpack.c.h.b16 %v285
  %v3670 = vunpack.c.l.b16 %v286
  %v3671 = vunpack.c.h.b16 %v286
  %v3672 = vunpack.c.l.b16 %v287
  %v3673 = vunpack.c.h.b16 %v287
  %v3674 = vunpack.c.l.b16 %v288
  %v3675 = vunpack.c.h.b16 %v288
  %v3676 = vunpack.c.l.b16 %v289
  %v3677 = vunpack.c.h.b16 %v289
  %v3678 = vunpack.c.l.b16 %v290
  %v3679 = vunpack.c.h.b16 %v290
  %v3680 = vunpack.c.l.b16 %v291
  %v3681 = vunpack.c.h.b16 %v291
  %v3682 = vunpack.c.l.b16 %v292
  %v3683 = vunpack.c.h.b16 %v292
  %v3684 = vunpack.c.l.b16 %v293
  %v3685 = vunpack.c.h.b16 %v293
  %v3686 = vunpack.c.l.b16 %v294
  %v3687 = vunpack.c.h.b16 %v294
  %v3688 = vunpack.c.l.b16 %v295
  %v3689 = vunpack.c.h.b16 %v295
  %v3690 = vunpack.c.l.b16 %v296
  %v3691 = vunpack.c.h.b16 %v296
  %v3692 = vunpack.c.l.b16 %v297
  %v3693 = vunpack.c.h.b16 %v297
  %v3694 = vunpack.c.l.b16 %v298
  %v3695 = vunpack.c.h.b16 %v298
  %v3696 = vunpack.c.l.b16 %v299
  %v3697 = vunpack.c.h.b16 %v299
  %v3698 = vunpack.c.l.b16 %v300
  %v3699 = vunpack.c.h.b16 %v300
  %v3700 = vunpack.c.l.b16 %v301
  %v3701 = vunpack.c.h.b16 %v301
  %v3702 = vunpack.c.l.b16 %v302
  %v3703 = vunpack.c.h.b16 %v302
  %v3704 = vunpack.c.l.b16 %v303
  %v3705 = vunpack.c.h.b16 %v303
  %v3706 = vunpack.c.l.b16 %v304
  %v3707 = vunpack.c.h.b16 %v304
  %v3708 = vunpack.c.l.b16 %v305
  %v3709 = vunpack.c.h.b16 %v305
  %v3710 = vunpack.c.l.b16 %v306
  %v3711 = vunpack.c.h.b16 %v306
  %v3712 = vunpack.c.l.b16 %v307
  %v3713 = vunpack.c.h.b16 %v307
  %v3714 = vunpack.c.l.b16 %v308
  %v3715 = vunpack.c.h.b16 %v308
  %v3716 = vunpack.c.l.b16 %v309
  %v3717 = vunpack.c.h.b16 %v309
  %v3718 = vunpack.c.l.b16 %v310
  %v3719 = vunpack.c.h.b16 %v310
  %v3720 = vunpack.c.l.b16 %v311
  %v3721 = vunpack.c.h.b16 %v311
  %v3722 = vunpack.c.l.b16 %v312
  %v3723 = vunpack.c.h.b16 %v312
  %v3724 = vunpack.c.l.b16 %v313
  %v3725 = vunpack.c.h.b16 %v313
  %v3726 = vunpack.c.l.b16 %v314
  %v3727 = vunpack.c.h.b16 %v314
  %v3728 = vunpack.c.l.b16 %v315
  %v3729 = vunpack.c.h.b16 %v315
  %v3730 = vunpack.c.l.b16 %v316
  %v3731 = vunpack.c.h.b16 %v316
  %v3732 = vunpack.c.l.b16 %v317
  %v3733 = vunpack.c.h.b16 %v317
  %v3734 = vunpack.c.l.b16 %v318
  %v3735 = vunpack.c.h.b16 %v318
  %v3736 = vunpack.c.l.b16 %v319
  %v3737 = vunpack.c.h.b16 %v319
  %v3738 = vunpack.c.l.b16 %v320
  %v3739 = vunpack.c.h.b16 %v320
  %v3740 = vunpack.c.l.b16 %v321
  %v3741 = vunpack.c.h.b16 %v321
  %v3742 = vunpack.c.l.b16 %v322
  %v3743 = vunpack.c.h.b16 %v322
  %v3744 = vunpack.c.l.b16 %v323
  %v3745 = vunpack.c.h.b16 %v323
  %v3746 = vunpack.c.l.b16 %v324
  %v3747 = vunpack.c.h.b16 %v324
  %v3748 = vunpack.c.l.b16 %v325
  %v3749 = vunpack.c.h.b16 %v325
  %v3750 = vunpack.c.l.b16 %v326
  %v3751 = vunpack.c.h.b16 %v326
  %v3752 = vunpack.c.l.b16 %v327
  %v3753 = vunpack.c.h.b16 %v327
  %v3754 = vunpack.c.l.b16 %v328
  %v3755 = vunpack.c.h.b16 %v328
  %v3756 = vunpack.c.l.b16 %v329
  %v3757 = vunpack.c.h.b16 %v329
  %v3758 = vunpack.c.l.b16 %v330
  %v3759 = vunpack.c.h.b16 %v330
  %v3760 = vunpack.c.l.b16 %v331
  %v3761 = vunpack.c.h.b16 %v331
  %v3762 = vunpack.c.l.b16 %v332
  %v3763 = vunpack.c.h.b16 %v332
  %v3764 = vunpack.c.l.b16 %v333
  %v3765 = vunpack.c.h.b16 %v333
  %v3766 = vunpack.c.l.b16 %v334
  %v3767 = vunpack.c.h.b16 %v334
  %v3768 = vunpack.c.l.b16 %v335
  %v3769 = vunpack.c.h.b16 %v335
  %v3770 = vunpack.c.l.b16 %v336
  %v3771 = vunpack.c.h.b16 %v336
  %v3772 = vunpack.c.l.b16 %v337
  %v3773 = vunpack.c.h.b16 %v337
  %v3774 = vunpack.c.l.b16 %v338
  %v3775 = vunpack.c.h.b16 %v338
  %v3776 = vunpack.c.l.b16 %v339
  %v3777 = vunpack.c.h.b16 %v339
  %v3778 = vunpack.c.l.b16 %v340
  %v3779 = vunpack.c.h.b16 %v340
  %v3780 = vunpack.c.l.b16 %v341
  %v3781 = vunpack.c.h.b16 %v341
  %v3782 = vunpack.c.l.b16 %v342
  %v3783 = vunpack.c.h.b16 %v342
  %v3784 = vunpack.c.l.b16 %v343
  %v3785 = vunpack.c.h.b16 %v343
  %v3786 = vunpack.c.l.b16 %v344
  %v3787 = vunpack.c.h.b16 %v344
  %v3788 = vunpack.c.l.b16 %v345
  %v3789 = vunpack.c.h.b16 %v345
  %v3790 = vunpack.c.l.b16 %v346
  %v3791 = vunpack.c.h.b16 %v346
  %v3792 = vunpack.c.l.b16 %v347
  %v3793 = vunpack.c.h.b16 %v347
  %v3794 = vunpack.c.l.b16 %v348
  %v3795 = vunpack.c.h.b16 %v348
  %v3796 = vunpack.c.l.b16 %v349
  %v3797 = vunpack.c.h.b16 %v349
  %v3798 = vunpack.c.l.b16 %v350
  %v3799 = vunpack.c.h.b16 %v350
  %v3800 = vunpack.c.l.b16 %v351
  %v3801 = vunpack.c.h.b16 %v351
  %v3802 = vunpack.c.l.b16 %v352
  %v3803 = vunpack.c.h.b16 %v352
  %v3804 = vunpack.c.l.b16 %v353
  %v3805 = vunpack.c.h.b16 %v353
  %v3806 = vunpack.c.l.b16 %v354
  %v3807 = vunpack.c.h.b16 %v354
  %v3808 = vunpack.c.l.b16 %v355
  %v3809 = vunpack.c.h.b16 %v355
  %v3810 = vunpack.c.l.b16 %v356
  %v3811 = vunpack.c.h.b16 %v356
  %v3812 = vunpack.c.l.b16 %v357
  %v3813 = vunpack.c.h.b16 %v357
  %v3814 = vunpack.c.l.b16 %v358
  %v3815 = vunpack.c.h.b16 %v358
  %v3816 = vunpack.c.l.b16 %v359
  %v3817 = vunpack.c.h.b16 %v359
  %v3818 = vunpack.c.l.b16 %v360
  %v3819 = vunpack.c.h.b16 %v360
  %v3820 = vunpack.c.l.b16 %v361
  %v3821 = vunpack.c.h.b16 %v361
  %v3822 = vunpack.c.l.b16 %v362
  %v3823 = vunpack.c.h.b16 %v362
  %v3824 = vunpack.c.l.b16 %v363
  %v3825 = vunpack.c.h.b16 %v363
  %v3826 = vunpack.c.l.b16 %v364
  %v3827 = vunpack.c.h.b16 %v364
  %v3828 = vunpack.c.l.b16 %v365
  %v3829 = vunpack.c.h.b16 %v365
  %v3830 = vunpack.c.l.b16 %v366
  %v3831 = vunpack.c.h.b16 %v366
  %v3832 = vunpack.c.l.b16 %v367
  %v3833 = vunpack.c.h.b16 %v367
  %v3834 = vunpack.c.l.b16 %v368
  %v3835 = vunpack.c.h.b16 %v368
  %v3836 = vunpack.c.l.b16 %v369
  %v3837 = vunpack.c.h.b16 %v369
  %v3838 = vunpack.c.l.b16 %v370
  %v3839 = vunpack.c.h.b16 %v370
  %v3840 = vunpack.c.l.b16 %v371
  %v3841 = vunpack.c.h.b16 %v371
  %v3842 = vunpack.c.l.b16 %v372
  %v3843 = vunpack.c.h.b16 %v372
  %v3844 = vunpack.c.l.b16 %v373
  %v3845 = vunpack.c.h.b16 %v373
  %v3846 = vunpack.c.l.b16 %v374
  %v3847 = vunpack.c.h.b16 %v374
  %v3848 = vunpack.c.l.b16 %v375
  %v3849 = vunpack.c.h.b16 %v375
  %v3850 = vunpack.c.l.b16 %v376
  %v3851 = vunpack.c.h.b16 %v376
  %v3852 = vunpack.c.l.b16 %v377
  %v3853 = vunpack.c.h.b16 %v377
  %v3854 = vunpack.c.l.b16 %v378
  %v3855 = vunpack.c.h.b16 %v378
  %v3856 = vunpack.c.l.b16 %v379
  %v3857 = vunpack.c.h.b16 %v379
  %v3858 = vunpack.c.l.b16 %v380
  %v3859 = vunpack.c.h.b16 %v380
  %v3860 = vunpack.c.l.b16 %v381
  %v3861 = vunpack.c.h.b16 %v381
  %v3862 = vunpack.c.l.b16 %v382
  %v3863 = vunpack.c.h.b16 %v382
  %v3864 = vunpack.c.l.b16 %v383
  %v3865 = vunpack.c.h.b16 %v383
  %v3866 = vunpack.c.l.b16 %v384
  %v3867 = vunpack.c.h.b16 %v384
  %v3868 = vunpack.c.l.b16 %v385
  %v3869 = vunpack.c.h.b16 %v385
  %v3870 = vunpack.c.l.b16 %v386
  %v3871 = vunpack.c.h.b16 %v386
  %v3872 = vunpack.c.l.b16 %v387
  %v3873 = vunpack.c.h.b16 %v387
  %v3874 = vunpack.c.l.b16 %v388
  %v3875 = vunpack.c.h.b16 %v388
  %v3876 = vunpack.c.l.b16 %v389
  %v3877 = vunpack.c.h.b16 %v389
  %v3878 = vunpack.c.l.b16 %v390
  %v3879 = vunpack.c.h.b16 %v390
  %v3880 = vunpack.c.l.b16 %v391
  %v3881 = vunpack.c.h.b16 %v391
  %v3882 = vunpack.c.l.b16 %v392
  %v3883 = vunpack.c.h.b16 %v392
  %v3884 = vunpack.c.l.b16 %v393
  %v3885 = vunpack.c.h.b16 %v393
  %v3886 = vunpack.c.l.b16 %v394
  %v3887 = vunpack.c.h.b16 %v394
  %v3888 = vunpack.c.l.b16 %v395
  %v3889 = vunpack.c.h.b16 %v395
  %v3890 = vunpack.c.l.b16 %v396
  %v3891 = vunpack.c.h.b16 %v396
  %v3892 = vunpack.c.l.b16 %v397
  %v3893 = vunpack.c.h.b16 %v397
  %v3894 = vunpack.c.l.b16 %v398
  %v3895 = vunpack.c.h.b16 %v398
  %v3896 = vunpack.c.l.b16 %v399
  %v3897 = vunpack.c.h.b16 %v399
  %v3898 = vunpack.c.l.b16 %v400
  %v3899 = vunpack.c.h.b16 %v400
  %v3900 = vunpack.c.l.b16 %v401
  %v3901 = vunpack.c.h.b16 %v401
  %v3902 = vunpack.c.l.b16 %v402
  %v3903 = vunpack.c.h.b16 %v402
  %v3904 = vunpack.c.l.b16 %v403
  %v3905 = vunpack.c.h.b16 %v403
  %v3906 = vunpack.c.l.b16 %v404
  %v3907 = vunpack.c.h.b16 %v404
  %v3908 = vunpack.c.l.b16 %v405
  %v3909 = vunpack.c.h.b16 %v405
  %v3910 = vunpack.c.l.b16 %v406
  %v3911 = vunpack.c.h.b16 %v406
  %v3912 = vunpack.c.l.b16 %v407
  %v3913 = vunpack.c.h.b16 %v407
  %v3914 = vunpack.c.l.b16 %v408
  %v3915 = vunpack.c.h.b16 %v408
  %v3916 = vunpack.c.l.b16 %v409
  %v3917 = vunpack.c.h.b16 %v409
  %v3918 = vunpack.c.l.b16 %v410
  %v3919 = vunpack.c.h.b16 %v410
  %v3920 = vunpack.c.l.b16 %v411
  %v3921 = vunpack.c.h.b16 %v411
  %v3922 = vunpack.c.l.b16 %v412
  %v3923 = vunpack.c.h.b16 %v412
  %v3924 = vunpack.c.l.b16 %v413
  %v3925 = vunpack.c.h.b16 %v413
  %v3926 = vunpack.c.l.b16 %v414
  %v3927 = vunpack.c.h.b16 %v414
  %v3928 = vunpack.c.l.b16 %v415
  %v3929 = vunpack.c.h.b16 %v415
  %v3930 = vunpack.c.l.b16 %v416
  %v3931 = vunpack.c.h.b16 %v416
  %v3932 = vunpack.c.l.b16 %v417
  %v3933 = vunpack.c.h.b16 %v417
  %v3934 = vunpack.c.l.b16 %v418
  %v3935 = vunpack.c.h.b16 %v418
  %v3936 = vunpack.c.l.b16 %v419
  %v3937 = vunpack.c.h.b16 %v419
  %v3938 = vunpack.c.l.b16 %v420
  %v3939 = vunpack.c.h.b16 %v420
  %v3940 = vunpack.c.l.b16 %v421
  %v3941 = vunpack.c.h.b16 %v421
  %v3942 = vunpack.c.l.b16 %v422
  %v3943 = vunpack.c.h.b16 %v422
  %v3944 = vunpack.c.l.b16 %v423
  %v3945 = vunpack.c.h.b16 %v423
  %v3946 = vunpack.c.l.b16 %v424
  %v3947 = vunpack.c.h.b16 %v424
  %v3948 = vunpack.c.l.b16 %v425
  %v3949 = vunpack.c.h.b16 %v425
  %v3950 = vunpack.c.l.b16 %v426
  %v3951 = vunpack.c.h.b16 %v426
  %v3952 = vunpack.c.l.b16 %v427
  %v3953 = vunpack.c.h.b16 %v427
  %v3954 = vunpack.c.l.b16 %v428
  %v3955 = vunpack.c.h.b16 %v428
  %v3956 = vunpack.c.l.b16 %v429
  %v3957 = vunpack.c.h.b16 %v429
  %v3958 = vunpack.c.l.b16 %v430
  %v3959 = vunpack.c.h.b16 %v430
  %v3960 = vunpack.c.l.b16 %v431
  %v3961 = vunpack.c.h.b16 %v431
  %v3962 = vunpack.c.l.b16 %v432
  %v3963 = vunpack.c.h.b16 %v432
  %v3964 = vunpack.c.l.b16 %v433
  %v3965 = vunpack.c.h.b16 %v433
  %v3966 = vunpack.c.l.b16 %v434
  %v3967 = vunpack.c.h.b16 %v434
  %v3968 = vunpack.c.l.b16 %v435
  %v3969 = vunpack.c.h.b16 %v435
  %v3970 = vunpack.c.l.b16 %v436
  %v3971 = vunpack.c.h.b16 %v436
  %v3972 = vunpack.c.l.b16 %v437
  %v3973 = vunpack.c.h.b16 %v437
  %v3974 = vunpack.c.l.b16 %v438
  %v3975 = vunpack.c.h.b16 %v438
  %v3976 = vunpack.c.l.b16 %v439
  %v3977 = vunpack.c.h.b16 %v439
  %v3978 = vunpack.c.l.b16 %v440
  %v3979 = vunpack.c.h.b16 %v440
  %v3980 = vunpack.c.l.b16 %v441
  %v3981 = vunpack.c.h.b16 %v441
  %v3982 = vunpack.c.l.b16 %v442
  %v3983 = vunpack.c.h.b16 %v442
  %v3984 = vunpack.c.l.b16 %v443
  %v3985 = vunpack.c.h.b16 %v443
  %v3986 = vunpack.c.l.b16 %v444
  %v3987 = vunpack.c.h.b16 %v444
  %v3988 = vunpack.c.l.b16 %v445
  %v3989 = vunpack.c.h.b16 %v445
  %v3990 = vunpack.c.l.b16 %v446
  %v3991 = vunpack.c.h.b16 %v446
  %v3992 = vunpack.c.l.b16 %v447
  %v3993 = vunpack.c.h.b16 %v447
  %v3994 = vunpack.c.l.b16 %v448
  %v3995 = vunpack.c.h.b16 %v448
  %v3996 = vunpack.c.l.b16 %v449
  %v3997 = vunpack.c.h.b16 %v449
  %v3998 = vunpack.c.l.b16 %v450
  %v3999 = vunpack.c.h.b16 %v450
  %v4000 = vunpack.c.l.b16 %v451
  %v4001 = vunpack.c.h.b16 %v451
  %v4002 = vunpack.c.l.b16 %v452
  %v4003 = vunpack.c.h.b16 %v452
  %v4004 = vunpack.c.l.b16 %v453
  %v4005 = vunpack.c.h.b16 %v453
  %v4006 = vunpack.c.l.b16 %v454
  %v4007 = vunpack.c.h.b16 %v454
  %v4008 = vunpack.c.l.b16 %v455
  %v4009 = vunpack.c.h.b16 %v455
  %v4010 = vunpack.c.l.b16 %v456
  %v4011 = vunpack.c.h.b16 %v456
  %v4012 = vunpack.c.l.b16 %v457
  %v4013 = vunpack.c.h.b16 %v457
  %v4014 = vunpack.c.l.b16 %v458
  %v4015 = vunpack.c.h.b16 %v458
  %v4016 = vunpack.c.l.b16 %v459
  %v4017 = vunpack.c.h.b16 %v459
  %v4018 = vunpack.c.l.b16 %v460
  %v4019 = vunpack.c.h.b16 %v460
  %v4020 = vunpack.c.l.b16 %v461
  %v4021 = vunpack.c.h.b16 %v461
  %v4022 = vunpack.c.l.b16 %v462
  %v4023 = vunpack.c.h.b16 %v462
  %v4024 = vunpack.c.l.b16 %v463
  %v4025 = vunpack.c.h.b16 %v463
  %v4026 = vunpack.c.l.b16 %v464
  %v4027 = vunpack.c.h.b16 %v464
  %v4028 = vunpack.c.l.b16 %v465
  %v4029 = vunpack.c.h.b16 %v465
  %v4030 = vunpack.c.l.b16 %v466
  %v4031 = vunpack.c.h.b16 %v466
  %v4032 = vunpack.c.l.b16 %v467
  %v4033 = vunpack.c.h.b16 %v467
  %v4034 = vunpack.c.l.b16 %v468
  %v4035 = vunpack.c.h.b16 %v468
  %v4036 = vunpack.c.l.b16 %v469
  %v4037 = vunpack.c.h.b16 %v469
  %v4038 = vunpack.c.l.b16 %v470
  %v4039 = vunpack.c.h.b16 %v470
  %v4040 = vunpack.c.l.b16 %v471
  %v4041 = vunpack.c.h.b16 %v471
  %v4042 = vunpack.c.l.b16 %v472
  %v4043 = vunpack.c.h.b16 %v472
  %v4044 = vunpack.c.l.b16 %v473
  %v4045 = vunpack.c.h.b16 %v473
  %v4046 = vunpack.c.l.b16 %v474
  %v4047 = vunpack.c.h.b16 %v474
  %v4048 = vunpack.c.l.b16 %v475
  %v4049 = vunpack.c.h.b16 %v475
  %v4050 = vunpack.c.l.b16 %v476
  %v4051 = vunpack.c.h.b16 %v476
  %v4052 = vunpack.c.l.b16 %v477
  %v4053 = vunpack.c.h.b16 %v477
  %v4054 = vunpack.c.l.b16 %v478
  %v4055 = vunpack.c.h.b16 %v478
  %v4056 = vunpack.c.l.b16 %v479
  %v4057 = vunpack.c.h.b16 %v479
  %v4058 = vunpack.c.l.b16 %v480
  %v4059 = vunpack.c.h.b16 %v480
  %v4060 = vunpack.c.l.b16 %v481
  %v4061 = vunpack.c.h.b16 %v481
  %v4062 = vunpack.c.l.b16 %v482
  %v4063 = vunpack.c.h.b16 %v482
  %v4064 = vunpack.c.l.b16 %v483
  %v4065 = vunpack.c.h.b16 %v483
  %v4066 = vunpack.c.l.b16 %v484
  %v4067 = vunpack.c.h.b16 %v484
  %v4068 = vunpack.c.l.b16 %v485
  %v4069 = vunpack.c.h.b16 %v485
  %v4070 = vunpack.c.l.b16 %v486
  %v4071 = vunpack.c.h.b16 %v486
  %v4072 = vunpack.c.l.b16 %v487
  %v4073 = vunpack.c.h.b16 %v487
  %v4074 = vunpack.c.l.b16 %v488
  %v4075 = vunpack.c.h.b16 %v488
  %v4076 = vunpack.c.l.b16 %v489
  %v4077 = vunpack.c.h.b16 %v489
  %v4078 = vunpack.c.l.b16 %v490
  %v4079 = vunpack.c.h.b16 %v490
  %v4080 = vunpack.c.l.b16 %v491
  %v4081 = vunpack.c.h.b16 %v491
  %v4082 = vunpack.c.l.b16 %v492
  %v4083 = vunpack.c.h.b16 %v492
  %v4084 = vunpack.c.l.b16 %v493
  %v4085 = vunpack.c.h.b16 %v493
  %v4086 = vunpack.c.l.b16 %v494
  %v4087 = vunpack.c.h.b16 %v494
  %v4088 = vunpack.c.l.b16 %v495
  %v4089 = vunpack.c.h.b16 %v495
  %v4090 = vunpack.c.l.b16 %v496
  %v4091 = vunpack.c.h.b16 %v496
  %v4092 = vunpack.c.l.b16 %v497
  %v4093 = vunpack.c.h.b16 %v497
  %v4094 = vunpack.c.l.b16 %v498
  %v4095 = vunpack.c.h.b16 %v498
  %v4096 = vunpack.c.l.b16 %v499
  %v4097 = vunpack.c.h.b16 %v499
  %v4098 = vunpack.c.l.b16 %v500
  %v4099 = vunpack.c.h.b16 %v500
  %v4100 = vunpack.c.l.b16 %v501
  %v4101 = vunpack.c.h.b16 %v501
  %v4102 = vunpack.c.l.b16 %v502
  %v4103 = vunpack.c.h.b16 %v502
  %v4104 = vunpack.c.l.b16 %v503
  %v4105 = vunpack.c.h.b16 %v503
  %v4106 = vunpack.c.l.b16 %v504
  %v4107 = vunpack.c.h.b16 %v504
  %v4108 = vunpack.c.l.b16 %v505
  %v4109 = vunpack.c.h.b16 %v505
  %v4110 = vunpack.c.l.b16 %v506
  %v4111 = vunpack.c.h.b16 %v506
  %v4112 = vunpack.c.l.b16 %v507
  %v4113 = vunpack.c.h.b16 %v507
  %v4114 = vunpack.c.l.b16 %v508
  %v4115 = vunpack.c.h.b16 %v508
  %v4116 = vunpack.c.l.b16 %v509
  %v4117 = vunpack.c.h.b16 %v509
  %v4118 = vunpack.c.l.b16 %v510
  %v4119 = vunpack.c.h.b16 %v510
  %v4120 = vunpack.c.l.b16 %v511
  %v4121 = vunpack.c.h.b16 %v511
  %v4122 = vunpack.c.l.b16 %v512
  %v4123 = vunpack.c.h.b16 %v512
  %v4124 = vunpack.c.l.b16 %v513
  %v4125 = vunpack.c.h.b16 %v513
  %v4126 = vunpack.c.l.b16 %v514
  %v4127 = vunpack.c.h.b16 %v514
  %v4128 = vunpack.c.l.b16 %v515
  %v4129 = vunpack.c.h.b16 %v515
  %v4130 = vunpack.c.l.b16 %v516
  %v4131 = vunpack.c.h.b16 %v516
  %v4132 = vunpack.c.l.b16 %v517
  %v4133 = vunpack.c.h.b16 %v517
  %v4134 = vunpack.c.l.b16 %v518
  %v4135 = vunpack.c.h.b16 %v518
  %v4136 = vunpack.c.l.b16 %v519
  %v4137 = vunpack.c.h.b16 %v519
  %v4138 = vunpack.c.l.b16 %v520
  %v4139 = vunpack.c.h.b16 %v520
  %v4140 = vunpack.c.l.b16 %v521
  %v4141 = vunpack.c.h.b16 %v521
  %v4142 = vunpack.c.l.b16 %v522
  %v4143 = vunpack.c.h.b16 %v522
  %v4144 = vunpack.c.l.b16 %v523
  %v4145 = vunpack.c.h.b16 %v523
  %v4146 = vunpack.c.l.b16 %v524
  %v4147 = vunpack.c.h.b16 %v524
  %v4148 = vunpack.c.l.b16 %v525
  %v4149 = vunpack.c.h.b16 %v525
  %v4150 = vunpack.c.l.b16 %v526
  %v4151 = vunpack.c.h.b16 %v526
  %v4152 = vunpack.c.l.b16 %v527
  %v4153 = vunpack.c.h.b16 %v527
  %v4154 = vunpack.c.l.b16 %v528
  %v4155 = vunpack.c.h.b16 %v528
  %v4156 = vunpack.c.l.b16 %v529
  %v4157 = vunpack.c.h.b16 %v529
  %v4158 = vunpack.c.l.b16 %v530
  %v4159 = vunpack.c.h.b16 %v530
  %v4160 = vunpack.c.l.b16 %v531
  %v4161 = vunpack.c.h.b16 %v531
  %v4162 = vunpack.c.l.b16 %v532
  %v4163 = vunpack.c.h.b16 %v532
  %v4164 = vunpack.c.l.b16 %v533
  %v4165 = vunpack.c.h.b16 %v533
  %v4166 = vunpack.c.l.b16 %v534
  %v4167 = vunpack.c.h.b16 %v534
  %v4168 = vunpack.c.l.b16 %v535
  %v4169 = vunpack.c.h.b16 %v535
  %v4170 = vunpack.c.l.b16 %v536
  %v4171 = vunpack.c.h.b16 %v536
  %v4172 = vunpack.c.l.b16 %v537
  %v4173 = vunpack.c.h.b16 %v537
  %v4174 = vunpack.c.l.b16 %v538
  %v4175 = vunpack.c.h.b16 %v538
  %v4176 = vunpack.c.l.b16 %v539
  %v4177 = vunpack.c.h.b16 %v539
  %v4178 = vunpack.c.l.b16 %v540
  %v4179 = vunpack.c.h.b16 %v540
  %v4180 = vunpack.c.l.b16 %v541
  %v4181 = vunpack.c.h.b16 %v541
  %v4182 = vunpack.c.l.b16 %v542
  %v4183 = vunpack.c.h.b16 %v542
  %v4184 = vunpack.c.l.b16 %v543
  %v4185 = vunpack.c.h.b16 %v543
  %v4186 = vunpack.c.l.b16 %v544
  %v4187 = vunpack.c.h.b16 %v544
  %v4188 = vunpack.c.l.b16 %v545
  %v4189 = vunpack.c.h.b16 %v545
  %v4190 = vunpack.c.l.b16 %v546
  %v4191 = vunpack.c.h.b16 %v546
  %v4192 = vunpack.c.l.b16 %v547
  %v4193 = vunpack.c.h.b16 %v547
  %v4194 = vunpack.c.l.b16 %v548
  %v4195 = vunpack.c.h.b16 %v548
  %v4196 = vunpack.c.l.b16 %v549
  %v4197 = vunpack.c.h.b16 %v549
  %v4198 = vunpack.c.l.b16 %v550
  %v4199 = vunpack.c.h.b16 %v550
  %v4200 = vunpack.c.l.b16 %v551
  %v4201 = vunpack.c.h.b16 %v551
  %v4202 = vunpack.c.l.b16 %v552
  %v4203 = vunpack.c.h.b16 %v552
  %v4204 = vunpack.c.l.b16 %v553
  %v4205 = vunpack.c.h.b16 %v553
  %v4206 = vunpack.c.l.b16 %v554
  %v4207 = vunpack.c.h.b16 %v554
  %v4208 = vunpack.c.l.b16 %v555
  %v4209 = vunpack.c.h.b16 %v555
  %v4210 = vunpack.c.l.b16 %v556
  %v4211 = vunpack.c.h.b16 %v556
  %v4212 = vunpack.c.l.b16 %v557
  %v4213 = vunpack.c.h.b16 %v557
  %v4214 = vunpack.c.l.b16 %v558
  %v4215 = vunpack.c.h.b16 %v558
  %v4216 = vunpack.c.l.b16 %v559
  %v4217 = vunpack.c.h.b16 %v559
  %v4218 = vunpack.c.l.b16 %v560
  %v4219 = vunpack.c.h.b16 %v560
  %v4220 = vunpack.c.l.b16 %v561
  %v4221 = vunpack.c.h.b16 %v561
  %v4222 = vunpack.c.l.b16 %v562
  %v4223 = vunpack.c.h.b16 %v562
  %v4224 = vunpack.c.l.b16 %v563
  %v4225 = vunpack.c.h.b16 %v563
  %v4226 = vunpack.c.l.b16 %v564
  %v4227 = vunpack.c.h.b16 %v564
  %v4228 = vunpack.c.l.b16 %v565
  %v4229 = vunpack.c.h.b16 %v565
  %v4230 = vunpack.c.l.b16 %v566
  %v4231 = vunpack.c.h.b16 %v566
  %v4232 = vunpack.c.l.b16 %v567
  %v4233 = vunpack.c.h.b16 %v567
  %v4234 = vunpack.c.l.b16 %v568
  %v4235 = vunpack.c.h.b16 %v568
  %v4236 = vunpack.c.l.b16 %v569
  %v4237 = vunpack.c.h.b16 %v569
  %v4238 = vunpack.c.l.b16 %v570
  %v4239 = vunpack.c.h.b16 %v570
  %v4240 = vunpack.c.l.b16 %v571
  %v4241 = vunpack.c.h.b16 %v571
  %v4242 = vunpack.c.l.b16 %v572
  %v4243 = vunpack.c.h.b16 %v572
  %v4244 = vunpack.c.l.b16 %v573
  %v4245 = vunpack.c.h.b16 %v573
  %v4246 = vunpack.c.l.b16 %v574
  %v4247 = vunpack.c.h.b16 %v574
  %v4248 = vunpack.c.l.b16 %v575
  %v4249 = vunpack.c.h.b16 %v575
  %v4250 = vunpack.c.l.b16 %v576
  %v4251 = vunpack.c.h.b16 %v576
  %v4252 = vunpack.c.l.b16 %v577
  %v4253 = vunpack.c.h.b16 %v577
  %v4254 = vunpack.c.l.b16 %v578
  %v4255 = vunpack.c.h.b16 %v578
  %v4256 = vunpack.c.l.b16 %v579
  %v4257 = vunpack.c.h.b16 %v579
  %v4258 = vunpack.c.l.b16 %v580
  %v4259 = vunpack.c.h.b16 %v580
  %v4260 = vunpack.c.l.b16 %v581
  %v4261 = vunpack.c.h.b16 %v581
  %v4262 = vunpack.c.l.b16 %v582
  %v4263 = vunpack.c.h.b16 %v582
  %v4264 = vunpack.c.l.b16 %v583
  %v4265 = vunpack.c.h.b16 %v583
  %v4266 = vunpack.c.l.b16 %v584
  %v4267 = vunpack.c.h.b16 %v584
  %v4268 = vunpack.c.l.b16 %v585
  %v4269 = vunpack.c.h.b16 %v585
  %v4270 = vunpack.c.l.b16 %v586
  %v4271 = vunpack.c.h.b16 %v586
  %v4272 = vunpack.c.l.b16 %v587
  %v4273 = vunpack.c.h.b16 %v587
  %v4274 = vunpack.c.l.b16 %v588
  %v4275 = vunpack.c.h.b16 %v588
  %v4276 = vunpack.c.l.b16 %v589
  %v4277 = vunpack.c.h.b16 %v589
  %v4278 = vunpack.c.l.b16 %v590
  %v4279 = vunpack.c.h.b16 %v590
  %v4280 = vunpack.c.l.b16 %v591
  %v4281 = vunpack.c.h.b16 %v591
  %v4282 = vunpack.c.l.b16 %v592
  %v4283 = vunpack.c.h.b16 %v592
  %v4284 = vunpack.c.l.b16 %v593
  %v4285 = vunpack.c.h.b16 %v593
  %v4286 = vunpack.c.l.b16 %v594
  %v4287 = vunpack.c.h.b16 %v594
  %v4288 = vunpack.c.l.b16 %v595
  %v4289 = vunpack.c.h.b16 %v595
  %v4290 = vunpack.c.l.b16 %v596
  %v4291 = vunpack.c.h.b16 %v596
  %v4292 = vunpack.c.l.b16 %v597
  %v4293 = vunpack.c.h.b16 %v597
  %v4294 = vunpack.c.l.b16 %v598
  %v4295 = vunpack.c.h.b16 %v598
  %v4296 = vunpack.c.l.b16 %v599
  %v4297 = vunpack.c.h.b16 %v599
  %v4298 = vunpack.c.l.b16 %v600
  %v4299 = vunpack.c.h.b16 %v600
  %v4300 = vunpack.c.l.b16 %v601
  %v4301 = vunpack.c.h.b16 %v601
  %v4302 = vunpack.c.l.b16 %v602
  %v4303 = vunpack.c.h.b16 %v602
  %v4304 = vunpack.c.l.b16 %v603
  %v4305 = vunpack.c.h.b16 %v603
  %v4306 = vunpack.c.l.b16 %v604
  %v4307 = vunpack.c.h.b16 %v604
  %v4308 = vunpack.c.l.b16 %v605
  %v4309 = vunpack.c.h.b16 %v605
  %v4310 = vunpack.c.l.b16 %v606
  %v4311 = vunpack.c.h.b16 %v606
  %v4312 = vunpack.c.l.b16 %v607
  %v4313 = vunpack.c.h.b16 %v607
  %v4314 = vunpack.c.l.b16 %v608
  %v4315 = vunpack.c.h.b16 %v608
  %v4316 = vunpack.c.l.b16 %v609
  %v4317 = vunpack.c.h.b16 %v609
  %v4318 = vunpack.c.l.b16 %v610
  %v4319 = vunpack.c.h.b16 %v610
  %v4320 = vunpack.c.l.b16 %v611
  %v4321 = vunpack.c.h.b16 %v611
  %v4322 = vunpack.c.l.b16 %v612
  %v4323 = vunpack.c.h.b16 %v612
  %v4324 = vunpack.c.l.b16 %v613
  %v4325 = vunpack.c.h.b16 %v613
  %v4326 = vunpack.c.l.b16 %v614
  %v4327 = vunpack.c.h.b16 %v614
  %v4328 = vunpack.c.l.b16 %v615
  %v4329 = vunpack.c.h.b16 %v615
  %v4330 = vunpack.c.l.b16 %v616
  %v4331 = vunpack.c.h.b16 %v616
  %v4332 = vunpack.c.l.b16 %v617
  %v4333 = vunpack.c.h.b16 %v617
  %v4334 = vunpack.c.l.b16 %v618
  %v4335 = vunpack.c.h.b16 %v618
  %v4336 = vunpack.c.l.b16 %v619
  %v4337 = vunpack.c.h.b16 %v619
  %v4338 = vunpack.c.l.b16 %v620
  %v4339 = vunpack.c.h.b16 %v620
  %v4340 = vunpack.c.l.b16 %v621
  %v4341 = vunpack.c.h.b16 %v621
  %v4342 = vunpack.c.l.b16 %v622
  %v4343 = vunpack.c.h.b16 %v622
  %v4344 = vunpack.c.l.b16 %v623
  %v4345 = vunpack.c.h.b16 %v623
  %v4346 = vunpack.c.l.b16 %v624
  %v4347 = vunpack.c.h.b16 %v624
  %v4348 = vunpack.c.l.b16 %v625
  %v4349 = vunpack.c.h.b16 %v625
  %v4350 = vunpack.c.l.b16 %v626
  %v4351 = vunpack.c.h.b16 %v626
  %v4352 = vunpack.c.l.b16 %v627
  %v4353 = vunpack.c.h.b16 %v627
  %v4354 = vunpack.c.l.b16 %v628
  %v4355 = vunpack.c.h.b16 %v628
  %v4356 = vunpack.c.l.b16 %v629
  %v4357 = vunpack.c.h.b16 %v629
  %v4358 = vunpack.c.l.b16 %v630
  %v4359 = vunpack.c.h.b16 %v630
  %v4360 = vunpack.c.l.b16 %v631
  %v4361 = vunpack.c.h.b16 %v631
  %v4362 = vunpack.c.l.b16 %v632
  %v4363 = vunpack.c.h.b16 %v632
  %v4364 = vunpack.c.l.b16 %v633
  %v4365 = vunpack.c.h.b16 %v633
  %v4366 = vunpack.c.l.b16 %v634
  %v4367 = vunpack.c.h.b16 %v634
  %v4368 = vunpack.c.l.b16 %v635
  %v4369 = vunpack.c.h.b16 %v635
  %v4370 = vunpack.c.l.b16 %v636
  %v4371 = vunpack.c.h.b16 %v636
  %v4372 = vunpack.c.l.b16 %v637
  %v4373 = vunpack.c.h.b16 %v637
  %v4374 = vunpack.c.l.b16 %v638
  %v4375 = vunpack.c.h.b16 %v638
  %v4376 = vunpack.c.l.b16 %v639
  %v4377 = vunpack.c.h.b16 %v639
  %v4378 = vunpack.c.l.b16 %v640
  %v4379 = vunpack.c.h.b16 %v640
  %v4380 = vunpack.c.l.b16 %v641
  %v4381 = vunpack.c.h.b16 %v641
  %v4382 = vunpack.c.l.b16 %v642
  %v4383 = vunpack.c.h.b16 %v642
  %v4384 = vunpack.c.l.b16 %v643
  %v4385 = vunpack.c.h.b16 %v643
  %v4386 = vunpack.c.l.b16 %v644
  %v4387 = vunpack.c.h.b16 %v644
  %v4388 = vunpack.c.l.b16 %v645
  %v4389 = vunpack.c.h.b16 %v645
  %v4390 = vunpack.c.l.b16 %v646
  %v4391 = vunpack.c.h.b16 %v646
  %v4392 = vunpack.c.l.b16 %v647
  %v4393 = vunpack.c.h.b16 %v647
  %v4394 = vunpack.c.l.b16 %v648
  %v4395 = vunpack.c.h.b16 %v648
  %v4396 = vunpack.c.l.b16 %v649
  %v4397 = vunpack.c.h.b16 %v649
  %v4398 = vunpack.c.l.b16 %v650
  %v4399 = vunpack.c.h.b16 %v650
  %v4400 = vunpack.c.l.b16 %v651
  %v4401 = vunpack.c.h.b16 %v651
  %v4402 = vunpack.c.l.b16 %v652
  %v4403 = vunpack.c.h.b16 %v652
  %v4404 = vunpack.c.l.b16 %v653
  %v4405 = vunpack.c.h.b16 %v653
  %v4406 = vunpack.c.l.b16 %v654
  %v4407 = vunpack.c.h.b16 %v654
  %v4408 = vunpack.c.l.b16 %v655
  %v4409 = vunpack.c.h.b16 %v655
  %v4410 = vunpack.c.l.b16 %v656
  %v4411 = vunpack.c.h.b16 %v656
  %v4412 = vunpack.c.l.b16 %v657
  %v4413 = vunpack.c.h.b16 %v657
  %v4414 = vunpack.c.l.b16 %v658
  %v4415 = vunpack.c.h.b16 %v658
  %v4416 = vunpack.c.l.b16 %v659
  %v4417 = vunpack.c.h.b16 %v659
  %v4418 = vunpack.c.l.b16 %v660
  %v4419 = vunpack.c.h.b16 %v660
  %v4420 = vunpack.c.l.b16 %v661
  %v4421 = vunpack.c.h.b16 %v661
  %v4422 = vunpack.c.l.b16 %v662
  %v4423 = vunpack.c.h.b16 %v662
  %v4424 = vunpack.c.l.b16 %v663
  %v4425 = vunpack.c.h.b16 %v663
  %v4426 = vunpack.c.l.b16 %v664
  %v4427 = vunpack.c.h.b16 %v664
  %v4428 = vunpack.c.l.b16 %v665
  %v4429 = vunpack.c.h.b16 %v665
  %v4430 = vunpack.c.l.b16 %v666
  %v4431 = vunpack.c.h.b16 %v666
  %v4432 = vunpack.c.l.b16 %v667
  %v4433 = vunpack.c.h.b16 %v667
  %v4434 = vunpack.c.l.b16 %v668
  %v4435 = vunpack.c.h.b16 %v668
  %v4436 = vunpack.c.l.b16 %v669
  %v4437 = vunpack.c.h.b16 %v669
  %v4438 = vunpack.c.l.b16 %v670
  %v4439 = vunpack.c.h.b16 %v670
  %v4440 = vunpack.c.l.b16 %v671
  %v4441 = vunpack.c.h.b16 %v671
  %v4442 = vunpack.c.l.b16 %v672
  %v4443 = vunpack.c.h.b16 %v672
  %v4444 = vunpack.c.l.b16 %v673
  %v4445 = vunpack.c.h.b16 %v673
  %v4446 = vunpack.c.l.b16 %v674
  %v4447 = vunpack.c.h.b16 %v674
  %v4448 = vunpack.c.l.b16 %v675
  %v4449 = vunpack.c.h.b16 %v675
  %v4450 = vunpack.c.l.b16 %v676
  %v4451 = vunpack.c.h.b16 %v676
  %v4452 = vunpack.c.l.b16 %v677
  %v4453 = vunpack.c.h.b16 %v677
  %v4454 = vunpack.c.l.b16 %v678
  %v4455 = vunpack.c.h.b16 %v678
  %v4456 = vunpack.c.l.b16 %v679
  %v4457 = vunpack.c.h.b16 %v679
  %v4458 = vunpack.c.l.b16 %v680
  %v4459 = vunpack.c.h.b16 %v680
  %v4460 = vunpack.c.l.b16 %v681
  %v4461 = vunpack.c.h.b16 %v681
  %v4462 = vunpack.c.l.b16 %v682
  %v4463 = vunpack.c.h.b16 %v682
  %v4464 = vunpack.c.l.b16 %v683
  %v4465 = vunpack.c.h.b16 %v683
  %v4466 = vunpack.c.l.b16 %v684
  %v4467 = vunpack.c.h.b16 %v684
  %v4468 = vunpack.c.l.b16 %v685
  %v4469 = vunpack.c.h.b16 %v685
  %v4470 = vunpack.c.l.b16 %v686
  %v4471 = vunpack.c.h.b16 %v686
  %v4472 = vunpack.c.l.b16 %v687
  %v4473 = vunpack.c.h.b16 %v687
  %v4474 = vunpack.c.l.b16 %v688
  %v4475 = vunpack.c.h.b16 %v688
  %v4476 = vunpack.c.l.b16 %v689
  %v4477 = vunpack.c.h.b16 %v689
  %v4478 = vunpack.c.l.b16 %v690
  %v4479 = vunpack.c.h.b16 %v690
  %v4480 = vunpack.c.l.b16 %v691
  %v4481 = vunpack.c.h.b16 %v691
  %v4482 = vunpack.c.l.b16 %v692
  %v4483 = vunpack.c.h.b16 %v692
  %v4484 = vunpack.c.l.b16 %v693
  %v4485 = vunpack.c.h.b16 %v693
  %v4486 = vunpack.c.l.b16 %v694
  %v4487 = vunpack.c.h.b16 %v694
  %v4488 = vunpack.c.l.b16 %v695
  %v4489 = vunpack.c.h.b16 %v695
  %v4490 = vunpack.c.l.b16 %v696
  %v4491 = vunpack.c.h.b16 %v696
  %v4492 = vunpack.c.l.b16 %v697
  %v4493 = vunpack.c.h.b16 %v697
  %v4494 = vunpack.c.l.b16 %v698
  %v4495 = vunpack.c.h.b16 %v698
  %v4496 = vunpack.c.l.b16 %v699
  %v4497 = vunpack.c.h.b16 %v699
  %v4498 = vunpack.c.l.b16 %v700
  %v4499 = vunpack.c.h.b16 %v700
  %v4500 = vunpack.c.l.b16 %v701
  %v4501 = vunpack.c.h.b16 %v701
  %v4502 = vunpack.c.l.b16 %v702
  %v4503 = vunpack.c.h.b16 %v702
  %v4504 = vunpack.c.l.b16 %v703
  %v4505 = vunpack.c.h.b16 %v703
  %v4506 = vunpack.c.l.b16 %v704
  %v4507 = vunpack.c.h.b16 %v704
  %v4508 = vunpack.c.l.b16 %v705
  %v4509 = vunpack.c.h.b16 %v705
  %v4510 = vunpack.c.l.b16 %v706
  %v4511 = vunpack.c.h.b16 %v706
  %v4512 = vunpack.c.l.b16 %v707
  %v4513 = vunpack.c.h.b16 %v707
  %v4514 = vunpack.c.l.b16 %v708
  %v4515 = vunpack.c.h.b16 %v708
  %v4516 = vunpack.c.l.b16 %v709
  %v4517 = vunpack.c.h.b16 %v709
  %v4518 = vunpack.c.l.b16 %v710
  %v4519 = vunpack.c.h.b16 %v710
  %v4520 = vunpack.c.l.b16 %v711
  %v4521 = vunpack.c.h.b16 %v711
  %v4522 = vunpack.c.l.b16 %v712
  %v4523 = vunpack.c.h.b16 %v712
  %v4524 = vunpack.c.l.b16 %v713
  %v4525 = vunpack.c.h.b16 %v713
  %v4526 = vunpack.c.l.b16 %v714
  %v4527 = vunpack.c.h.b16 %v714
  %v4528 = vunpack.c.l.b16 %v715
  %v4529 = vunpack.c.h.b16 %v715
  %v4530 = vunpack.c.l.b16 %v716
  %v4531 = vunpack.c.h.b16 %v716
  %v4532 = vunpack.c.l.b16 %v717
  %v4533 = vunpack.c.h.b16 %v717
  %v4534 = vunpack.c.l.b16 %v718
  %v4535 = vunpack.c.h.b16 %v718
  %v4536 = vunpack.c.l.b16 %v719
  %v4537 = vunpack.c.h.b16 %v719
  %v4538 = vunpack.c.l.b16 %v720
  %v4539 = vunpack.c.h.b16 %v720
  %v4540 = vunpack.c.l.b16 %v721
  %v4541 = vunpack.c.h.b16 %v721
  %v4542 = vunpack.c.l.b16 %v722
  %v4543 = vunpack.c.h.b16 %v722
  %v4544 = vunpack.c.l.b16 %v723
  %v4545 = vunpack.c.h.b16 %v723
  %v4546 = vunpack.c.l.b16 %v724
  %v4547 = vunpack.c.h.b16 %v724
  %v4548 = vunpack.c.l.b16 %v725
  %v4549 = vunpack.c.h.b16 %v725
  %v4550 = vunpack.c.l.b16 %v726
  %v4551 = vunpack.c.h.b16 %v726
  %v4552 = vunpack.c.l.b16 %v727
  %v4553 = vunpack.c.h.b16 %v727
  %v4554 = vunpack.c.l.b16 %v728
  %v4555 = vunpack.c.h.b16 %v728
  %v4556 = vunpack.c.l.b16 %v729
  %v4557 = vunpack.c.h.b16 %v729
  %v4558 = vunpack.c.l.b16 %v730
  %v4559 = vunpack.c.h.b16 %v730
  %v4560 = vunpack.c.l.b16 %v731
  %v4561 = vunpack.c.h.b16 %v731
  %v4562 = vunpack.c.l.b16 %v732
  %v4563 = vunpack.c.h.b16 %v732
  %v4564 = vunpack.c.l.b16 %v733
  %v4565 = vunpack.c.h.b16 %v733
  %v4566 = vunpack.c.l.b16 %v734
  %v4567 = vunpack.c.h.b16 %v734
  %v4568 = vunpack.c.l.b16 %v735
  %v4569 = vunpack.c.h.b16 %v735
  %v4570 = vunpack.c.l.b16 %v736
  %v4571 = vunpack.c.h.b16 %v736
  %v4572 = vunpack.c.l.b16 %v737
  %v4573 = vunpack.c.h.b16 %v737
  %v4574 = vunpack.c.l.b16 %v738
  %v4575 = vunpack.c.h.b16 %v738
  %v4576 = vunpack.c.l.b16 %v739
  %v4577 = vunpack.c.h.b16 %v739
  %v4578 = vunpack.c.l.b16 %v740
  %v4579 = vunpack.c.h.b16 %v740
  %v4580 = vunpack.c.l.b16 %v741
  %v4581 = vunpack.c.h.b16 %v741
  %v4582 = vunpack.c.l.b16 %v742
  %v4583 = vunpack.c.h.b16 %v742
  %v4584 = vunpack.c.l.b16 %v743
  %v4585 = vunpack.c.h.b16 %v743
  %v4586 = vunpack.c.l.b16 %v744
  %v4587 = vunpack.c.h.b16 %v744
  %v4588 = vunpack.c.l.b16 %v745
  %v4589 = vunpack.c.h.b16 %v745
  %v4590 = vunpack.c.l.b16 %v746
  %v4591 = vunpack.c.h.b16 %v746
  %v4592 = vunpack.c.l.b16 %v747
  %v4593 = vunpack.c.h.b16 %v747
  %v4594 = vunpack.c.l.b16 %v748
  %v4595 = vunpack.c.h.b16 %v748
  %v4596 = vunpack.c.l.b16 %v749
  %v4597 = vunpack.c.h.b16 %v749
  %v4598 = vunpack.c.l.b16 %v750
  %v4599 = vunpack.c.h.b16 %v750
  %v4600 = vunpack.c.l.b16 %v751
  %v4601 = vunpack.c.h.b16 %v751
  %v4602 = vunpack.c.l.b16 %v752
  %v4603 = vunpack.c.h.b16 %v752
  %v4604 = vunpack.c.l.b16 %v753
  %v4605 = vunpack.c.h.b16 %v753
  %v4606 = vunpack.c.l.b16 %v754
  %v4607 = vunpack.c.h.b16 %v754
  %v4608 = vunpack.c.l.b16 %v755
  %v4609 = vunpack.c.h.b16 %v755
  %v4610 = vunpack.c.l.b16 %v756
  %v4611 = vunpack.c.h.b16 %v756
  %v4612 = vunpack.c.l.b16 %v757
  %v4613 = vunpack.c.h.b16 %v757
  %v4614 = vunpack.c.l.b16 %v758
  %v4615 = vunpack.c.h.b16 %v758
  %v4616 = vunpack.c.l.b16 %v759
  %v4617 = vunpack.c.h.b16 %v759
  %v4618 = vunpack.c.l.b16 %v760
  %v4619 = vunpack.c.h.b16 %v760
  %v4620 = vunpack.c.l.b16 %v761
  %v4621 = vunpack.c.h.b16 %v761
  %v4622 = vunpack.c.l.b16 %v762
  %v4623 = vunpack.c.h.b16 %v762
  %v4624 = vunpack.c.l.b16 %v763
  %v4625 = vunpack.c.h.b16 %v763
  %v4626 = vunpack.c.l.b16 %v764
  %v4627 = vunpack.c.h.b16 %v764
  %v4628 = vunpack.c.l.b16 %v765
  %v4629 = vunpack.c.h.b16 %v765
  %v4630 = vunpack.c.l.b16 %v766
  %v4631 = vunpack.c.h.b16 %v766
  %v4632 = vunpack.c.l.b16 %v767
  %v4633 = vunpack.c.h.b16 %v767
  %v4634 = vunpack.c.l.b16 %v768
  %v4635 = vunpack.c.h.b16 %v768
  %v4636 = vunpack.c.l.b16 %v769
  %v4637 = vunpack.c.h.b16 %v769
  %v4638 = vunpack.c.l.b16 %v770
  %v4639 = vunpack.c.h.b16 %v770
  %v4640 = vunpack.c.l.b16 %v771
  %v4641 = vunpack.c.h.b16 %v771
  %v4642 = vunpack.c.l.b16 %v772
  %v4643 = vunpack.c.h.b16 %v772
  %v4644 = vunpack.c.l.b16 %v773
  %v4645 = vunpack.c.h.b16 %v773
  %v4646 = vunpack.c.l.b16 %v774
  %v4647 = vunpack.c.h.b16 %v774
  %v4648 = vunpack.c.l.b16 %v775
  %v4649 = vunpack.c.h.b16 %v775
  %v4650 = vunpack.c.l.b16 %v776
  %v4651 = vunpack.c.h.b16 %v776
  %v4652 = vunpack.c.l.b16 %v777
  %v4653 = vunpack.c.h.b16 %v777
  %v4654 = vunpack.c.l.b16 %v778
  %v4655 = vunpack.c.h.b16 %v778
  %v4656 = vunpack.c.l.b16 %v779
  %v4657 = vunpack.c.h.b16 %v779
  %v4658 = vunpack.c.l.b16 %v780
  %v4659 = vunpack.c.h.b16 %v780
  %v4660 = vunpack.c.l.b16 %v781
  %v4661 = vunpack.c.h.b16 %v781
  %v4662 = vunpack.c.l.b16 %v782
  %v4663 = vunpack.c.h.b16 %v782
  %v4664 = vunpack.c.l.b16 %v783
  %v4665 = vunpack.c.h.b16 %v783
  %v4666 = vunpack.c.l.b16 %v784
  %v4667 = vunpack.c.h.b16 %v784
  %v4668 = vunpack.c.l.b16 %v785
  %v4669 = vunpack.c.h.b16 %v785
  %v4670 = vunpack.c.l.b16 %v786
  %v4671 = vunpack.c.h.b16 %v786
  %v4672 = vunpack.c.l.b16 %v787
  %v4673 = vunpack.c.h.b16 %v787
  %v4674 = vunpack.c.l.b16 %v788
  %v4675 = vunpack.c.h.b16 %v788
  %v4676 = vunpack.c.l.b16 %v789
  %v4677 = vunpack.c.h.b16 %v789
  %v4678 = vunpack.c.l.b16 %v790
  %v4679 = vunpack.c.h.b16 %v790
  %v4680 = vunpack.c.l.b16 %v791
  %v4681 = vunpack.c.h.b16 %v791
  %v4682 = vunpack.c.l.b16 %v792
  %v4683 = vunpack.c.h.b16 %v792
  %v4684 = vunpack.c.l.b16 %v793
  %v4685 = vunpack.c.h.b16 %v793
  %v4686 = vunpack.c.l.b16 %v794
  %v4687 = vunpack.c.h.b16 %v794
  %v4688 = vunpack.c.l.b16 %v795
  %v4689 = vunpack.c.h.b16 %v795
  %v4690 = vunpack.c.l.b16 %v796
  %v4691 = vunpack.c.h.b16 %v796
  %v4692 = vunpack.c.l.b16 %v797
  %v4693 = vunpack.c.h.b16 %v797
  %v4694 = vunpack.c.l.b16 %v798
  %v4695 = vunpack.c.h.b16 %v798
  %v4696 = vunpack.c.l.b16 %v799
  %v4697 = vunpack.c.h.b16 %v799
  %v4698 = vunpack.c.l.b16 %v800
  %v4699 = vunpack.c.h.b16 %v800
  %v4700 = vunpack.c.l.b16 %v801
  %v4701 = vunpack.c.h.b16 %v801
  %v4702 = vunpack.c.l.b16 %v802
  %v4703 = vunpack.c.h.b16 %v802
  %v4704 = vunpack.c.l.b16 %v803
  %v4705 = vunpack.c.h.b16 %v803
  %v4706 = vunpack.c.l.b16 %v804
  %v4707 = vunpack.c.h.b16 %v804
  %v4708 = vunpack.c.l.b16 %v805
  %v4709 = vunpack.c.h.b16 %v805
  %v4710 = vunpack.c.l.b16 %v806
  %v4711 = vunpack.c.h.b16 %v806
  %v4712 = vunpack.c.l.b16 %v807
  %v4713 = vunpack.c.h.b16 %v807
  %v4714 = vunpack.c.l.b16 %v808
  %v4715 = vunpack.c.h.b16 %v808
  %v4716 = vunpack.c.l.b16 %v809
  %v4717 = vunpack.c.h.b16 %v809
  %v4718 = vunpack.c.l.b16 %v810
  %v4719 = vunpack.c.h.b16 %v810
  %v4720 = vunpack.c.l.b16 %v811
  %v4721 = vunpack.c.h.b16 %v811
  %v4722 = vunpack.c.l.b16 %v812
  %v4723 = vunpack.c.h.b16 %v812
  %v4724 = vunpack.c.l.b16 %v813
  %v4725 = vunpack.c.h.b16 %v813
  %v4726 = vunpack.c.l.b16 %v814
  %v4727 = vunpack.c.h.b16 %v814
  %v4728 = vunpack.c.l.b16 %v815
  %v4729 = vunpack.c.h.b16 %v815
  %v4730 = vunpack.c.l.b16 %v816
  %v4731 = vunpack.c.h.b16 %v816
  %v4732 = vunpack.c.l.b16 %v817
  %v4733 = vunpack.c.h.b16 %v817
  %v4734 = vunpack.c.l.b16 %v818
  %v4735 = vunpack.c.h.b16 %v818
  %v4736 = vunpack.c.l.b16 %v819
  %v4737 = vunpack.c.h.b16 %v819
  %v4738 = vunpack.c.l.b16 %v820
  %v4739 = vunpack.c.h.b16 %v820
  %v4740 = vunpack.c.l.b16 %v821
  %v4741 = vunpack.c.h.b16 %v821
  %v4742 = vunpack.c.l.b16 %v822
  %v4743 = vunpack.c.h.b16 %v822
  %v4744 = vunpack.c.l.b16 %v823
  %v4745 = vunpack.c.h.b16 %v823
  %v4746 = vunpack.c.l.b16 %v824
  %v4747 = vunpack.c.h.b16 %v824
  %v4748 = vunpack.c.l.b16 %v825
  %v4749 = vunpack.c.h.b16 %v825
  %v4750 = vunpack.c.l.b16 %v826
  %v4751 = vunpack.c.h.b16 %v826
  %v4752 = vunpack.c.l.b16 %v827
  %v4753 = vunpack.c.h.b16 %v827
  %v4754 = vunpack.c.l.b16 %v828
  %v4755 = vunpack.c.h.b16 %v828
  %v4756 = vunpack.c.l.b16 %v829
  %v4757 = vunpack.c.h.b16 %v829
  %v4758 = vunpack.c.l.b16 %v830
  %v4759 = vunpack.c.h.b16 %v830
  %v4760 = vunpack.c.l.b16 %v831
  %v4761 = vunpack.c.h.b16 %v831
  %v4762 = vunpack.c.l.b16 %v832
  %v4763 = vunpack.c.h.b16 %v832
  %v4764 = vunpack.c.l.b16 %v833
  %v4765 = vunpack.c.h.b16 %v833
  %v4766 = vunpack.c.l.b16 %v834
  %v4767 = vunpack.c.h.b16 %v834
  %v4768 = vunpack.c.l.b16 %v835
  %v4769 = vunpack.c.h.b16 %v835
  %v4770 = vunpack.c.l.b16 %v836
  %v4771 = vunpack.c.h.b16 %v836
  %v4772 = vunpack.c.l.b16 %v837
  %v4773 = vunpack.c.h.b16 %v837
  %v4774 = vunpack.c.l.b16 %v838
  %v4775 = vunpack.c.h.b16 %v838
  %v4776 = vunpack.c.l.b16 %v839
  %v4777 = vunpack.c.h.b16 %v839
  %v4778 = vunpack.c.l.b16 %v840
  %v4779 = vunpack.c.h.b16 %v840
  %v4780 = vunpack.c.l.b16 %v841
  %v4781 = vunpack.c.h.b16 %v841
  %v4782 = vunpack.c.l.b16 %v842
  %v4783 = vunpack.c.h.b16 %v842
  %v4784 = vunpack.c.l.b16 %v843
  %v4785 = vunpack.c.h.b16 %v843
  %v4786 = vunpack.c.l.b16 %v844
  %v4787 = vunpack.c.h.b16 %v844
  %v4788 = vunpack.c.l.b16 %v845
  %v4789 = vunpack.c.h.b16 %v845
  %v4790 = vunpack.c.l.b16 %v846
  %v4791 = vunpack.c.h.b16 %v846
  %v4792 = vunpack.c.l.b16 %v847
  %v4793 = vunpack.c.h.b16 %v847
  %v4794 = vunpack.c.l.b16 %v848
  %v4795 = vunpack.c.h.b16 %v848
  %v4796 = vunpack.c.l.b16 %v849
  %v4797 = vunpack.c.h.b16 %v849
  %v4798 = vunpack.c.l.b16 %v850
  %v4799 = vunpack.c.h.b16 %v850
  %v4800 = vunpack.c.l.b16 %v851
  %v4801 = vunpack.c.h.b16 %v851
  %v4802 = vunpack.c.l.b16 %v852
  %v4803 = vunpack.c.h.b16 %v852
  %v4804 = vunpack.c.l.b16 %v853
  %v4805 = vunpack.c.h.b16 %v853
  %v4806 = vunpack.c.l.b16 %v854
  %v4807 = vunpack.c.h.b16 %v854
  %v4808 = vunpack.c.l.b16 %v855
  %v4809 = vunpack.c.h.b16 %v855
  %v4810 = vunpack.c.l.b16 %v856
  %v4811 = vunpack.c.h.b16 %v856
  %v4812 = vunpack.c.l.b16 %v857
  %v4813 = vunpack.c.h.b16 %v857
  %v4814 = vunpack.c.l.b16 %v858
  %v4815 = vunpack.c.h.b16 %v858
  %v4816 = vunpack.c.l.b16 %v859
  %v4817 = vunpack.c.h.b16 %v859
  %v4818 = vunpack.c.l.b16 %v860
  %v4819 = vunpack.c.h.b16 %v860
  %v4820 = vunpack.c.l.b16 %v861
  %v4821 = vunpack.c.h.b16 %v861
  %v4822 = vunpack.c.l.b16 %v862
  %v4823 = vunpack.c.h.b16 %v862
  %v4824 = vunpack.c.l.b16 %v863
  %v4825 = vunpack.c.h.b16 %v863
  %v4826 = vunpack.c.l.b16 %v864
  %v4827 = vunpack.c.h.b16 %v864
  %v4828 = vunpack.c.l.b16 %v865
  %v4829 = vunpack.c.h.b16 %v865
  %v4830 = vunpack.c.l.b16 %v866
  %v4831 = vunpack.c.h.b16 %v866
  %v4832 = vunpack.c.l.b16 %v867
  %v4833 = vunpack.c.h.b16 %v867
  %v4834 = vunpack.c.l.b16 %v868
  %v4835 = vunpack.c.h.b16 %v868
  %v4836 = vunpack.c.l.b16 %v869
  %v4837 = vunpack.c.h.b16 %v869
  %v4838 = vunpack.c.l.b16 %v870
  %v4839 = vunpack.c.h.b16 %v870
  %v4840 = vunpack.c.l.b16 %v871
  %v4841 = vunpack.c.h.b16 %v871
  %v4842 = vunpack.c.l.b16 %v872
  %v4843 = vunpack.c.h.b16 %v872
  %v4844 = vunpack.c.l.b16 %v873
  %v4845 = vunpack.c.h.b16 %v873
  %v4846 = vunpack.c.l.b16 %v874
  %v4847 = vunpack.c.h.b16 %v874
  %v4848 = vunpack.c.l.b16 %v875
  %v4849 = vunpack.c.h.b16 %v875
  %v4850 = vunpack.c.l.b16 %v876
  %v4851 = vunpack.c.h.b16 %v876
  %v4852 = vunpack.c.l.b16 %v877
  %v4853 = vunpack.c.h.b16 %v877
  %v4854 = vunpack.c.l.b16 %v878
  %v4855 = vunpack.c.h.b16 %v878
  %v4856 = vunpack.c.l.b16 %v879
  %v4857 = vunpack.c.h.b16 %v879
  %v4858 = vunpack.c.l.b16 %v880
  %v4859 = vunpack.c.h.b16 %v880
  %v4860 = vunpack.c.l.b16 %v881
  %v4861 = vunpack.c.h.b16 %v881
  %v4862 = vunpack.c.l.b16 %v882
  %v4863 = vunpack.c.h.b16 %v882
  %v4864 = vunpack.c.l.b16 %v883
  %v4865 = vunpack.c.h.b16 %v883
  %v4866 = vunpack.c.l.b16 %v884
  %v4867 = vunpack.c.h.b16 %v884
  %v4868 = vunpack.c.l.b16 %v885
  %v4869 = vunpack.c.h.b16 %v885
  %v4870 = vunpack.c.l.b16 %v886
  %v4871 = vunpack.c.h.b16 %v886
  %v4872 = vunpack.c.l.b16 %v887
  %v4873 = vunpack.c.h.b16 %v887
  %v4874 = vunpack.c.l.b16 %v888
  %v4875 = vunpack.c.h.b16 %v888
  %v4876 = vunpack.c.l.b16 %v889
  %v4877 = vunpack.c.h.b16 %v889
  %v4878 = vunpack.c.l.b16 %v890
  %v4879 = vunpack.c.h.b16 %v890
  %v4880 = vunpack.c.l.b16 %v891
  %v4881 = vunpack.c.h.b16 %v891
  %v4882 = vunpack.c.l.b16 %v892
  %v4883 = vunpack.c.h.b16 %v892
  %v4884 = vunpack.c.l.b16 %v893
  %v4885 = vunpack.c.h.b16 %v893
  %v4886 = vunpack.c.l.b16 %v894
  %v4887 = vunpack.c.h.b16 %v894
  %v4888 = vunpack.c.l.b16 %v895
  %v4889 = vunpack.c.h.b16 %v895
  %v4890 = vunpack.c.l.b16 %v896
  %v4891 = vunpack.c.h.b16 %v896
  %v4892 = vunpack.c.l.b16 %v897
  %v4893 = vunpack.c.h.b16 %v897
  %v4894 = vunpack.c.l.b16 %v898
  %v4895 = vunpack.c.h.b16 %v898
  %v4896 = vunpack.c.l.b16 %v899
  %v4897 = vunpack.c.h.b16 %v899
  %v4898 = vunpack.c.l.b16 %v900
  %v4899 = vunpack.c.h.b16 %v900
  %v4900 = vunpack.c.l.b16 %v901
  %v4901 = vunpack.c.h.b16 %v901
  %v4902 = vunpack.c.l.b16 %v902
  %v4903 = vunpack.c.h.b16 %v902
  %v4904 = vunpack.c.l.b16 %v903
  %v4905 = vunpack.c.h.b16 %v903
  %v4906 = vunpack.c.l.b16 %v904
  %v4907 = vunpack.c.h.b16 %v904
  %v4908 = vunpack.c.l.b16 %v905
  %v4909 = vunpack.c.h.b16 %v905
  %v4910 = vunpack.c.l.b16 %v906
  %v4911 = vunpack.c.h.b16 %v906
  %v4912 = vunpack.c.l.b16 %v907
  %v4913 = vunpack.c.h.b16 %v907
  %v4914 = vunpack.c.l.b16 %v908
  %v4915 = vunpack.c.h.b16 %v908
  %v4916 = vunpack.c.l.b16 %v909
  %v4917 = vunpack.c.h.b16 %v909
  %v4918 = vunpack.c.l.b16 %v910
  %v4919 = vunpack.c.h.b16 %v910
  %v4920 = vunpack.c.l.b16 %v911
  %v4921 = vunpack.c.h.b16 %v911
  %v4922 = vunpack.c.l.b16 %v912
  %v4923 = vunpack.c.h.b16 %v912
  %v4924 = vunpack.c.l.b16 %v913
  %v4925 = vunpack.c.h.b16 %v913
  %v4926 = vunpack.c.l.b16 %v914
  %v4927 = vunpack.c.h.b16 %v914
  %v4928 = vunpack.c.l.b16 %v915
  %v4929 = vunpack.c.h.b16 %v915
  %v4930 = vunpack.c.l.b16 %v916
  %v4931 = vunpack.c.h.b16 %v916
  %v4932 = vunpack.c.l.b16 %v917
  %v4933 = vunpack.c.h.b16 %v917
  %v4934 = vunpack.c.l.b16 %v918
  %v4935 = vunpack.c.h.b16 %v918
  %v4936 = vunpack.c.l.b16 %v919
  %v4937 = vunpack.c.h.b16 %v919
  %v4938 = vunpack.c.l.b16 %v920
  %v4939 = vunpack.c.h.b16 %v920
  %v4940 = vunpack.c.l.b16 %v921
  %v4941 = vunpack.c.h.b16 %v921
  %v4942 = vunpack.c.l.b16 %v922
  %v4943 = vunpack.c.h.b16 %v922
  %v4944 = vunpack.c.l.b16 %v923
  %v4945 = vunpack.c.h.b16 %v923
  %v4946 = vunpack.c.l.b16 %v924
  %v4947 = vunpack.c.h.b16 %v924
  %v4948 = vunpack.c.l.b16 %v925
  %v4949 = vunpack.c.h.b16 %v925
  %v4950 = vunpack.c.l.b16 %v926
  %v4951 = vunpack.c.h.b16 %v926
  %v4952 = vunpack.c.l.b16 %v927
  %v4953 = vunpack.c.h.b16 %v927
  %v4954 = vunpack.c.l.b16 %v928
  %v4955 = vunpack.c.h.b16 %v928
  %v4956 = vunpack.c.l.b16 %v929
  %v4957 = vunpack.c.h.b16 %v929
  %v4958 = vunpack.c.l.b16 %v930
  %v4959 = vunpack.c.h.b16 %v930
  %v4960 = vunpack.c.l.b16 %v931
  %v4961 = vunpack.c.h.b16 %v931
  %v4962 = vunpack.c.l.b16 %v932
  %v4963 = vunpack.c.h.b16 %v932
  %v4964 = vunpack.c.l.b16 %v933
  %v4965 = vunpack.c.h.b16 %v933
  %v4966 = vunpack.c.l.b16 %v934
  %v4967 = vunpack.c.h.b16 %v934
  %v4968 = vunpack.c.l.b16 %v935
  %v4969 = vunpack.c.h.b16 %v935
  %v4970 = vunpack.c.l.b16 %v936
  %v4971 = vunpack.c.h.b16 %v936
  %v4972 = vunpack.c.l.b16 %v937
  %v4973 = vunpack.c.h.b16 %v937
  %v4974 = vunpack.c.l.b16 %v938
  %v4975 = vunpack.c.h.b16 %v938
  %v4976 = vunpack.c.l.b16 %v939
  %v4977 = vunpack.c.h.b16 %v939
  %v4978 = vunpack.c.l.b16 %v940
  %v4979 = vunpack.c.h.b16 %v940
  %v4980 = vunpack.c.l.b16 %v941
  %v4981 = vunpack.c.h.b16 %v941
  %v4982 = vunpack.c.l.b16 %v942
  %v4983 = vunpack.c.h.b16 %v942
  %v4984 = vunpack.c.l.b16 %v943
  %v4985 = vunpack.c.h.b16 %v943
  %v4986 = vunpack.c.l.b16 %v944
  %v4987 = vunpack.c.h.b16 %v944
  %v4988 = vunpack.c.l.b16 %v945
  %v4989 = vunpack.c.h.b16 %v945
  %v4990 = vunpack.c.l.b16 %v946
  %v4991 = vunpack.c.h.b16 %v946
  %v4992 = vunpack.c.l.b16 %v947
  %v4993 = vunpack.c.h.b16 %v947
  %v4994 = vunpack.c.l.b16 %v948
  %v4995 = vunpack.c.h.b16 %v948
  %v4996 = vunpack.c.l.b16 %v949
  %v4997 = vunpack.c.h.b16 %v949
  %v4998 = vunpack.c.l.b16 %v950
  %v4999 = vunpack.c.h.b16 %v950
  %v5000 = vunpack.c.l.b16 %v951
  %v5001 = vunpack.c.h.b16 %v951
  %v5002 = vunpack.c.l.b16 %v952
  %v5003 = vunpack.c.h.b16 %v952
  %v5004 = vunpack.c.l.b16 %v953
  %v5005 = vunpack.c.h.b16 %v953
  %v5006 = vunpack.c.l.b16 %v954
  %v5007 = vunpack.c.h.b16 %v954
  %v5008 = vunpack.c.l.b16 %v955
  %v5009 = vunpack.c.h.b16 %v955
  %v5010 = vunpack.c.l.b16 %v956
  %v5011 = vunpack.c.h.b16 %v956
  %v5012 = vunpack.c.l.b16 %v957
  %v5013 = vunpack.c.h.b16 %v957
  %v5014 = vunpack.c.l.b16 %v958
  %v5015 = vunpack.c.h.b16 %v958
  %v5016 = vunpack.c.l.b16 %v959
  %v5017 = vunpack.c.h.b16 %v959
  %v5018 = vunpack.c.l.b16 %v960
  %v5019 = vunpack.c.h.b16 %v960
  %v5020 = vunpack.c.l.b16 %v961
  %v5021 = vunpack.c.h.b16 %v961
  %v5022 = vunpack.c.l.b16 %v962
  %v5023 = vunpack.c.h.b16 %v962
  %v5024 = vunpack.c.l.b16 %v963
  %v5025 = vunpack.c.h.b16 %v963
  %v5026 = vunpack.c.l.b16 %v964
  %v5027 = vunpack.c.h.b16 %v964
  %v5028 = vunpack.c.l.b16 %v965
  %v5029 = vunpack.c.h.b16 %v965
  %v5030 = vunpack.c.l.b16 %v966
  %v5031 = vunpack.c.h.b16 %v966
  %v5032 = vunpack.c.l.b16 %v967
  %v5033 = vunpack.c.h.b16 %v967
  %v5034 = vunpack.c.l.b16 %v968
  %v5035 = vunpack.c.h.b16 %v968
  %v5036 = vunpack.c.l.b16 %v969
  %v5037 = vunpack.c.h.b16 %v969
  %v5038 = vunpack.c.l.b16 %v970
  %v5039 = vunpack.c.h.b16 %v970
  %v5040 = vunpack.c.l.b16 %v971
  %v5041 = vunpack.c.h.b16 %v971
  %v5042 = vunpack.c.l.b16 %v972
  %v5043 = vunpack.c.h.b16 %v972
  %v5044 = vunpack.c.l.b16 %v973
  %v5045 = vunpack.c.h.b16 %v973
  %v5046 = vunpack.c.l.b16 %v974
  %v5047 = vunpack.c.h.b16 %v974
  %v5048 = vunpack.c.l.b16 %v975
  %v5049 = vunpack.c.h.b16 %v975
  %v5050 = vunpack.c.l.b16 %v976
  %v5051 = vunpack.c.h.b16 %v976
  %v5052 = vunpack.c.l.b16 %v977
  %v5053 = vunpack.c.h.b16 %v977
  %v5054 = vunpack.c.l.b16 %v978
  %v5055 = vunpack.c.h.b16 %v978
  %v5056 = vunpack.c.l.b16 %v979
  %v5057 = vunpack.c.h.b16 %v979
  %v5058 = vunpack.c.l.b16 %v980
  %v5059 = vunpack.c.h.b16 %v980
  %v5060 = vunpack.c.l.b16 %v981
  %v5061 = vunpack.c.h.b16 %v981
  %v5062 = vunpack.c.l.b16 %v982
  %v5063 = vunpack.c.h.b16 %v982
  %v5064 = vunpack.c.l.b16 %v983
  %v5065 = vunpack.c.h.b16 %v983
  %v5066 = vunpack.c.l.b16 %v984
  %v5067 = vunpack.c.h.b16 %v984
  %v5068 = vunpack.c.l.b16 %v985
  %v5069 = vunpack.c.h.b16 %v985
  %v5070 = vunpack.c.l.b16 %v986
  %v5071 = vunpack.c.h.b16 %v986
  %v5072 = vunpack.c.l.b16 %v987
  %v5073 = vunpack.c.h.b16 %v987
  %v5074 = vunpack.c.l.b16 %v988
  %v5075 = vunpack.c.h.b16 %v988
  %v5076 = vunpack.c.l.b16 %v989
  %v5077 = vunpack.c.h.b16 %v989
  %v5078 = vunpack.c.l.b16 %v990
  %v5079 = vunpack.c.h.b16 %v990
  %v5080 = vunpack.c.l.b16 %v991
  %v5081 = vunpack.c.h.b16 %v991
  %v5082 = vunpack.c.l.b16 %v992
  %v5083 = vunpack.c.h.b16 %v992
  %v5084 = vunpack.c.l.b16 %v993
  %v5085 = vunpack.c.h.b16 %v993
  %v5086 = vunpack.c.l.b16 %v994
  %v5087 = vunpack.c.h.b16 %v994
  %v5088 = vunpack.c.l.b16 %v995
  %v5089 = vunpack.c.h.b16 %v995
  %v5090 = vunpack.c.l.b16 %v996
  %v5091 = vunpack.c.h.b16 %v996
  %v5092 = vunpack.c.l.b16 %v997
  %v5093 = vunpack.c.h.b16 %v997
  %v5094 = vunpack.c.l.b16 %v998
  %v5095 = vunpack.c.h.b16 %v998
  %v5096 = vunpack.c.l.b16 %v999
  %v5097 = vunpack.c.h.b16 %v999
  %v5098 = vunpack.c.l.b16 %v1000
  %v5099 = vunpack.c.h.b16 %v1000
  %v5100 = vunpack.c.l.b16 %v1001
  %v5101 = vunpack.c.h.b16 %v1001
  %v5102 = vunpack.c.l.b16 %v1002
  %v5103 = vunpack.c.h.b16 %v1002
  %v5104 = vunpack.c.l.b16 %v1003
  %v5105 = vunpack.c.h.b16 %v1003
  %v5106 = vunpack.c.l.b16 %v1004
  %v5107 = vunpack.c.h.b16 %v1004
  %v5108 = vunpack.c.l.b16 %v1005
  %v5109 = vunpack.c.h.b16 %v1005
  %v5110 = vunpack.c.l.b16 %v1006
  %v5111 = vunpack.c.h.b16 %v1006
  %v5112 = vunpack.c.l.b16 %v1007
  %v5113 = vunpack.c.h.b16 %v1007
  %v5114 = vunpack.c.l.b16 %v1008
  %v5115 = vunpack.c.h.b16 %v1008
  %v5116 = vunpack.c.l.b16 %v1009
  %v5117 = vunpack.c.h.b16 %v1009
  %v5118 = vunpack.c.l.b16 %v1010
  %v5119 = vunpack.c.h.b16 %v1010
  %v5120 = vunpack.c.l.b16 %v1011
  %v5121 = vunpack.c.h.b16 %v1011
  %v5122 = vunpack.c.l.b16 %v1012
  %v5123 = vunpack.c.h.b16 %v1012
  %v5124 = vunpack.c.l.b16 %v1013
  %v5125 = vunpack.c.h.b16 %v1013
  %v5126 = vunpack.c.l.b16 %v1014
  %v5127 = vunpack.c.h.b16 %v1014
  %v5128 = vunpack.c.l.b16 %v1015
  %v5129 = vunpack.c.h.b16 %v1015
  %v5130 = vunpack.c.l.b16 %v1016
  %v5131 = vunpack.c.h.b16 %v1016
  %v5132 = vunpack.c.l.b16 %v1017
  %v5133 = vunpack.c.h.b16 %v1017
  %v5134 = vunpack.c.l.b16 %v1018
  %v5135 = vunpack.c.h.b16 %v1018
  %v5136 = vunpack.c.l.b16 %v1019
  %v5137 = vunpack.c.h.b16 %v1019
  %v5138 = vunpack.c.l.b16 %v1020
  %v5139 = vunpack.c.h.b16 %v1020
  %v5140 = vunpack.c.l.b16 %v1021
  %v5141 = vunpack.c.h.b16 %v1021
  %v5142 = vunpack.c.l.b16 %v1022
  %v5143 = vunpack.c.h.b16 %v1022
  %v5144 = vunpack.c.l.b16 %v1023
  %v5145 = vunpack.c.h.b16 %v1023
  %v5146 = vunpack.c.l.b16 %v1024
  %v5147 = vunpack.c.h.b16 %v1024
  %v5148 = vunpack.c.l.b16 %v1025
  %v5149 = vunpack.c.h.b16 %v1025
  %v5150 = vunpack.c.l.b16 %v1026
  %v5151 = vunpack.c.h.b16 %v1026
  %v5152 = vunpack.c.l.b16 %v1027
  %v5153 = vunpack.c.h.b16 %v1027
  %v5154 = vunpack.c.l.b16 %v1028
  %v5155 = vunpack.c.h.b16 %v1028
  %v5156 = vunpack.c.l.b16 %v1029
  %v5157 = vunpack.c.h.b16 %v1029
  %v5158 = vunpack.c.l.b16 %v1030
  %v5159 = vunpack.c.h.b16 %v1030
  %v5160 = vunpack.c.l.b16 %v1031
  %v5161 = vunpack.c.h.b16 %v1031
  %v5162 = vunpack.c.l.b16 %v1032
  %v5163 = vunpack.c.h.b16 %v1032
  %v5164 = vunpack.c.l.b16 %v1033
  %v5165 = vunpack.c.h.b16 %v1033
  %v5166 = vunpack.c.l.b16 %v1034
  %v5167 = vunpack.c.h.b16 %v1034
  %v5168 = vunpack.c.l.b16 %v1035
  %v5169 = vunpack.c.h.b16 %v1035
  %v5170 = vunpack.c.l.b16 %v1036
  %v5171 = vunpack.c.h.b16 %v1036
  %v5172 = vunpack.c.l.b16 %v1037
  %v5173 = vunpack.c.h.b16 %v1037
  %v5174 = vunpack.c.l.b16 %v1038
  %v5175 = vunpack.c.h.b16 %v1038
  %v5176 = vunpack.c.l.b16 %v1039
  %v5177 = vunpack.c.h.b16 %v1039
  %v5178 = vunpack.c.l.b16 %v1040
  %v5179 = vunpack.c.h.b16 %v1040
  %v5180 = vunpack.c.l.b16 %v1041
  %v5181 = vunpack.c.h.b16 %v1041
  %v5182 = vunpack.c.l.b16 %v1042
  %v5183 = vunpack.c.h.b16 %v1042
  %v5184 = vunpack.c.l.b16 %v1043
  %v5185 = vunpack.c.h.b16 %v1043
  %v5186 = vunpack.c.l.b16 %v1044
  %v5187 = vunpack.c.h.b16 %v1044
  %v5188 = vunpack.c.l.b16 %v1045
  %v5189 = vunpack.c.h.b16 %v1045
  %v5190 = vunpack.c.l.b16 %v1046
  %v5191 = vunpack.c.h.b16 %v1046
  %v5192 = vunpack.c.l.b16 %v1047
  %v5193 = vunpack.c.h.b16 %v1047
  %v5194 = vunpack.c.l.b16 %v1048
  %v5195 = vunpack.c.h.b16 %v1048
  %v5196 = vunpack.c.l.b16 %v1049
  %v5197 = vunpack.c.h.b16 %v1049
  %v5198 = vunpack.c.l.b16 %v1050
  %v5199 = vunpack.c.h.b16 %v1050
  %v5200 = vunpack.c.l.b16 %v1051
  %v5201 = vunpack.c.h.b16 %v1051
  %v5202 = vunpack.c.l.b16 %v1052
  %v5203 = vunpack.c.h.b16 %v1052
  %v5204 = vunpack.c.l.b16 %v1053
  %v5205 = vunpack.c.h.b16 %v1053
  %v5206 = vunpack.c.l.b16 %v1054
  %v5207 = vunpack.c.h.b16 %v1054
  %v5208 = vunpack.c.l.b16 %v1055
  %v5209 = vunpack.c.h.b16 %v1055
  %v5210 = vunpack.c.l.b16 %v1056
  %v5211 = vunpack.c.h.b16 %v1056
  %v5212 = vunpack.c.l.b16 %v1057
  %v5213 = vunpack.c.h.b16 %v1057
  %v5214 = vunpack.c.l.b16 %v1058
  %v5215 = vunpack.c.h.b16 %v1058
  %v5216 = vunpack.c.l.b16 %v1059
  %v5217 = vunpack.c.h.b16 %v1059
  %v5218 = vunpack.c.l.b16 %v1060
  %v5219 = vunpack.c.h.b16 %v1060
  %v5220 = vunpack.c.l.b16 %v1061
  %v5221 = vunpack.c.h.b16 %v1061
  %v5222 = vunpack.c.l.b16 %v1062
  %v5223 = vunpack.c.h.b16 %v1062
  %v5224 = vunpack.c.l.b16 %v1063
  %v5225 = vunpack.c.h.b16 %v1063
  %v5226 = vunpack.c.l.b16 %v1064
  %v5227 = vunpack.c.h.b16 %v1064
  %v5228 = vunpack.c.l.b16 %v1065
  %v5229 = vunpack.c.h.b16 %v1065
  %v5230 = vunpack.c.l.b16 %v1066
  %v5231 = vunpack.c.h.b16 %v1066
  %v5232 = vunpack.c.l.b16 %v1067
  %v5233 = vunpack.c.h.b16 %v1067
  %v5234 = vunpack.c.l.b16 %v1068
  %v5235 = vunpack.c.h.b16 %v1068
  %v5236 = vunpack.c.l.b16 %v1069
  %v5237 = vunpack.c.h.b16 %v1069
  %v5238 = vunpack.c.l.b16 %v1070
  %v5239 = vunpack.c.h.b16 %v1070
  %v5240 = vunpack.c.l.b16 %v1071
  %v5241 = vunpack.c.h.b16 %v1071
  %v5242 = vunpack.c.l.b16 %v1072
  %v5243 = vunpack.c.h.b16 %v1072
  %v5244 = vunpack.c.l.b16 %v1073
  %v5245 = vunpack.c.h.b16 %v1073
  %v5246 = vunpack.c.l.b16 %v1074
  %v5247 = vunpack.c.h.b16 %v1074
  %v5248 = vunpack.c.l.b16 %v1075
  %v5249 = vunpack.c.h.b16 %v1075
  %v5250 = vunpack.c.l.b16 %v1076
  %v5251 = vunpack.c.h.b16 %v1076
  %v5252 = vunpack.c.l.b16 %v1077
  %v5253 = vunpack.c.h.b16 %v1077
  %v5254 = vunpack.c.l.b16 %v1078
  %v5255 = vunpack.c.h.b16 %v1078
  %v5256 = vunpack.c.l.b16 %v1079
  %v5257 = vunpack.c.h.b16 %v1079
  %v5258 = vunpack.c.l.b16 %v1080
  %v5259 = vunpack.c.h.b16 %v1080
  %v5260 = vunpack.c.l.b16 %v1081
  %v5261 = vunpack.c.h.b16 %v1081
  %v5262 = vunpack.c.l.b16 %v1082
  %v5263 = vunpack.c.h.b16 %v1082
  %v5264 = vunpack.c.l.b16 %v1083
  %v5265 = vunpack.c.h.b16 %v1083
  %v5266 = vunpack.c.l.b16 %v1084
  %v5267 = vunpack.c.h.b16 %v1084
  %v5268 = vunpack.c.l.b16 %v1085
  %v5269 = vunpack.c.h.b16 %v1085
  %v5270 = vunpack.c.l.b16 %v1086
  %v5271 = vunpack.c.h.b16 %v1086
  %v5272 = vunpack.c.l.b16 %v1087
  %v5273 = vunpack.c.h.b16 %v1087
  %v5274 = vunpack.c.l.b16 %v1088
  %v5275 = vunpack.c.h.b16 %v1088
  %v5276 = vunpack.c.l.b16 %v1089
  %v5277 = vunpack.c.h.b16 %v1089
  %v5278 = vunpack.c.l.b16 %v1090
  %v5279 = vunpack.c.h.b16 %v1090
  %v5280 = vunpack.c.l.b16 %v1091
  %v5281 = vunpack.c.h.b16 %v1091
  %v5282 = vunpack.c.l.b16 %v1092
  %v5283 = vunpack.c.h.b16 %v1092
  %v5284 = vunpack.c.l.b16 %v1093
  %v5285 = vunpack.c.h.b16 %v1093
  %v5286 = vunpack.c.l.b16 %v1094
  %v5287 = vunpack.c.h.b16 %v1094
  %v5288 = vunpack.c.l.b16 %v1095
  %v5289 = vunpack.c.h.b16 %v1095
  %v5290 = vunpack.c.l.b16 %v1096
  %v5291 = vunpack.c.h.b16 %v1096
  %v5292 = vunpack.c.l.b16 %v1097
  %v5293 = vunpack.c.h.b16 %v1097
  %v5294 = vunpack.c.l.b16 %v1098
  %v5295 = vunpack.c.h.b16 %v1098
  %v5296 = vunpack.c.l.b16 %v1099
  %v5297 = vunpack.c.h.b16 %v1099
  %v5298 = vunpack.c.l.b16 %v1100
  %v5299 = vunpack.c.h.b16 %v1100
  %v5300 = vunpack.c.l.b16 %v1101
  %v5301 = vunpack.c.h.b16 %v1101
  %v5302 = vunpack.c.l.b16 %v1102
  %v5303 = vunpack.c.h.b16 %v1102
  %v5304 = vunpack.c.l.b16 %v1103
  %v5305 = vunpack.c.h.b16 %v1103
  %v5306 = vunpack.c.l.b16 %v1104
  %v5307 = vunpack.c.h.b16 %v1104
  %v5308 = vunpack.c.l.b16 %v1105
  %v5309 = vunpack.c.h.b16 %v1105
  %v5310 = vunpack.c.l.b16 %v1106
  %v5311 = vunpack.c.h.b16 %v1106
  %v5312 = vunpack.c.l.b16 %v1107
  %v5313 = vunpack.c.h.b16 %v1107
  %v5314 = vunpack.c.l.b16 %v1108
  %v5315 = vunpack.c.h.b16 %v1108
  %v5316 = vunpack.c.l.b16 %v1109
  %v5317 = vunpack.c.h.b16 %v1109
  %v5318 = vunpack.c.l.b16 %v1110
  %v5319 = vunpack.c.h.b16 %v1110
  %v5320 = vunpack.c.l.b16 %v1111
  %v5321 = vunpack.c.h.b16 %v1111
  %v5322 = vunpack.c.l.b16 %v1112
  %v5323 = vunpack.c.h.b16 %v1112
  %v5324 = vunpack.c.l.b16 %v1113
  %v5325 = vunpack.c.h.b16 %v1113
  %v5326 = vunpack.c.l.b16 %v1114
  %v5327 = vunpack.c.h.b16 %v1114
  %v5328 = vunpack.c.l.b16 %v1115
  %v5329 = vunpack.c.h.b16 %v1115
  %v5330 = vunpack.c.l.b16 %v1116
  %v5331 = vunpack.c.h.b16 %v1116
  %v5332 = vunpack.c.l.b16 %v1117
  %v5333 = vunpack.c.h.b16 %v1117
  %v5334 = vunpack.c.l.b16 %v1118
  %v5335 = vunpack.c.h.b16 %v1118
  %v5336 = vunpack.c.l.b16 %v1119
  %v5337 = vunpack.c.h.b16 %v1119
  %v5338 = vunpack.c.l.b16 %v1120
  %v5339 = vunpack.c.h.b16 %v1120
  %v5340 = vunpack.c.l.b16 %v1121
  %v5341 = vunpack.c.h.b16 %v1121
  %v5342 = vunpack.c.l.b16 %v1122
  %v5343 = vunpack.c.h.b16 %v1122
  %v5344 = vunpack.c.l.b16 %v1123
  %v5345 = vunpack.c.h.b16 %v1123
  %v5346 = vunpack.c.l.b16 %v1124
  %v5347 = vunpack.c.h.b16 %v1124
  %v5348 = vunpack.c.l.b16 %v1125
  %v5349 = vunpack.c.h.b16 %v1125
  %v5350 = vunpack.c.l.b16 %v1126
  %v5351 = vunpack.c.h.b16 %v1126
  %v5352 = vunpack.c.l.b16 %v1127
  %v5353 = vunpack.c.h.b16 %v1127
  %v5354 = vunpack.c.l.b16 %v1128
  %v5355 = vunpack.c.h.b16 %v1128
  %v5356 = vunpack.c.l.b16 %v1129
  %v5357 = vunpack.c.h.b16 %v1129
  %v5358 = vunpack.c.l.b16 %v1130
  %v5359 = vunpack.c.h.b16 %v1130
  %v5360 = vunpack.c.l.b16 %v1131
  %v5361 = vunpack.c.h.b16 %v1131
  %v5362 = vunpack.c.l.b16 %v1132
  %v5363 = vunpack.c.h.b16 %v1132
  %v5364 = vunpack.c.l.b16 %v1133
  %v5365 = vunpack.c.h.b16 %v1133
  %v5366 = vunpack.c.l.b16 %v1134
  %v5367 = vunpack.c.h.b16 %v1134
  %v5368 = vunpack.c.l.b16 %v1135
  %v5369 = vunpack.c.h.b16 %v1135
  %v5370 = vunpack.c.l.b16 %v1136
  %v5371 = vunpack.c.h.b16 %v1136
  %v5372 = vunpack.c.l.b16 %v1137
  %v5373 = vunpack.c.h.b16 %v1137
  %v5374 = vunpack.c.l.b16 %v1138
  %v5375 = vunpack.c.h.b16 %v1138
  %v5376 = vunpack.c.l.b16 %v1139
  %v5377 = vunpack.c.h.b16 %v1139
  %v5378 = vunpack.c.l.b16 %v1140
  %v5379 = vunpack.c.h.b16 %v1140
  %v5380 = vunpack.c.l.b16 %v1141
  %v5381 = vunpack.c.h.b16 %v1141
  %v5382 = vunpack.c.l.b16 %v1142
  %v5383 = vunpack.c.h.b16 %v1142
  %v5384 = vunpack.c.l.b16 %v1143
  %v5385 = vunpack.c.h.b16 %v1143
  %v5386 = vunpack.c.l.b16 %v1144
  %v5387 = vunpack.c.h.b16 %v1144
  %v5388 = vunpack.c.l.b16 %v1145
  %v5389 = vunpack.c.h.b16 %v1145
  %v5390 = vunpack.c.l.b16 %v1146
  %v5391 = vunpack.c.h.b16 %v1146
  %v5392 = vunpack.c.l.b16 %v1147
  %v5393 = vunpack.c.h.b16 %v1147
  %v5394 = vunpack.c.l.b16 %v1148
  %v5395 = vunpack.c.h.b16 %v1148
  %v5396 = vunpack.c.l.b16 %v1149
  %v5397 = vunpack.c.h.b16 %v1149
  %v5398 = vunpack.c.l.b16 %v1150
  %v5399 = vunpack.c.h.b16 %v1150
  %v5400 = vunpack.c.l.b16 %v1151
  %v5401 = vunpack.c.h.b16 %v1151
  %v5402 = vunpack.c.l.b16 %v1152
  %v5403 = vunpack.c.h.b16 %v1152
  %v5404 = vunpack.c.l.b16 %v1153
  %v5405 = vunpack.c.h.b16 %v1153
  %v5406 = vunpack.c.l.b16 %v1154
  %v5407 = vunpack.c.h.b16 %v1154
  %v5408 = vunpack.c.l.b16 %v1155
  %v5409 = vunpack.c.h.b16 %v1155
  %v5410 = vunpack.c.l.b16 %v1156
  %v5411 = vunpack.c.h.b16 %v1156
  %v5412 = vunpack.c.l.b16 %v1157
  %v5413 = vunpack.c.h.b16 %v1157
  %v5414 = vunpack.c.l.b16 %v1158
  %v5415 = vunpack.c.h.b16 %v1158
  %v5416 = vunpack.c.l.b16 %v1159
  %v5417 = vunpack.c.h.b16 %v1159
  %v5418 = vunpack.c.l.b16 %v1160
  %v5419 = vunpack.c.h.b16 %v1160
  %v5420 = vunpack.c.l.b16 %v1161
  %v5421 = vunpack.c.h.b16 %v1161
  %v5422 = vunpack.c.l.b16 %v1162
  %v5423 = vunpack.c.h.b16 %v1162
  %v5424 = vunpack.c.l.b16 %v1163
  %v5425 = vunpack.c.h.b16 %v1163
  %v5426 = vunpack.c.l.b16 %v1164
  %v5427 = vunpack.c.h.b16 %v1164
  %v5428 = vunpack.c.l.b16 %v1165
  %v5429 = vunpack.c.h.b16 %v1165
  %v5430 = vunpack.c.l.b16 %v1166
  %v5431 = vunpack.c.h.b16 %v1166
  %v5432 = vunpack.c.l.b16 %v1167
  %v5433 = vunpack.c.h.b16 %v1167
  %v5434 = vunpack.c.l.b16 %v1168
  %v5435 = vunpack.c.h.b16 %v1168
  %v5436 = vunpack.c.l.b16 %v1169
  %v5437 = vunpack.c.h.b16 %v1169
  %v5438 = vunpack.c.l.b16 %v1170
  %v5439 = vunpack.c.h.b16 %v1170
  %v5440 = vunpack.c.l.b16 %v1171
  %v5441 = vunpack.c.h.b16 %v1171
  %v5442 = vunpack.c.l.b16 %v1172
  %v5443 = vunpack.c.h.b16 %v1172
  %v5444 = vunpack.c.l.b16 %v1173
  %v5445 = vunpack.c.h.b16 %v1173
  %v5446 = vunpack.c.l.b16 %v1174
  %v5447 = vunpack.c.h.b16 %v1174
  %v5448 = vunpack.c.l.b16 %v1175
  %v5449 = vunpack.c.h.b16 %v1175
  %v5450 = vunpack.c.l.b16 %v1176
  %v5451 = vunpack.c.h.b16 %v1176
  %v5452 = vunpack.c.l.b16 %v1177
  %v5453 = vunpack.c.h.b16 %v1177
  %v5454 = vunpack.c.l.b16 %v1178
  %v5455 = vunpack.c.h.b16 %v1178
  %v5456 = vunpack.c.l.b16 %v1179
  %v5457 = vunpack.c.h.b16 %v1179
  %v5458 = vunpack.c.l.b16 %v1180
  %v5459 = vunpack.c.h.b16 %v1180
  %v5460 = vunpack.c.l.b16 %v1181
  %v5461 = vunpack.c.h.b16 %v1181
  %v5462 = vunpack.c.l.b16 %v1182
  %v5463 = vunpack.c.h.b16 %v1182
  %v5464 = vunpack.c.l.b16 %v1183
  %v5465 = vunpack.c.h.b16 %v1183
  %v5466 = vunpack.c.l.b16 %v1184
  %v5467 = vunpack.c.h.b16 %v1184
  %v5468 = vunpack.c.l.b16 %v1185
  %v5469 = vunpack.c.h.b16 %v1185
  %v5470 = vunpack.c.l.b16 %v1186
  %v5471 = vunpack.c.h.b16 %v1186
  %v5472 = vunpack.c.l.b16 %v1187
  %v5473 = vunpack.c.h.b16 %v1187
  %v5474 = vunpack.c.l.b16 %v1188
  %v5475 = vunpack.c.h.b16 %v1188
  %v5476 = vunpack.c.l.b16 %v1189
  %v5477 = vunpack.c.h.b16 %v1189
  %v5478 = vunpack.c.l.b16 %v1190
  %v5479 = vunpack.c.h.b16 %v1190
  %v5480 = vunpack.c.l.b16 %v1191
  %v5481 = vunpack.c.h.b16 %v1191
  %v5482 = vunpack.c.l.b16 %v1192
  %v5483 = vunpack.c.h.b16 %v1192
  %v5484 = vunpack.c.l.b16 %v1193
  %v5485 = vunpack.c.h.b16 %v1193
  %v5486 = vunpack.c.l.b16 %v1194
  %v5487 = vunpack.c.h.b16 %v1194
  %v5488 = vunpack.c.l.b16 %v1195
  %v5489 = vunpack.c.h.b16 %v1195
  %v5490 = vunpack.c.l.b16 %v1196
  %v5491 = vunpack.c.h.b16 %v1196
  %v5492 = vunpack.c.l.b16 %v1197
  %v5493 = vunpack.c.h.b16 %v1197
  %v5494 = vunpack.c.l.b16 %v1198
  %v5495 = vunpack.c.h.b16 %v1198
  %v5496 = vunpack.c.l.b16 %v1199
  %v5497 = vunpack.c.h.b16 %v1199
  %v5498 = vunpack.c.l.b16 %v1200
  %v5499 = vunpack.c.h.b16 %v1200
  %v5500 = vunpack.c.l.b16 %v1201
  %v5501 = vunpack.c.h.b16 %v1201
  %v5502 = vunpack.c.l.b16 %v1202
  %v5503 = vunpack.c.h.b16 %v1202
  %v5504 = vunpack.c.l.b16 %v1203
  %v5505 = vunpack.c.h.b16 %v1203
  %v5506 = vunpack.c.l.b16 %v1204
  %v5507 = vunpack.c.h.b16 %v1204
  %v5508 = vunpack.c.l.b16 %v1205
  %v5509 = vunpack.c.h.b16 %v1205
  %v5510 = vunpack.c.l.b16 %v1206
  %v5511 = vunpack.c.h.b16 %v1206
  %v5512 = vunpack.c.l.b16 %v1207
  %v5513 = vunpack.c.h.b16 %v1207
  %v5514 = vunpack.c.l.b16 %v1208
  %v5515 = vunpack.c.h.b16 %v1208
  %v5516 = vunpack.c.l.b16 %v1209
  %v5517 = vunpack.c.h.b16 %v1209
  %v5518 = vunpack.c.l.b16 %v1210
  %v5519 = vunpack.c.h.b16 %v1210
  %v5520 = vunpack.c.l.b16 %v1211
  %v5521 = vunpack.c.h.b16 %v1211
  %v5522 = vunpack.c.l.b16 %v1212
  %v5523 = vunpack.c.h.b16 %v1212
  %v5524 = vunpack.c.l.b16 %v1213
  %v5525 = vunpack.c.h.b16 %v1213
  %v5526 = vunpack.c.l.b16 %v1214
  %v5527 = vunpack.c.h.b16 %v1214
  %v5528 = vunpack.c.l.b16 %v1215
  %v5529 = vunpack.c.h.b16 %v1215
  %v5530 = vunpack.c.l.b16 %v1216
  %v5531 = vunpack.c.h.b16 %v1216
  %v5532 = vunpack.c.l.b16 %v1217
  %v5533 = vunpack.c.h.b16 %v1217
  %v5534 = vunpack.c.l.b16 %v1218
  %v5535 = vunpack.c.h.b16 %v1218
  %v5536 = vunpack.c.l.b16 %v1219
  %v5537 = vunpack.c.h.b16 %v1219
  %v5538 = vunpack.c.l.b16 %v1220
  %v5539 = vunpack.c.h.b16 %v1220
  %v5540 = vunpack.c.l.b16 %v1221
  %v5541 = vunpack.c.h.b16 %v1221
  %v5542 = vunpack.c.l.b16 %v1222
  %v5543 = vunpack.c.h.b16 %v1222
  %v5544 = vunpack.c.l.b16 %v1223
  %v5545 = vunpack.c.h.b16 %v1223
  %v5546 = vunpack.c.l.b16 %v1224
  %v5547 = vunpack.c.h.b16 %v1224
  %v5548 = vunpack.c.l.b16 %v1225
  %v5549 = vunpack.c.h.b16 %v1225
  %v5550 = vunpack.c.l.b16 %v1226
  %v5551 = vunpack.c.h.b16 %v1226
  %v5552 = vunpack.c.l.b16 %v1227
  %v5553 = vunpack.c.h.b16 %v1227
  %v5554 = vunpack.c.l.b16 %v1228
  %v5555 = vunpack.c.h.b16 %v1228
  %v5556 = vunpack.c.l.b16 %v1229
  %v5557 = vunpack.c.h.b16 %v1229
  %v5558 = vunpack.c.l.b16 %v1230
  %v5559 = vunpack.c.h.b16 %v1230
  %v5560 = vunpack.c.l.b16 %v1231
  %v5561 = vunpack.c.h.b16 %v1231
  %v5562 = vunpack.c.l.b16 %v1232
  %v5563 = vunpack.c.h.b16 %v1232
  %v5564 = vunpack.c.l.b16 %v1233
  %v5565 = vunpack.c.h.b16 %v1233
  %v5566 = vunpack.c.l.b16 %v1234
  %v5567 = vunpack.c.h.b16 %v1234
  %v5568 = vunpack.c.l.b16 %v1235
  %v5569 = vunpack.c.h.b16 %v1235
  %v5570 = vunpack.c.l.b16 %v1236
  %v5571 = vunpack.c.h.b16 %v1236
  %v5572 = vunpack.c.l.b16 %v1237
  %v5573 = vunpack.c.h.b16 %v1237
  %v5574 = vunpack.c.l.b16 %v1238
  %v5575 = vunpack.c.h.b16 %v1238
  %v5576 = vunpack.c.l.b16 %v1239
  %v5577 = vunpack.c.h.b16 %v1239
  %v5578 = vunpack.c.l.b16 %v1240
  %v5579 = vunpack.c.h.b16 %v1240
  %v5580 = vunpack.c.l.b16 %v1241
  %v5581 = vunpack.c.h.b16 %v1241
  %v5582 = vunpack.c.l.b16 %v1242
  %v5583 = vunpack.c.h.b16 %v1242
  %v5584 = vunpack.c.l.b16 %v1243
  %v5585 = vunpack.c.h.b16 %v1243
  %v5586 = vunpack.c.l.b16 %v1244
  %v5587 = vunpack.c.h.b16 %v1244
  %v5588 = vunpack.c.l.b16 %v1245
  %v5589 = vunpack.c.h.b16 %v1245
  %v5590 = vunpack.c.l.b16 %v1246
  %v5591 = vunpack.c.h.b16 %v1246
  %v5592 = vunpack.c.l.b16 %v1247
  %v5593 = vunpack.c.h.b16 %v1247
  %v5594 = vunpack.c.l.b16 %v1248
  %v5595 = vunpack.c.h.b16 %v1248
  %v5596 = vunpack.c.l.b16 %v1249
  %v5597 = vunpack.c.h.b16 %v1249
  %v5598 = vunpack.c.l.b16 %v1250
  %v5599 = vunpack.c.h.b16 %v1250
  %v5600 = vunpack.c.l.b16 %v1251
  %v5601 = vunpack.c.h.b16 %v1251
  %v5602 = vunpack.c.l.b16 %v1252
  %v5603 = vunpack.c.h.b16 %v1252
  %v5604 = vunpack.c.l.b16 %v1253
  %v5605 = vunpack.c.h.b16 %v1253
  %v5606 = vunpack.c.l.b16 %v1254
  %v5607 = vunpack.c.h.b16 %v1254
  %v5608 = vunpack.c.l.b16 %v1255
  %v5609 = vunpack.c.h.b16 %v1255
  %v5610 = vunpack.c.l.b16 %v1256
  %v5611 = vunpack.c.h.b16 %v1256
  %v5612 = vunpack.c.l.b16 %v1257
  %v5613 = vunpack.c.h.b16 %v1257
  %v5614 = vunpack.c.l.b16 %v1258
  %v5615 = vunpack.c.h.b16 %v1258
  %v5616 = vunpack.c.l.b16 %v1259
  %v5617 = vunpack.c.h.b16 %v1259
  %v5618 = vunpack.c.l.b16 %v1260
  %v5619 = vunpack.c.h.b16 %v1260
  %v5620 = vunpack.c.l.b16 %v1261
  %v5621 = vunpack.c.h.b16 %v1261
  %v5622 = vunpack.c.l.b16 %v1262
  %v5623 = vunpack.c.h.b16 %v1262
  %v5624 = vunpack.c.l.b16 %v1263
  %v5625 = vunpack.c.h.b16 %v1263
  %v5626 = vunpack.c.l.b16 %v1264
  %v5627 = vunpack.c.h.b16 %v1264
  %v5628 = vunpack.c.l.b16 %v1265
  %v5629 = vunpack.c.h.b16 %v1265
  %v5630 = vunpack.c.l.b16 %v1266
  %v5631 = vunpack.c.h.b16 %v1266
  %v5632 = vunpack.c.l.b16 %v1267
  %v5633 = vunpack.c.h.b16 %v1267
  %v5634 = vunpack.c.l.b16 %v1268
  %v5635 = vunpack.c.h.b16 %v1268
  %v5636 = vunpack.c.l.b16 %v1269
  %v5637 = vunpack.c.h.b16 %v1269
  %v5638 = vunpack.c.l.b16 %v1270
  %v5639 = vunpack.c.h.b16 %v1270
  %v5640 = vunpack.c.l.b16 %v1271
  %v5641 = vunpack.c.h.b16 %v1271
  %v5642 = vunpack.c.l.b16 %v1272
  %v5643 = vunpack.c.h.b16 %v1272
  %v5644 = vunpack.c.l.b16 %v1273
  %v5645 = vunpack.c.h.b16 %v1273
  %v5646 = vunpack.c.l.b16 %v1274
  %v5647 = vunpack.c.h.b16 %v1274
  %v5648 = vunpack.c.l.b16 %v1275
  %v5649 = vunpack.c.h.b16 %v1275
  %v5650 = vunpack.c.l.b16 %v1276
  %v5651 = vunpack.c.h.b16 %v1276
  %v5652 = vunpack.c.l.b16 %v1277
  %v5653 = vunpack.c.h.b16 %v1277
  %v5654 = vunpack.c.l.b16 %v1278
  %v5655 = vunpack.c.h.b16 %v1278
  %v5656 = vunpack.c.l.b16 %v1279
  %v5657 = vunpack.c.h.b16 %v1279
  %v5658 = vunpack.c.l.b16 %v1280
  %v5659 = vunpack.c.h.b16 %v1280
  %v5660 = vunpack.c.l.b16 %v1281
  %v5661 = vunpack.c.h.b16 %v1281
  %v5662 = vunpack.c.l.b16 %v1282
  %v5663 = vunpack.c.h.b16 %v1282
  %v5664 = vunpack.c.l.b16 %v1283
  %v5665 = vunpack.c.h.b16 %v1283
  %v5666 = vunpack.c.l.b16 %v1284
  %v5667 = vunpack.c.h.b16 %v1284
  %v5668 = vunpack.c.l.b16 %v1285
  %v5669 = vunpack.c.h.b16 %v1285
  %v5670 = vunpack.c.l.b16 %v1286
  %v5671 = vunpack.c.h.b16 %v1286
  %v5672 = vunpack.c.l.b16 %v1287
  %v5673 = vunpack.c.h.b16 %v1287
  %v5674 = vunpack.c.l.b16 %v1288
  %v5675 = vunpack.c.h.b16 %v1288
  %v5676 = vunpack.c.l.b16 %v1289
  %v5677 = vunpack.c.h.b16 %v1289
  %v5678 = vunpack.c.l.b16 %v1290
  %v5679 = vunpack.c.h.b16 %v1290
  %v5680 = vunpack.c.l.b16 %v1291
  %v5681 = vunpack.c.h.b16 %v1291
  %v5682 = vunpack.c.l.b16 %v1292
  %v5683 = vunpack.c.h.b16 %v1292
  %v5684 = vunpack.c.l.b16 %v1293
  %v5685 = vunpack.c.h.b16 %v1293
  %v5686 = vunpack.c.l.b16 %v1294
  %v5687 = vunpack.c.h.b16 %v1294
  %v5688 = vunpack.c.l.b16 %v1295
  %v5689 = vunpack.c.h.b16 %v1295
  %v5690 = vunpack.c.l.b16 %v1296
  %v5691 = vunpack.c.h.b16 %v1296
  %v5692 = vunpack.c.l.b16 %v1297
  %v5693 = vunpack.c.h.b16 %v1297
  %v5694 = vunpack.c.l.b16 %v1298
  %v5695 = vunpack.c.h.b16 %v1298
  %v5696 = vunpack.c.l.b16 %v1299
  %v5697 = vunpack.c.h.b16 %v1299
  %v5698 = vunpack.c.l.b16 %v1300
  %v5699 = vunpack.c.h.b16 %v1300
  %v5700 = vunpack.c.l.b16 %v1301
  %v5701 = vunpack.c.h.b16 %v1301
  %v5702 = vunpack.c.l.b16 %v1302
  %v5703 = vunpack.c.h.b16 %v1302
  %v5704 = vunpack.c.l.b16 %v1303
  %v5705 = vunpack.c.h.b16 %v1303
  %v5706 = vunpack.c.l.b16 %v1304
  %v5707 = vunpack.c.h.b16 %v1304
  %v5708 = vunpack.c.l.b16 %v1305
  %v5709 = vunpack.c.h.b16 %v1305
  %v5710 = vunpack.c.l.b16 %v1306
  %v5711 = vunpack.c.h.b16 %v1306
  %v5712 = vunpack.c.l.b16 %v1307
  %v5713 = vunpack.c.h.b16 %v1307
  %v5714 = vunpack.c.l.b16 %v1308
  %v5715 = vunpack.c.h.b16 %v1308
  %v5716 = vunpack.c.l.b16 %v1309
  %v5717 = vunpack.c.h.b16 %v1309
  %v5718 = vunpack.c.l.b16 %v1310
  %v5719 = vunpack.c.h.b16 %v1310
  %v5720 = vunpack.c.l.b16 %v1311
  %v5721 = vunpack.c.h.b16 %v1311
  %v5722 = vunpack.c.l.b16 %v1312
  %v5723 = vunpack.c.h.b16 %v1312
  %v5724 = vunpack.c.l.b16 %v1313
  %v5725 = vunpack.c.h.b16 %v1313
  %v5726 = vunpack.c.l.b16 %v1314
  %v5727 = vunpack.c.h.b16 %v1314
  %v5728 = vunpack.c.l.b16 %v1315
  %v5729 = vunpack.c.h.b16 %v1315
  %v5730 = vunpack.c.l.b16 %v1316
  %v5731 = vunpack.c.h.b16 %v1316
  %v5732 = vunpack.c.l.b16 %v1317
  %v5733 = vunpack.c.h.b16 %v1317
  %v5734 = vunpack.c.l.b16 %v1318
  %v5735 = vunpack.c.h.b16 %v1318
  %v5736 = vunpack.c.l.b16 %v1319
  %v5737 = vunpack.c.h.b16 %v1319
  %v5738 = vunpack.c.l.b16 %v1320
  %v5739 = vunpack.c.h.b16 %v1320
  %v5740 = vunpack.c.l.b16 %v1321
  %v5741 = vunpack.c.h.b16 %v1321
  %v5742 = vunpack.c.l.b16 %v1322
  %v5743 = vunpack.c.h.b16 %v1322
  %v5744 = vunpack.c.l.b16 %v1323
  %v5745 = vunpack.c.h.b16 %v1323
  %v5746 = vunpack.c.l.b16 %v1324
  %v5747 = vunpack.c.h.b16 %v1324
  %v5748 = vunpack.c.l.b16 %v1325
  %v5749 = vunpack.c.h.b16 %v1325
  %v5750 = vunpack.c.l.b16 %v1326
  %v5751 = vunpack.c.h.b16 %v1326
  %v5752 = vunpack.c.l.b16 %v1327
  %v5753 = vunpack.c.h.b16 %v1327
  %v5754 = vunpack.c.l.b16 %v1328
  %v5755 = vunpack.c.h.b16 %v1328
  %v5756 = vunpack.c.l.b16 %v1329
  %v5757 = vunpack.c.h.b16 %v1329
  %v5758 = vunpack.c.l.b16 %v1330
  %v5759 = vunpack.c.h.b16 %v1330
  %v5760 = vunpack.c.l.b16 %v1331
  %v5761 = vunpack.c.h.b16 %v1331
  %v5762 = vpack.c.b16 %v3172, %v3170
  %v5763 = vpack.c.b16 %v3173, %v3171
  %v5764 = vpack.c.b16 %v3176, %v3174
  %v5765 = vpack.c.b16 %v3177, %v3175
  %v5766 = vpack.c.b16 %v3180, %v3178
  %v5767 = vpack.c.b16 %v3181, %v3179
  %v5768 = vpack.c.b16 %v3184, %v3182
  %v5769 = vpack.c.b16 %v3185, %v3183
  %v5770 = vpack.c.b16 %v3188, %v3186
  %v5771 = vpack.c.b16 %v3189, %v3187
  %v5772 = vpack.c.b16 %v3192, %v3190
  %v5773 = vpack.c.b16 %v3193, %v3191
  %v5774 = vpack.c.b16 %v3196, %v3194
  %v5775 = vpack.c.b16 %v3197, %v3195
  %v5776 = vpack.c.b16 %v3200, %v3198
  %v5777 = vpack.c.b16 %v3201, %v3199
  %v5778 = vpack.c.b16 %v3204, %v3202
  %v5779 = vpack.c.b16 %v3205, %v3203
  %v5780 = vpack.c.b16 %v3208, %v3206
  %v5781 = vpack.c.b16 %v3209, %v3207
  %v5782 = vpack.c.b16 %v3212, %v3210
  %v5783 = vpack.c.b16 %v3213, %v3211
  %v5784 = vpack.c.b16 %v3216, %v3214
  %v5785 = vpack.c.b16 %v3217, %v3215
  %v5786 = vpack.c.b16 %v3220, %v3218
  %v5787 = vpack.c.b16 %v3221, %v3219
  %v5788 = vpack.c.b16 %v3224, %v3222
  %v5789 = vpack.c.b16 %v3225, %v3223
  %v5790 = vpack.c.b16 %v3228, %v3226
  %v5791 = vpack.c.b16 %v3229, %v3227
  %v5792 = vpack.c.b16 %v3232, %v3230
  %v5793 = vpack.c.b16 %v3233, %v3231
  %v5794 = vpack.c.b16 %v3236, %v3234
  %v5795 = vpack.c.b16 %v3237, %v3235
  %v5796 = vpack.c.b16 %v3240, %v3238
  %v5797 = vpack.c.b16 %v3241, %v3239
  %v5798 = vpack.c.b16 %v3244, %v3242
  %v5799 = vpack.c.b16 %v3245, %v3243
  %v5800 = vpack.c.b16 %v3248, %v3246
  %v5801 = vpack.c.b16 %v3249, %v3247
  %v5802 = vpack.c.b16 %v3252, %v3250
  %v5803 = vpack.c.b16 %v3253, %v3251
  %v5804 = vpack.c.b16 %v3256, %v3254
  %v5805 = vpack.c.b16 %v3257, %v3255
  %v5806 = vpack.c.b16 %v3260, %v3258
  %v5807 = vpack.c.b16 %v3261, %v3259
  %v5808 = vpack.c.b16 %v3264, %v3262
  %v5809 = vpack.c.b16 %v3265, %v3263
  %v5810 = vpack.c.b16 %v3268, %v3266
  %v5811 = vpack.c.b16 %v3269, %v3267
  %v5812 = vpack.c.b16 %v3272, %v3270
  %v5813 = vpack.c.b16 %v3273, %v3271
  %v5814 = vpack.c.b16 %v3276, %v3274
  %v5815 = vpack.c.b16 %v3277, %v3275
  %v5816 = vpack.c.b16 %v3280, %v3278
  %v5817 = vpack.c.b16 %v3281, %v3279
  %v5818 = vpack.c.b16 %v3284, %v3282
  %v5819 = vpack.c.b16 %v3285, %v3283
  %v5820 = vpack.c.b16 %v3288, %v3286
  %v5821 = vpack.c.b16 %v3289, %v3287
  %v5822 = vpack.c.b16 %v3292, %v3290
  %v5823 = vpack.c.b16 %v3293, %v3291
  %v5824 = vpack.c.b16 %v3296, %v3294
  %v5825 = vpack.c.b16 %v3297, %v3295
  %v5826 = vpack.c.b16 %v3300, %v3298
  %v5827 = vpack.c.b16 %v3301, %v3299
  %v5828 = vpack.c.b16 %v3304, %v3302
  %v5829 = vpack.c.b16 %v3305, %v3303
  %v5830 = vpack.c.b16 %v3308, %v3306
  %v5831 = vpack.c.b16 %v3309, %v3307
  %v5832 = vpack.c.b16 %v3312, %v3310
  %v5833 = vpack.c.b16 %v3313, %v3311
  %v5834 = vpack.c.b16 %v3316, %v3314
  %v5835 = vpack.c.b16 %v3317, %v3315
  %v5836 = vpack.c.b16 %v3320, %v3318
  %v5837 = vpack.c.b16 %v3321, %v3319
  %v5838 = vpack.c.b16 %v3324, %v3322
  %v5839 = vpack.c.b16 %v3325, %v3323
  %v5840 = vpack.c.b16 %v3328, %v3326
  %v5841 = vpack.c.b16 %v3329, %v3327
  %v5842 = vpack.c.b16 %v3332, %v3330
  %v5843 = vpack.c.b16 %v3333, %v3331
  %v5844 = vpack.c.b16 %v3336, %v3334
  %v5845 = vpack.c.b16 %v3337, %v3335
  %v5846 = vpack.c.b16 %v3340, %v3338
  %v5847 = vpack.c.b16 %v3341, %v3339
  %v5848 = vpack.c.b16 %v3344, %v3342
  %v5849 = vpack.c.b16 %v3345, %v3343
  %v5850 = vpack.c.b16 %v3348, %v3346
  %v5851 = vpack.c.b16 %v3349, %v3347
  %v5852 = vpack.c.b16 %v3352, %v3350
  %v5853 = vpack.c.b16 %v3353, %v3351
  %v5854 = vpack.c.b16 %v3356, %v3354
  %v5855 = vpack.c.b16 %v3357, %v3355
  %v5856 = vpack.c.b16 %v3360, %v3358
  %v5857 = vpack.c.b16 %v3361, %v3359
  %v5858 = vpack.c.b16 %v3364, %v3362
  %v5859 = vpack.c.b16 %v3365, %v3363
  %v5860 = vpack.c.b16 %v3368, %v3366
  %v5861 = vpack.c.b16 %v3369, %v3367
  %v5862 = vpack.c.b16 %v3372, %v3370
  %v5863 = vpack.c.b16 %v3373, %v3371
  %v5864 = vpack.c.b16 %v3376, %v3374
  %v5865 = vpack.c.b16 %v3377, %v3375
  %v5866 = vpack.c.b16 %v3380, %v3378
  %v5867 = vpack.c.b16 %v3381, %v3379
  %v5868 = vpack.c.b16 %v3384, %v3382
  %v5869 = vpack.c.b16 %v3385, %v3383
  %v5870 = vpack.c.b16 %v3388, %v3386
  %v5871 = vpack.c.b16 %v3389, %v3387
  %v5872 = vpack.c.b16 %v3392, %v3390
  %v5873 = vpack.c.b16 %v3393, %v3391
  %v5874 = vpack.c.b16 %v3396, %v3394
  %v5875 = vpack.c.b16 %v3397, %v3395
  %v5876 = vpack.c.b16 %v3400, %v3398
  %v5877 = vpack.c.b16 %v3401, %v3399
  %v5878 = vpack.c.b16 %v3404, %v3402
  %v5879 = vpack.c.b16 %v3405, %v3403
  %v5880 = vpack.c.b16 %v3408, %v3406
  %v5881 = vpack.c.b16 %v3409, %v3407
  %v5882 = vpack.c.b16 %v3412, %v3410
  %v5883 = vpack.c.b16 %v3413, %v3411
  %v5884 = vpack.c.b16 %v3416, %v3414
  %v5885 = vpack.c.b16 %v3417, %v3415
  %v5886 = vpack.c.b16 %v3420, %v3418
  %v5887 = vpack.c.b16 %v3421, %v3419
  %v5888 = vpack.c.b16 %v3424, %v3422
  %v5889 = vpack.c.b16 %v3425, %v3423
  %v5890 = vpack.c.b16 %v3428, %v3426
  %v5891 = vpack.c.b16 %v3429, %v3427
  %v5892 = vpack.c.b16 %v3432, %v3430
  %v5893 = vpack.c.b16 %v3433, %v3431
  %v5894 = vpack.c.b16 %v3436, %v3434
  %v5895 = vpack.c.b16 %v3437, %v3435
  %v5896 = vpack.c.b16 %v3440, %v3438
  %v5897 = vpack.c.b16 %v3441, %v3439
  %v5898 = vpack.c.b16 %v3444, %v3442
  %v5899 = vpack.c.b16 %v3445, %v3443
  %v5900 = vpack.c.b16 %v3448, %v3446
  %v5901 = vpack.c.b16 %v3449, %v3447
  %v5902 = vpack.c.b16 %v3452, %v3450
  %v5903 = vpack.c.b16 %v3453, %v3451
  %v5904 = vpack.c.b16 %v3456, %v3454
  %v5905 = vpack.c.b16 %v3457, %v3455
  %v5906 = vpack.c.b16 %v3460, %v3458
  %v5907 = vpack.c.b16 %v3461, %v3459
  %v5908 = vpack.c.b16 %v3464, %v3462
  %v5909 = vpack.c.b16 %v3465, %v3463
  %v5910 = vpack.c.b16 %v3468, %v3466
  %v5911 = vpack.c.b16 %v3469, %v3467
  %v5912 = vpack.c.b16 %v3472, %v3470
  %v5913 = vpack.c.b16 %v3473, %v3471
  %v5914 = vpack.c.b16 %v3476, %v3474
  %v5915 = vpack.c.b16 %v3477, %v3475
  %v5916 = vpack.c.b16 %v3480, %v3478
  %v5917 = vpack.c.b16 %v3481, %v3479
  %v5918 = vpack.c.b16 %v3484, %v3482
  %v5919 = vpack.c.b16 %v3485, %v3483
  %v5920 = vpack.c.b16 %v3488, %v3486
  %v5921 = vpack.c.b16 %v3489, %v3487
  %v5922 = vpack.c.b16 %v3492, %v3490
  %v5923 = vpack.c.b16 %v3493, %v3491
  %v5924 = vpack.c.b16 %v3496, %v3494
  %v5925 = vpack.c.b16 %v3497, %v3495
  %v5926 = vpack.c.b16 %v3500, %v3498
  %v5927 = vpack.c.b16 %v3501, %v3499
  %v5928 = vpack.c.b16 %v3504, %v3502
  %v5929 = vpack.c.b16 %v3505, %v3503
  %v5930 = vpack.c.b16 %v3508, %v3506
  %v5931 = vpack.c.b16 %v3509, %v3507
  %v5932 = vpack.c.b16 %v3512, %v3510
  %v5933 = vpack.c.b16 %v3513, %v3511
  %v5934 = vpack.c.b16 %v3516, %v3514
  %v5935 = vpack.c.b16 %v3517, %v3515
  %v5936 = vpack.c.b16 %v3520, %v3518
  %v5937 = vpack.c.b16 %v3521, %v3519
  %v5938 = vpack.c.b16 %v3524, %v3522
  %v5939 = vpack.c.b16 %v3525, %v3523
  %v5940 = vpack.c.b16 %v3528, %v3526
  %v5941 = vpack.c.b16 %v3529, %v3527
  %v5942 = vpack.c.b16 %v3532, %v3530
  %v5943 = vpack.c.b16 %v3533, %v3531
  %v5944 = vpack.c.b16 %v3536, %v3534
  %v5945 = vpack.c.b16 %v3537, %v3535
  %v5946 = vpack.c.b16 %v3540, %v3538
  %v5947 = vpack.c.b16 %v3541, %v3539
  %v5948 = vpack.c.b16 %v3544, %v3542
  %v5949 = vpack.c.b16 %v3545, %v3543
  %v5950 = vpack.c.b16 %v3548, %v3546
  %v5951 = vpack.c.b16 %v3549, %v3547
  %v5952 = vpack.c.b16 %v3552, %v3550
  %v5953 = vpack.c.b16 %v3553, %v3551
  %v5954 = vpack.c.b16 %v3556, %v3554
  %v5955 = vpack.c.b16 %v3557, %v3555
  %v5956 = vpack.c.b16 %v3560, %v3558
  %v5957 = vpack.c.b16 %v3561, %v3559
  %v5958 = vpack.c.b16 %v3564, %v3562
  %v5959 = vpack.c.b16 %v3565, %v3563
  %v5960 = vpack.c.b16 %v3568, %v3566
  %v5961 = vpack.c.b16 %v3569, %v3567
  %v5962 = vpack.c.b16 %v3572, %v3570
  %v5963 = vpack.c.b16 %v3573, %v3571
  %v5964 = vpack.c.b16 %v3576, %v3574
  %v5965 = vpack.c.b16 %v3577, %v3575
  %v5966 = vpack.c.b16 %v3580, %v3578
  %v5967 = vpack.c.b16 %v3581, %v3579
  %v5968 = vpack.c.b16 %v3584, %v3582
  %v5969 = vpack.c.b16 %v3585, %v3583
  %v5970 = vpack.c.b16 %v3588, %v3586
  %v5971 = vpack.c.b16 %v3589, %v3587
  %v5972 = vpack.c.b16 %v3592, %v3590
  %v5973 = vpack.c.b16 %v3593, %v3591
  %v5974 = vpack.c.b16 %v3596, %v3594
  %v5975 = vpack.c.b16 %v3597, %v3595
  %v5976 = vpack.c.b16 %v3600, %v3598
  %v5977 = vpack.c.b16 %v3601, %v3599
  %v5978 = vpack.c.b16 %v3604, %v3602
  %v5979 = vpack.c.b16 %v3605, %v3603
  %v5980 = vpack.c.b16 %v3608, %v3606
  %v5981 = vpack.c.b16 %v3609, %v3607
  %v5982 = vpack.c.b16 %v3612, %v3610
  %v5983 = vpack.c.b16 %v3613, %v3611
  %v5984 = vpack.c.b16 %v3616, %v3614
  %v5985 = vpack.c.b16 %v3617, %v3615
  %v5986 = vpack.c.b16 %v3620, %v3618
  %v5987 = vpack.c.b16 %v3621, %v3619
  %v5988 = vpack.c.b16 %v3624, %v3622
  %v5989 = vpack.c.b16 %v3625, %v3623
  %v5990 = vpack.c.b16 %v3628, %v3626
  %v5991 = vpack.c.b16 %v3629, %v3627
  %v5992 = vpack.c.b16 %v3632, %v3630
  %v5993 = vpack.c.b16 %v3633, %v3631
  %v5994 = vpack.c.b16 %v3636, %v3634
  %v5995 = vpack.c.b16 %v3637, %v3635
  %v5996 = vpack.c.b16 %v3640, %v3638
  %v5997 = vpack.c.b16 %v3641, %v3639
  %v5998 = vpack.c.b16 %v3644, %v3642
  %v5999 = vpack.c.b16 %v3645, %v3643
  %v6000 = vpack.c.b16 %v3648, %v3646
  %v6001 = vpack.c.b16 %v3649, %v3647
  %v6002 = vpack.c.b16 %v3652, %v3650
  %v6003 = vpack.c.b16 %v3653, %v3651
  %v6004 = vpack.c.b16 %v3656, %v3654
  %v6005 = vpack.c.b16 %v3657, %v3655
  %v6006 = vpack.c.b16 %v3660, %v3658
  %v6007 = vpack.c.b16 %v3661, %v3659
  %v6008 = vpack.c.b16 %v3664, %v3662
  %v6009 = vpack.c.b16 %v3665, %v3663
  %v6010 = vpack.c.b16 %v3668, %v3666
  %v6011 = vpack.c.b16 %v3669, %v3667
  %v6012 = vpack.c.b16 %v3672, %v3670
  %v6013 = vpack.c.b16 %v3673, %v3671
  %v6014 = vpack.c.b16 %v3676, %v3674
  %v6015 = vpack.c.b16 %v3677, %v3675
  %v6016 = vpack.c.b16 %v3680, %v3678
  %v6017 = vpack.c.b16 %v3681, %v3679
  %v6018 = vpack.c.b16 %v3684, %v3682
  %v6019 = vpack.c.b16 %v3685, %v3683
  %v6020 = vpack.c.b16 %v3688, %v3686
  %v6021 = vpack.c.b16 %v3689, %v3687
  %v6022 = vpack.c.b16 %v3692, %v3690
  %v6023 = vpack.c.b16 %v3693, %v3691
  %v6024 = vpack.c.b16 %v3696, %v3694
  %v6025 = vpack.c.b16 %v3697, %v3695
  %v6026 = vpack.c.b16 %v3700, %v3698
  %v6027 = vpack.c.b16 %v3701, %v3699
  %v6028 = vpack.c.b16 %v3704, %v3702
  %v6029 = vpack.c.b16 %v3705, %v3703
  %v6030 = vpack.c.b16 %v3708, %v3706
  %v6031 = vpack.c.b16 %v3709, %v3707
  %v6032 = vpack.c.b16 %v3712, %v3710
  %v6033 = vpack.c.b16 %v3713, %v3711
  %v6034 = vpack.c.b16 %v3716, %v3714
  %v6035 = vpack.c.b16 %v3717, %v3715
  %v6036 = vpack.c.b16 %v3720, %v3718
  %v6037 = vpack.c.b16 %v3721, %v3719
  %v6038 = vpack.c.b16 %v3724, %v3722
  %v6039 = vpack.c.b16 %v3725, %v3723
  %v6040 = vpack.c.b16 %v3728, %v3726
  %v6041 = vpack.c.b16 %v3729, %v3727
  %v6042 = vpack.c.b16 %v3732, %v3730
  %v6043 = vpack.c.b16 %v3733, %v3731
  %v6044 = vpack.c.b16 %v3736, %v3734
  %v6045 = vpack.c.b16 %v3737, %v3735
  %v6046 = vpack.c.b16 %v3740, %v3738
  %v6047 = vpack.c.b16 %v3741, %v3739
  %v6048 = vpack.c.b16 %v3744, %v3742
  %v6049 = vpack.c.b16 %v3745, %v3743
  %v6050 = vpack.c.b16 %v3748, %v3746
  %v6051 = vpack.c.b16 %v3749, %v3747
  %v6052 = vpack.c.b16 %v3752, %v3750
  %v6053 = vpack.c.b16 %v3753, %v3751
  %v6054 = vpack.c.b16 %v3756, %v3754
  %v6055 = vpack.c.b16 %v3757, %v3755
  %v6056 = vpack.c.b16 %v3760, %v3758
  %v6057 = vpack.c.b16 %v3761, %v3759
  %v6058 = vpack.c.b16 %v3764, %v3762
  %v6059 = vpack.c.b16 %v3765, %v3763
  %v6060 = vpack.c.b16 %v3768, %v3766
  %v6061 = vpack.c.b16 %v3769, %v3767
  %v6062 = vpack.c.b16 %v3772, %v3770
  %v6063 = vpack.c.b16 %v3773, %v3771
  %v6064 = vpack.c.b16 %v3776, %v3774
  %v6065 = vpack.c.b16 %v3777, %v3775
  %v6066 = vpack.c.b16 %v3780, %v3778
  %v6067 = vpack.c.b16 %v3781, %v3779
  %v6068 = vpack.c.b16 %v3784, %v3782
  %v6069 = vpack.c.b16 %v3785, %v3783
  %v6070 = vpack.c.b16 %v3788, %v3786
  %v6071 = vpack.c.b16 %v3789, %v3787
  %v6072 = vpack.c.b16 %v3792, %v3790
  %v6073 = vpack.c.b16 %v3793, %v3791
  %v6074 = vpack.c.b16 %v3796, %v3794
  %v6075 = vpack.c.b16 %v3797, %v3795
  %v6076 = vpack.c.b16 %v3800, %v3798
  %v6077 = vpack.c.b16 %v3801, %v3799
  %v6078 = vpack.c.b16 %v3804, %v3802
  %v6079 = vpack.c.b16 %v3805, %v3803
  %v6080 = vpack.c.b16 %v3808, %v3806
  %v6081 = vpack.c.b16 %v3809, %v3807
  %v6082 = vpack.c.b16 %v3812, %v3810
  %v6083 = vpack.c.b16 %v3813, %v3811
  %v6084 = vpack.c.b16 %v3816, %v3814
  %v6085 = vpack.c.b16 %v3817, %v3815
  %v6086 = vpack.c.b16 %v3820, %v3818
  %v6087 = vpack.c.b16 %v3821, %v3819
  %v6088 = vpack.c.b16 %v3824, %v3822
  %v6089 = vpack.c.b16 %v3825, %v3823
  %v6090 = vpack.c.b16 %v3828, %v3826
  %v6091 = vpack.c.b16 %v3829, %v3827
  %v6092 = vpack.c.b16 %v3832, %v3830
  %v6093 = vpack.c.b16 %v3833, %v3831
  %v6094 = vpack.c.b16 %v3836, %v3834
  %v6095 = vpack.c.b16 %v3837, %v3835
  %v6096 = vpack.c.b16 %v3840, %v3838
  %v6097 = vpack.c.b16 %v3841, %v3839
  %v6098 = vpack.c.b16 %v3844, %v3842
  %v6099 = vpack.c.b16 %v3845, %v3843
  %v6100 = vpack.c.b16 %v3848, %v3846
  %v6101 = vpack.c.b16 %v3849, %v3847
  %v6102 = vpack.c.b16 %v3852, %v3850
  %v6103 = vpack.c.b16 %v3853, %v3851
  %v6104 = vpack.c.b16 %v3856, %v3854
  %v6105 = vpack.c.b16 %v3857, %v3855
  %v6106 = vpack.c.b16 %v3860, %v3858
  %v6107 = vpack.c.b16 %v3861, %v3859
  %v6108 = vpack.c.b16 %v3864, %v3862
  %v6109 = vpack.c.b16 %v3865, %v3863
  %v6110 = vpack.c.b16 %v3868, %v3866
  %v6111 = vpack.c.b16 %v3869, %v3867
  %v6112 = vpack.c.b16 %v3872, %v3870
  %v6113 = vpack.c.b16 %v3873, %v3871
  %v6114 = vpack.c.b16 %v3876, %v3874
  %v6115 = vpack.c.b16 %v3877, %v3875
  %v6116 = vpack.c.b16 %v3880, %v3878
  %v6117 = vpack.c.b16 %v3881, %v3879
  %v6118 = vpack.c.b16 %v3884, %v3882
  %v6119 = vpack.c.b16 %v3885, %v3883
  %v6120 = vpack.c.b16 %v3888, %v3886
  %v6121 = vpack.c.b16 %v3889, %v3887
  %v6122 = vpack.c.b16 %v3892, %v3890
  %v6123 = vpack.c.b16 %v3893, %v3891
  %v6124 = vpack.c.b16 %v3896, %v3894
  %v6125 = vpack.c.b16 %v3897, %v3895
  %v6126 = vpack.c.b16 %v3900, %v3898
  %v6127 = vpack.c.b16 %v3901, %v3899
  %v6128 = vpack.c.b16 %v3904, %v3902
  %v6129 = vpack.c.b16 %v3905, %v3903
  %v6130 = vpack.c.b16 %v3908, %v3906
  %v6131 = vpack.c.b16 %v3909, %v3907
  %v6132 = vpack.c.b16 %v3912, %v3910
  %v6133 = vpack.c.b16 %v3913, %v3911
  %v6134 = vpack.c.b16 %v3916, %v3914
  %v6135 = vpack.c.b16 %v3917, %v3915
  %v6136 = vpack.c.b16 %v3920, %v3918
  %v6137 = vpack.c.b16 %v3921, %v3919
  %v6138 = vpack.c.b16 %v3924, %v3922
  %v6139 = vpack.c.b16 %v3925, %v3923
  %v6140 = vpack.c.b16 %v3928, %v3926
  %v6141 = vpack.c.b16 %v3929, %v3927
  %v6142 = vpack.c.b16 %v3932, %v3930
  %v6143 = vpack.c.b16 %v3933, %v3931
  %v6144 = vpack.c.b16 %v3936, %v3934
  %v6145 = vpack.c.b16 %v3937, %v3935
  %v6146 = vpack.c.b16 %v3940, %v3938
  %v6147 = vpack.c.b16 %v3941, %v3939
  %v6148 = vpack.c.b16 %v3944, %v3942
  %v6149 = vpack.c.b16 %v3945, %v3943
  %v6150 = vpack.c.b16 %v3948, %v3946
  %v6151 = vpack.c.b16 %v3949, %v3947
  %v6152 = vpack.c.b16 %v3952, %v3950
  %v6153 = vpack.c.b16 %v3953, %v3951
  %v6154 = vpack.c.b16 %v3956, %v3954
  %v6155 = vpack.c.b16 %v3957, %v3955
  %v6156 = vpack.c.b16 %v3960, %v3958
  %v6157 = vpack.c.b16 %v3961, %v3959
  %v6158 = vpack.c.b16 %v3964, %v3962
  %v6159 = vpack.c.b16 %v3965, %v3963
  %v6160 = vpack.c.b16 %v3968, %v3966
  %v6161 = vpack.c.b16 %v3969, %v3967
  %v6162 = vpack.c.b16 %v3972, %v3970
  %v6163 = vpack.c.b16 %v3973, %v3971
  %v6164 = vpack.c.b16 %v3976, %v3974
  %v6165 = vpack.c.b16 %v3977, %v3975
  %v6166 = vpack.c.b16 %v3980, %v3978
  %v6167 = vpack.c.b16 %v3981, %v3979
  %v6168 = vpack.c.b16 %v3984, %v3982
  %v6169 = vpack.c.b16 %v3985, %v3983
  %v6170 = vpack.c.b16 %v3988, %v3986
  %v6171 = vpack.c.b16 %v3989, %v3987
  %v6172 = vpack.c.b16 %v3992, %v3990
  %v6173 = vpack.c.b16 %v3993, %v3991
  %v6174 = vpack.c.b16 %v3996, %v3994
  %v6175 = vpack.c.b16 %v3997, %v3995
  %v6176 = vpack.c.b16 %v4000, %v3998
  %v6177 = vpack.c.b16 %v4001, %v3999
  %v6178 = vpack.c.b16 %v4004, %v4002
  %v6179 = vpack.c.b16 %v4005, %v4003
  %v6180 = vpack.c.b16 %v4008, %v4006
  %v6181 = vpack.c.b16 %v4009, %v4007
  %v6182 = vpack.c.b16 %v4012, %v4010
  %v6183 = vpack.c.b16 %v4013, %v4011
  %v6184 = vpack.c.b16 %v4016, %v4014
  %v6185 = vpack.c.b16 %v4017, %v4015
  %v6186 = vpack.c.b16 %v4020, %v4018
  %v6187 = vpack.c.b16 %v4021, %v4019
  %v6188 = vpack.c.b16 %v4024, %v4022
  %v6189 = vpack.c.b16 %v4025, %v4023
  %v6190 = vpack.c.b16 %v4028, %v4026
  %v6191 = vpack.c.b16 %v4029, %v4027
  %v6192 = vpack.c.b16 %v4032, %v4030
  %v6193 = vpack.c.b16 %v4033, %v4031
  %v6194 = vpack.c.b16 %v4036, %v4034
  %v6195 = vpack.c.b16 %v4037, %v4035
  %v6196 = vpack.c.b16 %v4040, %v4038
  %v6197 = vpack.c.b16 %v4041, %v4039
  %v6198 = vpack.c.b16 %v4044, %v4042
  %v6199 = vpack.c.b16 %v4045, %v4043
  %v6200 = vpack.c.b16 %v4048, %v4046
  %v6201 = vpack.c.b16 %v4049, %v4047
  %v6202 = vpack.c.b16 %v4052, %v4050
  %v6203 = vpack.c.b16 %v4053, %v4051
  %v6204 = vpack.c.b16 %v4056, %v4054
  %v6205 = vpack.c.b16 %v4057, %v4055
  %v6206 = vpack.c.b16 %v4060, %v4058
  %v6207 = vpack.c.b16 %v4061, %v4059
  %v6208 = vpack.c.b16 %v4064, %v4062
  %v6209 = vpack.c.b16 %v4065, %v4063
  %v6210 = vpack.c.b16 %v4068, %v4066
  %v6211 = vpack.c.b16 %v4069, %v4067
  %v6212 = vpack.c.b16 %v4072, %v4070
  %v6213 = vpack.c.b16 %v4073, %v4071
  %v6214 = vpack.c.b16 %v4076, %v4074
  %v6215 = vpack.c.b16 %v4077, %v4075
  %v6216 = vpack.c.b16 %v4080, %v4078
  %v6217 = vpack.c.b16 %v4081, %v4079
  %v6218 = vpack.c.b16 %v4084, %v4082
  %v6219 = vpack.c.b16 %v4085, %v4083
  %v6220 = vpack.c.b16 %v4088, %v4086
  %v6221 = vpack.c.b16 %v4089, %v4087
  %v6222 = vpack.c.b16 %v4092, %v4090
  %v6223 = vpack.c.b16 %v4093, %v4091
  %v6224 = vpack.c.b16 %v4096, %v4094
  %v6225 = vpack.c.b16 %v4097, %v4095
  %v6226 = vpack.c.b16 %v4100, %v4098
  %v6227 = vpack.c.b16 %v4101, %v4099
  %v6228 = vpack.c.b16 %v4104, %v4102
  %v6229 = vpack.c.b16 %v4105, %v4103
  %v6230 = vpack.c.b16 %v4108, %v4106
  %v6231 = vpack.c.b16 %v4109, %v4107
  %v6232 = vpack.c.b16 %v4112, %v4110
  %v6233 = vpack.c.b16 %v4113, %v4111
  %v6234 = vpack.c.b16 %v4116, %v4114
  %v6235 = vpack.c.b16 %v4117, %v4115
  %v6236 = vpack.c.b16 %v4120, %v4118
  %v6237 = vpack.c.b16 %v4121, %v4119
  %v6238 = vpack.c.b16 %v4124, %v4122
  %v6239 = vpack.c.b16 %v4125, %v4123
  %v6240 = vpack.c.b16 %v4128, %v4126
  %v6241 = vpack.c.b16 %v4129, %v4127
  %v6242 = vpack.c.b16 %v4132, %v4130
  %v6243 = vpack.c.b16 %v4133, %v4131
  %v6244 = vpack.c.b16 %v4136, %v4134
  %v6245 = vpack.c.b16 %v4137, %v4135
  %v6246 = vpack.c.b16 %v4140, %v4138
  %v6247 = vpack.c.b16 %v4141, %v4139
  %v6248 = vpack.c.b16 %v4144, %v4142
  %v6249 = vpack.c.b16 %v4145, %v4143
  %v6250 = vpack.c.b16 %v4148, %v4146
  %v6251 = vpack.c.b16 %v4149, %v4147
  %v6252 = vpack.c.b16 %v4152, %v4150
  %v6253 = vpack.c.b16 %v4153, %v4151
  %v6254 = vpack.c.b16 %v4156, %v4154
  %v6255 = vpack.c.b16 %v4157, %v4155
  %v6256 = vpack.c.b16 %v4160, %v4158
  %v6257 = vpack.c.b16 %v4161, %v4159
  %v6258 = vpack.c.b16 %v4164, %v4162
  %v6259 = vpack.c.b16 %v4165, %v4163
  %v6260 = vpack.c.b16 %v4168, %v4166
  %v6261 = vpack.c.b16 %v4169, %v4167
  %v6262 = vpack.c.b16 %v4172, %v4170
  %v6263 = vpack.c.b16 %v4173, %v4171
  %v6264 = vpack.c.b16 %v4176, %v4174
  %v6265 = vpack.c.b16 %v4177, %v4175
  %v6266 = vpack.c.b16 %v4180, %v4178
  %v6267 = vpack.c.b16 %v4181, %v4179
  %v6268 = vpack.c.b16 %v4184, %v4182
  %v6269 = vpack.c.b16 %v4185, %v4183
  %v6270 = vpack.c.b16 %v4188, %v4186
  %v6271 = vpack.c.b16 %v4189, %v4187
  %v6272 = vpack.c.b16 %v4192, %v4190
  %v6273 = vpack.c.b16 %v4193, %v4191
  %v6274 = vpack.c.b16 %v4196, %v4194
  %v6275 = vpack.c.b16 %v4197, %v4195
  %v6276 = vpack.c.b16 %v4200, %v4198
  %v6277 = vpack.c.b16 %v4201, %v4199
  %v6278 = vpack.c.b16 %v4204, %v4202
  %v6279 = vpack.c.b16 %v4205, %v4203
  %v6280 = vpack.c.b16 %v4208, %v4206
  %v6281 = vpack.c.b16 %v4209, %v4207
  %v6282 = vpack.c.b16 %v4212, %v4210
  %v6283 = vpack.c.b16 %v4213, %v4211
  %v6284 = vpack.c.b16 %v4216, %v4214
  %v6285 = vpack.c.b16 %v4217, %v4215
  %v6286 = vpack.c.b16 %v4220, %v4218
  %v6287 = vpack.c.b16 %v4221, %v4219
  %v6288 = vpack.c.b16 %v4224, %v4222
  %v6289 = vpack.c.b16 %v4225, %v4223
  %v6290 = vpack.c.b16 %v4228, %v4226
  %v6291 = vpack.c.b16 %v4229, %v4227
  %v6292 = vpack.c.b16 %v4232, %v4230
  %v6293 = vpack.c.b16 %v4233, %v4231
  %v6294 = vpack.c.b16 %v4236, %v4234
  %v6295 = vpack.c.b16 %v4237, %v4235
  %v6296 = vpack.c.b16 %v4240, %v4238
  %v6297 = vpack.c.b16 %v4241, %v4239
  %v6298 = vpack.c.b16 %v4244, %v4242
  %v6299 = vpack.c.b16 %v4245, %v4243
  %v6300 = vpack.c.b16 %v4248, %v4246
  %v6301 = vpack.c.b16 %v4249, %v4247
  %v6302 = vpack.c.b16 %v4252, %v4250
  %v6303 = vpack.c.b16 %v4253, %v4251
  %v6304 = vpack.c.b16 %v4256, %v4254
  %v6305 = vpack.c.b16 %v4257, %v4255
  %v6306 = vpack.c.b16 %v4260, %v4258
  %v6307 = vpack.c.b16 %v4261, %v4259
  %v6308 = vpack.c.b16 %v4264, %v4262
  %v6309 = vpack.c.b16 %v4265, %v4263
  %v6310 = vpack.c.b16 %v4268, %v4266
  %v6311 = vpack.c.b16 %v4269, %v4267
  %v6312 = vpack.c.b16 %v4272, %v4270
  %v6313 = vpack.c.b16 %v4273, %v4271
  %v6314 = vpack.c.b16 %v4276, %v4274
  %v6315 = vpack.c.b16 %v4277, %v4275
  %v6316 = vpack.c.b16 %v4280, %v4278
  %v6317 = vpack.c.b16 %v4281, %v4279
  %v6318 = vpack.c.b16 %v4284, %v4282
  %v6319 = vpack.c.b16 %v4285, %v4283
  %v6320 = vpack.c.b16 %v4288, %v4286
  %v6321 = vpack.c.b16 %v4289, %v4287
  %v6322 = vpack.c.b16 %v4292, %v4290
  %v6323 = vpack.c.b16 %v4293, %v4291
  %v6324 = vpack.c.b16 %v4296, %v4294
  %v6325 = vpack.c.b16 %v4297, %v4295
  %v6326 = vpack.c.b16 %v4300, %v4298
  %v6327 = vpack.c.b16 %v4301, %v4299
  %v6328 = vpack.c.b16 %v4304, %v4302
  %v6329 = vpack.c.b16 %v4305, %v4303
  %v6330 = vpack.c.b16 %v4308, %v4306
  %v6331 = vpack.c.b16 %v4309, %v4307
  %v6332 = vpack.c.b16 %v4312, %v4310
  %v6333 = vpack.c.b16 %v4313, %v4311
  %v6334 = vpack.c.b16 %v4316, %v4314
  %v6335 = vpack.c.b16 %v4317, %v4315
  %v6336 = vpack.c.b16 %v4320, %v4318
  %v6337 = vpack.c.b16 %v4321, %v4319
  %v6338 = vpack.c.b16 %v4324, %v4322
  %v6339 = vpack.c.b16 %v4325, %v4323
  %v6340 = vpack.c.b16 %v4328, %v4326
  %v6341 = vpack.c.b16 %v4329, %v4327
  %v6342 = vpack.c.b16 %v4332, %v4330
  %v6343 = vpack.c.b16 %v4333, %v4331
  %v6344 = vpack.c.b16 %v4336, %v4334
  %v6345 = vpack.c.b16 %v4337, %v4335
  %v6346 = vpack.c.b16 %v4340, %v4338
  %v6347 = vpack.c.b16 %v4341, %v4339
  %v6348 = vpack.c.b16 %v4344, %v4342
  %v6349 = vpack.c.b16 %v4345, %v4343
  %v6350 = vpack.c.b16 %v4348, %v4346
  %v6351 = vpack.c.b16 %v4349, %v4347
  %v6352 = vpack.c.b16 %v4352, %v4350
  %v6353 = vpack.c.b16 %v4353, %v4351
  %v6354 = vpack.c.b16 %v4356, %v4354
  %v6355 = vpack.c.b16 %v4357, %v4355
  %v6356 = vpack.c.b16 %v4360, %v4358
  %v6357 = vpack.c.b16 %v4361, %v4359
  %v6358 = vpack.c.b16 %v4364, %v4362
  %v6359 = vpack.c.b16 %v4365, %v4363
  %v6360 = vpack.c.b16 %v4368, %v4366
  %v6361 = vpack.c.b16 %v4369, %v4367
  %v6362 = vpack.c.b16 %v4372, %v4370
  %v6363 = vpack.c.b16 %v4373, %v4371
  %v6364 = vpack.c.b16 %v4376, %v4374
  %v6365 = vpack.c.b16 %v4377, %v4375
  %v6366 = vpack.c.b16 %v4380, %v4378
  %v6367 = vpack.c.b16 %v4381, %v4379
  %v6368 = vpack.c.b16 %v4384, %v4382
  %v6369 = vpack.c.b16 %v4385, %v4383
  %v6370 = vpack.c.b16 %v4388, %v4386
  %v6371 = vpack.c.b16 %v4389, %v4387
  %v6372 = vpack.c.b16 %v4392, %v4390
  %v6373 = vpack.c.b16 %v4393, %v4391
  %v6374 = vpack.c.b16 %v4396, %v4394
  %v6375 = vpack.c.b16 %v4397, %v4395
  %v6376 = vpack.c.b16 %v4400, %v4398
  %v6377 = vpack.c.b16 %v4401, %v4399
  %v6378 = vpack.c.b16 %v4404, %v4402
  %v6379 = vpack.c.b16 %v4405, %v4403
  %v6380 = vpack.c.b16 %v4408, %v4406
  %v6381 = vpack.c.b16 %v4409, %v4407
  %v6382 = vpack.c.b16 %v4412, %v4410
  %v6383 = vpack.c.b16 %v4413, %v4411
  %v6384 = vpack.c.b16 %v4416, %v4414
  %v6385 = vpack.c.b16 %v4417, %v4415
  %v6386 = vpack.c.b16 %v4420, %v4418
  %v6387 = vpack.c.b16 %v4421, %v4419
  %v6388 = vpack.c.b16 %v4424, %v4422
  %v6389 = vpack.c.b16 %v4425, %v4423
  %v6390 = vpack.c.b16 %v4428, %v4426
  %v6391 = vpack.c.b16 %v4429, %v4427
  %v6392 = vpack.c.b16 %v4432, %v4430
  %v6393 = vpack.c.b16 %v4433, %v4431
  %v6394 = vpack.c.b16 %v4436, %v4434
  %v6395 = vpack.c.b16 %v4437, %v4435
  %v6396 = vpack.c.b16 %v4440, %v4438
  %v6397 = vpack.c.b16 %v4441, %v4439
  %v6398 = vpack.c.b16 %v4444, %v4442
  %v6399 = vpack.c.b16 %v4445, %v4443
  %v6400 = vpack.c.b16 %v4448, %v4446
  %v6401 = vpack.c.b16 %v4449, %v4447
  %v6402 = vpack.c.b16 %v4452, %v4450
  %v6403 = vpack.c.b16 %v4453, %v4451
  %v6404 = vpack.c.b16 %v4456, %v4454
  %v6405 = vpack.c.b16 %v4457, %v4455
  %v6406 = vpack.c.b16 %v4460, %v4458
  %v6407 = vpack.c.b16 %v4461, %v4459
  %v6408 = vpack.c.b16 %v4464, %v4462
  %v6409 = vpack.c.b16 %v4465, %v4463
  %v6410 = vpack.c.b16 %v4468, %v4466
  %v6411 = vpack.c.b16 %v4469, %v4467
  %v6412 = vpack.c.b16 %v4472, %v4470
  %v6413 = vpack.c.b16 %v4473, %v4471
  %v6414 = vpack.c.b16 %v4476, %v4474
  %v6415 = vpack.c.b16 %v4477, %v4475
  %v6416 = vpack.c.b16 %v4480, %v4478
  %v6417 = vpack.c.b16 %v4481, %v4479
  %v6418 = vpack.c.b16 %v4484, %v4482
  %v6419 = vpack.c.b16 %v4485, %v4483
  %v6420 = vpack.c.b16 %v4488, %v4486
  %v6421 = vpack.c.b16 %v4489, %v4487
  %v6422 = vpack.c.b16 %v4492, %v4490
  %v6423 = vpack.c.b16 %v4493, %v4491
  %v6424 = vpack.c.b16 %v4496, %v4494
  %v6425 = vpack.c.b16 %v4497, %v4495
  %v6426 = vpack.c.b16 %v4500, %v4498
  %v6427 = vpack.c.b16 %v4501, %v4499
  %v6428 = vpack.c.b16 %v4504, %v4502
  %v6429 = vpack.c.b16 %v4505, %v4503
  %v6430 = vpack.c.b16 %v4508, %v4506
  %v6431 = vpack.c.b16 %v4509, %v4507
  %v6432 = vpack.c.b16 %v4512, %v4510
  %v6433 = vpack.c.b16 %v4513, %v4511
  %v6434 = vpack.c.b16 %v4516, %v4514
  %v6435 = vpack.c.b16 %v4517, %v4515
  %v6436 = vpack.c.b16 %v4520, %v4518
  %v6437 = vpack.c.b16 %v4521, %v4519
  %v6438 = vpack.c.b16 %v4524, %v4522
  %v6439 = vpack.c.b16 %v4525, %v4523
  %v6440 = vpack.c.b16 %v4528, %v4526
  %v6441 = vpack.c.b16 %v4529, %v4527
  %v6442 = vpack.c.b16 %v4532, %v4530
  %v6443 = vpack.c.b16 %v4533, %v4531
  %v6444 = vpack.c.b16 %v4536, %v4534
  %v6445 = vpack.c.b16 %v4537, %v4535
  %v6446 = vpack.c.b16 %v4540, %v4538
  %v6447 = vpack.c.b16 %v4541, %v4539
  %v6448 = vpack.c.b16 %v4544, %v4542
  %v6449 = vpack.c.b16 %v4545, %v4543
  %v6450 = vpack.c.b16 %v4548, %v4546
  %v6451 = vpack.c.b16 %v4549, %v4547
  %v6452 = vpack.c.b16 %v4552, %v4550
  %v6453 = vpack.c.b16 %v4553, %v4551
  %v6454 = vpack.c.b16 %v4556, %v4554
  %v6455 = vpack.c.b16 %v4557, %v4555
  %v6456 = vpack.c.b16 %v4560, %v4558
  %v6457 = vpack.c.b16 %v4561, %v4559
  %v6458 = vpack.c.b16 %v4564, %v4562
  %v6459 = vpack.c.b16 %v4565, %v4563
  %v6460 = vpack.c.b16 %v4568, %v4566
  %v6461 = vpack.c.b16 %v4569, %v4567
  %v6462 = vpack.c.b16 %v4572, %v4570
  %v6463 = vpack.c.b16 %v4573, %v4571
  %v6464 = vpack.c.b16 %v4576, %v4574
  %v6465 = vpack.c.b16 %v4577, %v4575
  %v6466 = vpack.c.b16 %v4580, %v4578
  %v6467 = vpack.c.b16 %v4581, %v4579
  %v6468 = vpack.c.b16 %v4584, %v4582
  %v6469 = vpack.c.b16 %v4585, %v4583
  %v6470 = vpack.c.b16 %v4588, %v4586
  %v6471 = vpack.c.b16 %v4589, %v4587
  %v6472 = vpack.c.b16 %v4592, %v4590
  %v6473 = vpack.c.b16 %v4593, %v4591
  %v6474 = vpack.c.b16 %v4596, %v4594
  %v6475 = vpack.c.b16 %v4597, %v4595
  %v6476 = vpack.c.b16 %v4600, %v4598
  %v6477 = vpack.c.b16 %v4601, %v4599
  %v6478 = vpack.c.b16 %v4604, %v4602
  %v6479 = vpack.c.b16 %v4605, %v4603
  %v6480 = vpack.c.b16 %v4608, %v4606
  %v6481 = vpack.c.b16 %v4609, %v4607
  %v6482 = vpack.c.b16 %v4612, %v4610
  %v6483 = vpack.c.b16 %v4613, %v4611
  %v6484 = vpack.c.b16 %v4616, %v4614
  %v6485 = vpack.c.b16 %v4617, %v4615
  %v6486 = vpack.c.b16 %v4620, %v4618
  %v6487 = vpack.c.b16 %v4621, %v4619
  %v6488 = vpack.c.b16 %v4624, %v4622
  %v6489 = vpack.c.b16 %v4625, %v4623
  %v6490 = vpack.c.b16 %v4628, %v4626
  %v6491 = vpack.c.b16 %v4629, %v4627
  %v6492 = vpack.c.b16 %v4632, %v4630
  %v6493 = vpack.c.b16 %v4633, %v4631
  %v6494 = vpack.c.b16 %v4636, %v4634
  %v6495 = vpack.c.b16 %v4637, %v4635
  %v6496 = vpack.c.b16 %v4640, %v4638
  %v6497 = vpack.c.b16 %v4641, %v4639
  %v6498 = vpack.c.b16 %v4644, %v4642
  %v6499 = vpack.c.b16 %v4645, %v4643
  %v6500 = vpack.c.b16 %v4648, %v4646
  %v6501 = vpack.c.b16 %v4649, %v4647
  %v6502 = vpack.c.b16 %v4652, %v4650
  %v6503 = vpack.c.b16 %v4653, %v4651
  %v6504 = vpack.c.b16 %v4656, %v4654
  %v6505 = vpack.c.b16 %v4657, %v4655
  %v6506 = vpack.c.b16 %v4660, %v4658
  %v6507 = vpack.c.b16 %v4661, %v4659
  %v6508 = vpack.c.b16 %v4664, %v4662
  %v6509 = vpack.c.b16 %v4665, %v4663
  %v6510 = vpack.c.b16 %v4668, %v4666
  %v6511 = vpack.c.b16 %v4669, %v4667
  %v6512 = vpack.c.b16 %v4672, %v4670
  %v6513 = vpack.c.b16 %v4673, %v4671
  %v6514 = vpack.c.b16 %v4676, %v4674
  %v6515 = vpack.c.b16 %v4677, %v4675
  %v6516 = vpack.c.b16 %v4680, %v4678
  %v6517 = vpack.c.b16 %v4681, %v4679
  %v6518 = vpack.c.b16 %v4684, %v4682
  %v6519 = vpack.c.b16 %v4685, %v4683
  %v6520 = vpack.c.b16 %v4688, %v4686
  %v6521 = vpack.c.b16 %v4689, %v4687
  %v6522 = vpack.c.b16 %v4692, %v4690
  %v6523 = vpack.c.b16 %v4693, %v4691
  %v6524 = vpack.c.b16 %v4696, %v4694
  %v6525 = vpack.c.b16 %v4697, %v4695
  %v6526 = vpack.c.b16 %v4700, %v4698
  %v6527 = vpack.c.b16 %v4701, %v4699
  %v6528 = vpack.c.b16 %v4704, %v4702
  %v6529 = vpack.c.b16 %v4705, %v4703
  %v6530 = vpack.c.b16 %v4708, %v4706
  %v6531 = vpack.c.b16 %v4709, %v4707
  %v6532 = vpack.c.b16 %v4712, %v4710
  %v6533 = vpack.c.b16 %v4713, %v4711
  %v6534 = vpack.c.b16 %v4716, %v4714
  %v6535 = vpack.c.b16 %v4717, %v4715
  %v6536 = vpack.c.b16 %v4720, %v4718
  %v6537 = vpack.c.b16 %v4721, %v4719
  %v6538 = vpack.c.b16 %v4724, %v4722
  %v6539 = vpack.c.b16 %v4725, %v4723
  %v6540 = vpack.c.b16 %v4728, %v4726
  %v6541 = vpack.c.b16 %v4729, %v4727
  %v6542 = vpack.c.b16 %v4732, %v4730
  %v6543 = vpack.c.b16 %v4733, %v4731
  %v6544 = vpack.c.b16 %v4736, %v4734
  %v6545 = vpack.c.b16 %v4737, %v4735
  %v6546 = vpack.c.b16 %v4740, %v4738
  %v6547 = vpack.c.b16 %v4741, %v4739
  %v6548 = vpack.c.b16 %v4744, %v4742
  %v6549 = vpack.c.b16 %v4745, %v4743
  %v6550 = vpack.c.b16 %v4748, %v4746
  %v6551 = vpack.c.b16 %v4749, %v4747
  %v6552 = vpack.c.b16 %v4752, %v4750
  %v6553 = vpack.c.b16 %v4753, %v4751
  %v6554 = vpack.c.b16 %v4756, %v4754
  %v6555 = vpack.c.b16 %v4757, %v4755
  %v6556 = vpack.c.b16 %v4760, %v4758
  %v6557 = vpack.c.b16 %v4761, %v4759
  %v6558 = vpack.c.b16 %v4764, %v4762
  %v6559 = vpack.c.b16 %v4765, %v4763
  %v6560 = vpack.c.b16 %v4768, %v4766
  %v6561 = vpack.c.b16 %v4769, %v4767
  %v6562 = vpack.c.b16 %v4772, %v4770
  %v6563 = vpack.c.b16 %v4773, %v4771
  %v6564 = vpack.c.b16 %v4776, %v4774
  %v6565 = vpack.c.b16 %v4777, %v4775
  %v6566 = vpack.c.b16 %v4780, %v4778
  %v6567 = vpack.c.b16 %v4781, %v4779
  %v6568 = vpack.c.b16 %v4784, %v4782
  %v6569 = vpack.c.b16 %v4785, %v4783
  %v6570 = vpack.c.b16 %v4788, %v4786
  %v6571 = vpack.c.b16 %v4789, %v4787
  %v6572 = vpack.c.b16 %v4792, %v4790
  %v6573 = vpack.c.b16 %v4793, %v4791
  %v6574 = vpack.c.b16 %v4796, %v4794
  %v6575 = vpack.c.b16 %v4797, %v4795
  %v6576 = vpack.c.b16 %v4800, %v4798
  %v6577 = vpack.c.b16 %v4801, %v4799
  %v6578 = vpack.c.b16 %v4804, %v4802
  %v6579 = vpack.c.b16 %v4805, %v4803
  %v6580 = vpack.c.b16 %v4808, %v4806
  %v6581 = vpack.c.b16 %v4809, %v4807
  %v6582 = vpack.c.b16 %v4812, %v4810
  %v6583 = vpack.c.b16 %v4813, %v4811
  %v6584 = vpack.c.b16 %v4816, %v4814
  %v6585 = vpack.c.b16 %v4817, %v4815
  %v6586 = vpack.c.b16 %v4820, %v4818
  %v6587 = vpack.c.b16 %v4821, %v4819
  %v6588 = vpack.c.b16 %v4824, %v4822
  %v6589 = vpack.c.b16 %v4825, %v4823
  %v6590 = vpack.c.b16 %v4828, %v4826
  %v6591 = vpack.c.b16 %v4829, %v4827
  %v6592 = vpack.c.b16 %v4832, %v4830
  %v6593 = vpack.c.b16 %v4833, %v4831
  %v6594 = vpack.c.b16 %v4836, %v4834
  %v6595 = vpack.c.b16 %v4837, %v4835
  %v6596 = vpack.c.b16 %v4840, %v4838
  %v6597 = vpack.c.b16 %v4841, %v4839
  %v6598 = vpack.c.b16 %v4844, %v4842
  %v6599 = vpack.c.b16 %v4845, %v4843
  %v6600 = vpack.c.b16 %v4848, %v4846
  %v6601 = vpack.c.b16 %v4849, %v4847
  %v6602 = vpack.c.b16 %v4852, %v4850
  %v6603 = vpack.c.b16 %v4853, %v4851
  %v6604 = vpack.c.b16 %v4856, %v4854
  %v6605 = vpack.c.b16 %v4857, %v4855
  %v6606 = vpack.c.b16 %v4860, %v4858
  %v6607 = vpack.c.b16 %v4861, %v4859
  %v6608 = vpack.c.b16 %v4864, %v4862
  %v6609 = vpack.c.b16 %v4865, %v4863
  %v6610 = vpack.c.b16 %v4868, %v4866
  %v6611 = vpack.c.b16 %v4869, %v4867
  %v6612 = vpack.c.b16 %v4872, %v4870
  %v6613 = vpack.c.b16 %v4873, %v4871
  %v6614 = vpack.c.b16 %v4876, %v4874
  %v6615 = vpack.c.b16 %v4877, %v4875
  %v6616 = vpack.c.b16 %v4880, %v4878
  %v6617 = vpack.c.b16 %v4881, %v4879
  %v6618 = vpack.c.b16 %v4884, %v4882
  %v6619 = vpack.c.b16 %v4885, %v4883
  %v6620 = vpack.c.b16 %v4888, %v4886
  %v6621 = vpack.c.b16 %v4889, %v4887
  %v6622 = vpack.c.b16 %v4892, %v4890
  %v6623 = vpack.c.b16 %v4893, %v4891
  %v6624 = vpack.c.b16 %v4896, %v4894
  %v6625 = vpack.c.b16 %v4897, %v4895
  %v6626 = vpack.c.b16 %v4900, %v4898
  %v6627 = vpack.c.b16 %v4901, %v4899
  %v6628 = vpack.c.b16 %v4904, %v4902
  %v6629 = vpack.c.b16 %v4905, %v4903
  %v6630 = vpack.c.b16 %v4908, %v4906
  %v6631 = vpack.c.b16 %v4909, %v4907
  %v6632 = vpack.c.b16 %v4912, %v4910
  %v6633 = vpack.c.b16 %v4913, %v4911
  %v6634 = vpack.c.b16 %v4916, %v4914
  %v6635 = vpack.c.b16 %v4917, %v4915
  %v6636 = vpack.c.b16 %v4920, %v4918
  %v6637 = vpack.c.b16 %v4921, %v4919
  %v6638 = vpack.c.b16 %v4924, %v4922
  %v6639 = vpack.c.b16 %v4925, %v4923
  %v6640 = vpack.c.b16 %v4928, %v4926
  %v6641 = vpack.c.b16 %v4929, %v4927
  %v6642 = vpack.c.b16 %v4932, %v4930
  %v6643 = vpack.c.b16 %v4933, %v4931
  %v6644 = vpack.c.b16 %v4936, %v4934
  %v6645 = vpack.c.b16 %v4937, %v4935
  %v6646 = vpack.c.b16 %v4940, %v4938
  %v6647 = vpack.c.b16 %v4941, %v4939
  %v6648 = vpack.c.b16 %v4944, %v4942
  %v6649 = vpack.c.b16 %v4945, %v4943
  %v6650 = vpack.c.b16 %v4948, %v4946
  %v6651 = vpack.c.b16 %v4949, %v4947
  %v6652 = vpack.c.b16 %v4952, %v4950
  %v6653 = vpack.c.b16 %v4953, %v4951
  %v6654 = vpack.c.b16 %v4956, %v4954
  %v6655 = vpack.c.b16 %v4957, %v4955
  %v6656 = vpack.c.b16 %v4960, %v4958
  %v6657 = vpack.c.b16 %v4961, %v4959
  %v6658 = vpack.c.b16 %v4964, %v4962
  %v6659 = vpack.c.b16 %v4965, %v4963
  %v6660 = vpack.c.b16 %v4968, %v4966
  %v6661 = vpack.c.b16 %v4969, %v4967
  %v6662 = vpack.c.b16 %v4972, %v4970
  %v6663 = vpack.c.b16 %v4973, %v4971
  %v6664 = vpack.c.b16 %v4976, %v4974
  %v6665 = vpack.c.b16 %v4977, %v4975
  %v6666 = vpack.c.b16 %v4980, %v4978
  %v6667 = vpack.c.b16 %v4981, %v4979
  %v6668 = vpack.c.b16 %v4984, %v4982
  %v6669 = vpack.c.b16 %v4985, %v4983
  %v6670 = vpack.c.b16 %v4988, %v4986
  %v6671 = vpack.c.b16 %v4989, %v4987
  %v6672 = vpack.c.b16 %v4992, %v4990
  %v6673 = vpack.c.b16 %v4993, %v4991
  %v6674 = vpack.c.b16 %v4996, %v4994
  %v6675 = vpack.c.b16 %v4997, %v4995
  %v6676 = vpack.c.b16 %v5000, %v4998
  %v6677 = vpack.c.b16 %v5001, %v4999
  %v6678 = vpack.c.b16 %v5004, %v5002
  %v6679 = vpack.c.b16 %v5005, %v5003
  %v6680 = vpack.c.b16 %v5008, %v5006
  %v6681 = vpack.c.b16 %v5009, %v5007
  %v6682 = vpack.c.b16 %v5012, %v5010
  %v6683 = vpack.c.b16 %v5013, %v5011
  %v6684 = vpack.c.b16 %v5016, %v5014
  %v6685 = vpack.c.b16 %v5017, %v5015
  %v6686 = vpack.c.b16 %v5020, %v5018
  %v6687 = vpack.c.b16 %v5021, %v5019
  %v6688 = vpack.c.b16 %v5024, %v5022
  %v6689 = vpack.c.b16 %v5025, %v5023
  %v6690 = vpack.c.b16 %v5028, %v5026
  %v6691 = vpack.c.b16 %v5029, %v5027
  %v6692 = vpack.c.b16 %v5032, %v5030
  %v6693 = vpack.c.b16 %v5033, %v5031
  %v6694 = vpack.c.b16 %v5036, %v5034
  %v6695 = vpack.c.b16 %v5037, %v5035
  %v6696 = vpack.c.b16 %v5040, %v5038
  %v6697 = vpack.c.b16 %v5041, %v5039
  %v6698 = vpack.c.b16 %v5044, %v5042
  %v6699 = vpack.c.b16 %v5045, %v5043
  %v6700 = vpack.c.b16 %v5048, %v5046
  %v6701 = vpack.c.b16 %v5049, %v5047
  %v6702 = vpack.c.b16 %v5052, %v5050
  %v6703 = vpack.c.b16 %v5053, %v5051
  %v6704 = vpack.c.b16 %v5056, %v5054
  %v6705 = vpack.c.b16 %v5057, %v5055
  %v6706 = vpack.c.b16 %v5060, %v5058
  %v6707 = vpack.c.b16 %v5061, %v5059
  %v6708 = vpack.c.b16 %v5064, %v5062
  %v6709 = vpack.c.b16 %v5065, %v5063
  %v6710 = vpack.c.b16 %v5068, %v5066
  %v6711 = vpack.c.b16 %v5069, %v5067
  %v6712 = vpack.c.b16 %v5072, %v5070
  %v6713 = vpack.c.b16 %v5073, %v5071
  %v6714 = vpack.c.b16 %v5076, %v5074
  %v6715 = vpack.c.b16 %v5077, %v5075
  %v6716 = vpack.c.b16 %v5080, %v5078
  %v6717 = vpack.c.b16 %v5081, %v5079
  %v6718 = vpack.c.b16 %v5084, %v5082
  %v6719 = vpack.c.b16 %v5085, %v5083
  %v6720 = vpack.c.b16 %v5088, %v5086
  %v6721 = vpack.c.b16 %v5089, %v5087
  %v6722 = vpack.c.b16 %v5092, %v5090
  %v6723 = vpack.c.b16 %v5093, %v5091
  %v6724 = vpack.c.b16 %v5096, %v5094
  %v6725 = vpack.c.b16 %v5097, %v5095
  %v6726 = vpack.c.b16 %v5100, %v5098
  %v6727 = vpack.c.b16 %v5101, %v5099
  %v6728 = vpack.c.b16 %v5104, %v5102
  %v6729 = vpack.c.b16 %v5105, %v5103
  %v6730 = vpack.c.b16 %v5108, %v5106
  %v6731 = vpack.c.b16 %v5109, %v5107
  %v6732 = vpack.c.b16 %v5112, %v5110
  %v6733 = vpack.c.b16 %v5113, %v5111
  %v6734 = vpack.c.b16 %v5116, %v5114
  %v6735 = vpack.c.b16 %v5117, %v5115
  %v6736 = vpack.c.b16 %v5120, %v5118
  %v6737 = vpack.c.b16 %v5121, %v5119
  %v6738 = vpack.c.b16 %v5124, %v5122
  %v6739 = vpack.c.b16 %v5125, %v5123
  %v6740 = vpack.c.b16 %v5128, %v5126
  %v6741 = vpack.c.b16 %v5129, %v5127
  %v6742 = vpack.c.b16 %v5132, %v5130
  %v6743 = vpack.c.b16 %v5133, %v5131
  %v6744 = vpack.c.b16 %v5136, %v5134
  %v6745 = vpack.c.b16 %v5137, %v5135
  %v6746 = vpack.c.b16 %v5140, %v5138
  %v6747 = vpack.c.b16 %v5141, %v5139
  %v6748 = vpack.c.b16 %v5144, %v5142
  %v6749 = vpack.c.b16 %v5145, %v5143
  %v6750 = vpack.c.b16 %v5148, %v5146
  %v6751 = vpack.c.b16 %v5149, %v5147
  %v6752 = vpack.c.b16 %v5152, %v5150
  %v6753 = vpack.c.b16 %v5153, %v5151
  %v6754 = vpack.c.b16 %v5156, %v5154
  %v6755 = vpack.c.b16 %v5157, %v5155
  %v6756 = vpack.c.b16 %v5160, %v5158
  %v6757 = vpack.c.b16 %v5161, %v5159
  %v6758 = vpack.c.b16 %v5164, %v5162
  %v6759 = vpack.c.b16 %v5165, %v5163
  %v6760 = vpack.c.b16 %v5168, %v5166
  %v6761 = vpack.c.b16 %v5169, %v5167
  %v6762 = vpack.c.b16 %v5172, %v5170
  %v6763 = vpack.c.b16 %v5173, %v5171
  %v6764 = vpack.c.b16 %v5176, %v5174
  %v6765 = vpack.c.b16 %v5177, %v5175
  %v6766 = vpack.c.b16 %v5180, %v5178
  %v6767 = vpack.c.b16 %v5181, %v5179
  %v6768 = vpack.c.b16 %v5184, %v5182
  %v6769 = vpack.c.b16 %v5185, %v5183
  %v6770 = vpack.c.b16 %v5188, %v5186
  %v6771 = vpack.c.b16 %v5189, %v5187
  %v6772 = vpack.c.b16 %v5192, %v5190
  %v6773 = vpack.c.b16 %v5193, %v5191
  %v6774 = vpack.c.b16 %v5196, %v5194
  %v6775 = vpack.c.b16 %v5197, %v5195
  %v6776 = vpack.c.b16 %v5200, %v5198
  %v6777 = vpack.c.b16 %v5201, %v5199
  %v6778 = vpack.c.b16 %v5204, %v5202
  %v6779 = vpack.c.b16 %v5205, %v5203
  %v6780 = vpack.c.b16 %v5208, %v5206
  %v6781 = vpack.c.b16 %v5209, %v5207
  %v6782 = vpack.c.b16 %v5212, %v5210
  %v6783 = vpack.c.b16 %v5213, %v5211
  %v6784 = vpack.c.b16 %v5216, %v5214
  %v6785 = vpack.c.b16 %v5217, %v5215
  %v6786 = vpack.c.b16 %v5220, %v5218
  %v6787 = vpack.c.b16 %v5221, %v5219
  %v6788 = vpack.c.b16 %v5224, %v5222
  %v6789 = vpack.c.b16 %v5225, %v5223
  %v6790 = vpack.c.b16 %v5228, %v5226
  %v6791 = vpack.c.b16 %v5229, %v5227
  %v6792 = vpack.c.b16 %v5232, %v5230
  %v6793 = vpack.c.b16 %v5233, %v5231
  %v6794 = vpack.c.b16 %v5236, %v5234
  %v6795 = vpack.c.b16 %v5237, %v5235
  %v6796 = vpack.c.b16 %v5240, %v5238
  %v6797 = vpack.c.b16 %v5241, %v5239
  %v6798 = vpack.c.b16 %v5244, %v5242
  %v6799 = vpack.c.b16 %v5245, %v5243
  %v6800 = vpack.c.b16 %v5248, %v5246
  %v6801 = vpack.c.b16 %v5249, %v5247
  %v6802 = vpack.c.b16 %v5252, %v5250
  %v6803 = vpack.c.b16 %v5253, %v5251
  %v6804 = vpack.c.b16 %v5256, %v5254
  %v6805 = vpack.c.b16 %v5257, %v5255
  %v6806 = vpack.c.b16 %v5260, %v5258
  %v6807 = vpack.c.b16 %v5261, %v5259
  %v6808 = vpack.c.b16 %v5264, %v5262
  %v6809 = vpack.c.b16 %v5265, %v5263
  %v6810 = vpack.c.b16 %v5268, %v5266
  %v6811 = vpack.c.b16 %v5269, %v5267
  %v6812 = vpack.c.b16 %v5272, %v5270
  %v6813 = vpack.c.b16 %v5273, %v5271
  %v6814 = vpack.c.b16 %v5276, %v5274
  %v6815 = vpack.c.b16 %v5277, %v5275
  %v6816 = vpack.c.b16 %v5280, %v5278
  %v6817 = vpack.c.b16 %v5281, %v5279
  %v6818 = vpack.c.b16 %v5284, %v5282
  %v6819 = vpack.c.b16 %v5285, %v5283
  %v6820 = vpack.c.b16 %v5288, %v5286
  %v6821 = vpack.c.b16 %v5289, %v5287
  %v6822 = vpack.c.b16 %v5292, %v5290
  %v6823 = vpack.c.b16 %v5293, %v5291
  %v6824 = vpack.c.b16 %v5296, %v5294
  %v6825 = vpack.c.b16 %v5297, %v5295
  %v6826 = vpack.c.b16 %v5300, %v5298
  %v6827 = vpack.c.b16 %v5301, %v5299
  %v6828 = vpack.c.b16 %v5304, %v5302
  %v6829 = vpack.c.b16 %v5305, %v5303
  %v6830 = vpack.c.b16 %v5308, %v5306
  %v6831 = vpack.c.b16 %v5309, %v5307
  %v6832 = vpack.c.b16 %v5312, %v5310
  %v6833 = vpack.c.b16 %v5313, %v5311
  %v6834 = vpack.c.b16 %v5316, %v5314
  %v6835 = vpack.c.b16 %v5317, %v5315
  %v6836 = vpack.c.b16 %v5320, %v5318
  %v6837 = vpack.c.b16 %v5321, %v5319
  %v6838 = vpack.c.b16 %v5324, %v5322
  %v6839 = vpack.c.b16 %v5325, %v5323
  %v6840 = vpack.c.b16 %v5328, %v5326
  %v6841 = vpack.c.b16 %v5329, %v5327
  %v6842 = vpack.c.b16 %v5332, %v5330
  %v6843 = vpack.c.b16 %v5333, %v5331
  %v6844 = vpack.c.b16 %v5336, %v5334
  %v6845 = vpack.c.b16 %v5337, %v5335
  %v6846 = vpack.c.b16 %v5340, %v5338
  %v6847 = vpack.c.b16 %v5341, %v5339
  %v6848 = vpack.c.b16 %v5344, %v5342
  %v6849 = vpack.c.b16 %v5345, %v5343
  %v6850 = vpack.c.b16 %v5348, %v5346
  %v6851 = vpack.c.b16 %v5349, %v5347
  %v6852 = vpack.c.b16 %v5352, %v5350
  %v6853 = vpack.c.b16 %v5353, %v5351
  %v6854 = vpack.c.b16 %v5356, %v5354
  %v6855 = vpack.c.b16 %v5357, %v5355
  %v6856 = vpack.c.b16 %v5360, %v5358
  %v6857 = vpack.c.b16 %v5361, %v5359
  %v6858 = vpack.c.b16 %v5364, %v5362
  %v6859 = vpack.c.b16 %v5365, %v5363
  %v6860 = vpack.c.b16 %v5368, %v5366
  %v6861 = vpack.c.b16 %v5369, %v5367
  %v6862 = vpack.c.b16 %v5372, %v5370
  %v6863 = vpack.c.b16 %v5373, %v5371
  %v6864 = vpack.c.b16 %v5376, %v5374
  %v6865 = vpack.c.b16 %v5377, %v5375
  %v6866 = vpack.c.b16 %v5380, %v5378
  %v6867 = vpack.c.b16 %v5381, %v5379
  %v6868 = vpack.c.b16 %v5384, %v5382
  %v6869 = vpack.c.b16 %v5385, %v5383
  %v6870 = vpack.c.b16 %v5388, %v5386
  %v6871 = vpack.c.b16 %v5389, %v5387
  %v6872 = vpack.c.b16 %v5392, %v5390
  %v6873 = vpack.c.b16 %v5393, %v5391
  %v6874 = vpack.c.b16 %v5396, %v5394
  %v6875 = vpack.c.b16 %v5397, %v5395
  %v6876 = vpack.c.b16 %v5400, %v5398
  %v6877 = vpack.c.b16 %v5401, %v5399
  %v6878 = vpack.c.b16 %v5404, %v5402
  %v6879 = vpack.c.b16 %v5405, %v5403
  %v6880 = vpack.c.b16 %v5408, %v5406
  %v6881 = vpack.c.b16 %v5409, %v5407
  %v6882 = vpack.c.b16 %v5412, %v5410
  %v6883 = vpack.c.b16 %v5413, %v5411
  %v6884 = vpack.c.b16 %v5416, %v5414
  %v6885 = vpack.c.b16 %v5417, %v5415
  %v6886 = vpack.c.b16 %v5420, %v5418
  %v6887 = vpack.c.b16 %v5421, %v5419
  %v6888 = vpack.c.b16 %v5424, %v5422
  %v6889 = vpack.c.b16 %v5425, %v5423
  %v6890 = vpack.c.b16 %v5428, %v5426
  %v6891 = vpack.c.b16 %v5429, %v5427
  %v6892 = vpack.c.b16 %v5432, %v5430
  %v6893 = vpack.c.b16 %v5433, %v5431
  %v6894 = vpack.c.b16 %v5436, %v5434
  %v6895 = vpack.c.b16 %v5437, %v5435
  %v6896 = vpack.c.b16 %v5440, %v5438
  %v6897 = vpack.c.b16 %v5441, %v5439
  %v6898 = vpack.c.b16 %v5444, %v5442
  %v6899 = vpack.c.b16 %v5445, %v5443
  %v6900 = vpack.c.b16 %v5448, %v5446
  %v6901 = vpack.c.b16 %v5449, %v5447
  %v6902 = vpack.c.b16 %v5452, %v5450
  %v6903 = vpack.c.b16 %v5453, %v5451
  %v6904 = vpack.c.b16 %v5456, %v5454
  %v6905 = vpack.c.b16 %v5457, %v5455
  %v6906 = vpack.c.b16 %v5460, %v5458
  %v6907 = vpack.c.b16 %v5461, %v5459
  %v6908 = vpack.c.b16 %v5464, %v5462
  %v6909 = vpack.c.b16 %v5465, %v5463
  %v6910 = vpack.c.b16 %v5468, %v5466
  %v6911 = vpack.c.b16 %v5469, %v5467
  %v6912 = vpack.c.b16 %v5472, %v5470
  %v6913 = vpack.c.b16 %v5473, %v5471
  %v6914 = vpack.c.b16 %v5476, %v5474
  %v6915 = vpack.c.b16 %v5477, %v5475
  %v6916 = vpack.c.b16 %v5480, %v5478
  %v6917 = vpack.c.b16 %v5481, %v5479
  %v6918 = vpack.c.b16 %v5484, %v5482
  %v6919 = vpack.c.b16 %v5485, %v5483
  %v6920 = vpack.c.b16 %v5488, %v5486
  %v6921 = vpack.c.b16 %v5489, %v5487
  %v6922 = vpack.c.b16 %v5492, %v5490
  %v6923 = vpack.c.b16 %v5493, %v5491
  %v6924 = vpack.c.b16 %v5496, %v5494
  %v6925 = vpack.c.b16 %v5497, %v5495
  %v6926 = vpack.c.b16 %v5500, %v5498
  %v6927 = vpack.c.b16 %v5501, %v5499
  %v6928 = vpack.c.b16 %v5504, %v5502
  %v6929 = vpack.c.b16 %v5505, %v5503
  %v6930 = vpack.c.b16 %v5508, %v5506
  %v6931 = vpack.c.b16 %v5509, %v5507
  %v6932 = vpack.c.b16 %v5512, %v5510
  %v6933 = vpack.c.b16 %v5513, %v5511
  %v6934 = vpack.c.b16 %v5516, %v5514
  %v6935 = vpack.c.b16 %v5517, %v5515
  %v6936 = vpack.c.b16 %v5520, %v5518
  %v6937 = vpack.c.b16 %v5521, %v5519
  %v6938 = vpack.c.b16 %v5524, %v5522
  %v6939 = vpack.c.b16 %v5525, %v5523
  %v6940 = vpack.c.b16 %v5528, %v5526
  %v6941 = vpack.c.b16 %v5529, %v5527
  %v6942 = vpack.c.b16 %v5532, %v5530
  %v6943 = vpack.c.b16 %v5533, %v5531
  %v6944 = vpack.c.b16 %v5536, %v5534
  %v6945 = vpack.c.b16 %v5537, %v5535
  %v6946 = vpack.c.b16 %v5540, %v5538
  %v6947 = vpack.c.b16 %v5541, %v5539
  %v6948 = vpack.c.b16 %v5544, %v5542
  %v6949 = vpack.c.b16 %v5545, %v5543
  %v6950 = vpack.c.b16 %v5548, %v5546
  %v6951 = vpack.c.b16 %v5549, %v5547
  %v6952 = vpack.c.b16 %v5552, %v5550
  %v6953 = vpack.c.b16 %v5553, %v5551
  %v6954 = vpack.c.b16 %v5556, %v5554
  %v6955 = vpack.c.b16 %v5557, %v5555
  %v6956 = vpack.c.b16 %v5560, %v5558
  %v6957 = vpack.c.b16 %v5561, %v5559
  %v6958 = vpack.c.b16 %v5564, %v5562
  %v6959 = vpack.c.b16 %v5565, %v5563
  %v6960 = vpack.c.b16 %v5568, %v5566
  %v6961 = vpack.c.b16 %v5569, %v5567
  %v6962 = vpack.c.b16 %v5572, %v5570
  %v6963 = vpack.c.b16 %v5573, %v5571
  %v6964 = vpack.c.b16 %v5576, %v5574
  %v6965 = vpack.c.b16 %v5577, %v5575
  %v6966 = vpack.c.b16 %v5580, %v5578
  %v6967 = vpack.c.b16 %v5581, %v5579
  %v6968 = vpack.c.b16 %v5584, %v5582
  %v6969 = vpack.c.b16 %v5585, %v5583
  %v6970 = vpack.c.b16 %v5588, %v5586
  %v6971 = vpack.c.b16 %v5589, %v5587
  %v6972 = vpack.c.b16 %v5592, %v5590
  %v6973 = vpack.c.b16 %v5593, %v5591
  %v6974 = vpack.c.b16 %v5596, %v5594
  %v6975 = vpack.c.b16 %v5597, %v5595
  %v6976 = vpack.c.b16 %v5600, %v5598
  %v6977 = vpack.c.b16 %v5601, %v5599
  %v6978 = vpack.c.b16 %v5604, %v5602
  %v6979 = vpack.c.b16 %v5605, %v5603
  %v6980 = vpack.c.b16 %v5608, %v5606
  %v6981 = vpack.c.b16 %v5609, %v5607
  %v6982 = vpack.c.b16 %v5612, %v5610
  %v6983 = vpack.c.b16 %v5613, %v5611
  %v6984 = vpack.c.b16 %v5616, %v5614
  %v6985 = vpack.c.b16 %v5617, %v5615
  %v6986 = vpack.c.b16 %v5620, %v5618
  %v6987 = vpack.c.b16 %v5621, %v5619
  %v6988 = vpack.c.b16 %v5624, %v5622
  %v6989 = vpack.c.b16 %v5625, %v5623
  %v6990 = vpack.c.b16 %v5628, %v5626
  %v6991 = vpack.c.b16 %v5629, %v5627
  %v6992 = vpack.c.b16 %v5632, %v5630
  %v6993 = vpack.c.b16 %v5633, %v5631
  %v6994 = vpack.c.b16 %v5636, %v5634
  %v6995 = vpack.c.b16 %v5637, %v5635
  %v6996 = vpack.c.b16 %v5640, %v5638
  %v6997 = vpack.c.b16 %v5641, %v5639
  %v6998 = vpack.c.b16 %v5644, %v5642
  %v6999 = vpack.c.b16 %v5645, %v5643
  %v7000 = vpack.c.b16 %v5648, %v5646
  %v7001 = vpack.c.b16 %v5649, %v5647
  %v7002 = vpack.c.b16 %v5652, %v5650
  %v7003 = vpack.c.b16 %v5653, %v5651
  %v7004 = vpack.c.b16 %v5656, %v5654
  %v7005 = vpack.c.b16 %v5657, %v5655
  %v7006 = vpack.c.b16 %v5660, %v5658
  %v7007 = vpack.c.b16 %v5661, %v5659
  %v7008 = vpack.c.b16 %v5664, %v5662
  %v7009 = vpack.c.b16 %v5665, %v5663
  %v7010 = vpack.c.b16 %v5668, %v5666
  %v7011 = vpack.c.b16 %v5669, %v5667
  %v7012 = vpack.c.b16 %v5672, %v5670
  %v7013 = vpack.c.b16 %v5673, %v5671
  %v7014 = vpack.c.b16 %v5676, %v5674
  %v7015 = vpack.c.b16 %v5677, %v5675
  %v7016 = vpack.c.b16 %v5680, %v5678
  %v7017 = vpack.c.b16 %v5681, %v5679
  %v7018 = vpack.c.b16 %v5684, %v5682
  %v7019 = vpack.c.b16 %v5685, %v5683
  %v7020 = vpack.c.b16 %v5688, %v5686
  %v7021 = vpack.c.b16 %v5689, %v5687
  %v7022 = vpack.c.b16 %v5692, %v5690
  %v7023 = vpack.c.b16 %v5693, %v5691
  %v7024 = vpack.c.b16 %v5696, %v5694
  %v7025 = vpack.c.b16 %v5697, %v5695
  %v7026 = vpack.c.b16 %v5700, %v5698
  %v7027 = vpack.c.b16 %v5701, %v5699
  %v7028 = vpack.c.b16 %v5704, %v5702
  %v7029 = vpack.c.b16 %v5705, %v5703
  %v7030 = vpack.c.b16 %v5708, %v5706
  %v7031 = vpack.c.b16 %v5709, %v5707
  %v7032 = vpack.c.b16 %v5712, %v5710
  %v7033 = vpack.c.b16 %v5713, %v5711
  %v7034 = vpack.c.b16 %v5716, %v5714
  %v7035 = vpack.c.b16 %v5717, %v5715
  %v7036 = vpack.c.b16 %v5720, %v5718
  %v7037 = vpack.c.b16 %v5721, %v5719
  %v7038 = vpack.c.b16 %v5724, %v5722
  %v7039 = vpack.c.b16 %v5725, %v5723
  %v7040 = vpack.c.b16 %v5728, %v5726
  %v7041 = vpack.c.b16 %v5729, %v5727
  %v7042 = vpack.c.b16 %v5732, %v5730
  %v7043 = vpack.c.b16 %v5733, %v5731
  %v7044 = vpack.c.b16 %v5736, %v5734
  %v7045 = vpack.c.b16 %v5737, %v5735
  %v7046 = vpack.c.b16 %v5740, %v5738
  %v7047 = vpack.c.b16 %v5741, %v5739
  %v7048 = vpack.c.b16 %v5744, %v5742
  %v7049 = vpack.c.b16 %v5745, %v5743
  %v7050 = vpack.c.b16 %v5748, %v5746
  %v7051 = vpack.c.b16 %v5749, %v5747
  %v7052 = vpack.c.b16 %v5752, %v5750
  %v7053 = vpack.c.b16 %v5753, %v5751
  %v7054 = vpack.c.b16 %v5756, %v5754
  %v7055 = vpack.c.b16 %v5757, %v5755
  %v7056 = vpack.c.b16 %v5760, %v5758
  %v7057 = vpack.c.b16 %v5761, %v5759
  %8354 = vmatprep.subr.bf16.mxu0 %v5763
  %8355 = vmatpush1.bf16.msra.mxu0 %v5762
  %8356 = vmatprep.subr.bf16.mxu0 %v5765
  %8357 = vmatpush1.bf16.msra.mxu0 %v5764
  %8358 = vmatprep.subr.bf16.mxu0 %v5767
  %8359 = vmatpush1.bf16.msra.mxu0 %v5766
  %8360 = vmatprep.subr.bf16.mxu0 %v5769
  %8361 = vmatpush1.bf16.msra.mxu0 %v5768
  %8362 = vmatprep.subr.bf16.mxu0 %v5771
  %8363 = vmatpush1.bf16.msra.mxu0 %v5770
  %8364 = vmatprep.subr.bf16.mxu0 %v5773
  %8365 = vmatpush1.bf16.msra.mxu0 %v5772
  %8366 = vmatprep.subr.bf16.mxu0 %v5775
  %8367 = vmatpush1.bf16.msra.mxu0 %v5774
  %8368 = vmatprep.subr.bf16.mxu0 %v5777
  %8369 = vmatpush1.bf16.msra.mxu0 %v5776
  %8370 = vmatprep.subr.bf16.mxu0 %v5779
  %8371 = vmatpush1.bf16.msra.mxu0 %v5778
  %8372 = vmatprep.subr.bf16.mxu0 %v5781
  %8373 = vmatpush1.bf16.msra.mxu0 %v5780
  %8374 = vmatprep.subr.bf16.mxu0 %v5783
  %8375 = vmatpush1.bf16.msra.mxu0 %v5782
  %8376 = vmatprep.subr.bf16.mxu0 %v5785
  %8377 = vmatpush1.bf16.msra.mxu0 %v5784
  %8378 = vmatprep.subr.bf16.mxu0 %v5787
  %8379 = vmatpush1.bf16.msra.mxu0 %v5786
  %8380 = vmatprep.subr.bf16.mxu0 %v5789
  %8381 = vmatpush1.bf16.msra.mxu0 %v5788
  %8382 = vmatprep.subr.bf16.mxu0 %v5791
  %8383 = vmatpush1.bf16.msra.mxu0 %v5790
  %8384 = vmatprep.subr.bf16.mxu0 %v5793
  %8385 = vmatpush1.bf16.msra.mxu0 %v5792
  %8386 = vmatprep.mubr.bf16.mxu0 %v1782
  %8387 = vmatmul.mubr.bf16.gmra.mrb[0].mxu0 %v1781
  %v8388 = vpop.f32.mrb[0].mxu0
  %v8389 = vadd.f32 %v1867, %v8388
  %v8390 = vpop.f32.mrb[0].mxu0
  %v8391 = vadd.f32 %v1871, %v8390
  %v8392 = vpop.f32.mrb[0].mxu0
  %v8393 = vpop.f32.mrb[0].mxu0
  %8394 = vdwg.mxu0
  %8395 = vmatprep.subr.bf16.mxu0 %v5795
  %8396 = vmatpush1.bf16.msra.mxu0 %v5794
  %8397 = vmatprep.subr.bf16.mxu0 %v5797
  %8398 = vmatpush1.bf16.msra.mxu0 %v5796
  %8399 = vmatprep.subr.bf16.mxu0 %v5799
  %8400 = vmatpush1.bf16.msra.mxu0 %v5798
  %8401 = vmatprep.subr.bf16.mxu0 %v5801
  %8402 = vmatpush1.bf16.msra.mxu0 %v5800
  %8403 = vmatprep.subr.bf16.mxu0 %v5803
  %8404 = vmatpush1.bf16.msra.mxu0 %v5802
  %8405 = vmatprep.subr.bf16.mxu0 %v5805
  %8406 = vmatpush1.bf16.msra.mxu0 %v5804
  %8407 = vmatprep.subr.bf16.mxu0 %v5807
  %8408 = vmatpush1.bf16.msra.mxu0 %v5806
  %8409 = vmatprep.subr.bf16.mxu0 %v5809
  %8410 = vmatpush1.bf16.msra.mxu0 %v5808
  %8411 = vmatprep.subr.bf16.mxu0 %v5811
  %8412 = vmatpush1.bf16.msra.mxu0 %v5810
  %8413 = vmatprep.subr.bf16.mxu0 %v5813
  %8414 = vmatpush1.bf16.msra.mxu0 %v5812
  %8415 = vmatprep.subr.bf16.mxu0 %v5815
  %8416 = vmatpush1.bf16.msra.mxu0 %v5814
  %8417 = vmatprep.subr.bf16.mxu0 %v5817
  %8418 = vmatpush1.bf16.msra.mxu0 %v5816
  %8419 = vmatprep.subr.bf16.mxu0 %v5819
  %8420 = vmatpush1.bf16.msra.mxu0 %v5818
  %8421 = vmatprep.subr.bf16.mxu0 %v5821
  %8422 = vmatpush1.bf16.msra.mxu0 %v5820
  %8423 = vmatprep.subr.bf16.mxu0 %v5823
  %8424 = vmatpush1.bf16.msra.mxu0 %v5822
  %8425 = vmatprep.subr.bf16.mxu0 %v5825
  %8426 = vmatpush1.bf16.msra.mxu0 %v5824
  %8427 = vmatprep.mubr.bf16.mxu0 %v1784
  %8428 = vmatmul.mubr.bf16.gmra.mrb[0].mxu0 %v1783
  %v8429 = vpop.f32.mrb[0].mxu0
  %v8430 = vadd.f32 %v8389, %v8429
  %v8431 = vpop.f32.mrb[0].mxu0
  %v8432 = vadd.f32 %v8391, %v8431
  %v8433 = vpop.f32.mrb[0].mxu0
  %v8434 = vpop.f32.mrb[0].mxu0
  %8435 = vdwg.mxu0
  %8436 = vmatprep.subr.bf16.mxu0 %v5827
  %8437 = vmatpush1.bf16.msra.mxu0 %v5826
  %8438 = vmatprep.subr.bf16.mxu0 %v5829
  %8439 = vmatpush1.bf16.msra.mxu0 %v5828
  %8440 = vmatprep.subr.bf16.mxu0 %v5831
  %8441 = vmatpush1.bf16.msra.mxu0 %v5830
  %8442 = vmatprep.subr.bf16.mxu0 %v5833
  %8443 = vmatpush1.bf16.msra.mxu0 %v5832
  %8444 = vmatprep.subr.bf16.mxu0 %v5835
  %8445 = vmatpush1.bf16.msra.mxu0 %v5834
  %8446 = vmatprep.subr.bf16.mxu0 %v5837
  %8447 = vmatpush1.bf16.msra.mxu0 %v5836
  %8448 = vmatprep.subr.bf16.mxu0 %v5839
  %8449 = vmatpush1.bf16.msra.mxu0 %v5838
  %8450 = vmatprep.subr.bf16.mxu0 %v5841
  %8451 = vmatpush1.bf16.msra.mxu0 %v5840
  %8452 = vmatprep.subr.bf16.mxu0 %v5843
  %8453 = vmatpush1.bf16.msra.mxu0 %v5842
  %8454 = vmatprep.subr.bf16.mxu0 %v5845
  %8455 = vmatpush1.bf16.msra.mxu0 %v5844
  %8456 = vmatprep.subr.bf16.mxu0 %v5847
  %8457 = vmatpush1.bf16.msra.mxu0 %v5846
  %8458 = vmatprep.subr.bf16.mxu0 %v5849
  %8459 = vmatpush1.bf16.msra.mxu0 %v5848
  %8460 = vmatprep.subr.bf16.mxu0 %v5851
  %8461 = vmatpush1.bf16.msra.mxu0 %v5850
  %8462 = vmatprep.subr.bf16.mxu0 %v5853
  %8463 = vmatpush1.bf16.msra.mxu0 %v5852
  %8464 = vmatprep.subr.bf16.mxu0 %v5855
  %8465 = vmatpush1.bf16.msra.mxu0 %v5854
  %8466 = vmatprep.subr.bf16.mxu0 %v5857
  %8467 = vmatpush1.bf16.msra.mxu0 %v5856
  %8468 = vmatprep.mubr.bf16.mxu0 %v1786
  %8469 = vmatmul.mubr.bf16.gmra.mrb[0].mxu0 %v1785
  %v8470 = vpop.f32.mrb[0].mxu0
  %v8471 = vadd.f32 %v8430, %v8470
  %v8472 = vpop.f32.mrb[0].mxu0
  %v8473 = vadd.f32 %v8432, %v8472
  %v8474 = vpop.f32.mrb[0].mxu0
  %v8475 = vpop.f32.mrb[0].mxu0
  %8476 = vdwg.mxu0
  %8477 = vmatprep.subr.bf16.mxu0 %v5859
  %8478 = vmatpush1.bf16.msra.mxu0 %v5858
  %8479 = vmatprep.subr.bf16.mxu0 %v5861
  %8480 = vmatpush1.bf16.msra.mxu0 %v5860
  %8481 = vmatprep.subr.bf16.mxu0 %v5863
  %8482 = vmatpush1.bf16.msra.mxu0 %v5862
  %8483 = vmatprep.subr.bf16.mxu0 %v5865
  %8484 = vmatpush1.bf16.msra.mxu0 %v5864
  %8485 = vmatprep.subr.bf16.mxu0 %v5867
  %8486 = vmatpush1.bf16.msra.mxu0 %v5866
  %8487 = vmatprep.subr.bf16.mxu0 %v5869
  %8488 = vmatpush1.bf16.msra.mxu0 %v5868
  %8489 = vmatprep.subr.bf16.mxu0 %v5871
  %8490 = vmatpush1.bf16.msra.mxu0 %v5870
  %8491 = vmatprep.subr.bf16.mxu0 %v5873
  %8492 = vmatpush1.bf16.msra.mxu0 %v5872
  %8493 = vmatprep.subr.bf16.mxu0 %v5875
  %8494 = vmatpush1.bf16.msra.mxu0 %v5874
  %8495 = vmatprep.subr.bf16.mxu0 %v5877
  %8496 = vmatpush1.bf16.msra.mxu0 %v5876
  %8497 = vmatprep.subr.bf16.mxu0 %v5879
  %8498 = vmatpush1.bf16.msra.mxu0 %v5878
  %8499 = vmatprep.subr.bf16.mxu0 %v5881
  %8500 = vmatpush1.bf16.msra.mxu0 %v5880
  %8501 = vmatprep.subr.bf16.mxu0 %v5883
  %8502 = vmatpush1.bf16.msra.mxu0 %v5882
  %8503 = vmatprep.subr.bf16.mxu0 %v5885
  %8504 = vmatpush1.bf16.msra.mxu0 %v5884
  %8505 = vmatprep.subr.bf16.mxu0 %v5887
  %8506 = vmatpush1.bf16.msra.mxu0 %v5886
  %8507 = vmatprep.subr.bf16.mxu0 %v5889
  %8508 = vmatpush1.bf16.msra.mxu0 %v5888
  %8509 = vmatprep.mubr.bf16.mxu0 %v1788
  %8510 = vmatmul.mubr.bf16.gmra.mrb[0].mxu0 %v1787
  %v8511 = vpop.f32.mrb[0].mxu0
  %v8512 = vadd.f32 %v8471, %v8511
  %v8513 = vpop.f32.mrb[0].mxu0
  %v8514 = vadd.f32 %v8473, %v8513
  %v8515 = vpop.f32.mrb[0].mxu0
  %v8516 = vpop.f32.mrb[0].mxu0
  %8517 = vdwg.mxu0
  %8518 = vmatprep.subr.bf16.mxu0 %v5891
  %8519 = vmatpush1.bf16.msra.mxu0 %v5890
  %8520 = vmatprep.subr.bf16.mxu0 %v5893
  %8521 = vmatpush1.bf16.msra.mxu0 %v5892
  %8522 = vmatprep.subr.bf16.mxu0 %v5895
  %8523 = vmatpush1.bf16.msra.mxu0 %v5894
  %8524 = vmatprep.subr.bf16.mxu0 %v5897
  %8525 = vmatpush1.bf16.msra.mxu0 %v5896
  %8526 = vmatprep.subr.bf16.mxu0 %v5899
  %8527 = vmatpush1.bf16.msra.mxu0 %v5898
  %8528 = vmatprep.subr.bf16.mxu0 %v5901
  %8529 = vmatpush1.bf16.msra.mxu0 %v5900
  %8530 = vmatprep.subr.bf16.mxu0 %v5903
  %8531 = vmatpush1.bf16.msra.mxu0 %v5902
  %8532 = vmatprep.subr.bf16.mxu0 %v5905
  %8533 = vmatpush1.bf16.msra.mxu0 %v5904
  %8534 = vmatprep.subr.bf16.mxu0 %v5907
  %8535 = vmatpush1.bf16.msra.mxu0 %v5906
  %8536 = vmatprep.subr.bf16.mxu0 %v5909
  %8537 = vmatpush1.bf16.msra.mxu0 %v5908
  %8538 = vmatprep.subr.bf16.mxu0 %v5911
  %8539 = vmatpush1.bf16.msra.mxu0 %v5910
  %8540 = vmatprep.subr.bf16.mxu0 %v5913
  %8541 = vmatpush1.bf16.msra.mxu0 %v5912
  %8542 = vmatprep.subr.bf16.mxu0 %v5915
  %8543 = vmatpush1.bf16.msra.mxu0 %v5914
  %8544 = vmatprep.subr.bf16.mxu0 %v5917
  %8545 = vmatpush1.bf16.msra.mxu0 %v5916
  %8546 = vmatprep.subr.bf16.mxu0 %v5919
  %8547 = vmatpush1.bf16.msra.mxu0 %v5918
  %8548 = vmatprep.subr.bf16.mxu0 %v5921
  %8549 = vmatpush1.bf16.msra.mxu0 %v5920
  %8550 = vmatprep.mubr.bf16.mxu0 %v1790
  %8551 = vmatmul.mubr.bf16.gmra.mrb[0].mxu0 %v1789
  %v8552 = vpop.f32.mrb[0].mxu0
  %v8553 = vadd.f32 %v8512, %v8552
  %v8554 = vpop.f32.mrb[0].mxu0
  %v8555 = vadd.f32 %v8514, %v8554
  %v8556 = vpop.f32.mrb[0].mxu0
  %v8557 = vpop.f32.mrb[0].mxu0
  %8558 = vdwg.mxu0
  %8559 = vmatprep.subr.bf16.mxu0 %v5923
  %8560 = vmatpush1.bf16.msra.mxu0 %v5922
  %8561 = vmatprep.subr.bf16.mxu0 %v5925
  %8562 = vmatpush1.bf16.msra.mxu0 %v5924
  %8563 = vmatprep.subr.bf16.mxu0 %v5927
  %8564 = vmatpush1.bf16.msra.mxu0 %v5926
  %8565 = vmatprep.subr.bf16.mxu0 %v5929
  %8566 = vmatpush1.bf16.msra.mxu0 %v5928
  %8567 = vmatprep.subr.bf16.mxu0 %v5931
  %8568 = vmatpush1.bf16.msra.mxu0 %v5930
  %8569 = vmatprep.subr.bf16.mxu0 %v5933
  %8570 = vmatpush1.bf16.msra.mxu0 %v5932
  %8571 = vmatprep.subr.bf16.mxu0 %v5935
  %8572 = vmatpush1.bf16.msra.mxu0 %v5934
  %8573 = vmatprep.subr.bf16.mxu0 %v5937
  %8574 = vmatpush1.bf16.msra.mxu0 %v5936
  %8575 = vmatprep.subr.bf16.mxu0 %v5939
  %8576 = vmatpush1.bf16.msra.mxu0 %v5938
  %8577 = vmatprep.subr.bf16.mxu0 %v5941
  %8578 = vmatpush1.bf16.msra.mxu0 %v5940
  %8579 = vmatprep.subr.bf16.mxu0 %v5943
  %8580 = vmatpush1.bf16.msra.mxu0 %v5942
  %8581 = vmatprep.subr.bf16.mxu0 %v5945
  %8582 = vmatpush1.bf16.msra.mxu0 %v5944
  %8583 = vmatprep.subr.bf16.mxu0 %v5947
  %8584 = vmatpush1.bf16.msra.mxu0 %v5946
  %8585 = vmatprep.subr.bf16.mxu0 %v5949
  %8586 = vmatpush1.bf16.msra.mxu0 %v5948
  %8587 = vmatprep.subr.bf16.mxu0 %v5951
  %8588 = vmatpush1.bf16.msra.mxu0 %v5950
  %8589 = vmatprep.subr.bf16.mxu0 %v5953
  %8590 = vmatpush1.bf16.msra.mxu0 %v5952
  %8591 = vmatprep.mubr.bf16.mxu0 %v1792
  %8592 = vmatmul.mubr.bf16.gmra.mrb[0].mxu0 %v1791
  %v8593 = vpop.f32.mrb[0].mxu0
  %v8594 = vadd.f32 %v8553, %v8593
  %v8595 = vpop.f32.mrb[0].mxu0
  %v8596 = vadd.f32 %v8555, %v8595
  %v8597 = vpop.f32.mrb[0].mxu0
  %v8598 = vpop.f32.mrb[0].mxu0
  %8599 = vdwg.mxu0
  %8600 = vmatprep.subr.bf16.mxu0 %v5955
  %8601 = vmatpush1.bf16.msra.mxu0 %v5954
  %8602 = vmatprep.subr.bf16.mxu0 %v5957
  %8603 = vmatpush1.bf16.msra.mxu0 %v5956
  %8604 = vmatprep.subr.bf16.mxu0 %v5959
  %8605 = vmatpush1.bf16.msra.mxu0 %v5958
  %8606 = vmatprep.subr.bf16.mxu0 %v5961
  %8607 = vmatpush1.bf16.msra.mxu0 %v5960
  %8608 = vmatprep.subr.bf16.mxu0 %v5963
  %8609 = vmatpush1.bf16.msra.mxu0 %v5962
  %8610 = vmatprep.subr.bf16.mxu0 %v5965
  %8611 = vmatpush1.bf16.msra.mxu0 %v5964
  %8612 = vmatprep.subr.bf16.mxu0 %v5967
  %8613 = vmatpush1.bf16.msra.mxu0 %v5966
  %8614 = vmatprep.subr.bf16.mxu0 %v5969
  %8615 = vmatpush1.bf16.msra.mxu0 %v5968
  %8616 = vmatprep.subr.bf16.mxu0 %v5971
  %8617 = vmatpush1.bf16.msra.mxu0 %v5970
  %8618 = vmatprep.subr.bf16.mxu0 %v5973
  %8619 = vmatpush1.bf16.msra.mxu0 %v5972
  %8620 = vmatprep.subr.bf16.mxu0 %v5975
  %8621 = vmatpush1.bf16.msra.mxu0 %v5974
  %8622 = vmatprep.subr.bf16.mxu0 %v5977
  %8623 = vmatpush1.bf16.msra.mxu0 %v5976
  %8624 = vmatprep.subr.bf16.mxu0 %v5979
  %8625 = vmatpush1.bf16.msra.mxu0 %v5978
  %8626 = vmatprep.subr.bf16.mxu0 %v5981
  %8627 = vmatpush1.bf16.msra.mxu0 %v5980
  %8628 = vmatprep.subr.bf16.mxu0 %v5983
  %8629 = vmatpush1.bf16.msra.mxu0 %v5982
  %8630 = vmatprep.subr.bf16.mxu0 %v5985
  %8631 = vmatpush1.bf16.msra.mxu0 %v5984
  %8632 = vmatprep.mubr.bf16.mxu0 %v1794
  %8633 = vmatmul.mubr.bf16.gmra.mrb[0].mxu0 %v1793
  %v8634 = vpop.f32.mrb[0].mxu0
  %v8635 = vadd.f32 %v8594, %v8634
  %v8636 = vpop.f32.mrb[0].mxu0
  %v8637 = vadd.f32 %v8596, %v8636
  %v8638 = vpop.f32.mrb[0].mxu0
  %v8639 = vpop.f32.mrb[0].mxu0
  %8640 = vdwg.mxu0
  %8641 = vmatprep.subr.bf16.mxu0 %v5987
  %8642 = vmatpush1.bf16.msra.mxu0 %v5986
  %8643 = vmatprep.subr.bf16.mxu0 %v5989
  %8644 = vmatpush1.bf16.msra.mxu0 %v5988
  %8645 = vmatprep.subr.bf16.mxu0 %v5991
  %8646 = vmatpush1.bf16.msra.mxu0 %v5990
  %8647 = vmatprep.subr.bf16.mxu0 %v5993
  %8648 = vmatpush1.bf16.msra.mxu0 %v5992
  %8649 = vmatprep.subr.bf16.mxu0 %v5995
  %8650 = vmatpush1.bf16.msra.mxu0 %v5994
  %8651 = vmatprep.subr.bf16.mxu0 %v5997
  %8652 = vmatpush1.bf16.msra.mxu0 %v5996
  %8653 = vmatprep.subr.bf16.mxu0 %v5999
  %8654 = vmatpush1.bf16.msra.mxu0 %v5998
  %8655 = vmatprep.subr.bf16.mxu0 %v6001
  %8656 = vmatpush1.bf16.msra.mxu0 %v6000
  %8657 = vmatprep.subr.bf16.mxu0 %v6003
  %8658 = vmatpush1.bf16.msra.mxu0 %v6002
  %8659 = vmatprep.subr.bf16.mxu0 %v6005
  %8660 = vmatpush1.bf16.msra.mxu0 %v6004
  %8661 = vmatprep.subr.bf16.mxu0 %v6007
  %8662 = vmatpush1.bf16.msra.mxu0 %v6006
  %8663 = vmatprep.subr.bf16.mxu0 %v6009
  %8664 = vmatpush1.bf16.msra.mxu0 %v6008
  %8665 = vmatprep.subr.bf16.mxu0 %v6011
  %8666 = vmatpush1.bf16.msra.mxu0 %v6010
  %8667 = vmatprep.subr.bf16.mxu0 %v6013
  %8668 = vmatpush1.bf16.msra.mxu0 %v6012
  %8669 = vmatprep.subr.bf16.mxu0 %v6015
  %8670 = vmatpush1.bf16.msra.mxu0 %v6014
  %8671 = vmatprep.subr.bf16.mxu0 %v6017
  %8672 = vmatpush1.bf16.msra.mxu0 %v6016
  %8673 = vmatprep.mubr.bf16.mxu0 %v1796
  %8674 = vmatmul.mubr.bf16.gmra.mrb[0].mxu0 %v1795
  %v8675 = vpop.f32.mrb[0].mxu0
  %v8676 = vadd.f32 %v8635, %v8675
  %v8677 = vpop.f32.mrb[0].mxu0
  %v8678 = vadd.f32 %v8637, %v8677
  %v8679 = vpop.f32.mrb[0].mxu0
  %v8680 = vpop.f32.mrb[0].mxu0
  %8681 = vdwg.mxu0
  %8682 = vmatprep.subr.bf16.mxu0 %v6019
  %8683 = vmatpush1.bf16.msra.mxu0 %v6018
  %8684 = vmatprep.subr.bf16.mxu0 %v6021
  %8685 = vmatpush1.bf16.msra.mxu0 %v6020
  %8686 = vmatprep.subr.bf16.mxu0 %v6023
  %8687 = vmatpush1.bf16.msra.mxu0 %v6022
  %8688 = vmatprep.subr.bf16.mxu0 %v6025
  %8689 = vmatpush1.bf16.msra.mxu0 %v6024
  %8690 = vmatprep.subr.bf16.mxu0 %v6027
  %8691 = vmatpush1.bf16.msra.mxu0 %v6026
  %8692 = vmatprep.subr.bf16.mxu0 %v6029
  %8693 = vmatpush1.bf16.msra.mxu0 %v6028
  %8694 = vmatprep.subr.bf16.mxu0 %v6031
  %8695 = vmatpush1.bf16.msra.mxu0 %v6030
  %8696 = vmatprep.subr.bf16.mxu0 %v6033
  %8697 = vmatpush1.bf16.msra.mxu0 %v6032
  %8698 = vmatprep.subr.bf16.mxu0 %v6035
  %8699 = vmatpush1.bf16.msra.mxu0 %v6034
  %8700 = vmatprep.subr.bf16.mxu0 %v6037
  %8701 = vmatpush1.bf16.msra.mxu0 %v6036
  %8702 = vmatprep.subr.bf16.mxu0 %v6039
  %8703 = vmatpush1.bf16.msra.mxu0 %v6038
  %8704 = vmatprep.subr.bf16.mxu0 %v6041
  %8705 = vmatpush1.bf16.msra.mxu0 %v6040
  %8706 = vmatprep.subr.bf16.mxu0 %v6043
  %8707 = vmatpush1.bf16.msra.mxu0 %v6042
  %8708 = vmatprep.subr.bf16.mxu0 %v6045
  %8709 = vmatpush1.bf16.msra.mxu0 %v6044
  %8710 = vmatprep.subr.bf16.mxu0 %v6047
  %8711 = vmatpush1.bf16.msra.mxu0 %v6046
  %8712 = vmatprep.subr.bf16.mxu0 %v6049
  %8713 = vmatpush1.bf16.msra.mxu0 %v6048
  %8714 = vmatprep.mubr.bf16.mxu0 %v1798
  %8715 = vmatmul.mubr.bf16.gmra.mrb[0].mxu0 %v1797
  %v8716 = vpop.f32.mrb[0].mxu0
  %v8717 = vadd.f32 %v8676, %v8716
  %v8718 = vpop.f32.mrb[0].mxu0
  %v8719 = vadd.f32 %v8678, %v8718
  %v8720 = vpop.f32.mrb[0].mxu0
  %v8721 = vpop.f32.mrb[0].mxu0
  %8722 = vdwg.mxu0
  %8723 = vmatprep.subr.bf16.mxu0 %v6051
  %8724 = vmatpush1.bf16.msra.mxu0 %v6050
  %8725 = vmatprep.subr.bf16.mxu0 %v6053
  %8726 = vmatpush1.bf16.msra.mxu0 %v6052
  %8727 = vmatprep.subr.bf16.mxu0 %v6055
  %8728 = vmatpush1.bf16.msra.mxu0 %v6054
  %8729 = vmatprep.subr.bf16.mxu0 %v6057
  %8730 = vmatpush1.bf16.msra.mxu0 %v6056
  %8731 = vmatprep.subr.bf16.mxu0 %v6059
  %8732 = vmatpush1.bf16.msra.mxu0 %v6058
  %8733 = vmatprep.subr.bf16.mxu0 %v6061
  %8734 = vmatpush1.bf16.msra.mxu0 %v6060
  %8735 = vmatprep.subr.bf16.mxu0 %v6063
  %8736 = vmatpush1.bf16.msra.mxu0 %v6062
  %8737 = vmatprep.subr.bf16.mxu0 %v6065
  %8738 = vmatpush1.bf16.msra.mxu0 %v6064
  %8739 = vmatprep.subr.bf16.mxu0 %v6067
  %8740 = vmatpush1.bf16.msra.mxu0 %v6066
  %8741 = vmatprep.subr.bf16.mxu0 %v6069
  %8742 = vmatpush1.bf16.msra.mxu0 %v6068
  %8743 = vmatprep.subr.bf16.mxu0 %v6071
  %8744 = vmatpush1.bf16.msra.mxu0 %v6070
  %8745 = vmatprep.subr.bf16.mxu0 %v6073
  %8746 = vmatpush1.bf16.msra.mxu0 %v6072
  %8747 = vmatprep.subr.bf16.mxu0 %v6075
  %8748 = vmatpush1.bf16.msra.mxu0 %v6074
  %8749 = vmatprep.subr.bf16.mxu0 %v6077
  %8750 = vmatpush1.bf16.msra.mxu0 %v6076
  %8751 = vmatprep.subr.bf16.mxu0 %v6079
  %8752 = vmatpush1.bf16.msra.mxu0 %v6078
  %8753 = vmatprep.subr.bf16.mxu0 %v6081
  %8754 = vmatpush1.bf16.msra.mxu0 %v6080
  %8755 = vmatprep.mubr.bf16.mxu0 %v1800
  %8756 = vmatmul.mubr.bf16.gmra.mrb[0].mxu0 %v1799
  %v8757 = vpop.f32.mrb[0].mxu0
  %v8758 = vadd.f32 %v8717, %v8757
  %v8759 = vpop.f32.mrb[0].mxu0
  %v8760 = vadd.f32 %v8719, %v8759
  %v8761 = vpop.f32.mrb[0].mxu0
  %v8762 = vpop.f32.mrb[0].mxu0
  %8763 = vdwg.mxu0
  %8764 = vmatprep.subr.bf16.mxu0 %v6083
  %8765 = vmatpush1.bf16.msra.mxu0 %v6082
  %8766 = vmatprep.subr.bf16.mxu0 %v6085
  %8767 = vmatpush1.bf16.msra.mxu0 %v6084
  %8768 = vmatprep.subr.bf16.mxu0 %v6087
  %8769 = vmatpush1.bf16.msra.mxu0 %v6086
  %8770 = vmatprep.subr.bf16.mxu0 %v6089
  %8771 = vmatpush1.bf16.msra.mxu0 %v6088
  %8772 = vmatprep.subr.bf16.mxu0 %v6091
  %8773 = vmatpush1.bf16.msra.mxu0 %v6090
  %8774 = vmatprep.subr.bf16.mxu0 %v6093
  %8775 = vmatpush1.bf16.msra.mxu0 %v6092
  %8776 = vmatprep.subr.bf16.mxu0 %v6095
  %8777 = vmatpush1.bf16.msra.mxu0 %v6094
  %8778 = vmatprep.subr.bf16.mxu0 %v6097
  %8779 = vmatpush1.bf16.msra.mxu0 %v6096
  %8780 = vmatprep.subr.bf16.mxu0 %v6099
  %8781 = vmatpush1.bf16.msra.mxu0 %v6098
  %8782 = vmatprep.subr.bf16.mxu0 %v6101
  %8783 = vmatpush1.bf16.msra.mxu0 %v6100
  %8784 = vmatprep.subr.bf16.mxu0 %v6103
  %8785 = vmatpush1.bf16.msra.mxu0 %v6102
  %8786 = vmatprep.subr.bf16.mxu0 %v6105
  %8787 = vmatpush1.bf16.msra.mxu0 %v6104
  %8788 = vmatprep.subr.bf16.mxu0 %v6107
  %8789 = vmatpush1.bf16.msra.mxu0 %v6106
  %8790 = vmatprep.subr.bf16.mxu0 %v6109
  %8791 = vmatpush1.bf16.msra.mxu0 %v6108
  %8792 = vmatprep.subr.bf16.mxu0 %v6111
  %8793 = vmatpush1.bf16.msra.mxu0 %v6110
  %8794 = vmatprep.subr.bf16.mxu0 %v6113
  %8795 = vmatpush1.bf16.msra.mxu0 %v6112
  %8796 = vmatprep.mubr.bf16.mxu0 %v1802
  %8797 = vmatmul.mubr.bf16.gmra.mrb[0].mxu0 %v1801
  %v8798 = vpop.f32.mrb[0].mxu0
  %v8799 = vadd.f32 %v8758, %v8798
  %v8800 = vpop.f32.mrb[0].mxu0
  %v8801 = vadd.f32 %v8760, %v8800
  %v8802 = vpop.f32.mrb[0].mxu0
  %v8803 = vpop.f32.mrb[0].mxu0
  %8804 = vdwg.mxu0
  %8805 = vmatprep.subr.bf16.mxu0 %v6115
  %8806 = vmatpush1.bf16.msra.mxu0 %v6114
  %8807 = vmatprep.subr.bf16.mxu0 %v6117
  %8808 = vmatpush1.bf16.msra.mxu0 %v6116
  %8809 = vmatprep.subr.bf16.mxu0 %v6119
  %8810 = vmatpush1.bf16.msra.mxu0 %v6118
  %8811 = vmatprep.subr.bf16.mxu0 %v6121
  %8812 = vmatpush1.bf16.msra.mxu0 %v6120
  %8813 = vmatprep.subr.bf16.mxu0 %v6123
  %8814 = vmatpush1.bf16.msra.mxu0 %v6122
  %8815 = vmatprep.subr.bf16.mxu0 %v6125
  %8816 = vmatpush1.bf16.msra.mxu0 %v6124
  %8817 = vmatprep.subr.bf16.mxu0 %v6127
  %8818 = vmatpush1.bf16.msra.mxu0 %v6126
  %8819 = vmatprep.subr.bf16.mxu0 %v6129
  %8820 = vmatpush1.bf16.msra.mxu0 %v6128
  %8821 = vmatprep.subr.bf16.mxu0 %v6131
  %8822 = vmatpush1.bf16.msra.mxu0 %v6130
  %8823 = vmatprep.subr.bf16.mxu0 %v6133
  %8824 = vmatpush1.bf16.msra.mxu0 %v6132
  %8825 = vmatprep.subr.bf16.mxu0 %v6135
  %8826 = vmatpush1.bf16.msra.mxu0 %v6134
  %8827 = vmatprep.subr.bf16.mxu0 %v6137
  %8828 = vmatpush1.bf16.msra.mxu0 %v6136
  %8829 = vmatprep.subr.bf16.mxu0 %v6139
  %8830 = vmatpush1.bf16.msra.mxu0 %v6138
  %8831 = vmatprep.subr.bf16.mxu0 %v6141
  %8832 = vmatpush1.bf16.msra.mxu0 %v6140
  %8833 = vmatprep.subr.bf16.mxu0 %v6143
  %8834 = vmatpush1.bf16.msra.mxu0 %v6142
  %8835 = vmatprep.subr.bf16.mxu0 %v6145
  %8836 = vmatpush1.bf16.msra.mxu0 %v6144
  %8837 = vmatprep.mubr.bf16.mxu0 %v1804
  %8838 = vmatmul.mubr.bf16.gmra.mrb[0].mxu0 %v1803
  %v8839 = vpop.f32.mrb[0].mxu0
  %v8840 = vadd.f32 %v8799, %v8839
  %v8841 = vpop.f32.mrb[0].mxu0
  %v8842 = vadd.f32 %v8801, %v8841
  %v8843 = vpop.f32.mrb[0].mxu0
  %v8844 = vpop.f32.mrb[0].mxu0
  %8845 = vdwg.mxu0
  %8846 = vmatprep.subr.bf16.mxu0 %v6147
  %8847 = vmatpush1.bf16.msra.mxu0 %v6146
  %8848 = vmatprep.subr.bf16.mxu0 %v6149
  %8849 = vmatpush1.bf16.msra.mxu0 %v6148
  %8850 = vmatprep.subr.bf16.mxu0 %v6151
  %8851 = vmatpush1.bf16.msra.mxu0 %v6150
  %8852 = vmatprep.subr.bf16.mxu0 %v6153
  %8853 = vmatpush1.bf16.msra.mxu0 %v6152
  %8854 = vmatprep.subr.bf16.mxu0 %v6155
  %8855 = vmatpush1.bf16.msra.mxu0 %v6154
  %8856 = vmatprep.subr.bf16.mxu0 %v6157
  %8857 = vmatpush1.bf16.msra.mxu0 %v6156
  %8858 = vmatprep.subr.bf16.mxu0 %v6159
  %8859 = vmatpush1.bf16.msra.mxu0 %v6158
  %8860 = vmatprep.subr.bf16.mxu0 %v6161
  %8861 = vmatpush1.bf16.msra.mxu0 %v6160
  %8862 = vmatprep.subr.bf16.mxu0 %v6163
  %8863 = vmatpush1.bf16.msra.mxu0 %v6162
  %8864 = vmatprep.subr.bf16.mxu0 %v6165
  %8865 = vmatpush1.bf16.msra.mxu0 %v6164
  %8866 = vmatprep.subr.bf16.mxu0 %v6167
  %8867 = vmatpush1.bf16.msra.mxu0 %v6166
  %8868 = vmatprep.subr.bf16.mxu0 %v6169
  %8869 = vmatpush1.bf16.msra.mxu0 %v6168
  %8870 = vmatprep.subr.bf16.mxu0 %v6171
  %8871 = vmatpush1.bf16.msra.mxu0 %v6170
  %8872 = vmatprep.subr.bf16.mxu0 %v6173
  %8873 = vmatpush1.bf16.msra.mxu0 %v6172
  %8874 = vmatprep.subr.bf16.mxu0 %v6175
  %8875 = vmatpush1.bf16.msra.mxu0 %v6174
  %8876 = vmatprep.subr.bf16.mxu0 %v6177
  %8877 = vmatpush1.bf16.msra.mxu0 %v6176
  %8878 = vmatprep.mubr.bf16.mxu0 %v1806
  %8879 = vmatmul.mubr.bf16.gmra.mrb[0].mxu0 %v1805
  %v8880 = vpop.f32.mrb[0].mxu0
  %v8881 = vadd.f32 %v8840, %v8880
  %v8882 = vpop.f32.mrb[0].mxu0
  %v8883 = vadd.f32 %v8842, %v8882
  %v8884 = vpop.f32.mrb[0].mxu0
  %v8885 = vpop.f32.mrb[0].mxu0
  %8886 = vdwg.mxu0
  %8887 = vmatprep.subr.bf16.mxu0 %v6179
  %8888 = vmatpush1.bf16.msra.mxu0 %v6178
  %8889 = vmatprep.subr.bf16.mxu0 %v6181
  %8890 = vmatpush1.bf16.msra.mxu0 %v6180
  %8891 = vmatprep.subr.bf16.mxu0 %v6183
  %8892 = vmatpush1.bf16.msra.mxu0 %v6182
  %8893 = vmatprep.subr.bf16.mxu0 %v6185
  %8894 = vmatpush1.bf16.msra.mxu0 %v6184
  %8895 = vmatprep.subr.bf16.mxu0 %v6187
  %8896 = vmatpush1.bf16.msra.mxu0 %v6186
  %8897 = vmatprep.subr.bf16.mxu0 %v6189
  %8898 = vmatpush1.bf16.msra.mxu0 %v6188
  %8899 = vmatprep.subr.bf16.mxu0 %v6191
  %8900 = vmatpush1.bf16.msra.mxu0 %v6190
  %8901 = vmatprep.subr.bf16.mxu0 %v6193
  %8902 = vmatpush1.bf16.msra.mxu0 %v6192
  %8903 = vmatprep.subr.bf16.mxu0 %v6195
  %8904 = vmatpush1.bf16.msra.mxu0 %v6194
  %8905 = vmatprep.subr.bf16.mxu0 %v6197
  %8906 = vmatpush1.bf16.msra.mxu0 %v6196
  %8907 = vmatprep.subr.bf16.mxu0 %v6199
  %8908 = vmatpush1.bf16.msra.mxu0 %v6198
  %8909 = vmatprep.subr.bf16.mxu0 %v6201
  %8910 = vmatpush1.bf16.msra.mxu0 %v6200
  %8911 = vmatprep.subr.bf16.mxu0 %v6203
  %8912 = vmatpush1.bf16.msra.mxu0 %v6202
  %8913 = vmatprep.subr.bf16.mxu0 %v6205
  %8914 = vmatpush1.bf16.msra.mxu0 %v6204
  %8915 = vmatprep.subr.bf16.mxu0 %v6207
  %8916 = vmatpush1.bf16.msra.mxu0 %v6206
  %8917 = vmatprep.subr.bf16.mxu0 %v6209
  %8918 = vmatpush1.bf16.msra.mxu0 %v6208
  %8919 = vmatprep.mubr.bf16.mxu0 %v1808
  %8920 = vmatmul.mubr.bf16.gmra.mrb[0].mxu0 %v1807
  %v8921 = vpop.f32.mrb[0].mxu0
  %v8922 = vadd.f32 %v8881, %v8921
  %v8923 = vpop.f32.mrb[0].mxu0
  %v8924 = vadd.f32 %v8883, %v8923
  %v8925 = vpop.f32.mrb[0].mxu0
  %v8926 = vpop.f32.mrb[0].mxu0
  %8927 = vdwg.mxu0
  %8928 = vmatprep.subr.bf16.mxu0 %v6211
  %8929 = vmatpush1.bf16.msra.mxu0 %v6210
  %8930 = vmatprep.subr.bf16.mxu0 %v6213
  %8931 = vmatpush1.bf16.msra.mxu0 %v6212
  %8932 = vmatprep.subr.bf16.mxu0 %v6215
  %8933 = vmatpush1.bf16.msra.mxu0 %v6214
  %8934 = vmatprep.subr.bf16.mxu0 %v6217
  %8935 = vmatpush1.bf16.msra.mxu0 %v6216
  %8936 = vmatprep.subr.bf16.mxu0 %v6219
  %8937 = vmatpush1.bf16.msra.mxu0 %v6218
  %8938 = vmatprep.subr.bf16.mxu0 %v6221
  %8939 = vmatpush1.bf16.msra.mxu0 %v6220
  %8940 = vmatprep.subr.bf16.mxu0 %v6223
  %8941 = vmatpush1.bf16.msra.mxu0 %v6222
  %8942 = vmatprep.subr.bf16.mxu0 %v6225
  %8943 = vmatpush1.bf16.msra.mxu0 %v6224
  %8944 = vmatprep.subr.bf16.mxu0 %v6227
  %8945 = vmatpush1.bf16.msra.mxu0 %v6226
  %8946 = vmatprep.subr.bf16.mxu0 %v6229
  %8947 = vmatpush1.bf16.msra.mxu0 %v6228
  %8948 = vmatprep.subr.bf16.mxu0 %v6231
  %8949 = vmatpush1.bf16.msra.mxu0 %v6230
  %8950 = vmatprep.subr.bf16.mxu0 %v6233
  %8951 = vmatpush1.bf16.msra.mxu0 %v6232
  %8952 = vmatprep.subr.bf16.mxu0 %v6235
  %8953 = vmatpush1.bf16.msra.mxu0 %v6234
  %8954 = vmatprep.subr.bf16.mxu0 %v6237
  %8955 = vmatpush1.bf16.msra.mxu0 %v6236
  %8956 = vmatprep.subr.bf16.mxu0 %v6239
  %8957 = vmatpush1.bf16.msra.mxu0 %v6238
  %8958 = vmatprep.subr.bf16.mxu0 %v6241
  %8959 = vmatpush1.bf16.msra.mxu0 %v6240
  %8960 = vmatprep.mubr.bf16.mxu0 %v1810
  %8961 = vmatmul.mubr.bf16.gmra.mrb[0].mxu0 %v1809
  %v8962 = vpop.f32.mrb[0].mxu0
  %v8963 = vadd.f32 %v8922, %v8962
  %v8964 = vpop.f32.mrb[0].mxu0
  %v8965 = vadd.f32 %v8924, %v8964
  %v8966 = vpop.f32.mrb[0].mxu0
  %v8967 = vpop.f32.mrb[0].mxu0
  %8968 = vdwg.mxu0
  %8969 = vmatprep.subr.bf16.mxu0 %v6243
  %8970 = vmatpush1.bf16.msra.mxu0 %v6242
  %8971 = vmatprep.subr.bf16.mxu0 %v6245
  %8972 = vmatpush1.bf16.msra.mxu0 %v6244
  %8973 = vmatprep.subr.bf16.mxu0 %v6247
  %8974 = vmatpush1.bf16.msra.mxu0 %v6246
  %8975 = vmatprep.subr.bf16.mxu0 %v6249
  %8976 = vmatpush1.bf16.msra.mxu0 %v6248
  %8977 = vmatprep.subr.bf16.mxu0 %v6251
  %8978 = vmatpush1.bf16.msra.mxu0 %v6250
  %8979 = vmatprep.subr.bf16.mxu0 %v6253
  %8980 = vmatpush1.bf16.msra.mxu0 %v6252
  %8981 = vmatprep.subr.bf16.mxu0 %v6255
  %8982 = vmatpush1.bf16.msra.mxu0 %v6254
  %8983 = vmatprep.subr.bf16.mxu0 %v6257
  %8984 = vmatpush1.bf16.msra.mxu0 %v6256
  %8985 = vmatprep.subr.bf16.mxu0 %v6259
  %8986 = vmatpush1.bf16.msra.mxu0 %v6258
  %8987 = vmatprep.subr.bf16.mxu0 %v6261
  %8988 = vmatpush1.bf16.msra.mxu0 %v6260
  %8989 = vmatprep.subr.bf16.mxu0 %v6263
  %8990 = vmatpush1.bf16.msra.mxu0 %v6262
  %8991 = vmatprep.subr.bf16.mxu0 %v6265
  %8992 = vmatpush1.bf16.msra.mxu0 %v6264
  %8993 = vmatprep.subr.bf16.mxu0 %v6267
  %8994 = vmatpush1.bf16.msra.mxu0 %v6266
  %8995 = vmatprep.subr.bf16.mxu0 %v6269
  %8996 = vmatpush1.bf16.msra.mxu0 %v6268
  %8997 = vmatprep.subr.bf16.mxu0 %v6271
  %8998 = vmatpush1.bf16.msra.mxu0 %v6270
  %8999 = vmatprep.subr.bf16.mxu0 %v6273
  %9000 = vmatpush1.bf16.msra.mxu0 %v6272
  %9001 = vmatprep.mubr.bf16.mxu0 %v1812
  %9002 = vmatmul.mubr.bf16.gmra.mrb[0].mxu0 %v1811
  %v9003 = vpop.f32.mrb[0].mxu0
  %v9004 = vadd.f32 %v8963, %v9003
  %v9005 = vpop.f32.mrb[0].mxu0
  %v9006 = vadd.f32 %v8965, %v9005
  %v9007 = vpop.f32.mrb[0].mxu0
  %v9008 = vpop.f32.mrb[0].mxu0
  %9009 = vdwg.mxu0
  %9010 = vmatprep.subr.bf16.mxu0 %v6275
  %9011 = vmatpush1.bf16.msra.mxu0 %v6274
  %9012 = vmatprep.subr.bf16.mxu0 %v6277
  %9013 = vmatpush1.bf16.msra.mxu0 %v6276
  %9014 = vmatprep.subr.bf16.mxu0 %v6279
  %9015 = vmatpush1.bf16.msra.mxu0 %v6278
  %9016 = vmatprep.subr.bf16.mxu0 %v6281
  %9017 = vmatpush1.bf16.msra.mxu0 %v6280
  %9018 = vmatprep.subr.bf16.mxu0 %v6283
  %9019 = vmatpush1.bf16.msra.mxu0 %v6282
  %9020 = vmatprep.subr.bf16.mxu0 %v6285
  %9021 = vmatpush1.bf16.msra.mxu0 %v6284
  %9022 = vmatprep.subr.bf16.mxu0 %v6287
  %9023 = vmatpush1.bf16.msra.mxu0 %v6286
  %9024 = vmatprep.subr.bf16.mxu0 %v6289
  %9025 = vmatpush1.bf16.msra.mxu0 %v6288
  %9026 = vmatprep.subr.bf16.mxu0 %v6291
  %9027 = vmatpush1.bf16.msra.mxu0 %v6290
  %9028 = vmatprep.subr.bf16.mxu0 %v6293
  %9029 = vmatpush1.bf16.msra.mxu0 %v6292
  %9030 = vmatprep.subr.bf16.mxu0 %v6295
  %9031 = vmatpush1.bf16.msra.mxu0 %v6294
  %9032 = vmatprep.subr.bf16.mxu0 %v6297
  %9033 = vmatpush1.bf16.msra.mxu0 %v6296
  %9034 = vmatprep.subr.bf16.mxu0 %v6299
  %9035 = vmatpush1.bf16.msra.mxu0 %v6298
  %9036 = vmatprep.subr.bf16.mxu0 %v6301
  %9037 = vmatpush1.bf16.msra.mxu0 %v6300
  %9038 = vmatprep.subr.bf16.mxu0 %v6303
  %9039 = vmatpush1.bf16.msra.mxu0 %v6302
  %9040 = vmatprep.subr.bf16.mxu0 %v6305
  %9041 = vmatpush1.bf16.msra.mxu0 %v6304
  %9042 = vmatprep.mubr.bf16.mxu0 %v1814
  %9043 = vmatmul.mubr.bf16.gmra.mrb[0].mxu0 %v1813
  %v9044 = vpop.f32.mrb[0].mxu0
  %v9045 = vadd.f32 %v9004, %v9044
  %v9046 = vpop.f32.mrb[0].mxu0
  %v9047 = vadd.f32 %v9006, %v9046
  %v9048 = vpop.f32.mrb[0].mxu0
  %v9049 = vpop.f32.mrb[0].mxu0
  %9050 = vdwg.mxu0
  %9051 = vmatprep.subr.bf16.mxu0 %v6307
  %9052 = vmatpush1.bf16.msra.mxu0 %v6306
  %9053 = vmatprep.subr.bf16.mxu0 %v6309
  %9054 = vmatpush1.bf16.msra.mxu0 %v6308
  %9055 = vmatprep.subr.bf16.mxu0 %v6311
  %9056 = vmatpush1.bf16.msra.mxu0 %v6310
  %9057 = vmatprep.subr.bf16.mxu0 %v6313
  %9058 = vmatpush1.bf16.msra.mxu0 %v6312
  %9059 = vmatprep.subr.bf16.mxu0 %v6315
  %9060 = vmatpush1.bf16.msra.mxu0 %v6314
  %9061 = vmatprep.subr.bf16.mxu0 %v6317
  %9062 = vmatpush1.bf16.msra.mxu0 %v6316
  %9063 = vmatprep.subr.bf16.mxu0 %v6319
  %9064 = vmatpush1.bf16.msra.mxu0 %v6318
  %9065 = vmatprep.subr.bf16.mxu0 %v6321
  %9066 = vmatpush1.bf16.msra.mxu0 %v6320
  %9067 = vmatprep.subr.bf16.mxu0 %v6323
  %9068 = vmatpush1.bf16.msra.mxu0 %v6322
  %9069 = vmatprep.subr.bf16.mxu0 %v6325
  %9070 = vmatpush1.bf16.msra.mxu0 %v6324
  %9071 = vmatprep.subr.bf16.mxu0 %v6327
  %9072 = vmatpush1.bf16.msra.mxu0 %v6326
  %9073 = vmatprep.subr.bf16.mxu0 %v6329
  %9074 = vmatpush1.bf16.msra.mxu0 %v6328
  %9075 = vmatprep.subr.bf16.mxu0 %v6331
  %9076 = vmatpush1.bf16.msra.mxu0 %v6330
  %9077 = vmatprep.subr.bf16.mxu0 %v6333
  %9078 = vmatpush1.bf16.msra.mxu0 %v6332
  %9079 = vmatprep.subr.bf16.mxu0 %v6335
  %9080 = vmatpush1.bf16.msra.mxu0 %v6334
  %9081 = vmatprep.subr.bf16.mxu0 %v6337
  %9082 = vmatpush1.bf16.msra.mxu0 %v6336
  %9083 = vmatprep.mubr.bf16.mxu0 %v1816
  %9084 = vmatmul.mubr.bf16.gmra.mrb[0].mxu0 %v1815
  %v9085 = vpop.f32.mrb[0].mxu0
  %v9086 = vadd.f32 %v9045, %v9085
  %v9087 = vpop.f32.mrb[0].mxu0
  %v9088 = vadd.f32 %v9047, %v9087
  %v9089 = vpop.f32.mrb[0].mxu0
  %v9090 = vpop.f32.mrb[0].mxu0
  %9091 = vdwg.mxu0
  %9092 = vmatprep.subr.bf16.mxu0 %v6339
  %9093 = vmatpush1.bf16.msra.mxu0 %v6338
  %9094 = vmatprep.subr.bf16.mxu0 %v6341
  %9095 = vmatpush1.bf16.msra.mxu0 %v6340
  %9096 = vmatprep.subr.bf16.mxu0 %v6343
  %9097 = vmatpush1.bf16.msra.mxu0 %v6342
  %9098 = vmatprep.subr.bf16.mxu0 %v6345
  %9099 = vmatpush1.bf16.msra.mxu0 %v6344
  %9100 = vmatprep.subr.bf16.mxu0 %v6347
  %9101 = vmatpush1.bf16.msra.mxu0 %v6346
  %9102 = vmatprep.subr.bf16.mxu0 %v6349
  %9103 = vmatpush1.bf16.msra.mxu0 %v6348
  %9104 = vmatprep.subr.bf16.mxu0 %v6351
  %9105 = vmatpush1.bf16.msra.mxu0 %v6350
  %9106 = vmatprep.subr.bf16.mxu0 %v6353
  %9107 = vmatpush1.bf16.msra.mxu0 %v6352
  %9108 = vmatprep.subr.bf16.mxu0 %v6355
  %9109 = vmatpush1.bf16.msra.mxu0 %v6354
  %9110 = vmatprep.subr.bf16.mxu0 %v6357
  %9111 = vmatpush1.bf16.msra.mxu0 %v6356
  %9112 = vmatprep.subr.bf16.mxu0 %v6359
  %9113 = vmatpush1.bf16.msra.mxu0 %v6358
  %9114 = vmatprep.subr.bf16.mxu0 %v6361
  %9115 = vmatpush1.bf16.msra.mxu0 %v6360
  %9116 = vmatprep.subr.bf16.mxu0 %v6363
  %9117 = vmatpush1.bf16.msra.mxu0 %v6362
  %9118 = vmatprep.subr.bf16.mxu0 %v6365
  %9119 = vmatpush1.bf16.msra.mxu0 %v6364
  %9120 = vmatprep.subr.bf16.mxu0 %v6367
  %9121 = vmatpush1.bf16.msra.mxu0 %v6366
  %9122 = vmatprep.subr.bf16.mxu0 %v6369
  %9123 = vmatpush1.bf16.msra.mxu0 %v6368
  %9124 = vmatprep.mubr.bf16.mxu0 %v1818
  %9125 = vmatmul.mubr.bf16.gmra.mrb[0].mxu0 %v1817
  %v9126 = vpop.f32.mrb[0].mxu0
  %v9127 = vadd.f32 %v9086, %v9126
  %v9128 = vpop.f32.mrb[0].mxu0
  %v9129 = vadd.f32 %v9088, %v9128
  %v9130 = vpop.f32.mrb[0].mxu0
  %v9131 = vpop.f32.mrb[0].mxu0
  %9132 = vdwg.mxu0
  %9133 = vmatprep.subr.bf16.mxu0 %v6371
  %9134 = vmatpush1.bf16.msra.mxu0 %v6370
  %9135 = vmatprep.subr.bf16.mxu0 %v6373
  %9136 = vmatpush1.bf16.msra.mxu0 %v6372
  %9137 = vmatprep.subr.bf16.mxu0 %v6375
  %9138 = vmatpush1.bf16.msra.mxu0 %v6374
  %9139 = vmatprep.subr.bf16.mxu0 %v6377
  %9140 = vmatpush1.bf16.msra.mxu0 %v6376
  %9141 = vmatprep.subr.bf16.mxu0 %v6379
  %9142 = vmatpush1.bf16.msra.mxu0 %v6378
  %9143 = vmatprep.subr.bf16.mxu0 %v6381
  %9144 = vmatpush1.bf16.msra.mxu0 %v6380
  %9145 = vmatprep.subr.bf16.mxu0 %v6383
  %9146 = vmatpush1.bf16.msra.mxu0 %v6382
  %9147 = vmatprep.subr.bf16.mxu0 %v6385
  %9148 = vmatpush1.bf16.msra.mxu0 %v6384
  %9149 = vmatprep.subr.bf16.mxu0 %v6387
  %9150 = vmatpush1.bf16.msra.mxu0 %v6386
  %9151 = vmatprep.subr.bf16.mxu0 %v6389
  %9152 = vmatpush1.bf16.msra.mxu0 %v6388
  %9153 = vmatprep.subr.bf16.mxu0 %v6391
  %9154 = vmatpush1.bf16.msra.mxu0 %v6390
  %9155 = vmatprep.subr.bf16.mxu0 %v6393
  %9156 = vmatpush1.bf16.msra.mxu0 %v6392
  %9157 = vmatprep.subr.bf16.mxu0 %v6395
  %9158 = vmatpush1.bf16.msra.mxu0 %v6394
  %9159 = vmatprep.subr.bf16.mxu0 %v6397
  %9160 = vmatpush1.bf16.msra.mxu0 %v6396
  %9161 = vmatprep.subr.bf16.mxu0 %v6399
  %9162 = vmatpush1.bf16.msra.mxu0 %v6398
  %9163 = vmatprep.subr.bf16.mxu0 %v6401
  %9164 = vmatpush1.bf16.msra.mxu0 %v6400
  %9165 = vmatprep.mubr.bf16.mxu0 %v1820
  %9166 = vmatmul.mubr.bf16.gmra.mrb[0].mxu0 %v1819
  %v9167 = vpop.f32.mrb[0].mxu0
  %v9168 = vadd.f32 %v9127, %v9167
  %v9169 = vpop.f32.mrb[0].mxu0
  %v9170 = vadd.f32 %v9129, %v9169
  %v9171 = vpop.f32.mrb[0].mxu0
  %v9172 = vpop.f32.mrb[0].mxu0
  %9173 = vdwg.mxu0
  %9174 = vmatprep.subr.bf16.mxu0 %v6403
  %9175 = vmatpush1.bf16.msra.mxu0 %v6402
  %9176 = vmatprep.subr.bf16.mxu0 %v6405
  %9177 = vmatpush1.bf16.msra.mxu0 %v6404
  %9178 = vmatprep.subr.bf16.mxu0 %v6407
  %9179 = vmatpush1.bf16.msra.mxu0 %v6406
  %9180 = vmatprep.subr.bf16.mxu0 %v6409
  %9181 = vmatpush1.bf16.msra.mxu0 %v6408
  %9182 = vmatprep.subr.bf16.mxu0 %v6411
  %9183 = vmatpush1.bf16.msra.mxu0 %v6410
  %9184 = vmatprep.subr.bf16.mxu0 %v6413
  %9185 = vmatpush1.bf16.msra.mxu0 %v6412
  %9186 = vmatprep.subr.bf16.mxu0 %v6415
  %9187 = vmatpush1.bf16.msra.mxu0 %v6414
  %9188 = vmatprep.subr.bf16.mxu0 %v6417
  %9189 = vmatpush1.bf16.msra.mxu0 %v6416
  %9190 = vmatprep.subr.bf16.mxu0 %v6419
  %9191 = vmatpush1.bf16.msra.mxu0 %v6418
  %9192 = vmatprep.subr.bf16.mxu0 %v6421
  %9193 = vmatpush1.bf16.msra.mxu0 %v6420
  %9194 = vmatprep.subr.bf16.mxu0 %v6423
  %9195 = vmatpush1.bf16.msra.mxu0 %v6422
  %9196 = vmatprep.subr.bf16.mxu0 %v6425
  %9197 = vmatpush1.bf16.msra.mxu0 %v6424
  %9198 = vmatprep.subr.bf16.mxu0 %v6427
  %9199 = vmatpush1.bf16.msra.mxu0 %v6426
  %9200 = vmatprep.subr.bf16.mxu0 %v6429
  %9201 = vmatpush1.bf16.msra.mxu0 %v6428
  %9202 = vmatprep.subr.bf16.mxu0 %v6431
  %9203 = vmatpush1.bf16.msra.mxu0 %v6430
  %9204 = vmatprep.subr.bf16.mxu0 %v6433
  %9205 = vmatpush1.bf16.msra.mxu0 %v6432
  %9206 = vmatprep.mubr.bf16.mxu0 %v1822
  %9207 = vmatmul.mubr.bf16.gmra.mrb[0].mxu0 %v1821
  %v9208 = vpop.f32.mrb[0].mxu0
  %v9209 = vadd.f32 %v9168, %v9208
  %v9210 = vpop.f32.mrb[0].mxu0
  %v9211 = vadd.f32 %v9170, %v9210
  %v9212 = vpop.f32.mrb[0].mxu0
  %v9213 = vpop.f32.mrb[0].mxu0
  %9214 = vdwg.mxu0
  %9215 = vmatprep.subr.bf16.mxu0 %v6435
  %9216 = vmatpush1.bf16.msra.mxu0 %v6434
  %9217 = vmatprep.subr.bf16.mxu0 %v6437
  %9218 = vmatpush1.bf16.msra.mxu0 %v6436
  %9219 = vmatprep.subr.bf16.mxu0 %v6439
  %9220 = vmatpush1.bf16.msra.mxu0 %v6438
  %9221 = vmatprep.subr.bf16.mxu0 %v6441
  %9222 = vmatpush1.bf16.msra.mxu0 %v6440
  %9223 = vmatprep.subr.bf16.mxu0 %v6443
  %9224 = vmatpush1.bf16.msra.mxu0 %v6442
  %9225 = vmatprep.subr.bf16.mxu0 %v6445
  %9226 = vmatpush1.bf16.msra.mxu0 %v6444
  %9227 = vmatprep.subr.bf16.mxu0 %v6447
  %9228 = vmatpush1.bf16.msra.mxu0 %v6446
  %9229 = vmatprep.subr.bf16.mxu0 %v6449
  %9230 = vmatpush1.bf16.msra.mxu0 %v6448
  %9231 = vmatprep.subr.bf16.mxu0 %v6451
  %9232 = vmatpush1.bf16.msra.mxu0 %v6450
  %9233 = vmatprep.subr.bf16.mxu0 %v6453
  %9234 = vmatpush1.bf16.msra.mxu0 %v6452
  %9235 = vmatprep.subr.bf16.mxu0 %v6455
  %9236 = vmatpush1.bf16.msra.mxu0 %v6454
  %9237 = vmatprep.subr.bf16.mxu0 %v6457
  %9238 = vmatpush1.bf16.msra.mxu0 %v6456
  %9239 = vmatprep.subr.bf16.mxu0 %v6459
  %9240 = vmatpush1.bf16.msra.mxu0 %v6458
  %9241 = vmatprep.subr.bf16.mxu0 %v6461
  %9242 = vmatpush1.bf16.msra.mxu0 %v6460
  %9243 = vmatprep.subr.bf16.mxu0 %v6463
  %9244 = vmatpush1.bf16.msra.mxu0 %v6462
  %9245 = vmatprep.subr.bf16.mxu0 %v6465
  %9246 = vmatpush1.bf16.msra.mxu0 %v6464
  %9247 = vmatprep.mubr.bf16.mxu0 %v1824
  %9248 = vmatmul.mubr.bf16.gmra.mrb[0].mxu0 %v1823
  %v9249 = vpop.f32.mrb[0].mxu0
  %v9250 = vadd.f32 %v9209, %v9249
  %v9251 = vpop.f32.mrb[0].mxu0
  %v9252 = vadd.f32 %v9211, %v9251
  %v9253 = vpop.f32.mrb[0].mxu0
  %v9254 = vpop.f32.mrb[0].mxu0
  %9255 = vdwg.mxu0
  %9256 = vmatprep.subr.bf16.mxu0 %v6467
  %9257 = vmatpush1.bf16.msra.mxu0 %v6466
  %9258 = vmatprep.subr.bf16.mxu0 %v6469
  %9259 = vmatpush1.bf16.msra.mxu0 %v6468
  %9260 = vmatprep.subr.bf16.mxu0 %v6471
  %9261 = vmatpush1.bf16.msra.mxu0 %v6470
  %9262 = vmatprep.subr.bf16.mxu0 %v6473
  %9263 = vmatpush1.bf16.msra.mxu0 %v6472
  %9264 = vmatprep.subr.bf16.mxu0 %v6475
  %9265 = vmatpush1.bf16.msra.mxu0 %v6474
  %9266 = vmatprep.subr.bf16.mxu0 %v6477
  %9267 = vmatpush1.bf16.msra.mxu0 %v6476
  %9268 = vmatprep.subr.bf16.mxu0 %v6479
  %9269 = vmatpush1.bf16.msra.mxu0 %v6478
  %9270 = vmatprep.subr.bf16.mxu0 %v6481
  %9271 = vmatpush1.bf16.msra.mxu0 %v6480
  %9272 = vmatprep.subr.bf16.mxu0 %v6483
  %9273 = vmatpush1.bf16.msra.mxu0 %v6482
  %9274 = vmatprep.subr.bf16.mxu0 %v6485
  %9275 = vmatpush1.bf16.msra.mxu0 %v6484
  %9276 = vmatprep.subr.bf16.mxu0 %v6487
  %9277 = vmatpush1.bf16.msra.mxu0 %v6486
  %9278 = vmatprep.subr.bf16.mxu0 %v6489
  %9279 = vmatpush1.bf16.msra.mxu0 %v6488
  %9280 = vmatprep.subr.bf16.mxu0 %v6491
  %9281 = vmatpush1.bf16.msra.mxu0 %v6490
  %9282 = vmatprep.subr.bf16.mxu0 %v6493
  %9283 = vmatpush1.bf16.msra.mxu0 %v6492
  %9284 = vmatprep.subr.bf16.mxu0 %v6495
  %9285 = vmatpush1.bf16.msra.mxu0 %v6494
  %9286 = vmatprep.subr.bf16.mxu0 %v6497
  %9287 = vmatpush1.bf16.msra.mxu0 %v6496
  %9288 = vmatprep.mubr.bf16.mxu0 %v1826
  %9289 = vmatmul.mubr.bf16.gmra.mrb[0].mxu0 %v1825
  %v9290 = vpop.f32.mrb[0].mxu0
  %v9291 = vadd.f32 %v9250, %v9290
  %v9292 = vpop.f32.mrb[0].mxu0
  %v9293 = vadd.f32 %v9252, %v9292
  %v9294 = vpop.f32.mrb[0].mxu0
  %v9295 = vpop.f32.mrb[0].mxu0
  %9296 = vdwg.mxu0
  %9297 = vmatprep.subr.bf16.mxu0 %v6499
  %9298 = vmatpush1.bf16.msra.mxu0 %v6498
  %9299 = vmatprep.subr.bf16.mxu0 %v6501
  %9300 = vmatpush1.bf16.msra.mxu0 %v6500
  %9301 = vmatprep.subr.bf16.mxu0 %v6503
  %9302 = vmatpush1.bf16.msra.mxu0 %v6502
  %9303 = vmatprep.subr.bf16.mxu0 %v6505
  %9304 = vmatpush1.bf16.msra.mxu0 %v6504
  %9305 = vmatprep.subr.bf16.mxu0 %v6507
  %9306 = vmatpush1.bf16.msra.mxu0 %v6506
  %9307 = vmatprep.subr.bf16.mxu0 %v6509
  %9308 = vmatpush1.bf16.msra.mxu0 %v6508
  %9309 = vmatprep.subr.bf16.mxu0 %v6511
  %9310 = vmatpush1.bf16.msra.mxu0 %v6510
  %9311 = vmatprep.subr.bf16.mxu0 %v6513
  %9312 = vmatpush1.bf16.msra.mxu0 %v6512
  %9313 = vmatprep.subr.bf16.mxu0 %v6515
  %9314 = vmatpush1.bf16.msra.mxu0 %v6514
  %9315 = vmatprep.subr.bf16.mxu0 %v6517
  %9316 = vmatpush1.bf16.msra.mxu0 %v6516
  %9317 = vmatprep.subr.bf16.mxu0 %v6519
  %9318 = vmatpush1.bf16.msra.mxu0 %v6518
  %9319 = vmatprep.subr.bf16.mxu0 %v6521
  %9320 = vmatpush1.bf16.msra.mxu0 %v6520
  %9321 = vmatprep.subr.bf16.mxu0 %v6523
  %9322 = vmatpush1.bf16.msra.mxu0 %v6522
  %9323 = vmatprep.subr.bf16.mxu0 %v6525
  %9324 = vmatpush1.bf16.msra.mxu0 %v6524
  %9325 = vmatprep.subr.bf16.mxu0 %v6527
  %9326 = vmatpush1.bf16.msra.mxu0 %v6526
  %9327 = vmatprep.subr.bf16.mxu0 %v6529
  %9328 = vmatpush1.bf16.msra.mxu0 %v6528
  %9329 = vmatprep.mubr.bf16.mxu0 %v1828
  %9330 = vmatmul.mubr.bf16.gmra.mrb[0].mxu0 %v1827
  %v9331 = vpop.f32.mrb[0].mxu0
  %v9332 = vadd.f32 %v9291, %v9331
  %v9333 = vpop.f32.mrb[0].mxu0
  %v9334 = vadd.f32 %v9293, %v9333
  %v9335 = vpop.f32.mrb[0].mxu0
  %v9336 = vpop.f32.mrb[0].mxu0
  %9337 = vdwg.mxu0
  %9338 = vmatprep.subr.bf16.mxu0 %v6531
  %9339 = vmatpush1.bf16.msra.mxu0 %v6530
  %9340 = vmatprep.subr.bf16.mxu0 %v6533
  %9341 = vmatpush1.bf16.msra.mxu0 %v6532
  %9342 = vmatprep.subr.bf16.mxu0 %v6535
  %9343 = vmatpush1.bf16.msra.mxu0 %v6534
  %9344 = vmatprep.subr.bf16.mxu0 %v6537
  %9345 = vmatpush1.bf16.msra.mxu0 %v6536
  %9346 = vmatprep.subr.bf16.mxu0 %v6539
  %9347 = vmatpush1.bf16.msra.mxu0 %v6538
  %9348 = vmatprep.subr.bf16.mxu0 %v6541
  %9349 = vmatpush1.bf16.msra.mxu0 %v6540
  %9350 = vmatprep.subr.bf16.mxu0 %v6543
  %9351 = vmatpush1.bf16.msra.mxu0 %v6542
  %9352 = vmatprep.subr.bf16.mxu0 %v6545
  %9353 = vmatpush1.bf16.msra.mxu0 %v6544
  %9354 = vmatprep.subr.bf16.mxu0 %v6547
  %9355 = vmatpush1.bf16.msra.mxu0 %v6546
  %9356 = vmatprep.subr.bf16.mxu0 %v6549
  %9357 = vmatpush1.bf16.msra.mxu0 %v6548
  %9358 = vmatprep.subr.bf16.mxu0 %v6551
  %9359 = vmatpush1.bf16.msra.mxu0 %v6550
  %9360 = vmatprep.subr.bf16.mxu0 %v6553
  %9361 = vmatpush1.bf16.msra.mxu0 %v6552
  %9362 = vmatprep.subr.bf16.mxu0 %v6555
  %9363 = vmatpush1.bf16.msra.mxu0 %v6554
  %9364 = vmatprep.subr.bf16.mxu0 %v6557
  %9365 = vmatpush1.bf16.msra.mxu0 %v6556
  %9366 = vmatprep.subr.bf16.mxu0 %v6559
  %9367 = vmatpush1.bf16.msra.mxu0 %v6558
  %9368 = vmatprep.subr.bf16.mxu0 %v6561
  %9369 = vmatpush1.bf16.msra.mxu0 %v6560
  %9370 = vmatprep.mubr.bf16.mxu0 %v1830
  %9371 = vmatmul.mubr.bf16.gmra.mrb[0].mxu0 %v1829
  %v9372 = vpop.f32.mrb[0].mxu0
  %v9373 = vadd.f32 %v9332, %v9372
  %v9374 = vpop.f32.mrb[0].mxu0
  %v9375 = vadd.f32 %v9334, %v9374
  %v9376 = vpop.f32.mrb[0].mxu0
  %v9377 = vpop.f32.mrb[0].mxu0
  %9378 = vdwg.mxu0
  %9379 = vmatprep.subr.bf16.mxu0 %v6563
  %9380 = vmatpush1.bf16.msra.mxu0 %v6562
  %9381 = vmatprep.subr.bf16.mxu0 %v6565
  %9382 = vmatpush1.bf16.msra.mxu0 %v6564
  %9383 = vmatprep.subr.bf16.mxu0 %v6567
  %9384 = vmatpush1.bf16.msra.mxu0 %v6566
  %9385 = vmatprep.subr.bf16.mxu0 %v6569
  %9386 = vmatpush1.bf16.msra.mxu0 %v6568
  %9387 = vmatprep.subr.bf16.mxu0 %v6571
  %9388 = vmatpush1.bf16.msra.mxu0 %v6570
  %9389 = vmatprep.subr.bf16.mxu0 %v6573
  %9390 = vmatpush1.bf16.msra.mxu0 %v6572
  %9391 = vmatprep.subr.bf16.mxu0 %v6575
  %9392 = vmatpush1.bf16.msra.mxu0 %v6574
  %9393 = vmatprep.subr.bf16.mxu0 %v6577
  %9394 = vmatpush1.bf16.msra.mxu0 %v6576
  %9395 = vmatprep.subr.bf16.mxu0 %v6579
  %9396 = vmatpush1.bf16.msra.mxu0 %v6578
  %9397 = vmatprep.subr.bf16.mxu0 %v6581
  %9398 = vmatpush1.bf16.msra.mxu0 %v6580
  %9399 = vmatprep.subr.bf16.mxu0 %v6583
  %9400 = vmatpush1.bf16.msra.mxu0 %v6582
  %9401 = vmatprep.subr.bf16.mxu0 %v6585
  %9402 = vmatpush1.bf16.msra.mxu0 %v6584
  %9403 = vmatprep.subr.bf16.mxu0 %v6587
  %9404 = vmatpush1.bf16.msra.mxu0 %v6586
  %9405 = vmatprep.subr.bf16.mxu0 %v6589
  %9406 = vmatpush1.bf16.msra.mxu0 %v6588
  %9407 = vmatprep.subr.bf16.mxu0 %v6591
  %9408 = vmatpush1.bf16.msra.mxu0 %v6590
  %9409 = vmatprep.subr.bf16.mxu0 %v6593
  %9410 = vmatpush1.bf16.msra.mxu0 %v6592
  %9411 = vmatprep.mubr.bf16.mxu0 %v1832
  %9412 = vmatmul.mubr.bf16.gmra.mrb[0].mxu0 %v1831
  %v9413 = vpop.f32.mrb[0].mxu0
  %v9414 = vadd.f32 %v9373, %v9413
  %v9415 = vpop.f32.mrb[0].mxu0
  %v9416 = vadd.f32 %v9375, %v9415
  %v9417 = vpop.f32.mrb[0].mxu0
  %v9418 = vpop.f32.mrb[0].mxu0
  %9419 = vdwg.mxu0
  %9420 = vmatprep.subr.bf16.mxu0 %v6595
  %9421 = vmatpush1.bf16.msra.mxu0 %v6594
  %9422 = vmatprep.subr.bf16.mxu0 %v6597
  %9423 = vmatpush1.bf16.msra.mxu0 %v6596
  %9424 = vmatprep.subr.bf16.mxu0 %v6599
  %9425 = vmatpush1.bf16.msra.mxu0 %v6598
  %9426 = vmatprep.subr.bf16.mxu0 %v6601
  %9427 = vmatpush1.bf16.msra.mxu0 %v6600
  %9428 = vmatprep.subr.bf16.mxu0 %v6603
  %9429 = vmatpush1.bf16.msra.mxu0 %v6602
  %9430 = vmatprep.subr.bf16.mxu0 %v6605
  %9431 = vmatpush1.bf16.msra.mxu0 %v6604
  %9432 = vmatprep.subr.bf16.mxu0 %v6607
  %9433 = vmatpush1.bf16.msra.mxu0 %v6606
  %9434 = vmatprep.subr.bf16.mxu0 %v6609
  %9435 = vmatpush1.bf16.msra.mxu0 %v6608
  %9436 = vmatprep.subr.bf16.mxu0 %v6611
  %9437 = vmatpush1.bf16.msra.mxu0 %v6610
  %9438 = vmatprep.subr.bf16.mxu0 %v6613
  %9439 = vmatpush1.bf16.msra.mxu0 %v6612
  %9440 = vmatprep.subr.bf16.mxu0 %v6615
  %9441 = vmatpush1.bf16.msra.mxu0 %v6614
  %9442 = vmatprep.subr.bf16.mxu0 %v6617
  %9443 = vmatpush1.bf16.msra.mxu0 %v6616
  %9444 = vmatprep.subr.bf16.mxu0 %v6619
  %9445 = vmatpush1.bf16.msra.mxu0 %v6618
  %9446 = vmatprep.subr.bf16.mxu0 %v6621
  %9447 = vmatpush1.bf16.msra.mxu0 %v6620
  %9448 = vmatprep.subr.bf16.mxu0 %v6623
  %9449 = vmatpush1.bf16.msra.mxu0 %v6622
  %9450 = vmatprep.subr.bf16.mxu0 %v6625
  %9451 = vmatpush1.bf16.msra.mxu0 %v6624
  %9452 = vmatprep.mubr.bf16.mxu0 %v1834
  %9453 = vmatmul.mubr.bf16.gmra.mrb[0].mxu0 %v1833
  %v9454 = vpop.f32.mrb[0].mxu0
  %v9455 = vadd.f32 %v9414, %v9454
  %v9456 = vpop.f32.mrb[0].mxu0
  %v9457 = vadd.f32 %v9416, %v9456
  %v9458 = vpop.f32.mrb[0].mxu0
  %v9459 = vpop.f32.mrb[0].mxu0
  %9460 = vdwg.mxu0
  %9461 = vmatprep.subr.bf16.mxu0 %v6627
  %9462 = vmatpush1.bf16.msra.mxu0 %v6626
  %9463 = vmatprep.subr.bf16.mxu0 %v6629
  %9464 = vmatpush1.bf16.msra.mxu0 %v6628
  %9465 = vmatprep.subr.bf16.mxu0 %v6631
  %9466 = vmatpush1.bf16.msra.mxu0 %v6630
  %9467 = vmatprep.subr.bf16.mxu0 %v6633
  %9468 = vmatpush1.bf16.msra.mxu0 %v6632
  %9469 = vmatprep.subr.bf16.mxu0 %v6635
  %9470 = vmatpush1.bf16.msra.mxu0 %v6634
  %9471 = vmatprep.subr.bf16.mxu0 %v6637
  %9472 = vmatpush1.bf16.msra.mxu0 %v6636
  %9473 = vmatprep.subr.bf16.mxu0 %v6639
  %9474 = vmatpush1.bf16.msra.mxu0 %v6638
  %9475 = vmatprep.subr.bf16.mxu0 %v6641
  %9476 = vmatpush1.bf16.msra.mxu0 %v6640
  %9477 = vmatprep.subr.bf16.mxu0 %v6643
  %9478 = vmatpush1.bf16.msra.mxu0 %v6642
  %9479 = vmatprep.subr.bf16.mxu0 %v6645
  %9480 = vmatpush1.bf16.msra.mxu0 %v6644
  %9481 = vmatprep.subr.bf16.mxu0 %v6647
  %9482 = vmatpush1.bf16.msra.mxu0 %v6646
  %9483 = vmatprep.subr.bf16.mxu0 %v6649
  %9484 = vmatpush1.bf16.msra.mxu0 %v6648
  %9485 = vmatprep.subr.bf16.mxu0 %v6651
  %9486 = vmatpush1.bf16.msra.mxu0 %v6650
  %9487 = vmatprep.subr.bf16.mxu0 %v6653
  %9488 = vmatpush1.bf16.msra.mxu0 %v6652
  %9489 = vmatprep.subr.bf16.mxu0 %v6655
  %9490 = vmatpush1.bf16.msra.mxu0 %v6654
  %9491 = vmatprep.subr.bf16.mxu0 %v6657
  %9492 = vmatpush1.bf16.msra.mxu0 %v6656
  %9493 = vmatprep.mubr.bf16.mxu0 %v1836
  %9494 = vmatmul.mubr.bf16.gmra.mrb[0].mxu0 %v1835
  %v9495 = vpop.f32.mrb[0].mxu0
  %v9496 = vadd.f32 %v9455, %v9495
  %v9497 = vpop.f32.mrb[0].mxu0
  %v9498 = vadd.f32 %v9457, %v9497
  %v9499 = vpop.f32.mrb[0].mxu0
  %v9500 = vpop.f32.mrb[0].mxu0
  %9501 = vdwg.mxu0
  %9502 = vmatprep.subr.bf16.mxu0 %v6659
  %9503 = vmatpush1.bf16.msra.mxu0 %v6658
  %9504 = vmatprep.subr.bf16.mxu0 %v6661
  %9505 = vmatpush1.bf16.msra.mxu0 %v6660
  %9506 = vmatprep.subr.bf16.mxu0 %v6663
  %9507 = vmatpush1.bf16.msra.mxu0 %v6662
  %9508 = vmatprep.subr.bf16.mxu0 %v6665
  %9509 = vmatpush1.bf16.msra.mxu0 %v6664
  %9510 = vmatprep.subr.bf16.mxu0 %v6667
  %9511 = vmatpush1.bf16.msra.mxu0 %v6666
  %9512 = vmatprep.subr.bf16.mxu0 %v6669
  %9513 = vmatpush1.bf16.msra.mxu0 %v6668
  %9514 = vmatprep.subr.bf16.mxu0 %v6671
  %9515 = vmatpush1.bf16.msra.mxu0 %v6670
  %9516 = vmatprep.subr.bf16.mxu0 %v6673
  %9517 = vmatpush1.bf16.msra.mxu0 %v6672
  %9518 = vmatprep.subr.bf16.mxu0 %v6675
  %9519 = vmatpush1.bf16.msra.mxu0 %v6674
  %9520 = vmatprep.subr.bf16.mxu0 %v6677
  %9521 = vmatpush1.bf16.msra.mxu0 %v6676
  %9522 = vmatprep.subr.bf16.mxu0 %v6679
  %9523 = vmatpush1.bf16.msra.mxu0 %v6678
  %9524 = vmatprep.subr.bf16.mxu0 %v6681
  %9525 = vmatpush1.bf16.msra.mxu0 %v6680
  %9526 = vmatprep.subr.bf16.mxu0 %v6683
  %9527 = vmatpush1.bf16.msra.mxu0 %v6682
  %9528 = vmatprep.subr.bf16.mxu0 %v6685
  %9529 = vmatpush1.bf16.msra.mxu0 %v6684
  %9530 = vmatprep.subr.bf16.mxu0 %v6687
  %9531 = vmatpush1.bf16.msra.mxu0 %v6686
  %9532 = vmatprep.subr.bf16.mxu0 %v6689
  %9533 = vmatpush1.bf16.msra.mxu0 %v6688
  %9534 = vmatprep.mubr.bf16.mxu0 %v1838
  %9535 = vmatmul.mubr.bf16.gmra.mrb[0].mxu0 %v1837
  %v9536 = vpop.f32.mrb[0].mxu0
  %v9537 = vadd.f32 %v9496, %v9536
  %v9538 = vpop.f32.mrb[0].mxu0
  %v9539 = vadd.f32 %v9498, %v9538
  %v9540 = vpop.f32.mrb[0].mxu0
  %v9541 = vpop.f32.mrb[0].mxu0
  %9542 = vdwg.mxu0
  %9543 = vmatprep.subr.bf16.mxu0 %v6691
  %9544 = vmatpush1.bf16.msra.mxu0 %v6690
  %9545 = vmatprep.subr.bf16.mxu0 %v6693
  %9546 = vmatpush1.bf16.msra.mxu0 %v6692
  %9547 = vmatprep.subr.bf16.mxu0 %v6695
  %9548 = vmatpush1.bf16.msra.mxu0 %v6694
  %9549 = vmatprep.subr.bf16.mxu0 %v6697
  %9550 = vmatpush1.bf16.msra.mxu0 %v6696
  %9551 = vmatprep.subr.bf16.mxu0 %v6699
  %9552 = vmatpush1.bf16.msra.mxu0 %v6698
  %9553 = vmatprep.subr.bf16.mxu0 %v6701
  %9554 = vmatpush1.bf16.msra.mxu0 %v6700
  %9555 = vmatprep.subr.bf16.mxu0 %v6703
  %9556 = vmatpush1.bf16.msra.mxu0 %v6702
  %9557 = vmatprep.subr.bf16.mxu0 %v6705
  %9558 = vmatpush1.bf16.msra.mxu0 %v6704
  %9559 = vmatprep.subr.bf16.mxu0 %v6707
  %9560 = vmatpush1.bf16.msra.mxu0 %v6706
  %9561 = vmatprep.subr.bf16.mxu0 %v6709
  %9562 = vmatpush1.bf16.msra.mxu0 %v6708
  %9563 = vmatprep.subr.bf16.mxu0 %v6711
  %9564 = vmatpush1.bf16.msra.mxu0 %v6710
  %9565 = vmatprep.subr.bf16.mxu0 %v6713
  %9566 = vmatpush1.bf16.msra.mxu0 %v6712
  %9567 = vmatprep.subr.bf16.mxu0 %v6715
  %9568 = vmatpush1.bf16.msra.mxu0 %v6714
  %9569 = vmatprep.subr.bf16.mxu0 %v6717
  %9570 = vmatpush1.bf16.msra.mxu0 %v6716
  %9571 = vmatprep.subr.bf16.mxu0 %v6719
  %9572 = vmatpush1.bf16.msra.mxu0 %v6718
  %9573 = vmatprep.subr.bf16.mxu0 %v6721
  %9574 = vmatpush1.bf16.msra.mxu0 %v6720
  %9575 = vmatprep.mubr.bf16.mxu0 %v1840
  %9576 = vmatmul.mubr.bf16.gmra.mrb[0].mxu0 %v1839
  %v9577 = vpop.f32.mrb[0].mxu0
  %v9578 = vadd.f32 %v9537, %v9577
  %v9579 = vpop.f32.mrb[0].mxu0
  %v9580 = vadd.f32 %v9539, %v9579
  %v9581 = vpop.f32.mrb[0].mxu0
  %v9582 = vpop.f32.mrb[0].mxu0
  %9583 = vdwg.mxu0
  %9584 = vmatprep.subr.bf16.mxu0 %v6723
  %9585 = vmatpush1.bf16.msra.mxu0 %v6722
  %9586 = vmatprep.subr.bf16.mxu0 %v6725
  %9587 = vmatpush1.bf16.msra.mxu0 %v6724
  %9588 = vmatprep.subr.bf16.mxu0 %v6727
  %9589 = vmatpush1.bf16.msra.mxu0 %v6726
  %9590 = vmatprep.subr.bf16.mxu0 %v6729
  %9591 = vmatpush1.bf16.msra.mxu0 %v6728
  %9592 = vmatprep.subr.bf16.mxu0 %v6731
  %9593 = vmatpush1.bf16.msra.mxu0 %v6730
  %9594 = vmatprep.subr.bf16.mxu0 %v6733
  %9595 = vmatpush1.bf16.msra.mxu0 %v6732
  %9596 = vmatprep.subr.bf16.mxu0 %v6735
  %9597 = vmatpush1.bf16.msra.mxu0 %v6734
  %9598 = vmatprep.subr.bf16.mxu0 %v6737
  %9599 = vmatpush1.bf16.msra.mxu0 %v6736
  %9600 = vmatprep.subr.bf16.mxu0 %v6739
  %9601 = vmatpush1.bf16.msra.mxu0 %v6738
  %9602 = vmatprep.subr.bf16.mxu0 %v6741
  %9603 = vmatpush1.bf16.msra.mxu0 %v6740
  %9604 = vmatprep.subr.bf16.mxu0 %v6743
  %9605 = vmatpush1.bf16.msra.mxu0 %v6742
  %9606 = vmatprep.subr.bf16.mxu0 %v6745
  %9607 = vmatpush1.bf16.msra.mxu0 %v6744
  %9608 = vmatprep.subr.bf16.mxu0 %v6747
  %9609 = vmatpush1.bf16.msra.mxu0 %v6746
  %9610 = vmatprep.subr.bf16.mxu0 %v6749
  %9611 = vmatpush1.bf16.msra.mxu0 %v6748
  %9612 = vmatprep.subr.bf16.mxu0 %v6751
  %9613 = vmatpush1.bf16.msra.mxu0 %v6750
  %9614 = vmatprep.subr.bf16.mxu0 %v6753
  %9615 = vmatpush1.bf16.msra.mxu0 %v6752
  %9616 = vmatprep.mubr.bf16.mxu0 %v1842
  %9617 = vmatmul.mubr.bf16.gmra.mrb[0].mxu0 %v1841
  %v9618 = vpop.f32.mrb[0].mxu0
  %v9619 = vadd.f32 %v9578, %v9618
  %v9620 = vpop.f32.mrb[0].mxu0
  %v9621 = vadd.f32 %v9580, %v9620
  %v9622 = vpop.f32.mrb[0].mxu0
  %v9623 = vpop.f32.mrb[0].mxu0
  %9624 = vdwg.mxu0
  %9625 = vmatprep.subr.bf16.mxu0 %v6755
  %9626 = vmatpush1.bf16.msra.mxu0 %v6754
  %9627 = vmatprep.subr.bf16.mxu0 %v6757
  %9628 = vmatpush1.bf16.msra.mxu0 %v6756
  %9629 = vmatprep.subr.bf16.mxu0 %v6759
  %9630 = vmatpush1.bf16.msra.mxu0 %v6758
  %9631 = vmatprep.subr.bf16.mxu0 %v6761
  %9632 = vmatpush1.bf16.msra.mxu0 %v6760
  %9633 = vmatprep.subr.bf16.mxu0 %v6763
  %9634 = vmatpush1.bf16.msra.mxu0 %v6762
  %9635 = vmatprep.subr.bf16.mxu0 %v6765
  %9636 = vmatpush1.bf16.msra.mxu0 %v6764
  %9637 = vmatprep.subr.bf16.mxu0 %v6767
  %9638 = vmatpush1.bf16.msra.mxu0 %v6766
  %9639 = vmatprep.subr.bf16.mxu0 %v6769
  %9640 = vmatpush1.bf16.msra.mxu0 %v6768
  %9641 = vmatprep.subr.bf16.mxu0 %v6771
  %9642 = vmatpush1.bf16.msra.mxu0 %v6770
  %9643 = vmatprep.subr.bf16.mxu0 %v6773
  %9644 = vmatpush1.bf16.msra.mxu0 %v6772
  %9645 = vmatprep.subr.bf16.mxu0 %v6775
  %9646 = vmatpush1.bf16.msra.mxu0 %v6774
  %9647 = vmatprep.subr.bf16.mxu0 %v6777
  %9648 = vmatpush1.bf16.msra.mxu0 %v6776
  %9649 = vmatprep.subr.bf16.mxu0 %v6779
  %9650 = vmatpush1.bf16.msra.mxu0 %v6778
  %9651 = vmatprep.subr.bf16.mxu0 %v6781
  %9652 = vmatpush1.bf16.msra.mxu0 %v6780
  %9653 = vmatprep.subr.bf16.mxu0 %v6783
  %9654 = vmatpush1.bf16.msra.mxu0 %v6782
  %9655 = vmatprep.subr.bf16.mxu0 %v6785
  %9656 = vmatpush1.bf16.msra.mxu0 %v6784
  %9657 = vmatprep.mubr.bf16.mxu0 %v1844
  %9658 = vmatmul.mubr.bf16.gmra.mrb[0].mxu0 %v1843
  %v9659 = vpop.f32.mrb[0].mxu0
  %v9660 = vadd.f32 %v9619, %v9659
  %v9661 = vpop.f32.mrb[0].mxu0
  %v9662 = vadd.f32 %v9621, %v9661
  %v9663 = vpop.f32.mrb[0].mxu0
  %v9664 = vpop.f32.mrb[0].mxu0
  %9665 = vdwg.mxu0
  %9666 = vmatprep.subr.bf16.mxu0 %v6787
  %9667 = vmatpush1.bf16.msra.mxu0 %v6786
  %9668 = vmatprep.subr.bf16.mxu0 %v6789
  %9669 = vmatpush1.bf16.msra.mxu0 %v6788
  %9670 = vmatprep.subr.bf16.mxu0 %v6791
  %9671 = vmatpush1.bf16.msra.mxu0 %v6790
  %9672 = vmatprep.subr.bf16.mxu0 %v6793
  %9673 = vmatpush1.bf16.msra.mxu0 %v6792
  %9674 = vmatprep.subr.bf16.mxu0 %v6795
  %9675 = vmatpush1.bf16.msra.mxu0 %v6794
  %9676 = vmatprep.subr.bf16.mxu0 %v6797
  %9677 = vmatpush1.bf16.msra.mxu0 %v6796
  %9678 = vmatprep.subr.bf16.mxu0 %v6799
  %9679 = vmatpush1.bf16.msra.mxu0 %v6798
  %9680 = vmatprep.subr.bf16.mxu0 %v6801
  %9681 = vmatpush1.bf16.msra.mxu0 %v6800
  %9682 = vmatprep.subr.bf16.mxu0 %v6803
  %9683 = vmatpush1.bf16.msra.mxu0 %v6802
  %9684 = vmatprep.subr.bf16.mxu0 %v6805
  %9685 = vmatpush1.bf16.msra.mxu0 %v6804
  %9686 = vmatprep.subr.bf16.mxu0 %v6807
  %9687 = vmatpush1.bf16.msra.mxu0 %v6806
  %9688 = vmatprep.subr.bf16.mxu0 %v6809
  %9689 = vmatpush1.bf16.msra.mxu0 %v6808
  %9690 = vmatprep.subr.bf16.mxu0 %v6811
  %9691 = vmatpush1.bf16.msra.mxu0 %v6810
  %9692 = vmatprep.subr.bf16.mxu0 %v6813
  %9693 = vmatpush1.bf16.msra.mxu0 %v6812
  %9694 = vmatprep.subr.bf16.mxu0 %v6815
  %9695 = vmatpush1.bf16.msra.mxu0 %v6814
  %9696 = vmatprep.subr.bf16.mxu0 %v6817
  %9697 = vmatpush1.bf16.msra.mxu0 %v6816
  %9698 = vmatprep.mubr.bf16.mxu0 %v1846
  %9699 = vmatmul.mubr.bf16.gmra.mrb[0].mxu0 %v1845
  %v9700 = vpop.f32.mrb[0].mxu0
  %v9701 = vadd.f32 %v9660, %v9700
  %v9702 = vpop.f32.mrb[0].mxu0
  %v9703 = vadd.f32 %v9662, %v9702
  %v9704 = vpop.f32.mrb[0].mxu0
  %v9705 = vpop.f32.mrb[0].mxu0
  %9706 = vdwg.mxu0
  %9707 = vmatprep.subr.bf16.mxu0 %v6819
  %9708 = vmatpush1.bf16.msra.mxu0 %v6818
  %9709 = vmatprep.subr.bf16.mxu0 %v6821
  %9710 = vmatpush1.bf16.msra.mxu0 %v6820
  %9711 = vmatprep.subr.bf16.mxu0 %v6823
  %9712 = vmatpush1.bf16.msra.mxu0 %v6822
  %9713 = vmatprep.subr.bf16.mxu0 %v6825
  %9714 = vmatpush1.bf16.msra.mxu0 %v6824
  %9715 = vmatprep.subr.bf16.mxu0 %v6827
  %9716 = vmatpush1.bf16.msra.mxu0 %v6826
  %9717 = vmatprep.subr.bf16.mxu0 %v6829
  %9718 = vmatpush1.bf16.msra.mxu0 %v6828
  %9719 = vmatprep.subr.bf16.mxu0 %v6831
  %9720 = vmatpush1.bf16.msra.mxu0 %v6830
  %9721 = vmatprep.subr.bf16.mxu0 %v6833
  %9722 = vmatpush1.bf16.msra.mxu0 %v6832
  %9723 = vmatprep.subr.bf16.mxu0 %v6835
  %9724 = vmatpush1.bf16.msra.mxu0 %v6834
  %9725 = vmatprep.subr.bf16.mxu0 %v6837
  %9726 = vmatpush1.bf16.msra.mxu0 %v6836
  %9727 = vmatprep.subr.bf16.mxu0 %v6839
  %9728 = vmatpush1.bf16.msra.mxu0 %v6838
  %9729 = vmatprep.subr.bf16.mxu0 %v6841
  %9730 = vmatpush1.bf16.msra.mxu0 %v6840
  %9731 = vmatprep.subr.bf16.mxu0 %v6843
  %9732 = vmatpush1.bf16.msra.mxu0 %v6842
  %9733 = vmatprep.subr.bf16.mxu0 %v6845
  %9734 = vmatpush1.bf16.msra.mxu0 %v6844
  %9735 = vmatprep.subr.bf16.mxu0 %v6847
  %9736 = vmatpush1.bf16.msra.mxu0 %v6846
  %9737 = vmatprep.subr.bf16.mxu0 %v6849
  %9738 = vmatpush1.bf16.msra.mxu0 %v6848
  %9739 = vmatprep.mubr.bf16.mxu0 %v1848
  %9740 = vmatmul.mubr.bf16.gmra.mrb[0].mxu0 %v1847
  %v9741 = vpop.f32.mrb[0].mxu0
  %v9742 = vadd.f32 %v9701, %v9741
  %v9743 = vpop.f32.mrb[0].mxu0
  %v9744 = vadd.f32 %v9703, %v9743
  %v9745 = vpop.f32.mrb[0].mxu0
  %v9746 = vpop.f32.mrb[0].mxu0
  %9747 = vdwg.mxu0
  %9748 = vmatprep.subr.bf16.mxu0 %v6851
  %9749 = vmatpush1.bf16.msra.mxu0 %v6850
  %9750 = vmatprep.subr.bf16.mxu0 %v6853
  %9751 = vmatpush1.bf16.msra.mxu0 %v6852
  %9752 = vmatprep.subr.bf16.mxu0 %v6855
  %9753 = vmatpush1.bf16.msra.mxu0 %v6854
  %9754 = vmatprep.subr.bf16.mxu0 %v6857
  %9755 = vmatpush1.bf16.msra.mxu0 %v6856
  %9756 = vmatprep.subr.bf16.mxu0 %v6859
  %9757 = vmatpush1.bf16.msra.mxu0 %v6858
  %9758 = vmatprep.subr.bf16.mxu0 %v6861
  %9759 = vmatpush1.bf16.msra.mxu0 %v6860
  %9760 = vmatprep.subr.bf16.mxu0 %v6863
  %9761 = vmatpush1.bf16.msra.mxu0 %v6862
  %9762 = vmatprep.subr.bf16.mxu0 %v6865
  %9763 = vmatpush1.bf16.msra.mxu0 %v6864
  %9764 = vmatprep.subr.bf16.mxu0 %v6867
  %9765 = vmatpush1.bf16.msra.mxu0 %v6866
  %9766 = vmatprep.subr.bf16.mxu0 %v6869
  %9767 = vmatpush1.bf16.msra.mxu0 %v6868
  %9768 = vmatprep.subr.bf16.mxu0 %v6871
  %9769 = vmatpush1.bf16.msra.mxu0 %v6870
  %9770 = vmatprep.subr.bf16.mxu0 %v6873
  %9771 = vmatpush1.bf16.msra.mxu0 %v6872
  %9772 = vmatprep.subr.bf16.mxu0 %v6875
  %9773 = vmatpush1.bf16.msra.mxu0 %v6874
  %9774 = vmatprep.subr.bf16.mxu0 %v6877
  %9775 = vmatpush1.bf16.msra.mxu0 %v6876
  %9776 = vmatprep.subr.bf16.mxu0 %v6879
  %9777 = vmatpush1.bf16.msra.mxu0 %v6878
  %9778 = vmatprep.subr.bf16.mxu0 %v6881
  %9779 = vmatpush1.bf16.msra.mxu0 %v6880
  %9780 = vmatprep.mubr.bf16.mxu0 %v1850
  %9781 = vmatmul.mubr.bf16.gmra.mrb[0].mxu0 %v1849
  %v9782 = vpop.f32.mrb[0].mxu0
  %v9783 = vadd.f32 %v9742, %v9782
  %v9784 = vpop.f32.mrb[0].mxu0
  %v9785 = vadd.f32 %v9744, %v9784
  %v9786 = vpop.f32.mrb[0].mxu0
  %v9787 = vpop.f32.mrb[0].mxu0
  %9788 = vdwg.mxu0
  %9789 = vmatprep.subr.bf16.mxu0 %v6883
  %9790 = vmatpush1.bf16.msra.mxu0 %v6882
  %9791 = vmatprep.subr.bf16.mxu0 %v6885
  %9792 = vmatpush1.bf16.msra.mxu0 %v6884
  %9793 = vmatprep.subr.bf16.mxu0 %v6887
  %9794 = vmatpush1.bf16.msra.mxu0 %v6886
  %9795 = vmatprep.subr.bf16.mxu0 %v6889
  %9796 = vmatpush1.bf16.msra.mxu0 %v6888
  %9797 = vmatprep.subr.bf16.mxu0 %v6891
  %9798 = vmatpush1.bf16.msra.mxu0 %v6890
  %9799 = vmatprep.subr.bf16.mxu0 %v6893
  %9800 = vmatpush1.bf16.msra.mxu0 %v6892
  %9801 = vmatprep.subr.bf16.mxu0 %v6895
  %9802 = vmatpush1.bf16.msra.mxu0 %v6894
  %9803 = vmatprep.subr.bf16.mxu0 %v6897
  %9804 = vmatpush1.bf16.msra.mxu0 %v6896
  %9805 = vmatprep.subr.bf16.mxu0 %v6899
  %9806 = vmatpush1.bf16.msra.mxu0 %v6898
  %9807 = vmatprep.subr.bf16.mxu0 %v6901
  %9808 = vmatpush1.bf16.msra.mxu0 %v6900
  %9809 = vmatprep.subr.bf16.mxu0 %v6903
  %9810 = vmatpush1.bf16.msra.mxu0 %v6902
  %9811 = vmatprep.subr.bf16.mxu0 %v6905
  %9812 = vmatpush1.bf16.msra.mxu0 %v6904
  %9813 = vmatprep.subr.bf16.mxu0 %v6907
  %9814 = vmatpush1.bf16.msra.mxu0 %v6906
  %9815 = vmatprep.subr.bf16.mxu0 %v6909
  %9816 = vmatpush1.bf16.msra.mxu0 %v6908
  %9817 = vmatprep.subr.bf16.mxu0 %v6911
  %9818 = vmatpush1.bf16.msra.mxu0 %v6910
  %9819 = vmatprep.subr.bf16.mxu0 %v6913
  %9820 = vmatpush1.bf16.msra.mxu0 %v6912
  %9821 = vmatprep.mubr.bf16.mxu0 %v1852
  %9822 = vmatmul.mubr.bf16.gmra.mrb[0].mxu0 %v1851
  %v9823 = vpop.f32.mrb[0].mxu0
  %v9824 = vadd.f32 %v9783, %v9823
  %v9825 = vpop.f32.mrb[0].mxu0
  %v9826 = vadd.f32 %v9785, %v9825
  %v9827 = vpop.f32.mrb[0].mxu0
  %v9828 = vpop.f32.mrb[0].mxu0
  %9829 = vdwg.mxu0
  %9830 = vmatprep.subr.bf16.mxu0 %v6915
  %9831 = vmatpush1.bf16.msra.mxu0 %v6914
  %9832 = vmatprep.subr.bf16.mxu0 %v6917
  %9833 = vmatpush1.bf16.msra.mxu0 %v6916
  %9834 = vmatprep.subr.bf16.mxu0 %v6919
  %9835 = vmatpush1.bf16.msra.mxu0 %v6918
  %9836 = vmatprep.subr.bf16.mxu0 %v6921
  %9837 = vmatpush1.bf16.msra.mxu0 %v6920
  %9838 = vmatprep.subr.bf16.mxu0 %v6923
  %9839 = vmatpush1.bf16.msra.mxu0 %v6922
  %9840 = vmatprep.subr.bf16.mxu0 %v6925
  %9841 = vmatpush1.bf16.msra.mxu0 %v6924
  %9842 = vmatprep.subr.bf16.mxu0 %v6927
  %9843 = vmatpush1.bf16.msra.mxu0 %v6926
  %9844 = vmatprep.subr.bf16.mxu0 %v6929
  %9845 = vmatpush1.bf16.msra.mxu0 %v6928
  %9846 = vmatprep.subr.bf16.mxu0 %v6931
  %9847 = vmatpush1.bf16.msra.mxu0 %v6930
  %9848 = vmatprep.subr.bf16.mxu0 %v6933
  %9849 = vmatpush1.bf16.msra.mxu0 %v6932
  %9850 = vmatprep.subr.bf16.mxu0 %v6935
  %9851 = vmatpush1.bf16.msra.mxu0 %v6934
  %9852 = vmatprep.subr.bf16.mxu0 %v6937
  %9853 = vmatpush1.bf16.msra.mxu0 %v6936
  %9854 = vmatprep.subr.bf16.mxu0 %v6939
  %9855 = vmatpush1.bf16.msra.mxu0 %v6938
  %9856 = vmatprep.subr.bf16.mxu0 %v6941
  %9857 = vmatpush1.bf16.msra.mxu0 %v6940
  %9858 = vmatprep.subr.bf16.mxu0 %v6943
  %9859 = vmatpush1.bf16.msra.mxu0 %v6942
  %9860 = vmatprep.subr.bf16.mxu0 %v6945
  %9861 = vmatpush1.bf16.msra.mxu0 %v6944
  %9862 = vmatprep.mubr.bf16.mxu0 %v1854
  %9863 = vmatmul.mubr.bf16.gmra.mrb[0].mxu0 %v1853
  %v9864 = vpop.f32.mrb[0].mxu0
  %v9865 = vadd.f32 %v9824, %v9864
  %v9866 = vpop.f32.mrb[0].mxu0
  %v9867 = vadd.f32 %v9826, %v9866
  %v9868 = vpop.f32.mrb[0].mxu0
  %v9869 = vpop.f32.mrb[0].mxu0
  %9870 = vdwg.mxu0
  %9871 = vmatprep.subr.bf16.mxu0 %v6947
  %9872 = vmatpush1.bf16.msra.mxu0 %v6946
  %9873 = vmatprep.subr.bf16.mxu0 %v6949
  %9874 = vmatpush1.bf16.msra.mxu0 %v6948
  %9875 = vmatprep.subr.bf16.mxu0 %v6951
  %9876 = vmatpush1.bf16.msra.mxu0 %v6950
  %9877 = vmatprep.subr.bf16.mxu0 %v6953
  %9878 = vmatpush1.bf16.msra.mxu0 %v6952
  %9879 = vmatprep.subr.bf16.mxu0 %v6955
  %9880 = vmatpush1.bf16.msra.mxu0 %v6954
  %9881 = vmatprep.subr.bf16.mxu0 %v6957
  %9882 = vmatpush1.bf16.msra.mxu0 %v6956
  %9883 = vmatprep.subr.bf16.mxu0 %v6959
  %9884 = vmatpush1.bf16.msra.mxu0 %v6958
  %9885 = vmatprep.subr.bf16.mxu0 %v6961
  %9886 = vmatpush1.bf16.msra.mxu0 %v6960
  %9887 = vmatprep.subr.bf16.mxu0 %v6963
  %9888 = vmatpush1.bf16.msra.mxu0 %v6962
  %9889 = vmatprep.subr.bf16.mxu0 %v6965
  %9890 = vmatpush1.bf16.msra.mxu0 %v6964
  %9891 = vmatprep.subr.bf16.mxu0 %v6967
  %9892 = vmatpush1.bf16.msra.mxu0 %v6966
  %9893 = vmatprep.subr.bf16.mxu0 %v6969
  %9894 = vmatpush1.bf16.msra.mxu0 %v6968
  %9895 = vmatprep.subr.bf16.mxu0 %v6971
  %9896 = vmatpush1.bf16.msra.mxu0 %v6970
  %9897 = vmatprep.subr.bf16.mxu0 %v6973
  %9898 = vmatpush1.bf16.msra.mxu0 %v6972
  %9899 = vmatprep.subr.bf16.mxu0 %v6975
  %9900 = vmatpush1.bf16.msra.mxu0 %v6974
  %9901 = vmatprep.subr.bf16.mxu0 %v6977
  %9902 = vmatpush1.bf16.msra.mxu0 %v6976
  %9903 = vmatprep.mubr.bf16.mxu0 %v1856
  %9904 = vmatmul.mubr.bf16.gmra.mrb[0].mxu0 %v1855
  %v9905 = vpop.f32.mrb[0].mxu0
  %v9906 = vadd.f32 %v9865, %v9905
  %v9907 = vpop.f32.mrb[0].mxu0
  %v9908 = vadd.f32 %v9867, %v9907
  %v9909 = vpop.f32.mrb[0].mxu0
  %v9910 = vpop.f32.mrb[0].mxu0
  %9911 = vdwg.mxu0
  %9912 = vmatprep.subr.bf16.mxu0 %v6979
  %9913 = vmatpush1.bf16.msra.mxu0 %v6978
  %9914 = vmatprep.subr.bf16.mxu0 %v6981
  %9915 = vmatpush1.bf16.msra.mxu0 %v6980
  %9916 = vmatprep.subr.bf16.mxu0 %v6983
  %9917 = vmatpush1.bf16.msra.mxu0 %v6982
  %9918 = vmatprep.subr.bf16.mxu0 %v6985
  %9919 = vmatpush1.bf16.msra.mxu0 %v6984
  %9920 = vmatprep.subr.bf16.mxu0 %v6987
  %9921 = vmatpush1.bf16.msra.mxu0 %v6986
  %9922 = vmatprep.subr.bf16.mxu0 %v6989
  %9923 = vmatpush1.bf16.msra.mxu0 %v6988
  %9924 = vmatprep.subr.bf16.mxu0 %v6991
  %9925 = vmatpush1.bf16.msra.mxu0 %v6990
  %9926 = vmatprep.subr.bf16.mxu0 %v6993
  %9927 = vmatpush1.bf16.msra.mxu0 %v6992
  %9928 = vmatprep.subr.bf16.mxu0 %v6995
  %9929 = vmatpush1.bf16.msra.mxu0 %v6994
  %9930 = vmatprep.subr.bf16.mxu0 %v6997
  %9931 = vmatpush1.bf16.msra.mxu0 %v6996
  %9932 = vmatprep.subr.bf16.mxu0 %v6999
  %9933 = vmatpush1.bf16.msra.mxu0 %v6998
  %9934 = vmatprep.subr.bf16.mxu0 %v7001
  %9935 = vmatpush1.bf16.msra.mxu0 %v7000
  %9936 = vmatprep.subr.bf16.mxu0 %v7003
  %9937 = vmatpush1.bf16.msra.mxu0 %v7002
  %9938 = vmatprep.subr.bf16.mxu0 %v7005
  %9939 = vmatpush1.bf16.msra.mxu0 %v7004
  %9940 = vmatprep.subr.bf16.mxu0 %v7007
  %9941 = vmatpush1.bf16.msra.mxu0 %v7006
  %9942 = vmatprep.subr.bf16.mxu0 %v7009
  %9943 = vmatpush1.bf16.msra.mxu0 %v7008
  %9944 = vmatprep.mubr.bf16.mxu0 %v1858
  %9945 = vmatmul.mubr.bf16.gmra.mrb[0].mxu0 %v1857
  %v9946 = vpop.f32.mrb[0].mxu0
  %v9947 = vadd.f32 %v9906, %v9946
  %v9948 = vpop.f32.mrb[0].mxu0
  %v9949 = vadd.f32 %v9908, %v9948
  %v9950 = vpop.f32.mrb[0].mxu0
  %v9951 = vpop.f32.mrb[0].mxu0
  %9952 = vdwg.mxu0
  %9953 = vmatprep.subr.bf16.mxu0 %v7011
  %9954 = vmatpush1.bf16.msra.mxu0 %v7010
  %9955 = vmatprep.subr.bf16.mxu0 %v7013
  %9956 = vmatpush1.bf16.msra.mxu0 %v7012
  %9957 = vmatprep.subr.bf16.mxu0 %v7015
  %9958 = vmatpush1.bf16.msra.mxu0 %v7014
  %9959 = vmatprep.subr.bf16.mxu0 %v7017
  %9960 = vmatpush1.bf16.msra.mxu0 %v7016
  %9961 = vmatprep.subr.bf16.mxu0 %v7019
  %9962 = vmatpush1.bf16.msra.mxu0 %v7018
  %9963 = vmatprep.subr.bf16.mxu0 %v7021
  %9964 = vmatpush1.bf16.msra.mxu0 %v7020
  %9965 = vmatprep.subr.bf16.mxu0 %v7023
  %9966 = vmatpush1.bf16.msra.mxu0 %v7022
  %9967 = vmatprep.subr.bf16.mxu0 %v7025
  %9968 = vmatpush1.bf16.msra.mxu0 %v7024
  %9969 = vmatprep.subr.bf16.mxu0 %v7027
  %9970 = vmatpush1.bf16.msra.mxu0 %v7026
  %9971 = vmatprep.subr.bf16.mxu0 %v7029
  %9972 = vmatpush1.bf16.msra.mxu0 %v7028
  %9973 = vmatprep.subr.bf16.mxu0 %v7031
  %9974 = vmatpush1.bf16.msra.mxu0 %v7030
  %9975 = vmatprep.subr.bf16.mxu0 %v7033
  %9976 = vmatpush1.bf16.msra.mxu0 %v7032
  %9977 = vmatprep.subr.bf16.mxu0 %v7035
  %9978 = vmatpush1.bf16.msra.mxu0 %v7034
  %9979 = vmatprep.subr.bf16.mxu0 %v7037
  %9980 = vmatpush1.bf16.msra.mxu0 %v7036
  %9981 = vmatprep.subr.bf16.mxu0 %v7039
  %9982 = vmatpush1.bf16.msra.mxu0 %v7038
  %9983 = vmatprep.subr.bf16.mxu0 %v7041
  %9984 = vmatpush1.bf16.msra.mxu0 %v7040
  %9985 = vmatprep.mubr.bf16.mxu0 %v1860
  %9986 = vmatmul.mubr.bf16.gmra.mrb[0].mxu0 %v1859
  %v9987 = vpop.f32.mrb[0].mxu0
  %v9988 = vadd.f32 %v9947, %v9987
  %v9989 = vpop.f32.mrb[0].mxu0
  %v9990 = vadd.f32 %v9949, %v9989
  %v9991 = vpop.f32.mrb[0].mxu0
  %v9992 = vpop.f32.mrb[0].mxu0
  %9993 = vdwg.mxu0
  %9994 = vmatprep.subr.bf16.mxu0 %v7043
  %9995 = vmatpush1.bf16.msra.mxu0 %v7042
  %9996 = vmatprep.subr.bf16.mxu0 %v7045
  %9997 = vmatpush1.bf16.msra.mxu0 %v7044
  %9998 = vmatprep.subr.bf16.mxu0 %v7047
  %9999 = vmatpush1.bf16.msra.mxu0 %v7046
  %10000 = vmatprep.subr.bf16.mxu0 %v7049
  %10001 = vmatpush1.bf16.msra.mxu0 %v7048
  %10002 = vmatprep.subr.bf16.mxu0 %v7051
  %10003 = vmatpush1.bf16.msra.mxu0 %v7050
  %10004 = vmatprep.subr.bf16.mxu0 %v7053
  %10005 = vmatpush1.bf16.msra.mxu0 %v7052
  %10006 = vmatprep.subr.bf16.mxu0 %v7055
  %10007 = vmatpush1.bf16.msra.mxu0 %v7054
  %10008 = vmatprep.subr.bf16.mxu0 %v7057
  %10009 = vmatpush1.bf16.msra.mxu0 %v7056
  %10010 = vmatprep.subr.bf16.mxu0 0
  %10011 = vmatpush1.bf16.msra.mxu0 0
  %10012 = vmatprep.subr.bf16.mxu0 0
  %10013 = vmatpush1.bf16.msra.mxu0 0
  %10014 = vmatprep.subr.bf16.mxu0 0
  %10015 = vmatpush1.bf16.msra.mxu0 0
  %10016 = vmatprep.subr.bf16.mxu0 0
  %10017 = vmatpush1.bf16.msra.mxu0 0
  %10018 = vmatprep.subr.bf16.mxu0 0
  %10019 = vmatpush1.bf16.msra.mxu0 0
  %10020 = vmatprep.subr.bf16.mxu0 0
  %10021 = vmatpush1.bf16.msra.mxu0 0
  %10022 = vmatprep.subr.bf16.mxu0 0
  %10023 = vmatpush1.bf16.msra.mxu0 0
  %10024 = vmatprep.subr.bf16.mxu0 0
  %10025 = vmatpush1.bf16.msra.mxu0 0
  %10026 = vmatprep.mubr.bf16.mxu0 0
  %10027 = vmatmul.mubr.bf16.gmra.mrb[0].mxu0 %v1861
  %v10028 = vpop.f32.mrb[0].mxu0
  %v10029 = vadd.f32 %v9988, %v10028
  %v10030 = vpop.f32.mrb[0].mxu0
  %v10031 = vadd.f32 %v9990, %v10030
  %v10032 = vpop.f32.mrb[0].mxu0
  %v10033 = vpop.f32.mrb[0].mxu0
  %10034 = vdwg.mxu0
  %v10035 = vmax.f32 %v10029, 0.0
  %v10036 = vmax.f32 %v10031, 0.0
  %v10039 = vcombine.low %v10035, %v10036
  %v10041 = vunpack.c.l.s4 1983009808
  %v10042 = vunpack.c.0.s8 %v10041
  %v10043 = vlaneseq
  %v10044 = vshrl.u32 %v10043, 7
  %v10045 = vsub.s32 %v10042, %v10044
  %v10046 = vrot.slane %v10039, %v10045
  %10048 = vst [vmem:[%s3] sm:$0xf] %v10046
  // Predicated region
  $region14: #{conv_layer_forward.5} parent=0 // pred_check
    _
  $region15: #{conv_layer_forward.5} parent=0 // pred_check_branch
    %10050 = sbr.rel (0) target = $region17
  $region16: #{conv_layer_forward.5} parent=0 // pred_region
    _
  $region17: #{conv_layer_forward.5} parent=0 // pred_fallthru
    _
  // Predicated region
  $region18: #{conv_layer_forward.5} parent=0 // pred_check
    _
  $region19: #{conv_layer_forward.5} parent=0 // pred_check_branch
    %10052 = sbr.rel (0) target = $region21
  $region20: #{conv_layer_forward.5} parent=0 // pred_region
    _
  $region21: #{conv_layer_forward.5} parent=0 // pred_fallthru
    _

</llo_original>
